<compile_context>
chip_gen: v7x
topology: tpu7x:2x2x1
jax: 0.10.0
libtpu: 0.0.40
codegen_flags: <defaults>
</compile_context>

<pallas_src>
import math
from functools import partial

import numpy as np
import jax
import jax.numpy as jnp
from jax.experimental import pallas as pl
from jax.experimental.pallas import tpu as pltpu


# ----------------------------------------------------------------------------
# Host-side preparation: tap-concatenated banded weights + reordered MLP weights
# ----------------------------------------------------------------------------
def _conv_band(w_np, w_in, stride=2, pad=1):
    """Conv2d weight [Cout,Cin,3,3] -> tap-concatenated band [W_in*Cin, 3*Wo*Cout]:
    out_row[ho] = sum_i in_row[2*ho+i-1] @ band[:, i*N:(i+1)*N]."""
    cout, cin, kh, kw = w_np.shape
    wo = (w_in + 2 * pad - kw) // stride + 1
    bands = np.zeros((kh, w_in * cin, wo * cout), np.float32)
    for i in range(kh):
        for o in range(wo):
            for j in range(kw):
                w = stride * o + j - pad
                if 0 <= w < w_in:
                    bands[i, w * cin:(w + 1) * cin, o * cout:(o + 1) * cout] += \
                        w_np[:, :, i, j].T
    return np.concatenate([bands[0], bands[1], bands[2]], axis=1)


def _deconv_band(w_np, w_in, stride=2, pad=1, out_pad=1):
    """ConvTranspose2d weight [Cin,Cout,3,3] -> tap-concatenated band
    [W_in*Cin, 3*Wo*Cout] for the subpixel decomposition:
    even(2m) uses tap 1, odd(2m+1) uses tap 2 of row m and tap 0 of row m+1."""
    cin, cout, kh, kw = w_np.shape
    wo = (w_in - 1) * stride - 2 * pad + kw + out_pad   # = 2 * w_in
    bands = np.zeros((kh, w_in * cin, wo * cout), np.float32)
    for k in range(kh):
        for iw in range(w_in):
            for j in range(kw):
                ow = stride * iw - pad + j
                if 0 <= ow < wo:
                    bands[k, iw * cin:(iw + 1) * cin, ow * cout:(ow + 1) * cout] += \
                        w_np[:, :, k, j]
    return np.concatenate([bands[0], bands[1], bands[2]], axis=1)


def prepare_params(params):
    """Convert params to kernel-ready tensors (runs once on host).
    Weights -> bf16, biases -> f32.  Latent dims padded to 128 with zeros."""
    def npa(a):
        return np.asarray(a, dtype=np.float32)

    L = npa(params["enc_l3_w"]).shape[1]

    a1 = _conv_band(npa(params["enc_c1_w"]), 32)           # [32, 768]
    a2 = _conv_band(npa(params["enc_c2_w"]), 16)           # [256, 768]
    a3 = _conv_band(npa(params["enc_c3_w"]), 8)            # [256, 768]
    b1 = np.tile(npa(params["enc_c1_b"]), 16)[None]        # [1, 256]
    b2 = np.tile(npa(params["enc_c2_b"]), 8)[None]
    b3 = np.tile(npa(params["enc_c3_b"]), 4)[None]

    # enc_l1 rows regrouped (c,h,w) -> (h,w,c) to match the row-slab layout.
    w1 = npa(params["enc_l1_w"]).reshape(64, 4, 4, 250).transpose(1, 2, 0, 3) \
        .reshape(1024, 250)
    c1 = npa(params["enc_l1_b"])[None]
    w2 = npa(params["enc_l2_w"]); c2 = npa(params["enc_l2_b"])[None]
    w3 = np.zeros((50, 128), np.float32); w3[:, :L] = npa(params["enc_l3_w"])
    c3 = np.zeros((1, 128), np.float32);  c3[0, :L] = npa(params["enc_l3_b"])

    v1 = np.zeros((128, 50), np.float32); v1[:L] = npa(params["dec_l1_w"])
    d1 = npa(params["dec_l1_b"])[None]
    v2 = npa(params["dec_l2_w"]); d2 = npa(params["dec_l2_b"])[None]
    # dec_l3 columns reordered (c,h,w) -> (h,w,c) so Unflatten is free.
    v3 = npa(params["dec_l3_w"]).reshape(250, 64, 4, 4).transpose(0, 2, 3, 1) \
        .reshape(250, 1024)
    d3 = npa(params["dec_l3_b"]).reshape(64, 4, 4).transpose(1, 2, 0).reshape(1, 1024)

    t1 = _deconv_band(npa(params["dec_t1_w"]), 4)           # [256, 768]
    t2 = _deconv_band(npa(params["dec_t2_w"]), 8)           # [256, 768]
    t3 = _deconv_band(npa(params["dec_t3_w"]), 16)          # [256, 96]
    e1 = np.tile(npa(params["dec_t1_b"]), 8)[None]          # [1, 256]
    e2 = np.tile(npa(params["dec_t2_b"]), 16)[None]
    e3 = np.tile(npa(params["dec_t3_b"]), 32)[None]         # [1, 32]

    pairs = [(a1, b1), (a2, b2), (a3, b3),
             (w1, c1), (w2, c2), (w3, c3),
             (v1, d1), (v2, d2), (v3, d3),
             (t1, e1), (t2, e2), (t3, e3)]
    out = []
    for w, b in pairs:
        out.append(jnp.asarray(w, jnp.bfloat16))
        out.append(jnp.asarray(b, jnp.float32))
    return out


# ----------------------------------------------------------------------------
# The fused Pallas kernel: whole autoencoder forward
# ----------------------------------------------------------------------------
def _autoencoder_kernel(
    x_ref,                                   # [32*B, 32]  input rows (W*Cin = 32)
    a1, b1, a2, b2, a3, b3,                  # enc conv band_cats / biases
    w1, c1, w2, c2, w3, c3,                  # enc fc1/fc2/fc3 (fc3 padded to 128)
    v1, d1, v2, d2, v3_hbm, d3,              # dec fc1/fc2/fc3 (fc3 weight in HBM)
    t1_hbm, e1, t2_hbm, e2, t3_hbm, e3,      # dec deconv band_cats (HBM) / biases
    recon_ref, latent_ref,                   # outputs: [B, 1024], [B, 128]
    y, h1, h2, dz, u1, u2,                   # VMEM activation scratch slabs
    v3v, t1v, t2v, t3v, sem,                 # decoder-weight landing buffers + sems
):
    f32 = jnp.float32
    bf16 = jnp.bfloat16
    B = x_ref.shape[0] // 32

    # Kick off decoder-weight DMAs so they overlap the encoder compute.
    cp_v3 = pltpu.make_async_copy(v3_hbm, v3v, sem.at[0])
    cp_t1 = pltpu.make_async_copy(t1_hbm, t1v, sem.at[1])
    cp_t2 = pltpu.make_async_copy(t2_hbm, t2v, sem.at[2])
    cp_t3 = pltpu.make_async_copy(t3_hbm, t3v, sem.at[3])
    cp_v3.start(); cp_t1.start(); cp_t2.start(); cp_t3.start()

    def conv_stride2(in_slab, band_ref, bias_ref, h_in, write_row):
        """3x3 / stride-2 / pad-1 conv + bias + ReLU.
        One slab matmul against the tap-concatenated band, then a per-output-row
        combine of stride-2-shifted rows (out[ho] <- in rows 2ho-1, 2ho, 2ho+1)."""
        h_out = h_in // 2
        n = bias_ref.shape[1]
        rows = h_in * B
        y[0:rows, 0:3 * n] = jnp.dot(in_slab.astype(bf16), band_ref[...],
                                     preferred_element_type=f32)
        bias = bias_ref[...]
        for ho in range(h_out):
            c = 2 * ho
            acc = bias + y[c * B:(c + 1) * B, n:2 * n] \
                       + y[(c + 1) * B:(c + 2) * B, 2 * n:3 * n]
            if ho > 0:
                acc = acc + y[(c - 1) * B:c * B, 0:n]
            write_row(ho, jnp.maximum(acc, 0.0))

    def deconv_stride2(in_ref, band_ref, bias_ref, h_in, write_row, relu):
        """3x3 / stride-2 / pad-1 / out-pad-1 transposed conv, subpixel phases.
        One slab matmul; even(2m)=tap1[m], odd(2m+1)=tap2[m]+tap0[m+1]."""
        n = bias_ref.shape[1]
        rows = h_in * B
        y[0:rows, 0:3 * n] = jnp.dot(in_ref[...].astype(bf16), band_ref[...],
                                     preferred_element_type=f32)
        bias = bias_ref[...]
        for m in range(h_in):
            even = bias + y[m * B:(m + 1) * B, n:2 * n]
            odd = bias + y[m * B:(m + 1) * B, 2 * n:3 * n]
            if m + 1 < h_in:
                odd = odd + y[(m + 1) * B:(m + 2) * B, 0:n]
            if relu:
                even = jnp.maximum(even, 0.0)
                odd = jnp.maximum(odd, 0.0)
            write_row(2 * m, even)
            write_row(2 * m + 1, odd)

    def slab_writer(ref):
        def write(r, v):
            ref[r * B:(r + 1) * B, :] = v
        return write

    # ------------------------------ encoder ------------------------------
    conv_stride2(x_ref[...], a1, b1, 32, slab_writer(h1))       # 32x32x1 -> 16x16x16
    conv_stride2(h1[...], a2, b2, 16, slab_writer(h2))          # -> 8x8x32
    h3_rows = []
    conv_stride2(h2[...], a3, b3, 8, lambda r, v: h3_rows.append(v))   # -> 4x4x64
    h3 = jnp.concatenate(h3_rows, axis=-1)                      # [B, 1024] (h,w,c)

    h = jnp.maximum(jnp.dot(h3.astype(bf16), w1[...],
                            preferred_element_type=f32) + c1[...], 0.0)
    h = jnp.maximum(jnp.dot(h.astype(bf16), w2[...],
                            preferred_element_type=f32) + c2[...], 0.0)
    lat = jnp.dot(h.astype(bf16), w3[...], preferred_element_type=f32) + c3[...]
    latent_ref[...] = lat                                       # [B, 128] (zero-padded)

    # ------------------------------ decoder ------------------------------
    d = jnp.maximum(jnp.dot(lat.astype(bf16), v1[...],
                            preferred_element_type=f32) + d1[...], 0.0)
    d = jnp.maximum(jnp.dot(d.astype(bf16), v2[...],
                            preferred_element_type=f32) + d2[...], 0.0)
    cp_v3.wait()
    d = jnp.maximum(jnp.dot(d.astype(bf16), v3v[...],
                            preferred_element_type=f32) + d3[...], 0.0)   # [B, 1024]
    for m in range(4):                                          # free Unflatten
        dz[m * B:(m + 1) * B, :] = d[:, m * 256:(m + 1) * 256]

    cp_t1.wait()
    deconv_stride2(dz, t1v, e1, 4, slab_writer(u1), relu=True)   # 4x4x64 -> 8x8x32
    cp_t2.wait()
    deconv_stride2(u1, t2v, e2, 8, slab_writer(u2), relu=True)   # -> 16x16x16
    cp_t3.wait()

    def recon_write(r, v):                                       # lane-dense output
        recon_ref[:, r * 32:(r + 1) * 32] = v
    deconv_stride2(u2, t3v, e3, 16, recon_write, relu=False)     # -> 32x32x1


# ----------------------------------------------------------------------------
# Forward wrapper (single gridless pallas_call; layout converts only at boundary)
# ----------------------------------------------------------------------------
def conv_autoencoder_forward(prepared, x, latent_dim):
    B = x.shape[0]
    f32 = jnp.float32
    # NCHW [B,1,32,32] -> row slab [32*B, 32], row index h*B + b.
    xr = x.astype(f32).reshape(B, 32, 32).transpose(1, 0, 2).reshape(32 * B, 32)

    vmem = pl.BlockSpec(memory_space=pltpu.MemorySpace.VMEM)
    hbm = pl.BlockSpec(memory_space=pl.ANY)
    # x, a1,b1,a2,b2,a3,b3, w1,c1,w2,c2,w3,c3, v1,d1,v2,d2  -> VMEM (17)
    # v3 (HBM), d3, t1 (HBM), e1, t2 (HBM), e2, t3 (HBM), e3 -> 8 more
    in_specs = [vmem] * 17 + [hbm, vmem, hbm, vmem, hbm, vmem, hbm, vmem]

    out_shape = (
        jax.ShapeDtypeStruct((B, 1024), f32),        # recon, lanes = h*32 + w
        jax.ShapeDtypeStruct((B, 128), f32),         # latent padded to 128 lanes
    )
    scratch = [
        pltpu.VMEM((32 * B, 768), f32),              # y: slab-matmul result (reused)
        pltpu.VMEM((16 * B, 256), f32),              # h1
        pltpu.VMEM((8 * B, 256), f32),               # h2
        pltpu.VMEM((4 * B, 256), f32),               # dz (decoder un-flatten slab)
        pltpu.VMEM((8 * B, 256), f32),               # u1
        pltpu.VMEM((16 * B, 256), f32),              # u2
        pltpu.VMEM((250, 1024), jnp.bfloat16),       # v3 landing buffer
        pltpu.VMEM((256, 768), jnp.bfloat16),        # t1 landing buffer
        pltpu.VMEM((256, 768), jnp.bfloat16),        # t2 landing buffer
        pltpu.VMEM((256, 96), jnp.bfloat16),         # t3 landing buffer
        pltpu.SemaphoreType.DMA((4,)),               # decoder-weight DMA sems
    ]
    recon_flat, latent_pad = pl.pallas_call(
        _autoencoder_kernel,
        out_shape=out_shape,
        in_specs=in_specs,
        out_specs=(vmem, vmem),
        scratch_shapes=scratch,
        compiler_params=pltpu.CompilerParams(vmem_limit_bytes=32 * 1024 * 1024),
    )(xr, *prepared)

    recon = recon_flat.reshape(B, 1, 32, 32)
    return recon, latent_pad[:, :latent_dim]


# ----------------------------------------------------------------------------
# Deterministic parameter init (xavier_uniform weights, zero biases)
# ----------------------------------------------------------------------------
def _xavier(key, shape, fan_in, fan_out):
    bound = math.sqrt(6.0 / (fan_in + fan_out))
    return jax.random.uniform(key, shape, jnp.float32, -bound, bound)


def init_params(key, latent_dim):
    ks = iter(jax.random.split(key, 16))
    p = {}
    # encoder convs (PyTorch Conv2d weight layout [Cout, Cin, k, k])
    p["enc_c1_w"] = _xavier(next(ks), (16, 1, 3, 3), 1 * 9, 16 * 9)
    p["enc_c1_b"] = jnp.zeros((16,), jnp.float32)
    p["enc_c2_w"] = _xavier(next(ks), (32, 16, 3, 3), 16 * 9, 32 * 9)
    p["enc_c2_b"] = jnp.zeros((32,), jnp.float32)
    p["enc_c3_w"] = _xavier(next(ks), (64, 32, 3, 3), 32 * 9, 64 * 9)
    p["enc_c3_b"] = jnp.zeros((64,), jnp.float32)
    # encoder linears, stored as [in, out] so forward is x @ W
    p["enc_l1_w"] = _xavier(next(ks), (1024, 250), 1024, 250)
    p["enc_l1_b"] = jnp.zeros((250,), jnp.float32)
    p["enc_l2_w"] = _xavier(next(ks), (250, 50), 250, 50)
    p["enc_l2_b"] = jnp.zeros((50,), jnp.float32)
    p["enc_l3_w"] = _xavier(next(ks), (50, latent_dim), 50, latent_dim)
    p["enc_l3_b"] = jnp.zeros((latent_dim,), jnp.float32)
    # decoder linears
    p["dec_l1_w"] = _xavier(next(ks), (latent_dim, 50), latent_dim, 50)
    p["dec_l1_b"] = jnp.zeros((50,), jnp.float32)
    p["dec_l2_w"] = _xavier(next(ks), (50, 250), 50, 250)
    p["dec_l2_b"] = jnp.zeros((250,), jnp.float32)
    p["dec_l3_w"] = _xavier(next(ks), (250, 1024), 250, 1024)
    p["dec_l3_b"] = jnp.zeros((1024,), jnp.float32)
    # decoder transposed convs (PyTorch ConvTranspose2d weight layout [Cin, Cout, k, k])
    p["dec_t1_w"] = _xavier(next(ks), (64, 32, 3, 3), 64 * 9, 32 * 9)
    p["dec_t1_b"] = jnp.zeros((32,), jnp.float32)
    p["dec_t2_w"] = _xavier(next(ks), (32, 16, 3, 3), 32 * 9, 16 * 9)
    p["dec_t2_b"] = jnp.zeros((16,), jnp.float32)
    p["dec_t3_w"] = _xavier(next(ks), (16, 1, 3, 3), 16 * 9, 1 * 9)
    p["dec_t3_b"] = jnp.zeros((1,), jnp.float32)
    return p


if __name__ == "__main__":
    latent_dim = 10
    key = jax.random.PRNGKey(0)
    k_param, k_x = jax.random.split(key)
    params = init_params(k_param, latent_dim)
    prepared = prepare_params(params)                 # host-side, once
    # input must be [B, 1, 32, 32] so that Flatten produces 64*4*4 = 1024
    x = jax.random.normal(k_x, (2, 1, 32, 32), jnp.float32)

    fwd = jax.jit(partial(conv_autoencoder_forward, latent_dim=latent_dim))
    recon, latent = fwd(prepared, x)
    jax.block_until_ready((recon, latent))

    assert recon.shape == (2, 1, 32, 32), recon.shape
    assert latent.shape == (2, latent_dim), latent.shape
    assert recon.dtype == jnp.float32 and latent.dtype == jnp.float32
    assert bool(jnp.all(jnp.isfinite(recon))) and bool(jnp.all(jnp.isfinite(latent)))
    print("KERNEL_OK")
</pallas_src>

<mosaic_0001>
module attributes {stable_mosaic.version = 11 : i64} {
  func.func @_autoencoder_kernel(%arg0: memref<64x32xf32, #tpu.memory_space<vmem>>, %arg1: memref<32x768xbf16, #tpu.memory_space<vmem>>, %arg2: memref<1x256xf32, #tpu.memory_space<vmem>>, %arg3: memref<256x768xbf16, #tpu.memory_space<vmem>>, %arg4: memref<1x256xf32, #tpu.memory_space<vmem>>, %arg5: memref<256x768xbf16, #tpu.memory_space<vmem>>, %arg6: memref<1x256xf32, #tpu.memory_space<vmem>>, %arg7: memref<1024x250xbf16, #tpu.memory_space<vmem>>, %arg8: memref<1x250xf32, #tpu.memory_space<vmem>>, %arg9: memref<250x50xbf16, #tpu.memory_space<vmem>>, %arg10: memref<1x50xf32, #tpu.memory_space<vmem>>, %arg11: memref<50x128xbf16, #tpu.memory_space<vmem>>, %arg12: memref<1x128xf32, #tpu.memory_space<vmem>>, %arg13: memref<128x50xbf16, #tpu.memory_space<vmem>>, %arg14: memref<1x50xf32, #tpu.memory_space<vmem>>, %arg15: memref<50x250xbf16, #tpu.memory_space<vmem>>, %arg16: memref<1x250xf32, #tpu.memory_space<vmem>>, %arg17: memref<250x1024xbf16, #tpu.memory_space<any>>, %arg18: memref<1x1024xf32, #tpu.memory_space<vmem>>, %arg19: memref<256x768xbf16, #tpu.memory_space<any>>, %arg20: memref<1x256xf32, #tpu.memory_space<vmem>>, %arg21: memref<256x768xbf16, #tpu.memory_space<any>>, %arg22: memref<1x256xf32, #tpu.memory_space<vmem>>, %arg23: memref<256x96xbf16, #tpu.memory_space<any>>, %arg24: memref<1x32xf32, #tpu.memory_space<vmem>>, %arg25: memref<2x1024xf32, #tpu.memory_space<vmem>>, %arg26: memref<2x128xf32, #tpu.memory_space<vmem>>, %arg27: memref<64x768xf32, #tpu.memory_space<vmem>>, %arg28: memref<32x256xf32, #tpu.memory_space<vmem>>, %arg29: memref<16x256xf32, #tpu.memory_space<vmem>>, %arg30: memref<8x256xf32, #tpu.memory_space<vmem>>, %arg31: memref<16x256xf32, #tpu.memory_space<vmem>>, %arg32: memref<32x256xf32, #tpu.memory_space<vmem>>, %arg33: memref<250x1024xbf16, #tpu.memory_space<vmem>>, %arg34: memref<256x768xbf16, #tpu.memory_space<vmem>>, %arg35: memref<256x768xbf16, #tpu.memory_space<vmem>>, %arg36: memref<256x96xbf16, #tpu.memory_space<vmem>>, %arg37: memref<4x!tpu.dma_semaphore, #tpu.memory_space<semaphore_mem>>) attributes {dimension_semantics = [], scalar_prefetch = 0 : i64, scratch_operands = 11 : i64, tpu.core_type = #tpu.core_type<tc>} {
    %c0_i32 = arith.constant 0 : i32
    %0 = tpu.memref_slice %arg37[%c0_i32] : memref<4x!tpu.dma_semaphore, #tpu.memory_space<semaphore_mem>> -> memref<1x!tpu.dma_semaphore, #tpu.memory_space<semaphore_mem>>
    %1 = tpu.memref_squeeze %0 : memref<1x!tpu.dma_semaphore, #tpu.memory_space<semaphore_mem>> -> memref<!tpu.dma_semaphore, #tpu.memory_space<semaphore_mem>>
    tpu.enqueue_dma source(%arg17 : memref<250x1024xbf16, #tpu.memory_space<any>>) target(%arg33 : memref<250x1024xbf16, #tpu.memory_space<vmem>>) target_semaphore(%1 : memref<!tpu.dma_semaphore, #tpu.memory_space<semaphore_mem>>)
    %c1_i32 = arith.constant 1 : i32
    %2 = tpu.memref_slice %arg37[%c1_i32] : memref<4x!tpu.dma_semaphore, #tpu.memory_space<semaphore_mem>> -> memref<1x!tpu.dma_semaphore, #tpu.memory_space<semaphore_mem>>
    %3 = tpu.memref_squeeze %2 : memref<1x!tpu.dma_semaphore, #tpu.memory_space<semaphore_mem>> -> memref<!tpu.dma_semaphore, #tpu.memory_space<semaphore_mem>>
    tpu.enqueue_dma source(%arg19 : memref<256x768xbf16, #tpu.memory_space<any>>) target(%arg34 : memref<256x768xbf16, #tpu.memory_space<vmem>>) target_semaphore(%3 : memref<!tpu.dma_semaphore, #tpu.memory_space<semaphore_mem>>)
    %c2_i32 = arith.constant 2 : i32
    %4 = tpu.memref_slice %arg37[%c2_i32] : memref<4x!tpu.dma_semaphore, #tpu.memory_space<semaphore_mem>> -> memref<1x!tpu.dma_semaphore, #tpu.memory_space<semaphore_mem>>
    %5 = tpu.memref_squeeze %4 : memref<1x!tpu.dma_semaphore, #tpu.memory_space<semaphore_mem>> -> memref<!tpu.dma_semaphore, #tpu.memory_space<semaphore_mem>>
    tpu.enqueue_dma source(%arg21 : memref<256x768xbf16, #tpu.memory_space<any>>) target(%arg35 : memref<256x768xbf16, #tpu.memory_space<vmem>>) target_semaphore(%5 : memref<!tpu.dma_semaphore, #tpu.memory_space<semaphore_mem>>)
    %c3_i32 = arith.constant 3 : i32
    %6 = tpu.memref_slice %arg37[%c3_i32] : memref<4x!tpu.dma_semaphore, #tpu.memory_space<semaphore_mem>> -> memref<1x!tpu.dma_semaphore, #tpu.memory_space<semaphore_mem>>
    %7 = tpu.memref_squeeze %6 : memref<1x!tpu.dma_semaphore, #tpu.memory_space<semaphore_mem>> -> memref<!tpu.dma_semaphore, #tpu.memory_space<semaphore_mem>>
    tpu.enqueue_dma source(%arg23 : memref<256x96xbf16, #tpu.memory_space<any>>) target(%arg36 : memref<256x96xbf16, #tpu.memory_space<vmem>>) target_semaphore(%7 : memref<!tpu.dma_semaphore, #tpu.memory_space<semaphore_mem>>)
    %c0 = arith.constant 0 : index
    %c0_0 = arith.constant 0 : index
    %8 = vector.load %arg0[%c0, %c0_0] : memref<64x32xf32, #tpu.memory_space<vmem>>, vector<64x32xf32>
    %9 = arith.truncf %8 : vector<64x32xf32> to vector<64x32xbf16>
    %c0_1 = arith.constant 0 : index
    %c0_2 = arith.constant 0 : index
    %10 = vector.load %arg1[%c0_1, %c0_2] : memref<32x768xbf16, #tpu.memory_space<vmem>>, vector<32x768xbf16>
    %cst = arith.constant dense<0.000000e+00> : vector<64x768xf32>
    %11 = tpu.matmul %9, %10, %cst {dimension_numbers = #tpu.dot_dimension_numbers<[1], [0], [0], [1], [0, 0, 1, 1], [], []>} : vector<64x32xbf16>, vector<32x768xbf16>, vector<64x768xf32> -> vector<64x768xf32>
    %c0_3 = arith.constant 0 : index
    %c0_4 = arith.constant 0 : index
    %12 = vector.load %arg27[%c0_3, %c0_4] : memref<64x768xf32, #tpu.memory_space<vmem>>, vector<64x768xf32>
    tpu.vector_store %arg27[%c0_3, %c0_4], %11 {strides = array<i32>} : memref<64x768xf32, #tpu.memory_space<vmem>>, vector<64x768xf32>,
    %c0_5 = arith.constant 0 : index
    %c0_6 = arith.constant 0 : index
    %13 = vector.load %arg2[%c0_5, %c0_6] : memref<1x256xf32, #tpu.memory_space<vmem>>, vector<1x256xf32>
    %c0_7 = arith.constant 0 : index
    %c256 = arith.constant 256 : index
    %14 = vector.load %arg27[%c0_7, %c256] : memref<64x768xf32, #tpu.memory_space<vmem>>, vector<2x256xf32>
    %15 = vector.broadcast %13 : vector<1x256xf32> to vector<2x256xf32>
    %16 = arith.addf %15, %14 : vector<2x256xf32>
    %c2 = arith.constant 2 : index
    %c512 = arith.constant 512 : index
    %17 = vector.load %arg27[%c2, %c512] : memref<64x768xf32, #tpu.memory_space<vmem>>, vector<2x256xf32>
    %18 = arith.addf %16, %17 : vector<2x256xf32>
    %cst_8 = arith.constant 0.000000e+00 : f32
    %19 = vector.broadcast %cst_8 : f32 to vector<2x256xf32>
    %20 = arith.maximumf %18, %19 : vector<2x256xf32>
    %c0_9 = arith.constant 0 : index
    %c0_10 = arith.constant 0 : index
    %21 = vector.load %arg28[%c0_9, %c0_10] : memref<32x256xf32, #tpu.memory_space<vmem>>, vector<2x256xf32>
    tpu.vector_store %arg28[%c0_9, %c0_10], %20 {strides = array<i32>} : memref<32x256xf32, #tpu.memory_space<vmem>>, vector<2x256xf32>,
    %c4 = arith.constant 4 : index
    %c256_11 = arith.constant 256 : index
    %22 = vector.load %arg27[%c4, %c256_11] : memref<64x768xf32, #tpu.memory_space<vmem>>, vector<2x256xf32>
    %23 = vector.broadcast %13 : vector<1x256xf32> to vector<2x256xf32>
    %24 = arith.addf %23, %22 : vector<2x256xf32>
    %c6 = arith.constant 6 : index
    %c512_12 = arith.constant 512 : index
    %25 = vector.load %arg27[%c6, %c512_12] : memref<64x768xf32, #tpu.memory_space<vmem>>, vector<2x256xf32>
    %26 = arith.addf %24, %25 : vector<2x256xf32>
    %c2_13 = arith.constant 2 : index
    %c0_14 = arith.constant 0 : index
    %27 = vector.load %arg27[%c2_13, %c0_14] : memref<64x768xf32, #tpu.memory_space<vmem>>, vector<2x256xf32>
    %28 = arith.addf %26, %27 : vector<2x256xf32>
    %cst_15 = arith.constant 0.000000e+00 : f32
    %29 = vector.broadcast %cst_15 : f32 to vector<2x256xf32>
    %30 = arith.maximumf %28, %29 : vector<2x256xf32>
    %c2_16 = arith.constant 2 : index
    %c0_17 = arith.constant 0 : index
    %31 = vector.load %arg28[%c2_16, %c0_17] : memref<32x256xf32, #tpu.memory_space<vmem>>, vector<2x256xf32>
    tpu.vector_store %arg28[%c2_16, %c0_17], %30 {strides = array<i32>} : memref<32x256xf32, #tpu.memory_space<vmem>>, vector<2x256xf32>,
    %c8 = arith.constant 8 : index
    %c256_18 = arith.constant 256 : index
    %32 = vector.load %arg27[%c8, %c256_18] : memref<64x768xf32, #tpu.memory_space<vmem>>, vector<2x256xf32>
    %33 = vector.broadcast %13 : vector<1x256xf32> to vector<2x256xf32>
    %34 = arith.addf %33, %32 : vector<2x256xf32>
    %c10 = arith.constant 10 : index
    %c512_19 = arith.constant 512 : index
    %35 = vector.load %arg27[%c10, %c512_19] : memref<64x768xf32, #tpu.memory_space<vmem>>, vector<2x256xf32>
    %36 = arith.addf %34, %35 : vector<2x256xf32>
    %c6_20 = arith.constant 6 : index
    %c0_21 = arith.constant 0 : index
    %37 = vector.load %arg27[%c6_20, %c0_21] : memref<64x768xf32, #tpu.memory_space<vmem>>, vector<2x256xf32>
    %38 = arith.addf %36, %37 : vector<2x256xf32>
    %cst_22 = arith.constant 0.000000e+00 : f32
    %39 = vector.broadcast %cst_22 : f32 to vector<2x256xf32>
    %40 = arith.maximumf %38, %39 : vector<2x256xf32>
    %c4_23 = arith.constant 4 : index
    %c0_24 = arith.constant 0 : index
    %41 = vector.load %arg28[%c4_23, %c0_24] : memref<32x256xf32, #tpu.memory_space<vmem>>, vector<2x256xf32>
    tpu.vector_store %arg28[%c4_23, %c0_24], %40 {strides = array<i32>} : memref<32x256xf32, #tpu.memory_space<vmem>>, vector<2x256xf32>,
    %c12 = arith.constant 12 : index
    %c256_25 = arith.constant 256 : index
    %42 = vector.load %arg27[%c12, %c256_25] : memref<64x768xf32, #tpu.memory_space<vmem>>, vector<2x256xf32>
    %43 = vector.broadcast %13 : vector<1x256xf32> to vector<2x256xf32>
    %44 = arith.addf %43, %42 : vector<2x256xf32>
    %c14 = arith.constant 14 : index
    %c512_26 = arith.constant 512 : index
    %45 = vector.load %arg27[%c14, %c512_26] : memref<64x768xf32, #tpu.memory_space<vmem>>, vector<2x256xf32>
    %46 = arith.addf %44, %45 : vector<2x256xf32>
    %c10_27 = arith.constant 10 : index
    %c0_28 = arith.constant 0 : index
    %47 = vector.load %arg27[%c10_27, %c0_28] : memref<64x768xf32, #tpu.memory_space<vmem>>, vector<2x256xf32>
    %48 = arith.addf %46, %47 : vector<2x256xf32>
    %cst_29 = arith.constant 0.000000e+00 : f32
    %49 = vector.broadcast %cst_29 : f32 to vector<2x256xf32>
    %50 = arith.maximumf %48, %49 : vector<2x256xf32>
    %c6_30 = arith.constant 6 : index
    %c0_31 = arith.constant 0 : index
    %51 = vector.load %arg28[%c6_30, %c0_31] : memref<32x256xf32, #tpu.memory_space<vmem>>, vector<2x256xf32>
    tpu.vector_store %arg28[%c6_30, %c0_31], %50 {strides = array<i32>} : memref<32x256xf32, #tpu.memory_space<vmem>>, vector<2x256xf32>,
    %c16 = arith.constant 16 : index
    %c256_32 = arith.constant 256 : index
    %52 = vector.load %arg27[%c16, %c256_32] : memref<64x768xf32, #tpu.memory_space<vmem>>, vector<2x256xf32>
    %53 = vector.broadcast %13 : vector<1x256xf32> to vector<2x256xf32>
    %54 = arith.addf %53, %52 : vector<2x256xf32>
    %c18 = arith.constant 18 : index
    %c512_33 = arith.constant 512 : index
    %55 = vector.load %arg27[%c18, %c512_33] : memref<64x768xf32, #tpu.memory_space<vmem>>, vector<2x256xf32>
    %56 = arith.addf %54, %55 : vector<2x256xf32>
    %c14_34 = arith.constant 14 : index
    %c0_35 = arith.constant 0 : index
    %57 = vector.load %arg27[%c14_34, %c0_35] : memref<64x768xf32, #tpu.memory_space<vmem>>, vector<2x256xf32>
    %58 = arith.addf %56, %57 : vector<2x256xf32>
    %cst_36 = arith.constant 0.000000e+00 : f32
    %59 = vector.broadcast %cst_36 : f32 to vector<2x256xf32>
    %60 = arith.maximumf %58, %59 : vector<2x256xf32>
    %c8_37 = arith.constant 8 : index
    %c0_38 = arith.constant 0 : index
    %61 = vector.load %arg28[%c8_37, %c0_38] : memref<32x256xf32, #tpu.memory_space<vmem>>, vector<2x256xf32>
    tpu.vector_store %arg28[%c8_37, %c0_38], %60 {strides = array<i32>} : memref<32x256xf32, #tpu.memory_space<vmem>>, vector<2x256xf32>,
    %c20 = arith.constant 20 : index
    %c256_39 = arith.constant 256 : index
    %62 = vector.load %arg27[%c20, %c256_39] : memref<64x768xf32, #tpu.memory_space<vmem>>, vector<2x256xf32>
    %63 = vector.broadcast %13 : vector<1x256xf32> to vector<2x256xf32>
    %64 = arith.addf %63, %62 : vector<2x256xf32>
    %c22 = arith.constant 22 : index
    %c512_40 = arith.constant 512 : index
    %65 = vector.load %arg27[%c22, %c512_40] : memref<64x768xf32, #tpu.memory_space<vmem>>, vector<2x256xf32>
    %66 = arith.addf %64, %65 : vector<2x256xf32>
    %c18_41 = arith.constant 18 : index
    %c0_42 = arith.constant 0 : index
    %67 = vector.load %arg27[%c18_41, %c0_42] : memref<64x768xf32, #tpu.memory_space<vmem>>, vector<2x256xf32>
    %68 = arith.addf %66, %67 : vector<2x256xf32>
    %cst_43 = arith.constant 0.000000e+00 : f32
    %69 = vector.broadcast %cst_43 : f32 to vector<2x256xf32>
    %70 = arith.maximumf %68, %69 : vector<2x256xf32>
    %c10_44 = arith.constant 10 : index
    %c0_45 = arith.constant 0 : index
    %71 = vector.load %arg28[%c10_44, %c0_45] : memref<32x256xf32, #tpu.memory_space<vmem>>, vector<2x256xf32>
    tpu.vector_store %arg28[%c10_44, %c0_45], %70 {strides = array<i32>} : memref<32x256xf32, #tpu.memory_space<vmem>>, vector<2x256xf32>,
    %c24 = arith.constant 24 : index
    %c256_46 = arith.constant 256 : index
    %72 = vector.load %arg27[%c24, %c256_46] : memref<64x768xf32, #tpu.memory_space<vmem>>, vector<2x256xf32>
    %73 = vector.broadcast %13 : vector<1x256xf32> to vector<2x256xf32>
    %74 = arith.addf %73, %72 : vector<2x256xf32>
    %c26 = arith.constant 26 : index
    %c512_47 = arith.constant 512 : index
    %75 = vector.load %arg27[%c26, %c512_47] : memref<64x768xf32, #tpu.memory_space<vmem>>, vector<2x256xf32>
    %76 = arith.addf %74, %75 : vector<2x256xf32>
    %c22_48 = arith.constant 22 : index
    %c0_49 = arith.constant 0 : index
    %77 = vector.load %arg27[%c22_48, %c0_49] : memref<64x768xf32, #tpu.memory_space<vmem>>, vector<2x256xf32>
    %78 = arith.addf %76, %77 : vector<2x256xf32>
    %cst_50 = arith.constant 0.000000e+00 : f32
    %79 = vector.broadcast %cst_50 : f32 to vector<2x256xf32>
    %80 = arith.maximumf %78, %79 : vector<2x256xf32>
    %c12_51 = arith.constant 12 : index
    %c0_52 = arith.constant 0 : index
    %81 = vector.load %arg28[%c12_51, %c0_52] : memref<32x256xf32, #tpu.memory_space<vmem>>, vector<2x256xf32>
    tpu.vector_store %arg28[%c12_51, %c0_52], %80 {strides = array<i32>} : memref<32x256xf32, #tpu.memory_space<vmem>>, vector<2x256xf32>,
    %c28 = arith.constant 28 : index
    %c256_53 = arith.constant 256 : index
    %82 = vector.load %arg27[%c28, %c256_53] : memref<64x768xf32, #tpu.memory_space<vmem>>, vector<2x256xf32>
    %83 = vector.broadcast %13 : vector<1x256xf32> to vector<2x256xf32>
    %84 = arith.addf %83, %82 : vector<2x256xf32>
    %c30 = arith.constant 30 : index
    %c512_54 = arith.constant 512 : index
    %85 = vector.load %arg27[%c30, %c512_54] : memref<64x768xf32, #tpu.memory_space<vmem>>, vector<2x256xf32>
    %86 = arith.addf %84, %85 : vector<2x256xf32>
    %c26_55 = arith.constant 26 : index
    %c0_56 = arith.constant 0 : index
    %87 = vector.load %arg27[%c26_55, %c0_56] : memref<64x768xf32, #tpu.memory_space<vmem>>, vector<2x256xf32>
    %88 = arith.addf %86, %87 : vector<2x256xf32>
    %cst_57 = arith.constant 0.000000e+00 : f32
    %89 = vector.broadcast %cst_57 : f32 to vector<2x256xf32>
    %90 = arith.maximumf %88, %89 : vector<2x256xf32>
    %c14_58 = arith.constant 14 : index
    %c0_59 = arith.constant 0 : index
    %91 = vector.load %arg28[%c14_58, %c0_59] : memref<32x256xf32, #tpu.memory_space<vmem>>, vector<2x256xf32>
    tpu.vector_store %arg28[%c14_58, %c0_59], %90 {strides = array<i32>} : memref<32x256xf32, #tpu.memory_space<vmem>>, vector<2x256xf32>,
    %c32 = arith.constant 32 : index
    %c256_60 = arith.constant 256 : index
    %92 = vector.load %arg27[%c32, %c256_60] : memref<64x768xf32, #tpu.memory_space<vmem>>, vector<2x256xf32>
    %93 = vector.broadcast %13 : vector<1x256xf32> to vector<2x256xf32>
    %94 = arith.addf %93, %92 : vector<2x256xf32>
    %c34 = arith.constant 34 : index
    %c512_61 = arith.constant 512 : index
    %95 = vector.load %arg27[%c34, %c512_61] : memref<64x768xf32, #tpu.memory_space<vmem>>, vector<2x256xf32>
    %96 = arith.addf %94, %95 : vector<2x256xf32>
    %c30_62 = arith.constant 30 : index
    %c0_63 = arith.constant 0 : index
    %97 = vector.load %arg27[%c30_62, %c0_63] : memref<64x768xf32, #tpu.memory_space<vmem>>, vector<2x256xf32>
    %98 = arith.addf %96, %97 : vector<2x256xf32>
    %cst_64 = arith.constant 0.000000e+00 : f32
    %99 = vector.broadcast %cst_64 : f32 to vector<2x256xf32>
    %100 = arith.maximumf %98, %99 : vector<2x256xf32>
    %c16_65 = arith.constant 16 : index
    %c0_66 = arith.constant 0 : index
    %101 = vector.load %arg28[%c16_65, %c0_66] : memref<32x256xf32, #tpu.memory_space<vmem>>, vector<2x256xf32>
    tpu.vector_store %arg28[%c16_65, %c0_66], %100 {strides = array<i32>} : memref<32x256xf32, #tpu.memory_space<vmem>>, vector<2x256xf32>,
    %c36 = arith.constant 36 : index
    %c256_67 = arith.constant 256 : index
    %102 = vector.load %arg27[%c36, %c256_67] : memref<64x768xf32, #tpu.memory_space<vmem>>, vector<2x256xf32>
    %103 = vector.broadcast %13 : vector<1x256xf32> to vector<2x256xf32>
    %104 = arith.addf %103, %102 : vector<2x256xf32>
    %c38 = arith.constant 38 : index
    %c512_68 = arith.constant 512 : index
    %105 = vector.load %arg27[%c38, %c512_68] : memref<64x768xf32, #tpu.memory_space<vmem>>, vector<2x256xf32>
    %106 = arith.addf %104, %105 : vector<2x256xf32>
    %c34_69 = arith.constant 34 : index
    %c0_70 = arith.constant 0 : index
    %107 = vector.load %arg27[%c34_69, %c0_70] : memref<64x768xf32, #tpu.memory_space<vmem>>, vector<2x256xf32>
    %108 = arith.addf %106, %107 : vector<2x256xf32>
    %cst_71 = arith.constant 0.000000e+00 : f32
    %109 = vector.broadcast %cst_71 : f32 to vector<2x256xf32>
    %110 = arith.maximumf %108, %109 : vector<2x256xf32>
    %c18_72 = arith.constant 18 : index
    %c0_73 = arith.constant 0 : index
    %111 = vector.load %arg28[%c18_72, %c0_73] : memref<32x256xf32, #tpu.memory_space<vmem>>, vector<2x256xf32>
    tpu.vector_store %arg28[%c18_72, %c0_73], %110 {strides = array<i32>} : memref<32x256xf32, #tpu.memory_space<vmem>>, vector<2x256xf32>,
    %c40 = arith.constant 40 : index
    %c256_74 = arith.constant 256 : index
    %112 = vector.load %arg27[%c40, %c256_74] : memref<64x768xf32, #tpu.memory_space<vmem>>, vector<2x256xf32>
    %113 = vector.broadcast %13 : vector<1x256xf32> to vector<2x256xf32>
    %114 = arith.addf %113, %112 : vector<2x256xf32>
    %c42 = arith.constant 42 : index
    %c512_75 = arith.constant 512 : index
    %115 = vector.load %arg27[%c42, %c512_75] : memref<64x768xf32, #tpu.memory_space<vmem>>, vector<2x256xf32>
    %116 = arith.addf %114, %115 : vector<2x256xf32>
    %c38_76 = arith.constant 38 : index
    %c0_77 = arith.constant 0 : index
    %117 = vector.load %arg27[%c38_76, %c0_77] : memref<64x768xf32, #tpu.memory_space<vmem>>, vector<2x256xf32>
    %118 = arith.addf %116, %117 : vector<2x256xf32>
    %cst_78 = arith.constant 0.000000e+00 : f32
    %119 = vector.broadcast %cst_78 : f32 to vector<2x256xf32>
    %120 = arith.maximumf %118, %119 : vector<2x256xf32>
    %c20_79 = arith.constant 20 : index
    %c0_80 = arith.constant 0 : index
    %121 = vector.load %arg28[%c20_79, %c0_80] : memref<32x256xf32, #tpu.memory_space<vmem>>, vector<2x256xf32>
    tpu.vector_store %arg28[%c20_79, %c0_80], %120 {strides = array<i32>} : memref<32x256xf32, #tpu.memory_space<vmem>>, vector<2x256xf32>,
    %c44 = arith.constant 44 : index
    %c256_81 = arith.constant 256 : index
    %122 = vector.load %arg27[%c44, %c256_81] : memref<64x768xf32, #tpu.memory_space<vmem>>, vector<2x256xf32>
    %123 = vector.broadcast %13 : vector<1x256xf32> to vector<2x256xf32>
    %124 = arith.addf %123, %122 : vector<2x256xf32>
    %c46 = arith.constant 46 : index
    %c512_82 = arith.constant 512 : index
    %125 = vector.load %arg27[%c46, %c512_82] : memref<64x768xf32, #tpu.memory_space<vmem>>, vector<2x256xf32>
    %126 = arith.addf %124, %125 : vector<2x256xf32>
    %c42_83 = arith.constant 42 : index
    %c0_84 = arith.constant 0 : index
    %127 = vector.load %arg27[%c42_83, %c0_84] : memref<64x768xf32, #tpu.memory_space<vmem>>, vector<2x256xf32>
    %128 = arith.addf %126, %127 : vector<2x256xf32>
    %cst_85 = arith.constant 0.000000e+00 : f32
    %129 = vector.broadcast %cst_85 : f32 to vector<2x256xf32>
    %130 = arith.maximumf %128, %129 : vector<2x256xf32>
    %c22_86 = arith.constant 22 : index
    %c0_87 = arith.constant 0 : index
    %131 = vector.load %arg28[%c22_86, %c0_87] : memref<32x256xf32, #tpu.memory_space<vmem>>, vector<2x256xf32>
    tpu.vector_store %arg28[%c22_86, %c0_87], %130 {strides = array<i32>} : memref<32x256xf32, #tpu.memory_space<vmem>>, vector<2x256xf32>,
    %c48 = arith.constant 48 : index
    %c256_88 = arith.constant 256 : index
    %132 = vector.load %arg27[%c48, %c256_88] : memref<64x768xf32, #tpu.memory_space<vmem>>, vector<2x256xf32>
    %133 = vector.broadcast %13 : vector<1x256xf32> to vector<2x256xf32>
    %134 = arith.addf %133, %132 : vector<2x256xf32>
    %c50 = arith.constant 50 : index
    %c512_89 = arith.constant 512 : index
    %135 = vector.load %arg27[%c50, %c512_89] : memref<64x768xf32, #tpu.memory_space<vmem>>, vector<2x256xf32>
    %136 = arith.addf %134, %135 : vector<2x256xf32>
    %c46_90 = arith.constant 46 : index
    %c0_91 = arith.constant 0 : index
    %137 = vector.load %arg27[%c46_90, %c0_91] : memref<64x768xf32, #tpu.memory_space<vmem>>, vector<2x256xf32>
    %138 = arith.addf %136, %137 : vector<2x256xf32>
    %cst_92 = arith.constant 0.000000e+00 : f32
    %139 = vector.broadcast %cst_92 : f32 to vector<2x256xf32>
    %140 = arith.maximumf %138, %139 : vector<2x256xf32>
    %c24_93 = arith.constant 24 : index
    %c0_94 = arith.constant 0 : index
    %141 = vector.load %arg28[%c24_93, %c0_94] : memref<32x256xf32, #tpu.memory_space<vmem>>, vector<2x256xf32>
    tpu.vector_store %arg28[%c24_93, %c0_94], %140 {strides = array<i32>} : memref<32x256xf32, #tpu.memory_space<vmem>>, vector<2x256xf32>,
    %c52 = arith.constant 52 : index
    %c256_95 = arith.constant 256 : index
    %142 = vector.load %arg27[%c52, %c256_95] : memref<64x768xf32, #tpu.memory_space<vmem>>, vector<2x256xf32>
    %143 = vector.broadcast %13 : vector<1x256xf32> to vector<2x256xf32>
    %144 = arith.addf %143, %142 : vector<2x256xf32>
    %c54 = arith.constant 54 : index
    %c512_96 = arith.constant 512 : index
    %145 = vector.load %arg27[%c54, %c512_96] : memref<64x768xf32, #tpu.memory_space<vmem>>, vector<2x256xf32>
    %146 = arith.addf %144, %145 : vector<2x256xf32>
    %c50_97 = arith.constant 50 : index
    %c0_98 = arith.constant 0 : index
    %147 = vector.load %arg27[%c50_97, %c0_98] : memref<64x768xf32, #tpu.memory_space<vmem>>, vector<2x256xf32>
    %148 = arith.addf %146, %147 : vector<2x256xf32>
    %cst_99 = arith.constant 0.000000e+00 : f32
    %149 = vector.broadcast %cst_99 : f32 to vector<2x256xf32>
    %150 = arith.maximumf %148, %149 : vector<2x256xf32>
    %c26_100 = arith.constant 26 : index
    %c0_101 = arith.constant 0 : index
    %151 = vector.load %arg28[%c26_100, %c0_101] : memref<32x256xf32, #tpu.memory_space<vmem>>, vector<2x256xf32>
    tpu.vector_store %arg28[%c26_100, %c0_101], %150 {strides = array<i32>} : memref<32x256xf32, #tpu.memory_space<vmem>>, vector<2x256xf32>,
    %c56 = arith.constant 56 : index
    %c256_102 = arith.constant 256 : index
    %152 = vector.load %arg27[%c56, %c256_102] : memref<64x768xf32, #tpu.memory_space<vmem>>, vector<2x256xf32>
    %153 = vector.broadcast %13 : vector<1x256xf32> to vector<2x256xf32>
    %154 = arith.addf %153, %152 : vector<2x256xf32>
    %c58 = arith.constant 58 : index
    %c512_103 = arith.constant 512 : index
    %155 = vector.load %arg27[%c58, %c512_103] : memref<64x768xf32, #tpu.memory_space<vmem>>, vector<2x256xf32>
    %156 = arith.addf %154, %155 : vector<2x256xf32>
    %c54_104 = arith.constant 54 : index
    %c0_105 = arith.constant 0 : index
    %157 = vector.load %arg27[%c54_104, %c0_105] : memref<64x768xf32, #tpu.memory_space<vmem>>, vector<2x256xf32>
    %158 = arith.addf %156, %157 : vector<2x256xf32>
    %cst_106 = arith.constant 0.000000e+00 : f32
    %159 = vector.broadcast %cst_106 : f32 to vector<2x256xf32>
    %160 = arith.maximumf %158, %159 : vector<2x256xf32>
    %c28_107 = arith.constant 28 : index
    %c0_108 = arith.constant 0 : index
    %161 = vector.load %arg28[%c28_107, %c0_108] : memref<32x256xf32, #tpu.memory_space<vmem>>, vector<2x256xf32>
    tpu.vector_store %arg28[%c28_107, %c0_108], %160 {strides = array<i32>} : memref<32x256xf32, #tpu.memory_space<vmem>>, vector<2x256xf32>,
    %c60 = arith.constant 60 : index
    %c256_109 = arith.constant 256 : index
    %162 = vector.load %arg27[%c60, %c256_109] : memref<64x768xf32, #tpu.memory_space<vmem>>, vector<2x256xf32>
    %163 = vector.broadcast %13 : vector<1x256xf32> to vector<2x256xf32>
    %164 = arith.addf %163, %162 : vector<2x256xf32>
    %c62 = arith.constant 62 : index
    %c512_110 = arith.constant 512 : index
    %165 = vector.load %arg27[%c62, %c512_110] : memref<64x768xf32, #tpu.memory_space<vmem>>, vector<2x256xf32>
    %166 = arith.addf %164, %165 : vector<2x256xf32>
    %c58_111 = arith.constant 58 : index
    %c0_112 = arith.constant 0 : index
    %167 = vector.load %arg27[%c58_111, %c0_112] : memref<64x768xf32, #tpu.memory_space<vmem>>, vector<2x256xf32>
    %168 = arith.addf %166, %167 : vector<2x256xf32>
    %cst_113 = arith.constant 0.000000e+00 : f32
    %169 = vector.broadcast %cst_113 : f32 to vector<2x256xf32>
    %170 = arith.maximumf %168, %169 : vector<2x256xf32>
    %c30_114 = arith.constant 30 : index
    %c0_115 = arith.constant 0 : index
    %171 = vector.load %arg28[%c30_114, %c0_115] : memref<32x256xf32, #tpu.memory_space<vmem>>, vector<2x256xf32>
    tpu.vector_store %arg28[%c30_114, %c0_115], %170 {strides = array<i32>} : memref<32x256xf32, #tpu.memory_space<vmem>>, vector<2x256xf32>,
    %c0_116 = arith.constant 0 : index
    %c0_117 = arith.constant 0 : index
    %172 = vector.load %arg28[%c0_116, %c0_117] : memref<32x256xf32, #tpu.memory_space<vmem>>, vector<32x256xf32>
    %173 = arith.truncf %172 : vector<32x256xf32> to vector<32x256xbf16>
    %c0_118 = arith.constant 0 : index
    %c0_119 = arith.constant 0 : index
    %174 = vector.load %arg3[%c0_118, %c0_119] : memref<256x768xbf16, #tpu.memory_space<vmem>>, vector<256x768xbf16>
    %cst_120 = arith.constant dense<0.000000e+00> : vector<32x768xf32>
    %175 = tpu.matmul %173, %174, %cst_120 {dimension_numbers = #tpu.dot_dimension_numbers<[1], [0], [0], [1], [0, 0, 1, 1], [], []>} : vector<32x256xbf16>, vector<256x768xbf16>, vector<32x768xf32> -> vector<32x768xf32>
    %c0_121 = arith.constant 0 : index
    %c0_122 = arith.constant 0 : index
    %176 = vector.load %arg27[%c0_121, %c0_122] : memref<64x768xf32, #tpu.memory_space<vmem>>, vector<32x768xf32>
    tpu.vector_store %arg27[%c0_121, %c0_122], %175 {strides = array<i32>} : memref<64x768xf32, #tpu.memory_space<vmem>>, vector<32x768xf32>,
    %c0_123 = arith.constant 0 : index
    %c0_124 = arith.constant 0 : index
    %177 = vector.load %arg4[%c0_123, %c0_124] : memref<1x256xf32, #tpu.memory_space<vmem>>, vector<1x256xf32>
    %c0_125 = arith.constant 0 : index
    %c256_126 = arith.constant 256 : index
    %178 = vector.load %arg27[%c0_125, %c256_126] : memref<64x768xf32, #tpu.memory_space<vmem>>, vector<2x256xf32>
    %179 = vector.broadcast %177 : vector<1x256xf32> to vector<2x256xf32>
    %180 = arith.addf %179, %178 : vector<2x256xf32>
    %c2_127 = arith.constant 2 : index
    %c512_128 = arith.constant 512 : index
    %181 = vector.load %arg27[%c2_127, %c512_128] : memref<64x768xf32, #tpu.memory_space<vmem>>, vector<2x256xf32>
    %182 = arith.addf %180, %181 : vector<2x256xf32>
    %cst_129 = arith.constant 0.000000e+00 : f32
    %183 = vector.broadcast %cst_129 : f32 to vector<2x256xf32>
    %184 = arith.maximumf %182, %183 : vector<2x256xf32>
    %c0_130 = arith.constant 0 : index
    %c0_131 = arith.constant 0 : index
    %185 = vector.load %arg29[%c0_130, %c0_131] : memref<16x256xf32, #tpu.memory_space<vmem>>, vector<2x256xf32>
    tpu.vector_store %arg29[%c0_130, %c0_131], %184 {strides = array<i32>} : memref<16x256xf32, #tpu.memory_space<vmem>>, vector<2x256xf32>,
    %c4_132 = arith.constant 4 : index
    %c256_133 = arith.constant 256 : index
    %186 = vector.load %arg27[%c4_132, %c256_133] : memref<64x768xf32, #tpu.memory_space<vmem>>, vector<2x256xf32>
    %187 = vector.broadcast %177 : vector<1x256xf32> to vector<2x256xf32>
    %188 = arith.addf %187, %186 : vector<2x256xf32>
    %c6_134 = arith.constant 6 : index
    %c512_135 = arith.constant 512 : index
    %189 = vector.load %arg27[%c6_134, %c512_135] : memref<64x768xf32, #tpu.memory_space<vmem>>, vector<2x256xf32>
    %190 = arith.addf %188, %189 : vector<2x256xf32>
    %c2_136 = arith.constant 2 : index
    %c0_137 = arith.constant 0 : index
    %191 = vector.load %arg27[%c2_136, %c0_137] : memref<64x768xf32, #tpu.memory_space<vmem>>, vector<2x256xf32>
    %192 = arith.addf %190, %191 : vector<2x256xf32>
    %cst_138 = arith.constant 0.000000e+00 : f32
    %193 = vector.broadcast %cst_138 : f32 to vector<2x256xf32>
    %194 = arith.maximumf %192, %193 : vector<2x256xf32>
    %c2_139 = arith.constant 2 : index
    %c0_140 = arith.constant 0 : index
    %195 = vector.load %arg29[%c2_139, %c0_140] : memref<16x256xf32, #tpu.memory_space<vmem>>, vector<2x256xf32>
    tpu.vector_store %arg29[%c2_139, %c0_140], %194 {strides = array<i32>} : memref<16x256xf32, #tpu.memory_space<vmem>>, vector<2x256xf32>,
    %c8_141 = arith.constant 8 : index
    %c256_142 = arith.constant 256 : index
    %196 = vector.load %arg27[%c8_141, %c256_142] : memref<64x768xf32, #tpu.memory_space<vmem>>, vector<2x256xf32>
    %197 = vector.broadcast %177 : vector<1x256xf32> to vector<2x256xf32>
    %198 = arith.addf %197, %196 : vector<2x256xf32>
    %c10_143 = arith.constant 10 : index
    %c512_144 = arith.constant 512 : index
    %199 = vector.load %arg27[%c10_143, %c512_144] : memref<64x768xf32, #tpu.memory_space<vmem>>, vector<2x256xf32>
    %200 = arith.addf %198, %199 : vector<2x256xf32>
    %c6_145 = arith.constant 6 : index
    %c0_146 = arith.constant 0 : index
    %201 = vector.load %arg27[%c6_145, %c0_146] : memref<64x768xf32, #tpu.memory_space<vmem>>, vector<2x256xf32>
    %202 = arith.addf %200, %201 : vector<2x256xf32>
    %cst_147 = arith.constant 0.000000e+00 : f32
    %203 = vector.broadcast %cst_147 : f32 to vector<2x256xf32>
    %204 = arith.maximumf %202, %203 : vector<2x256xf32>
    %c4_148 = arith.constant 4 : index
    %c0_149 = arith.constant 0 : index
    %205 = vector.load %arg29[%c4_148, %c0_149] : memref<16x256xf32, #tpu.memory_space<vmem>>, vector<2x256xf32>
    tpu.vector_store %arg29[%c4_148, %c0_149], %204 {strides = array<i32>} : memref<16x256xf32, #tpu.memory_space<vmem>>, vector<2x256xf32>,
    %c12_150 = arith.constant 12 : index
    %c256_151 = arith.constant 256 : index
    %206 = vector.load %arg27[%c12_150, %c256_151] : memref<64x768xf32, #tpu.memory_space<vmem>>, vector<2x256xf32>
    %207 = vector.broadcast %177 : vector<1x256xf32> to vector<2x256xf32>
    %208 = arith.addf %207, %206 : vector<2x256xf32>
    %c14_152 = arith.constant 14 : index
    %c512_153 = arith.constant 512 : index
    %209 = vector.load %arg27[%c14_152, %c512_153] : memref<64x768xf32, #tpu.memory_space<vmem>>, vector<2x256xf32>
    %210 = arith.addf %208, %209 : vector<2x256xf32>
    %c10_154 = arith.constant 10 : index
    %c0_155 = arith.constant 0 : index
    %211 = vector.load %arg27[%c10_154, %c0_155] : memref<64x768xf32, #tpu.memory_space<vmem>>, vector<2x256xf32>
    %212 = arith.addf %210, %211 : vector<2x256xf32>
    %cst_156 = arith.constant 0.000000e+00 : f32
    %213 = vector.broadcast %cst_156 : f32 to vector<2x256xf32>
    %214 = arith.maximumf %212, %213 : vector<2x256xf32>
    %c6_157 = arith.constant 6 : index
    %c0_158 = arith.constant 0 : index
    %215 = vector.load %arg29[%c6_157, %c0_158] : memref<16x256xf32, #tpu.memory_space<vmem>>, vector<2x256xf32>
    tpu.vector_store %arg29[%c6_157, %c0_158], %214 {strides = array<i32>} : memref<16x256xf32, #tpu.memory_space<vmem>>, vector<2x256xf32>,
    %c16_159 = arith.constant 16 : index
    %c256_160 = arith.constant 256 : index
    %216 = vector.load %arg27[%c16_159, %c256_160] : memref<64x768xf32, #tpu.memory_space<vmem>>, vector<2x256xf32>
    %217 = vector.broadcast %177 : vector<1x256xf32> to vector<2x256xf32>
    %218 = arith.addf %217, %216 : vector<2x256xf32>
    %c18_161 = arith.constant 18 : index
    %c512_162 = arith.constant 512 : index
    %219 = vector.load %arg27[%c18_161, %c512_162] : memref<64x768xf32, #tpu.memory_space<vmem>>, vector<2x256xf32>
    %220 = arith.addf %218, %219 : vector<2x256xf32>
    %c14_163 = arith.constant 14 : index
    %c0_164 = arith.constant 0 : index
    %221 = vector.load %arg27[%c14_163, %c0_164] : memref<64x768xf32, #tpu.memory_space<vmem>>, vector<2x256xf32>
    %222 = arith.addf %220, %221 : vector<2x256xf32>
    %cst_165 = arith.constant 0.000000e+00 : f32
    %223 = vector.broadcast %cst_165 : f32 to vector<2x256xf32>
    %224 = arith.maximumf %222, %223 : vector<2x256xf32>
    %c8_166 = arith.constant 8 : index
    %c0_167 = arith.constant 0 : index
    %225 = vector.load %arg29[%c8_166, %c0_167] : memref<16x256xf32, #tpu.memory_space<vmem>>, vector<2x256xf32>
    tpu.vector_store %arg29[%c8_166, %c0_167], %224 {strides = array<i32>} : memref<16x256xf32, #tpu.memory_space<vmem>>, vector<2x256xf32>,
    %c20_168 = arith.constant 20 : index
    %c256_169 = arith.constant 256 : index
    %226 = vector.load %arg27[%c20_168, %c256_169] : memref<64x768xf32, #tpu.memory_space<vmem>>, vector<2x256xf32>
    %227 = vector.broadcast %177 : vector<1x256xf32> to vector<2x256xf32>
    %228 = arith.addf %227, %226 : vector<2x256xf32>
    %c22_170 = arith.constant 22 : index
    %c512_171 = arith.constant 512 : index
    %229 = vector.load %arg27[%c22_170, %c512_171] : memref<64x768xf32, #tpu.memory_space<vmem>>, vector<2x256xf32>
    %230 = arith.addf %228, %229 : vector<2x256xf32>
    %c18_172 = arith.constant 18 : index
    %c0_173 = arith.constant 0 : index
    %231 = vector.load %arg27[%c18_172, %c0_173] : memref<64x768xf32, #tpu.memory_space<vmem>>, vector<2x256xf32>
    %232 = arith.addf %230, %231 : vector<2x256xf32>
    %cst_174 = arith.constant 0.000000e+00 : f32
    %233 = vector.broadcast %cst_174 : f32 to vector<2x256xf32>
    %234 = arith.maximumf %232, %233 : vector<2x256xf32>
    %c10_175 = arith.constant 10 : index
    %c0_176 = arith.constant 0 : index
    %235 = vector.load %arg29[%c10_175, %c0_176] : memref<16x256xf32, #tpu.memory_space<vmem>>, vector<2x256xf32>
    tpu.vector_store %arg29[%c10_175, %c0_176], %234 {strides = array<i32>} : memref<16x256xf32, #tpu.memory_space<vmem>>, vector<2x256xf32>,
    %c24_177 = arith.constant 24 : index
    %c256_178 = arith.constant 256 : index
    %236 = vector.load %arg27[%c24_177, %c256_178] : memref<64x768xf32, #tpu.memory_space<vmem>>, vector<2x256xf32>
    %237 = vector.broadcast %177 : vector<1x256xf32> to vector<2x256xf32>
    %238 = arith.addf %237, %236 : vector<2x256xf32>
    %c26_179 = arith.constant 26 : index
    %c512_180 = arith.constant 512 : index
    %239 = vector.load %arg27[%c26_179, %c512_180] : memref<64x768xf32, #tpu.memory_space<vmem>>, vector<2x256xf32>
    %240 = arith.addf %238, %239 : vector<2x256xf32>
    %c22_181 = arith.constant 22 : index
    %c0_182 = arith.constant 0 : index
    %241 = vector.load %arg27[%c22_181, %c0_182] : memref<64x768xf32, #tpu.memory_space<vmem>>, vector<2x256xf32>
    %242 = arith.addf %240, %241 : vector<2x256xf32>
    %cst_183 = arith.constant 0.000000e+00 : f32
    %243 = vector.broadcast %cst_183 : f32 to vector<2x256xf32>
    %244 = arith.maximumf %242, %243 : vector<2x256xf32>
    %c12_184 = arith.constant 12 : index
    %c0_185 = arith.constant 0 : index
    %245 = vector.load %arg29[%c12_184, %c0_185] : memref<16x256xf32, #tpu.memory_space<vmem>>, vector<2x256xf32>
    tpu.vector_store %arg29[%c12_184, %c0_185], %244 {strides = array<i32>} : memref<16x256xf32, #tpu.memory_space<vmem>>, vector<2x256xf32>,
    %c28_186 = arith.constant 28 : index
    %c256_187 = arith.constant 256 : index
    %246 = vector.load %arg27[%c28_186, %c256_187] : memref<64x768xf32, #tpu.memory_space<vmem>>, vector<2x256xf32>
    %247 = vector.broadcast %177 : vector<1x256xf32> to vector<2x256xf32>
    %248 = arith.addf %247, %246 : vector<2x256xf32>
    %c30_188 = arith.constant 30 : index
    %c512_189 = arith.constant 512 : index
    %249 = vector.load %arg27[%c30_188, %c512_189] : memref<64x768xf32, #tpu.memory_space<vmem>>, vector<2x256xf32>
    %250 = arith.addf %248, %249 : vector<2x256xf32>
    %c26_190 = arith.constant 26 : index
    %c0_191 = arith.constant 0 : index
    %251 = vector.load %arg27[%c26_190, %c0_191] : memref<64x768xf32, #tpu.memory_space<vmem>>, vector<2x256xf32>
    %252 = arith.addf %250, %251 : vector<2x256xf32>
    %cst_192 = arith.constant 0.000000e+00 : f32
    %253 = vector.broadcast %cst_192 : f32 to vector<2x256xf32>
    %254 = arith.maximumf %252, %253 : vector<2x256xf32>
    %c14_193 = arith.constant 14 : index
    %c0_194 = arith.constant 0 : index
    %255 = vector.load %arg29[%c14_193, %c0_194] : memref<16x256xf32, #tpu.memory_space<vmem>>, vector<2x256xf32>
    tpu.vector_store %arg29[%c14_193, %c0_194], %254 {strides = array<i32>} : memref<16x256xf32, #tpu.memory_space<vmem>>, vector<2x256xf32>,
    %c0_195 = arith.constant 0 : index
    %c0_196 = arith.constant 0 : index
    %256 = vector.load %arg29[%c0_195, %c0_196] : memref<16x256xf32, #tpu.memory_space<vmem>>, vector<16x256xf32>
    %257 = arith.truncf %256 : vector<16x256xf32> to vector<16x256xbf16>
    %c0_197 = arith.constant 0 : index
    %c0_198 = arith.constant 0 : index
    %258 = vector.load %arg5[%c0_197, %c0_198] : memref<256x768xbf16, #tpu.memory_space<vmem>>, vector<256x768xbf16>
    %cst_199 = arith.constant dense<0.000000e+00> : vector<16x768xf32>
    %259 = tpu.matmul %257, %258, %cst_199 {dimension_numbers = #tpu.dot_dimension_numbers<[1], [0], [0], [1], [0, 0, 1, 1], [], []>} : vector<16x256xbf16>, vector<256x768xbf16>, vector<16x768xf32> -> vector<16x768xf32>
    %c0_200 = arith.constant 0 : index
    %c0_201 = arith.constant 0 : index
    %260 = vector.load %arg27[%c0_200, %c0_201] : memref<64x768xf32, #tpu.memory_space<vmem>>, vector<16x768xf32>
    tpu.vector_store %arg27[%c0_200, %c0_201], %259 {strides = array<i32>} : memref<64x768xf32, #tpu.memory_space<vmem>>, vector<16x768xf32>,
    %c0_202 = arith.constant 0 : index
    %c0_203 = arith.constant 0 : index
    %261 = vector.load %arg6[%c0_202, %c0_203] : memref<1x256xf32, #tpu.memory_space<vmem>>, vector<1x256xf32>
    %c0_204 = arith.constant 0 : index
    %c256_205 = arith.constant 256 : index
    %262 = vector.load %arg27[%c0_204, %c256_205] : memref<64x768xf32, #tpu.memory_space<vmem>>, vector<2x256xf32>
    %263 = vector.broadcast %261 : vector<1x256xf32> to vector<2x256xf32>
    %264 = arith.addf %263, %262 : vector<2x256xf32>
    %c2_206 = arith.constant 2 : index
    %c512_207 = arith.constant 512 : index
    %265 = vector.load %arg27[%c2_206, %c512_207] : memref<64x768xf32, #tpu.memory_space<vmem>>, vector<2x256xf32>
    %266 = arith.addf %264, %265 : vector<2x256xf32>
    %cst_208 = arith.constant 0.000000e+00 : f32
    %267 = vector.broadcast %cst_208 : f32 to vector<2x256xf32>
    %268 = arith.maximumf %266, %267 : vector<2x256xf32>
    %c4_209 = arith.constant 4 : index
    %c256_210 = arith.constant 256 : index
    %269 = vector.load %arg27[%c4_209, %c256_210] : memref<64x768xf32, #tpu.memory_space<vmem>>, vector<2x256xf32>
    %270 = vector.broadcast %261 : vector<1x256xf32> to vector<2x256xf32>
    %271 = arith.addf %270, %269 : vector<2x256xf32>
    %c6_211 = arith.constant 6 : index
    %c512_212 = arith.constant 512 : index
    %272 = vector.load %arg27[%c6_211, %c512_212] : memref<64x768xf32, #tpu.memory_space<vmem>>, vector<2x256xf32>
    %273 = arith.addf %271, %272 : vector<2x256xf32>
    %c2_213 = arith.constant 2 : index
    %c0_214 = arith.constant 0 : index
    %274 = vector.load %arg27[%c2_213, %c0_214] : memref<64x768xf32, #tpu.memory_space<vmem>>, vector<2x256xf32>
    %275 = arith.addf %273, %274 : vector<2x256xf32>
    %cst_215 = arith.constant 0.000000e+00 : f32
    %276 = vector.broadcast %cst_215 : f32 to vector<2x256xf32>
    %277 = arith.maximumf %275, %276 : vector<2x256xf32>
    %c8_216 = arith.constant 8 : index
    %c256_217 = arith.constant 256 : index
    %278 = vector.load %arg27[%c8_216, %c256_217] : memref<64x768xf32, #tpu.memory_space<vmem>>, vector<2x256xf32>
    %279 = vector.broadcast %261 : vector<1x256xf32> to vector<2x256xf32>
    %280 = arith.addf %279, %278 : vector<2x256xf32>
    %c10_218 = arith.constant 10 : index
    %c512_219 = arith.constant 512 : index
    %281 = vector.load %arg27[%c10_218, %c512_219] : memref<64x768xf32, #tpu.memory_space<vmem>>, vector<2x256xf32>
    %282 = arith.addf %280, %281 : vector<2x256xf32>
    %c6_220 = arith.constant 6 : index
    %c0_221 = arith.constant 0 : index
    %283 = vector.load %arg27[%c6_220, %c0_221] : memref<64x768xf32, #tpu.memory_space<vmem>>, vector<2x256xf32>
    %284 = arith.addf %282, %283 : vector<2x256xf32>
    %cst_222 = arith.constant 0.000000e+00 : f32
    %285 = vector.broadcast %cst_222 : f32 to vector<2x256xf32>
    %286 = arith.maximumf %284, %285 : vector<2x256xf32>
    %c12_223 = arith.constant 12 : index
    %c256_224 = arith.constant 256 : index
    %287 = vector.load %arg27[%c12_223, %c256_224] : memref<64x768xf32, #tpu.memory_space<vmem>>, vector<2x256xf32>
    %288 = vector.broadcast %261 : vector<1x256xf32> to vector<2x256xf32>
    %289 = arith.addf %288, %287 : vector<2x256xf32>
    %c14_225 = arith.constant 14 : index
    %c512_226 = arith.constant 512 : index
    %290 = vector.load %arg27[%c14_225, %c512_226] : memref<64x768xf32, #tpu.memory_space<vmem>>, vector<2x256xf32>
    %291 = arith.addf %289, %290 : vector<2x256xf32>
    %c10_227 = arith.constant 10 : index
    %c0_228 = arith.constant 0 : index
    %292 = vector.load %arg27[%c10_227, %c0_228] : memref<64x768xf32, #tpu.memory_space<vmem>>, vector<2x256xf32>
    %293 = arith.addf %291, %292 : vector<2x256xf32>
    %cst_229 = arith.constant 0.000000e+00 : f32
    %294 = vector.broadcast %cst_229 : f32 to vector<2x256xf32>
    %295 = arith.maximumf %293, %294 : vector<2x256xf32>
    %296 = tpu.concatenate %268, %277, %286, %295 in 1 : vector<2x256xf32>, vector<2x256xf32>, vector<2x256xf32>, vector<2x256xf32> -> vector<2x1024xf32>
    %297 = arith.truncf %296 : vector<2x1024xf32> to vector<2x1024xbf16>
    %c0_230 = arith.constant 0 : index
    %c0_231 = arith.constant 0 : index
    %298 = vector.load %arg7[%c0_230, %c0_231] : memref<1024x250xbf16, #tpu.memory_space<vmem>>, vector<1024x250xbf16>
    %cst_232 = arith.constant dense<0.000000e+00> : vector<2x250xf32>
    %299 = tpu.matmul %297, %298, %cst_232 {dimension_numbers = #tpu.dot_dimension_numbers<[1], [0], [0], [1], [0, 0, 1, 1], [], []>} : vector<2x1024xbf16>, vector<1024x250xbf16>, vector<2x250xf32> -> vector<2x250xf32>
    %c0_233 = arith.constant 0 : index
    %c0_234 = arith.constant 0 : index
    %300 = vector.load %arg8[%c0_233, %c0_234] : memref<1x250xf32, #tpu.memory_space<vmem>>, vector<1x250xf32>
    %301 = vector.broadcast %300 : vector<1x250xf32> to vector<2x250xf32>
    %302 = arith.addf %299, %301 : vector<2x250xf32>
    %cst_235 = arith.constant 0.000000e+00 : f32
    %303 = vector.broadcast %cst_235 : f32 to vector<2x250xf32>
    %304 = arith.maximumf %302, %303 : vector<2x250xf32>
    %305 = arith.truncf %304 : vector<2x250xf32> to vector<2x250xbf16>
    %c0_236 = arith.constant 0 : index
    %c0_237 = arith.constant 0 : index
    %306 = vector.load %arg9[%c0_236, %c0_237] : memref<250x50xbf16, #tpu.memory_space<vmem>>, vector<250x50xbf16>
    %cst_238 = arith.constant dense<0.000000e+00> : vector<2x50xf32>
    %307 = tpu.matmul %305, %306, %cst_238 {dimension_numbers = #tpu.dot_dimension_numbers<[1], [0], [0], [1], [0, 0, 1, 1], [], []>} : vector<2x250xbf16>, vector<250x50xbf16>, vector<2x50xf32> -> vector<2x50xf32>
    %c0_239 = arith.constant 0 : index
    %c0_240 = arith.constant 0 : index
    %308 = vector.load %arg10[%c0_239, %c0_240] : memref<1x50xf32, #tpu.memory_space<vmem>>, vector<1x50xf32>
    %309 = vector.broadcast %308 : vector<1x50xf32> to vector<2x50xf32>
    %310 = arith.addf %307, %309 : vector<2x50xf32>
    %cst_241 = arith.constant 0.000000e+00 : f32
    %311 = vector.broadcast %cst_241 : f32 to vector<2x50xf32>
    %312 = arith.maximumf %310, %311 : vector<2x50xf32>
    %313 = arith.truncf %312 : vector<2x50xf32> to vector<2x50xbf16>
    %c0_242 = arith.constant 0 : index
    %c0_243 = arith.constant 0 : index
    %314 = vector.load %arg11[%c0_242, %c0_243] : memref<50x128xbf16, #tpu.memory_space<vmem>>, vector<50x128xbf16>
    %cst_244 = arith.constant dense<0.000000e+00> : vector<2x128xf32>
    %315 = tpu.matmul %313, %314, %cst_244 {dimension_numbers = #tpu.dot_dimension_numbers<[1], [0], [0], [1], [0, 0, 1, 1], [], []>} : vector<2x50xbf16>, vector<50x128xbf16>, vector<2x128xf32> -> vector<2x128xf32>
    %c0_245 = arith.constant 0 : index
    %c0_246 = arith.constant 0 : index
    %316 = vector.load %arg12[%c0_245, %c0_246] : memref<1x128xf32, #tpu.memory_space<vmem>>, vector<1x128xf32>
    %317 = vector.broadcast %316 : vector<1x128xf32> to vector<2x128xf32>
    %318 = arith.addf %315, %317 : vector<2x128xf32>
    %c0_247 = arith.constant 0 : index
    %c0_248 = arith.constant 0 : index
    %319 = vector.load %arg26[%c0_247, %c0_248] : memref<2x128xf32, #tpu.memory_space<vmem>>, vector<2x128xf32>
    tpu.vector_store %arg26[%c0_247, %c0_248], %318 {strides = array<i32>} : memref<2x128xf32, #tpu.memory_space<vmem>>, vector<2x128xf32>,
    %320 = arith.truncf %318 : vector<2x128xf32> to vector<2x128xbf16>
    %c0_249 = arith.constant 0 : index
    %c0_250 = arith.constant 0 : index
    %321 = vector.load %arg13[%c0_249, %c0_250] : memref<128x50xbf16, #tpu.memory_space<vmem>>, vector<128x50xbf16>
    %cst_251 = arith.constant dense<0.000000e+00> : vector<2x50xf32>
    %322 = tpu.matmul %320, %321, %cst_251 {dimension_numbers = #tpu.dot_dimension_numbers<[1], [0], [0], [1], [0, 0, 1, 1], [], []>} : vector<2x128xbf16>, vector<128x50xbf16>, vector<2x50xf32> -> vector<2x50xf32>
    %c0_252 = arith.constant 0 : index
    %c0_253 = arith.constant 0 : index
    %323 = vector.load %arg14[%c0_252, %c0_253] : memref<1x50xf32, #tpu.memory_space<vmem>>, vector<1x50xf32>
    %324 = vector.broadcast %323 : vector<1x50xf32> to vector<2x50xf32>
    %325 = arith.addf %322, %324 : vector<2x50xf32>
    %cst_254 = arith.constant 0.000000e+00 : f32
    %326 = vector.broadcast %cst_254 : f32 to vector<2x50xf32>
    %327 = arith.maximumf %325, %326 : vector<2x50xf32>
    %328 = arith.truncf %327 : vector<2x50xf32> to vector<2x50xbf16>
    %c0_255 = arith.constant 0 : index
    %c0_256 = arith.constant 0 : index
    %329 = vector.load %arg15[%c0_255, %c0_256] : memref<50x250xbf16, #tpu.memory_space<vmem>>, vector<50x250xbf16>
    %cst_257 = arith.constant dense<0.000000e+00> : vector<2x250xf32>
    %330 = tpu.matmul %328, %329, %cst_257 {dimension_numbers = #tpu.dot_dimension_numbers<[1], [0], [0], [1], [0, 0, 1, 1], [], []>} : vector<2x50xbf16>, vector<50x250xbf16>, vector<2x250xf32> -> vector<2x250xf32>
    %c0_258 = arith.constant 0 : index
    %c0_259 = arith.constant 0 : index
    %331 = vector.load %arg16[%c0_258, %c0_259] : memref<1x250xf32, #tpu.memory_space<vmem>>, vector<1x250xf32>
    %332 = vector.broadcast %331 : vector<1x250xf32> to vector<2x250xf32>
    %333 = arith.addf %330, %332 : vector<2x250xf32>
    %cst_260 = arith.constant 0.000000e+00 : f32
    %334 = vector.broadcast %cst_260 : f32 to vector<2x250xf32>
    %335 = arith.maximumf %333, %334 : vector<2x250xf32>
    %c0_i32_261 = arith.constant 0 : i32
    %336 = tpu.memref_slice %arg37[%c0_i32_261] : memref<4x!tpu.dma_semaphore, #tpu.memory_space<semaphore_mem>> -> memref<1x!tpu.dma_semaphore, #tpu.memory_space<semaphore_mem>>
    %337 = tpu.memref_squeeze %336 : memref<1x!tpu.dma_semaphore, #tpu.memory_space<semaphore_mem>> -> memref<!tpu.dma_semaphore, #tpu.memory_space<semaphore_mem>>
    tpu.wait_dma2 semaphore(%337 : memref<!tpu.dma_semaphore, #tpu.memory_space<semaphore_mem>>) src(%arg17 : memref<250x1024xbf16, #tpu.memory_space<any>>) dst(%arg33 : memref<250x1024xbf16, #tpu.memory_space<vmem>>)
    %338 = arith.truncf %335 : vector<2x250xf32> to vector<2x250xbf16>
    %c0_262 = arith.constant 0 : index
    %c0_263 = arith.constant 0 : index
    %339 = vector.load %arg33[%c0_262, %c0_263] : memref<250x1024xbf16, #tpu.memory_space<vmem>>, vector<250x1024xbf16>
    %cst_264 = arith.constant dense<0.000000e+00> : vector<2x1024xf32>
    %340 = tpu.matmul %338, %339, %cst_264 {dimension_numbers = #tpu.dot_dimension_numbers<[1], [0], [0], [1], [0, 0, 1, 1], [], []>} : vector<2x250xbf16>, vector<250x1024xbf16>, vector<2x1024xf32> -> vector<2x1024xf32>
    %c0_265 = arith.constant 0 : index
    %c0_266 = arith.constant 0 : index
    %341 = vector.load %arg18[%c0_265, %c0_266] : memref<1x1024xf32, #tpu.memory_space<vmem>>, vector<1x1024xf32>
    %342 = vector.broadcast %341 : vector<1x1024xf32> to vector<2x1024xf32>
    %343 = arith.addf %340, %342 : vector<2x1024xf32>
    %cst_267 = arith.constant 0.000000e+00 : f32
    %344 = vector.broadcast %cst_267 : f32 to vector<2x1024xf32>
    %345 = arith.maximumf %343, %344 : vector<2x1024xf32>
    %346 = vector.extract_strided_slice %345 {offsets = [0, 0], sizes = [2, 256], strides = [1, 1]} : vector<2x1024xf32> to vector<2x256xf32>
    %c0_268 = arith.constant 0 : index
    %c0_269 = arith.constant 0 : index
    %347 = vector.load %arg30[%c0_268, %c0_269] : memref<8x256xf32, #tpu.memory_space<vmem>>, vector<2x256xf32>
    tpu.vector_store %arg30[%c0_268, %c0_269], %346 {strides = array<i32>} : memref<8x256xf32, #tpu.memory_space<vmem>>, vector<2x256xf32>,
    %348 = vector.extract_strided_slice %345 {offsets = [0, 256], sizes = [2, 256], strides = [1, 1]} : vector<2x1024xf32> to vector<2x256xf32>
    %c2_270 = arith.constant 2 : index
    %c0_271 = arith.constant 0 : index
    %349 = vector.load %arg30[%c2_270, %c0_271] : memref<8x256xf32, #tpu.memory_space<vmem>>, vector<2x256xf32>
    tpu.vector_store %arg30[%c2_270, %c0_271], %348 {strides = array<i32>} : memref<8x256xf32, #tpu.memory_space<vmem>>, vector<2x256xf32>,
    %350 = vector.extract_strided_slice %345 {offsets = [0, 512], sizes = [2, 256], strides = [1, 1]} : vector<2x1024xf32> to vector<2x256xf32>
    %c4_272 = arith.constant 4 : index
    %c0_273 = arith.constant 0 : index
    %351 = vector.load %arg30[%c4_272, %c0_273] : memref<8x256xf32, #tpu.memory_space<vmem>>, vector<2x256xf32>
    tpu.vector_store %arg30[%c4_272, %c0_273], %350 {strides = array<i32>} : memref<8x256xf32, #tpu.memory_space<vmem>>, vector<2x256xf32>,
    %352 = vector.extract_strided_slice %345 {offsets = [0, 768], sizes = [2, 256], strides = [1, 1]} : vector<2x1024xf32> to vector<2x256xf32>
    %c6_274 = arith.constant 6 : index
    %c0_275 = arith.constant 0 : index
    %353 = vector.load %arg30[%c6_274, %c0_275] : memref<8x256xf32, #tpu.memory_space<vmem>>, vector<2x256xf32>
    tpu.vector_store %arg30[%c6_274, %c0_275], %352 {strides = array<i32>} : memref<8x256xf32, #tpu.memory_space<vmem>>, vector<2x256xf32>,
    %c1_i32_276 = arith.constant 1 : i32
    %354 = tpu.memref_slice %arg37[%c1_i32_276] : memref<4x!tpu.dma_semaphore, #tpu.memory_space<semaphore_mem>> -> memref<1x!tpu.dma_semaphore, #tpu.memory_space<semaphore_mem>>
    %355 = tpu.memref_squeeze %354 : memref<1x!tpu.dma_semaphore, #tpu.memory_space<semaphore_mem>> -> memref<!tpu.dma_semaphore, #tpu.memory_space<semaphore_mem>>
    tpu.wait_dma2 semaphore(%355 : memref<!tpu.dma_semaphore, #tpu.memory_space<semaphore_mem>>) src(%arg19 : memref<256x768xbf16, #tpu.memory_space<any>>) dst(%arg34 : memref<256x768xbf16, #tpu.memory_space<vmem>>)
    %c0_277 = arith.constant 0 : index
    %c0_278 = arith.constant 0 : index
    %356 = vector.load %arg30[%c0_277, %c0_278] : memref<8x256xf32, #tpu.memory_space<vmem>>, vector<8x256xf32>
    %357 = arith.truncf %356 : vector<8x256xf32> to vector<8x256xbf16>
    %c0_279 = arith.constant 0 : index
    %c0_280 = arith.constant 0 : index
    %358 = vector.load %arg34[%c0_279, %c0_280] : memref<256x768xbf16, #tpu.memory_space<vmem>>, vector<256x768xbf16>
    %cst_281 = arith.constant dense<0.000000e+00> : vector<8x768xf32>
    %359 = tpu.matmul %357, %358, %cst_281 {dimension_numbers = #tpu.dot_dimension_numbers<[1], [0], [0], [1], [0, 0, 1, 1], [], []>} : vector<8x256xbf16>, vector<256x768xbf16>, vector<8x768xf32> -> vector<8x768xf32>
    %c0_282 = arith.constant 0 : index
    %c0_283 = arith.constant 0 : index
    %360 = vector.load %arg27[%c0_282, %c0_283] : memref<64x768xf32, #tpu.memory_space<vmem>>, vector<8x768xf32>
    tpu.vector_store %arg27[%c0_282, %c0_283], %359 {strides = array<i32>} : memref<64x768xf32, #tpu.memory_space<vmem>>, vector<8x768xf32>,
    %c0_284 = arith.constant 0 : index
    %c0_285 = arith.constant 0 : index
    %361 = vector.load %arg20[%c0_284, %c0_285] : memref<1x256xf32, #tpu.memory_space<vmem>>, vector<1x256xf32>
    %c0_286 = arith.constant 0 : index
    %c256_287 = arith.constant 256 : index
    %362 = vector.load %arg27[%c0_286, %c256_287] : memref<64x768xf32, #tpu.memory_space<vmem>>, vector<2x256xf32>
    %363 = vector.broadcast %361 : vector<1x256xf32> to vector<2x256xf32>
    %364 = arith.addf %363, %362 : vector<2x256xf32>
    %c0_288 = arith.constant 0 : index
    %c512_289 = arith.constant 512 : index
    %365 = vector.load %arg27[%c0_288, %c512_289] : memref<64x768xf32, #tpu.memory_space<vmem>>, vector<2x256xf32>
    %366 = vector.broadcast %361 : vector<1x256xf32> to vector<2x256xf32>
    %367 = arith.addf %366, %365 : vector<2x256xf32>
    %c2_290 = arith.constant 2 : index
    %c0_291 = arith.constant 0 : index
    %368 = vector.load %arg27[%c2_290, %c0_291] : memref<64x768xf32, #tpu.memory_space<vmem>>, vector<2x256xf32>
    %369 = arith.addf %367, %368 : vector<2x256xf32>
    %cst_292 = arith.constant 0.000000e+00 : f32
    %370 = vector.broadcast %cst_292 : f32 to vector<2x256xf32>
    %371 = arith.maximumf %364, %370 : vector<2x256xf32>
    %cst_293 = arith.constant 0.000000e+00 : f32
    %372 = vector.broadcast %cst_293 : f32 to vector<2x256xf32>
    %373 = arith.maximumf %369, %372 : vector<2x256xf32>
    %c0_294 = arith.constant 0 : index
    %c0_295 = arith.constant 0 : index
    %374 = vector.load %arg31[%c0_294, %c0_295] : memref<16x256xf32, #tpu.memory_space<vmem>>, vector<2x256xf32>
    tpu.vector_store %arg31[%c0_294, %c0_295], %371 {strides = array<i32>} : memref<16x256xf32, #tpu.memory_space<vmem>>, vector<2x256xf32>,
    %c2_296 = arith.constant 2 : index
    %c0_297 = arith.constant 0 : index
    %375 = vector.load %arg31[%c2_296, %c0_297] : memref<16x256xf32, #tpu.memory_space<vmem>>, vector<2x256xf32>
    tpu.vector_store %arg31[%c2_296, %c0_297], %373 {strides = array<i32>} : memref<16x256xf32, #tpu.memory_space<vmem>>, vector<2x256xf32>,
    %c2_298 = arith.constant 2 : index
    %c256_299 = arith.constant 256 : index
    %376 = vector.load %arg27[%c2_298, %c256_299] : memref<64x768xf32, #tpu.memory_space<vmem>>, vector<2x256xf32>
    %377 = vector.broadcast %361 : vector<1x256xf32> to vector<2x256xf32>
    %378 = arith.addf %377, %376 : vector<2x256xf32>
    %c2_300 = arith.constant 2 : index
    %c512_301 = arith.constant 512 : index
    %379 = vector.load %arg27[%c2_300, %c512_301] : memref<64x768xf32, #tpu.memory_space<vmem>>, vector<2x256xf32>
    %380 = vector.broadcast %361 : vector<1x256xf32> to vector<2x256xf32>
    %381 = arith.addf %380, %379 : vector<2x256xf32>
    %c4_302 = arith.constant 4 : index
    %c0_303 = arith.constant 0 : index
    %382 = vector.load %arg27[%c4_302, %c0_303] : memref<64x768xf32, #tpu.memory_space<vmem>>, vector<2x256xf32>
    %383 = arith.addf %381, %382 : vector<2x256xf32>
    %cst_304 = arith.constant 0.000000e+00 : f32
    %384 = vector.broadcast %cst_304 : f32 to vector<2x256xf32>
    %385 = arith.maximumf %378, %384 : vector<2x256xf32>
    %cst_305 = arith.constant 0.000000e+00 : f32
    %386 = vector.broadcast %cst_305 : f32 to vector<2x256xf32>
    %387 = arith.maximumf %383, %386 : vector<2x256xf32>
    %c4_306 = arith.constant 4 : index
    %c0_307 = arith.constant 0 : index
    %388 = vector.load %arg31[%c4_306, %c0_307] : memref<16x256xf32, #tpu.memory_space<vmem>>, vector<2x256xf32>
    tpu.vector_store %arg31[%c4_306, %c0_307], %385 {strides = array<i32>} : memref<16x256xf32, #tpu.memory_space<vmem>>, vector<2x256xf32>,
    %c6_308 = arith.constant 6 : index
    %c0_309 = arith.constant 0 : index
    %389 = vector.load %arg31[%c6_308, %c0_309] : memref<16x256xf32, #tpu.memory_space<vmem>>, vector<2x256xf32>
    tpu.vector_store %arg31[%c6_308, %c0_309], %387 {strides = array<i32>} : memref<16x256xf32, #tpu.memory_space<vmem>>, vector<2x256xf32>,
    %c4_310 = arith.constant 4 : index
    %c256_311 = arith.constant 256 : index
    %390 = vector.load %arg27[%c4_310, %c256_311] : memref<64x768xf32, #tpu.memory_space<vmem>>, vector<2x256xf32>
    %391 = vector.broadcast %361 : vector<1x256xf32> to vector<2x256xf32>
    %392 = arith.addf %391, %390 : vector<2x256xf32>
    %c4_312 = arith.constant 4 : index
    %c512_313 = arith.constant 512 : index
    %393 = vector.load %arg27[%c4_312, %c512_313] : memref<64x768xf32, #tpu.memory_space<vmem>>, vector<2x256xf32>
    %394 = vector.broadcast %361 : vector<1x256xf32> to vector<2x256xf32>
    %395 = arith.addf %394, %393 : vector<2x256xf32>
    %c6_314 = arith.constant 6 : index
    %c0_315 = arith.constant 0 : index
    %396 = vector.load %arg27[%c6_314, %c0_315] : memref<64x768xf32, #tpu.memory_space<vmem>>, vector<2x256xf32>
    %397 = arith.addf %395, %396 : vector<2x256xf32>
    %cst_316 = arith.constant 0.000000e+00 : f32
    %398 = vector.broadcast %cst_316 : f32 to vector<2x256xf32>
    %399 = arith.maximumf %392, %398 : vector<2x256xf32>
    %cst_317 = arith.constant 0.000000e+00 : f32
    %400 = vector.broadcast %cst_317 : f32 to vector<2x256xf32>
    %401 = arith.maximumf %397, %400 : vector<2x256xf32>
    %c8_318 = arith.constant 8 : index
    %c0_319 = arith.constant 0 : index
    %402 = vector.load %arg31[%c8_318, %c0_319] : memref<16x256xf32, #tpu.memory_space<vmem>>, vector<2x256xf32>
    tpu.vector_store %arg31[%c8_318, %c0_319], %399 {strides = array<i32>} : memref<16x256xf32, #tpu.memory_space<vmem>>, vector<2x256xf32>,
    %c10_320 = arith.constant 10 : index
    %c0_321 = arith.constant 0 : index
    %403 = vector.load %arg31[%c10_320, %c0_321] : memref<16x256xf32, #tpu.memory_space<vmem>>, vector<2x256xf32>
    tpu.vector_store %arg31[%c10_320, %c0_321], %401 {strides = array<i32>} : memref<16x256xf32, #tpu.memory_space<vmem>>, vector<2x256xf32>,
    %c6_322 = arith.constant 6 : index
    %c256_323 = arith.constant 256 : index
    %404 = vector.load %arg27[%c6_322, %c256_323] : memref<64x768xf32, #tpu.memory_space<vmem>>, vector<2x256xf32>
    %405 = vector.broadcast %361 : vector<1x256xf32> to vector<2x256xf32>
    %406 = arith.addf %405, %404 : vector<2x256xf32>
    %c6_324 = arith.constant 6 : index
    %c512_325 = arith.constant 512 : index
    %407 = vector.load %arg27[%c6_324, %c512_325] : memref<64x768xf32, #tpu.memory_space<vmem>>, vector<2x256xf32>
    %408 = vector.broadcast %361 : vector<1x256xf32> to vector<2x256xf32>
    %409 = arith.addf %408, %407 : vector<2x256xf32>
    %cst_326 = arith.constant 0.000000e+00 : f32
    %410 = vector.broadcast %cst_326 : f32 to vector<2x256xf32>
    %411 = arith.maximumf %406, %410 : vector<2x256xf32>
    %cst_327 = arith.constant 0.000000e+00 : f32
    %412 = vector.broadcast %cst_327 : f32 to vector<2x256xf32>
    %413 = arith.maximumf %409, %412 : vector<2x256xf32>
    %c12_328 = arith.constant 12 : index
    %c0_329 = arith.constant 0 : index
    %414 = vector.load %arg31[%c12_328, %c0_329] : memref<16x256xf32, #tpu.memory_space<vmem>>, vector<2x256xf32>
    tpu.vector_store %arg31[%c12_328, %c0_329], %411 {strides = array<i32>} : memref<16x256xf32, #tpu.memory_space<vmem>>, vector<2x256xf32>,
    %c14_330 = arith.constant 14 : index
    %c0_331 = arith.constant 0 : index
    %415 = vector.load %arg31[%c14_330, %c0_331] : memref<16x256xf32, #tpu.memory_space<vmem>>, vector<2x256xf32>
    tpu.vector_store %arg31[%c14_330, %c0_331], %413 {strides = array<i32>} : memref<16x256xf32, #tpu.memory_space<vmem>>, vector<2x256xf32>,
    %c2_i32_332 = arith.constant 2 : i32
    %416 = tpu.memref_slice %arg37[%c2_i32_332] : memref<4x!tpu.dma_semaphore, #tpu.memory_space<semaphore_mem>> -> memref<1x!tpu.dma_semaphore, #tpu.memory_space<semaphore_mem>>
    %417 = tpu.memref_squeeze %416 : memref<1x!tpu.dma_semaphore, #tpu.memory_space<semaphore_mem>> -> memref<!tpu.dma_semaphore, #tpu.memory_space<semaphore_mem>>
    tpu.wait_dma2 semaphore(%417 : memref<!tpu.dma_semaphore, #tpu.memory_space<semaphore_mem>>) src(%arg21 : memref<256x768xbf16, #tpu.memory_space<any>>) dst(%arg35 : memref<256x768xbf16, #tpu.memory_space<vmem>>)
    %c0_333 = arith.constant 0 : index
    %c0_334 = arith.constant 0 : index
    %418 = vector.load %arg31[%c0_333, %c0_334] : memref<16x256xf32, #tpu.memory_space<vmem>>, vector<16x256xf32>
    %419 = arith.truncf %418 : vector<16x256xf32> to vector<16x256xbf16>
    %c0_335 = arith.constant 0 : index
    %c0_336 = arith.constant 0 : index
    %420 = vector.load %arg35[%c0_335, %c0_336] : memref<256x768xbf16, #tpu.memory_space<vmem>>, vector<256x768xbf16>
    %cst_337 = arith.constant dense<0.000000e+00> : vector<16x768xf32>
    %421 = tpu.matmul %419, %420, %cst_337 {dimension_numbers = #tpu.dot_dimension_numbers<[1], [0], [0], [1], [0, 0, 1, 1], [], []>} : vector<16x256xbf16>, vector<256x768xbf16>, vector<16x768xf32> -> vector<16x768xf32>
    %c0_338 = arith.constant 0 : index
    %c0_339 = arith.constant 0 : index
    %422 = vector.load %arg27[%c0_338, %c0_339] : memref<64x768xf32, #tpu.memory_space<vmem>>, vector<16x768xf32>
    tpu.vector_store %arg27[%c0_338, %c0_339], %421 {strides = array<i32>} : memref<64x768xf32, #tpu.memory_space<vmem>>, vector<16x768xf32>,
    %c0_340 = arith.constant 0 : index
    %c0_341 = arith.constant 0 : index
    %423 = vector.load %arg22[%c0_340, %c0_341] : memref<1x256xf32, #tpu.memory_space<vmem>>, vector<1x256xf32>
    %c0_342 = arith.constant 0 : index
    %c256_343 = arith.constant 256 : index
    %424 = vector.load %arg27[%c0_342, %c256_343] : memref<64x768xf32, #tpu.memory_space<vmem>>, vector<2x256xf32>
    %425 = vector.broadcast %423 : vector<1x256xf32> to vector<2x256xf32>
    %426 = arith.addf %425, %424 : vector<2x256xf32>
    %c0_344 = arith.constant 0 : index
    %c512_345 = arith.constant 512 : index
    %427 = vector.load %arg27[%c0_344, %c512_345] : memref<64x768xf32, #tpu.memory_space<vmem>>, vector<2x256xf32>
    %428 = vector.broadcast %423 : vector<1x256xf32> to vector<2x256xf32>
    %429 = arith.addf %428, %427 : vector<2x256xf32>
    %c2_346 = arith.constant 2 : index
    %c0_347 = arith.constant 0 : index
    %430 = vector.load %arg27[%c2_346, %c0_347] : memref<64x768xf32, #tpu.memory_space<vmem>>, vector<2x256xf32>
    %431 = arith.addf %429, %430 : vector<2x256xf32>
    %cst_348 = arith.constant 0.000000e+00 : f32
    %432 = vector.broadcast %cst_348 : f32 to vector<2x256xf32>
    %433 = arith.maximumf %426, %432 : vector<2x256xf32>
    %cst_349 = arith.constant 0.000000e+00 : f32
    %434 = vector.broadcast %cst_349 : f32 to vector<2x256xf32>
    %435 = arith.maximumf %431, %434 : vector<2x256xf32>
    %c0_350 = arith.constant 0 : index
    %c0_351 = arith.constant 0 : index
    %436 = vector.load %arg32[%c0_350, %c0_351] : memref<32x256xf32, #tpu.memory_space<vmem>>, vector<2x256xf32>
    tpu.vector_store %arg32[%c0_350, %c0_351], %433 {strides = array<i32>} : memref<32x256xf32, #tpu.memory_space<vmem>>, vector<2x256xf32>,
    %c2_352 = arith.constant 2 : index
    %c0_353 = arith.constant 0 : index
    %437 = vector.load %arg32[%c2_352, %c0_353] : memref<32x256xf32, #tpu.memory_space<vmem>>, vector<2x256xf32>
    tpu.vector_store %arg32[%c2_352, %c0_353], %435 {strides = array<i32>} : memref<32x256xf32, #tpu.memory_space<vmem>>, vector<2x256xf32>,
    %c2_354 = arith.constant 2 : index
    %c256_355 = arith.constant 256 : index
    %438 = vector.load %arg27[%c2_354, %c256_355] : memref<64x768xf32, #tpu.memory_space<vmem>>, vector<2x256xf32>
    %439 = vector.broadcast %423 : vector<1x256xf32> to vector<2x256xf32>
    %440 = arith.addf %439, %438 : vector<2x256xf32>
    %c2_356 = arith.constant 2 : index
    %c512_357 = arith.constant 512 : index
    %441 = vector.load %arg27[%c2_356, %c512_357] : memref<64x768xf32, #tpu.memory_space<vmem>>, vector<2x256xf32>
    %442 = vector.broadcast %423 : vector<1x256xf32> to vector<2x256xf32>
    %443 = arith.addf %442, %441 : vector<2x256xf32>
    %c4_358 = arith.constant 4 : index
    %c0_359 = arith.constant 0 : index
    %444 = vector.load %arg27[%c4_358, %c0_359] : memref<64x768xf32, #tpu.memory_space<vmem>>, vector<2x256xf32>
    %445 = arith.addf %443, %444 : vector<2x256xf32>
    %cst_360 = arith.constant 0.000000e+00 : f32
    %446 = vector.broadcast %cst_360 : f32 to vector<2x256xf32>
    %447 = arith.maximumf %440, %446 : vector<2x256xf32>
    %cst_361 = arith.constant 0.000000e+00 : f32
    %448 = vector.broadcast %cst_361 : f32 to vector<2x256xf32>
    %449 = arith.maximumf %445, %448 : vector<2x256xf32>
    %c4_362 = arith.constant 4 : index
    %c0_363 = arith.constant 0 : index
    %450 = vector.load %arg32[%c4_362, %c0_363] : memref<32x256xf32, #tpu.memory_space<vmem>>, vector<2x256xf32>
    tpu.vector_store %arg32[%c4_362, %c0_363], %447 {strides = array<i32>} : memref<32x256xf32, #tpu.memory_space<vmem>>, vector<2x256xf32>,
    %c6_364 = arith.constant 6 : index
    %c0_365 = arith.constant 0 : index
    %451 = vector.load %arg32[%c6_364, %c0_365] : memref<32x256xf32, #tpu.memory_space<vmem>>, vector<2x256xf32>
    tpu.vector_store %arg32[%c6_364, %c0_365], %449 {strides = array<i32>} : memref<32x256xf32, #tpu.memory_space<vmem>>, vector<2x256xf32>,
    %c4_366 = arith.constant 4 : index
    %c256_367 = arith.constant 256 : index
    %452 = vector.load %arg27[%c4_366, %c256_367] : memref<64x768xf32, #tpu.memory_space<vmem>>, vector<2x256xf32>
    %453 = vector.broadcast %423 : vector<1x256xf32> to vector<2x256xf32>
    %454 = arith.addf %453, %452 : vector<2x256xf32>
    %c4_368 = arith.constant 4 : index
    %c512_369 = arith.constant 512 : index
    %455 = vector.load %arg27[%c4_368, %c512_369] : memref<64x768xf32, #tpu.memory_space<vmem>>, vector<2x256xf32>
    %456 = vector.broadcast %423 : vector<1x256xf32> to vector<2x256xf32>
    %457 = arith.addf %456, %455 : vector<2x256xf32>
    %c6_370 = arith.constant 6 : index
    %c0_371 = arith.constant 0 : index
    %458 = vector.load %arg27[%c6_370, %c0_371] : memref<64x768xf32, #tpu.memory_space<vmem>>, vector<2x256xf32>
    %459 = arith.addf %457, %458 : vector<2x256xf32>
    %cst_372 = arith.constant 0.000000e+00 : f32
    %460 = vector.broadcast %cst_372 : f32 to vector<2x256xf32>
    %461 = arith.maximumf %454, %460 : vector<2x256xf32>
    %cst_373 = arith.constant 0.000000e+00 : f32
    %462 = vector.broadcast %cst_373 : f32 to vector<2x256xf32>
    %463 = arith.maximumf %459, %462 : vector<2x256xf32>
    %c8_374 = arith.constant 8 : index
    %c0_375 = arith.constant 0 : index
    %464 = vector.load %arg32[%c8_374, %c0_375] : memref<32x256xf32, #tpu.memory_space<vmem>>, vector<2x256xf32>
    tpu.vector_store %arg32[%c8_374, %c0_375], %461 {strides = array<i32>} : memref<32x256xf32, #tpu.memory_space<vmem>>, vector<2x256xf32>,
    %c10_376 = arith.constant 10 : index
    %c0_377 = arith.constant 0 : index
    %465 = vector.load %arg32[%c10_376, %c0_377] : memref<32x256xf32, #tpu.memory_space<vmem>>, vector<2x256xf32>
    tpu.vector_store %arg32[%c10_376, %c0_377], %463 {strides = array<i32>} : memref<32x256xf32, #tpu.memory_space<vmem>>, vector<2x256xf32>,
    %c6_378 = arith.constant 6 : index
    %c256_379 = arith.constant 256 : index
    %466 = vector.load %arg27[%c6_378, %c256_379] : memref<64x768xf32, #tpu.memory_space<vmem>>, vector<2x256xf32>
    %467 = vector.broadcast %423 : vector<1x256xf32> to vector<2x256xf32>
    %468 = arith.addf %467, %466 : vector<2x256xf32>
    %c6_380 = arith.constant 6 : index
    %c512_381 = arith.constant 512 : index
    %469 = vector.load %arg27[%c6_380, %c512_381] : memref<64x768xf32, #tpu.memory_space<vmem>>, vector<2x256xf32>
    %470 = vector.broadcast %423 : vector<1x256xf32> to vector<2x256xf32>
    %471 = arith.addf %470, %469 : vector<2x256xf32>
    %c8_382 = arith.constant 8 : index
    %c0_383 = arith.constant 0 : index
    %472 = vector.load %arg27[%c8_382, %c0_383] : memref<64x768xf32, #tpu.memory_space<vmem>>, vector<2x256xf32>
    %473 = arith.addf %471, %472 : vector<2x256xf32>
    %cst_384 = arith.constant 0.000000e+00 : f32
    %474 = vector.broadcast %cst_384 : f32 to vector<2x256xf32>
    %475 = arith.maximumf %468, %474 : vector<2x256xf32>
    %cst_385 = arith.constant 0.000000e+00 : f32
    %476 = vector.broadcast %cst_385 : f32 to vector<2x256xf32>
    %477 = arith.maximumf %473, %476 : vector<2x256xf32>
    %c12_386 = arith.constant 12 : index
    %c0_387 = arith.constant 0 : index
    %478 = vector.load %arg32[%c12_386, %c0_387] : memref<32x256xf32, #tpu.memory_space<vmem>>, vector<2x256xf32>
    tpu.vector_store %arg32[%c12_386, %c0_387], %475 {strides = array<i32>} : memref<32x256xf32, #tpu.memory_space<vmem>>, vector<2x256xf32>,
    %c14_388 = arith.constant 14 : index
    %c0_389 = arith.constant 0 : index
    %479 = vector.load %arg32[%c14_388, %c0_389] : memref<32x256xf32, #tpu.memory_space<vmem>>, vector<2x256xf32>
    tpu.vector_store %arg32[%c14_388, %c0_389], %477 {strides = array<i32>} : memref<32x256xf32, #tpu.memory_space<vmem>>, vector<2x256xf32>,
    %c8_390 = arith.constant 8 : index
    %c256_391 = arith.constant 256 : index
    %480 = vector.load %arg27[%c8_390, %c256_391] : memref<64x768xf32, #tpu.memory_space<vmem>>, vector<2x256xf32>
    %481 = vector.broadcast %423 : vector<1x256xf32> to vector<2x256xf32>
    %482 = arith.addf %481, %480 : vector<2x256xf32>
    %c8_392 = arith.constant 8 : index
    %c512_393 = arith.constant 512 : index
    %483 = vector.load %arg27[%c8_392, %c512_393] : memref<64x768xf32, #tpu.memory_space<vmem>>, vector<2x256xf32>
    %484 = vector.broadcast %423 : vector<1x256xf32> to vector<2x256xf32>
    %485 = arith.addf %484, %483 : vector<2x256xf32>
    %c10_394 = arith.constant 10 : index
    %c0_395 = arith.constant 0 : index
    %486 = vector.load %arg27[%c10_394, %c0_395] : memref<64x768xf32, #tpu.memory_space<vmem>>, vector<2x256xf32>
    %487 = arith.addf %485, %486 : vector<2x256xf32>
    %cst_396 = arith.constant 0.000000e+00 : f32
    %488 = vector.broadcast %cst_396 : f32 to vector<2x256xf32>
    %489 = arith.maximumf %482, %488 : vector<2x256xf32>
    %cst_397 = arith.constant 0.000000e+00 : f32
    %490 = vector.broadcast %cst_397 : f32 to vector<2x256xf32>
    %491 = arith.maximumf %487, %490 : vector<2x256xf32>
    %c16_398 = arith.constant 16 : index
    %c0_399 = arith.constant 0 : index
    %492 = vector.load %arg32[%c16_398, %c0_399] : memref<32x256xf32, #tpu.memory_space<vmem>>, vector<2x256xf32>
    tpu.vector_store %arg32[%c16_398, %c0_399], %489 {strides = array<i32>} : memref<32x256xf32, #tpu.memory_space<vmem>>, vector<2x256xf32>,
    %c18_400 = arith.constant 18 : index
    %c0_401 = arith.constant 0 : index
    %493 = vector.load %arg32[%c18_400, %c0_401] : memref<32x256xf32, #tpu.memory_space<vmem>>, vector<2x256xf32>
    tpu.vector_store %arg32[%c18_400, %c0_401], %491 {strides = array<i32>} : memref<32x256xf32, #tpu.memory_space<vmem>>, vector<2x256xf32>,
    %c10_402 = arith.constant 10 : index
    %c256_403 = arith.constant 256 : index
    %494 = vector.load %arg27[%c10_402, %c256_403] : memref<64x768xf32, #tpu.memory_space<vmem>>, vector<2x256xf32>
    %495 = vector.broadcast %423 : vector<1x256xf32> to vector<2x256xf32>
    %496 = arith.addf %495, %494 : vector<2x256xf32>
    %c10_404 = arith.constant 10 : index
    %c512_405 = arith.constant 512 : index
    %497 = vector.load %arg27[%c10_404, %c512_405] : memref<64x768xf32, #tpu.memory_space<vmem>>, vector<2x256xf32>
    %498 = vector.broadcast %423 : vector<1x256xf32> to vector<2x256xf32>
    %499 = arith.addf %498, %497 : vector<2x256xf32>
    %c12_406 = arith.constant 12 : index
    %c0_407 = arith.constant 0 : index
    %500 = vector.load %arg27[%c12_406, %c0_407] : memref<64x768xf32, #tpu.memory_space<vmem>>, vector<2x256xf32>
    %501 = arith.addf %499, %500 : vector<2x256xf32>
    %cst_408 = arith.constant 0.000000e+00 : f32
    %502 = vector.broadcast %cst_408 : f32 to vector<2x256xf32>
    %503 = arith.maximumf %496, %502 : vector<2x256xf32>
    %cst_409 = arith.constant 0.000000e+00 : f32
    %504 = vector.broadcast %cst_409 : f32 to vector<2x256xf32>
    %505 = arith.maximumf %501, %504 : vector<2x256xf32>
    %c20_410 = arith.constant 20 : index
    %c0_411 = arith.constant 0 : index
    %506 = vector.load %arg32[%c20_410, %c0_411] : memref<32x256xf32, #tpu.memory_space<vmem>>, vector<2x256xf32>
    tpu.vector_store %arg32[%c20_410, %c0_411], %503 {strides = array<i32>} : memref<32x256xf32, #tpu.memory_space<vmem>>, vector<2x256xf32>,
    %c22_412 = arith.constant 22 : index
    %c0_413 = arith.constant 0 : index
    %507 = vector.load %arg32[%c22_412, %c0_413] : memref<32x256xf32, #tpu.memory_space<vmem>>, vector<2x256xf32>
    tpu.vector_store %arg32[%c22_412, %c0_413], %505 {strides = array<i32>} : memref<32x256xf32, #tpu.memory_space<vmem>>, vector<2x256xf32>,
    %c12_414 = arith.constant 12 : index
    %c256_415 = arith.constant 256 : index
    %508 = vector.load %arg27[%c12_414, %c256_415] : memref<64x768xf32, #tpu.memory_space<vmem>>, vector<2x256xf32>
    %509 = vector.broadcast %423 : vector<1x256xf32> to vector<2x256xf32>
    %510 = arith.addf %509, %508 : vector<2x256xf32>
    %c12_416 = arith.constant 12 : index
    %c512_417 = arith.constant 512 : index
    %511 = vector.load %arg27[%c12_416, %c512_417] : memref<64x768xf32, #tpu.memory_space<vmem>>, vector<2x256xf32>
    %512 = vector.broadcast %423 : vector<1x256xf32> to vector<2x256xf32>
    %513 = arith.addf %512, %511 : vector<2x256xf32>
    %c14_418 = arith.constant 14 : index
    %c0_419 = arith.constant 0 : index
    %514 = vector.load %arg27[%c14_418, %c0_419] : memref<64x768xf32, #tpu.memory_space<vmem>>, vector<2x256xf32>
    %515 = arith.addf %513, %514 : vector<2x256xf32>
    %cst_420 = arith.constant 0.000000e+00 : f32
    %516 = vector.broadcast %cst_420 : f32 to vector<2x256xf32>
    %517 = arith.maximumf %510, %516 : vector<2x256xf32>
    %cst_421 = arith.constant 0.000000e+00 : f32
    %518 = vector.broadcast %cst_421 : f32 to vector<2x256xf32>
    %519 = arith.maximumf %515, %518 : vector<2x256xf32>
    %c24_422 = arith.constant 24 : index
    %c0_423 = arith.constant 0 : index
    %520 = vector.load %arg32[%c24_422, %c0_423] : memref<32x256xf32, #tpu.memory_space<vmem>>, vector<2x256xf32>
    tpu.vector_store %arg32[%c24_422, %c0_423], %517 {strides = array<i32>} : memref<32x256xf32, #tpu.memory_space<vmem>>, vector<2x256xf32>,
    %c26_424 = arith.constant 26 : index
    %c0_425 = arith.constant 0 : index
    %521 = vector.load %arg32[%c26_424, %c0_425] : memref<32x256xf32, #tpu.memory_space<vmem>>, vector<2x256xf32>
    tpu.vector_store %arg32[%c26_424, %c0_425], %519 {strides = array<i32>} : memref<32x256xf32, #tpu.memory_space<vmem>>, vector<2x256xf32>,
    %c14_426 = arith.constant 14 : index
    %c256_427 = arith.constant 256 : index
    %522 = vector.load %arg27[%c14_426, %c256_427] : memref<64x768xf32, #tpu.memory_space<vmem>>, vector<2x256xf32>
    %523 = vector.broadcast %423 : vector<1x256xf32> to vector<2x256xf32>
    %524 = arith.addf %523, %522 : vector<2x256xf32>
    %c14_428 = arith.constant 14 : index
    %c512_429 = arith.constant 512 : index
    %525 = vector.load %arg27[%c14_428, %c512_429] : memref<64x768xf32, #tpu.memory_space<vmem>>, vector<2x256xf32>
    %526 = vector.broadcast %423 : vector<1x256xf32> to vector<2x256xf32>
    %527 = arith.addf %526, %525 : vector<2x256xf32>
    %cst_430 = arith.constant 0.000000e+00 : f32
    %528 = vector.broadcast %cst_430 : f32 to vector<2x256xf32>
    %529 = arith.maximumf %524, %528 : vector<2x256xf32>
    %cst_431 = arith.constant 0.000000e+00 : f32
    %530 = vector.broadcast %cst_431 : f32 to vector<2x256xf32>
    %531 = arith.maximumf %527, %530 : vector<2x256xf32>
    %c28_432 = arith.constant 28 : index
    %c0_433 = arith.constant 0 : index
    %532 = vector.load %arg32[%c28_432, %c0_433] : memref<32x256xf32, #tpu.memory_space<vmem>>, vector<2x256xf32>
    tpu.vector_store %arg32[%c28_432, %c0_433], %529 {strides = array<i32>} : memref<32x256xf32, #tpu.memory_space<vmem>>, vector<2x256xf32>,
    %c30_434 = arith.constant 30 : index
    %c0_435 = arith.constant 0 : index
    %533 = vector.load %arg32[%c30_434, %c0_435] : memref<32x256xf32, #tpu.memory_space<vmem>>, vector<2x256xf32>
    tpu.vector_store %arg32[%c30_434, %c0_435], %531 {strides = array<i32>} : memref<32x256xf32, #tpu.memory_space<vmem>>, vector<2x256xf32>,
    %c3_i32_436 = arith.constant 3 : i32
    %534 = tpu.memref_slice %arg37[%c3_i32_436] : memref<4x!tpu.dma_semaphore, #tpu.memory_space<semaphore_mem>> -> memref<1x!tpu.dma_semaphore, #tpu.memory_space<semaphore_mem>>
    %535 = tpu.memref_squeeze %534 : memref<1x!tpu.dma_semaphore, #tpu.memory_space<semaphore_mem>> -> memref<!tpu.dma_semaphore, #tpu.memory_space<semaphore_mem>>
    tpu.wait_dma2 semaphore(%535 : memref<!tpu.dma_semaphore, #tpu.memory_space<semaphore_mem>>) src(%arg23 : memref<256x96xbf16, #tpu.memory_space<any>>) dst(%arg36 : memref<256x96xbf16, #tpu.memory_space<vmem>>)
    %c0_437 = arith.constant 0 : index
    %c0_438 = arith.constant 0 : index
    %536 = vector.load %arg32[%c0_437, %c0_438] : memref<32x256xf32, #tpu.memory_space<vmem>>, vector<32x256xf32>
    %537 = arith.truncf %536 : vector<32x256xf32> to vector<32x256xbf16>
    %c0_439 = arith.constant 0 : index
    %c0_440 = arith.constant 0 : index
    %538 = vector.load %arg36[%c0_439, %c0_440] : memref<256x96xbf16, #tpu.memory_space<vmem>>, vector<256x96xbf16>
    %cst_441 = arith.constant dense<0.000000e+00> : vector<32x96xf32>
    %539 = tpu.matmul %537, %538, %cst_441 {dimension_numbers = #tpu.dot_dimension_numbers<[1], [0], [0], [1], [0, 0, 1, 1], [], []>} : vector<32x256xbf16>, vector<256x96xbf16>, vector<32x96xf32> -> vector<32x96xf32>
    %c0_442 = arith.constant 0 : index
    %c0_443 = arith.constant 0 : index
    %540 = vector.load %arg27[%c0_442, %c0_443] : memref<64x768xf32, #tpu.memory_space<vmem>>, vector<32x96xf32>
    tpu.vector_store %arg27[%c0_442, %c0_443], %539 {strides = array<i32>} : memref<64x768xf32, #tpu.memory_space<vmem>>, vector<32x96xf32>,
    %c0_444 = arith.constant 0 : index
    %c0_445 = arith.constant 0 : index
    %541 = vector.load %arg24[%c0_444, %c0_445] : memref<1x32xf32, #tpu.memory_space<vmem>>, vector<1x32xf32>
    %c0_446 = arith.constant 0 : index
    %c32_447 = arith.constant 32 : index
    %542 = vector.load %arg27[%c0_446, %c32_447] : memref<64x768xf32, #tpu.memory_space<vmem>>, vector<2x32xf32>
    %543 = vector.broadcast %541 : vector<1x32xf32> to vector<2x32xf32>
    %544 = arith.addf %543, %542 : vector<2x32xf32>
    %c0_448 = arith.constant 0 : index
    %c64 = arith.constant 64 : index
    %545 = vector.load %arg27[%c0_448, %c64] : memref<64x768xf32, #tpu.memory_space<vmem>>, vector<2x32xf32>
    %546 = vector.broadcast %541 : vector<1x32xf32> to vector<2x32xf32>
    %547 = arith.addf %546, %545 : vector<2x32xf32>
    %c2_449 = arith.constant 2 : index
    %c0_450 = arith.constant 0 : index
    %548 = vector.load %arg27[%c2_449, %c0_450] : memref<64x768xf32, #tpu.memory_space<vmem>>, vector<2x32xf32>
    %549 = arith.addf %547, %548 : vector<2x32xf32>
    %c0_451 = arith.constant 0 : index
    %c0_452 = arith.constant 0 : index
    %550 = vector.load %arg25[%c0_451, %c0_452] : memref<2x1024xf32, #tpu.memory_space<vmem>>, vector<2x32xf32>
    tpu.vector_store %arg25[%c0_451, %c0_452], %544 {strides = array<i32>} : memref<2x1024xf32, #tpu.memory_space<vmem>>, vector<2x32xf32>,
    %c0_453 = arith.constant 0 : index
    %c32_454 = arith.constant 32 : index
    %551 = vector.load %arg25[%c0_453, %c32_454] : memref<2x1024xf32, #tpu.memory_space<vmem>>, vector<2x32xf32>
    tpu.vector_store %arg25[%c0_453, %c32_454], %549 {strides = array<i32>} : memref<2x1024xf32, #tpu.memory_space<vmem>>, vector<2x32xf32>,
    %c2_455 = arith.constant 2 : index
    %c32_456 = arith.constant 32 : index
    %552 = vector.load %arg27[%c2_455, %c32_456] : memref<64x768xf32, #tpu.memory_space<vmem>>, vector<2x32xf32>
    %553 = vector.broadcast %541 : vector<1x32xf32> to vector<2x32xf32>
    %554 = arith.addf %553, %552 : vector<2x32xf32>
    %c2_457 = arith.constant 2 : index
    %c64_458 = arith.constant 64 : index
    %555 = vector.load %arg27[%c2_457, %c64_458] : memref<64x768xf32, #tpu.memory_space<vmem>>, vector<2x32xf32>
    %556 = vector.broadcast %541 : vector<1x32xf32> to vector<2x32xf32>
    %557 = arith.addf %556, %555 : vector<2x32xf32>
    %c4_459 = arith.constant 4 : index
    %c0_460 = arith.constant 0 : index
    %558 = vector.load %arg27[%c4_459, %c0_460] : memref<64x768xf32, #tpu.memory_space<vmem>>, vector<2x32xf32>
    %559 = arith.addf %557, %558 : vector<2x32xf32>
    %c0_461 = arith.constant 0 : index
    %c64_462 = arith.constant 64 : index
    %560 = vector.load %arg25[%c0_461, %c64_462] : memref<2x1024xf32, #tpu.memory_space<vmem>>, vector<2x32xf32>
    tpu.vector_store %arg25[%c0_461, %c64_462], %554 {strides = array<i32>} : memref<2x1024xf32, #tpu.memory_space<vmem>>, vector<2x32xf32>,
    %c0_463 = arith.constant 0 : index
    %c96 = arith.constant 96 : index
    %561 = vector.load %arg25[%c0_463, %c96] : memref<2x1024xf32, #tpu.memory_space<vmem>>, vector<2x32xf32>
    tpu.vector_store %arg25[%c0_463, %c96], %559 {strides = array<i32>} : memref<2x1024xf32, #tpu.memory_space<vmem>>, vector<2x32xf32>,
    %c4_464 = arith.constant 4 : index
    %c32_465 = arith.constant 32 : index
    %562 = vector.load %arg27[%c4_464, %c32_465] : memref<64x768xf32, #tpu.memory_space<vmem>>, vector<2x32xf32>
    %563 = vector.broadcast %541 : vector<1x32xf32> to vector<2x32xf32>
    %564 = arith.addf %563, %562 : vector<2x32xf32>
    %c4_466 = arith.constant 4 : index
    %c64_467 = arith.constant 64 : index
    %565 = vector.load %arg27[%c4_466, %c64_467] : memref<64x768xf32, #tpu.memory_space<vmem>>, vector<2x32xf32>
    %566 = vector.broadcast %541 : vector<1x32xf32> to vector<2x32xf32>
    %567 = arith.addf %566, %565 : vector<2x32xf32>
    %c6_468 = arith.constant 6 : index
    %c0_469 = arith.constant 0 : index
    %568 = vector.load %arg27[%c6_468, %c0_469] : memref<64x768xf32, #tpu.memory_space<vmem>>, vector<2x32xf32>
    %569 = arith.addf %567, %568 : vector<2x32xf32>
    %c0_470 = arith.constant 0 : index
    %c128 = arith.constant 128 : index
    %570 = vector.load %arg25[%c0_470, %c128] : memref<2x1024xf32, #tpu.memory_space<vmem>>, vector<2x32xf32>
    tpu.vector_store %arg25[%c0_470, %c128], %564 {strides = array<i32>} : memref<2x1024xf32, #tpu.memory_space<vmem>>, vector<2x32xf32>,
    %c0_471 = arith.constant 0 : index
    %c160 = arith.constant 160 : index
    %571 = vector.load %arg25[%c0_471, %c160] : memref<2x1024xf32, #tpu.memory_space<vmem>>, vector<2x32xf32>
    tpu.vector_store %arg25[%c0_471, %c160], %569 {strides = array<i32>} : memref<2x1024xf32, #tpu.memory_space<vmem>>, vector<2x32xf32>,
    %c6_472 = arith.constant 6 : index
    %c32_473 = arith.constant 32 : index
    %572 = vector.load %arg27[%c6_472, %c32_473] : memref<64x768xf32, #tpu.memory_space<vmem>>, vector<2x32xf32>
    %573 = vector.broadcast %541 : vector<1x32xf32> to vector<2x32xf32>
    %574 = arith.addf %573, %572 : vector<2x32xf32>
    %c6_474 = arith.constant 6 : index
    %c64_475 = arith.constant 64 : index
    %575 = vector.load %arg27[%c6_474, %c64_475] : memref<64x768xf32, #tpu.memory_space<vmem>>, vector<2x32xf32>
    %576 = vector.broadcast %541 : vector<1x32xf32> to vector<2x32xf32>
    %577 = arith.addf %576, %575 : vector<2x32xf32>
    %c8_476 = arith.constant 8 : index
    %c0_477 = arith.constant 0 : index
    %578 = vector.load %arg27[%c8_476, %c0_477] : memref<64x768xf32, #tpu.memory_space<vmem>>, vector<2x32xf32>
    %579 = arith.addf %577, %578 : vector<2x32xf32>
    %c0_478 = arith.constant 0 : index
    %c192 = arith.constant 192 : index
    %580 = vector.load %arg25[%c0_478, %c192] : memref<2x1024xf32, #tpu.memory_space<vmem>>, vector<2x32xf32>
    tpu.vector_store %arg25[%c0_478, %c192], %574 {strides = array<i32>} : memref<2x1024xf32, #tpu.memory_space<vmem>>, vector<2x32xf32>,
    %c0_479 = arith.constant 0 : index
    %c224 = arith.constant 224 : index
    %581 = vector.load %arg25[%c0_479, %c224] : memref<2x1024xf32, #tpu.memory_space<vmem>>, vector<2x32xf32>
    tpu.vector_store %arg25[%c0_479, %c224], %579 {strides = array<i32>} : memref<2x1024xf32, #tpu.memory_space<vmem>>, vector<2x32xf32>,
    %c8_480 = arith.constant 8 : index
    %c32_481 = arith.constant 32 : index
    %582 = vector.load %arg27[%c8_480, %c32_481] : memref<64x768xf32, #tpu.memory_space<vmem>>, vector<2x32xf32>
    %583 = vector.broadcast %541 : vector<1x32xf32> to vector<2x32xf32>
    %584 = arith.addf %583, %582 : vector<2x32xf32>
    %c8_482 = arith.constant 8 : index
    %c64_483 = arith.constant 64 : index
    %585 = vector.load %arg27[%c8_482, %c64_483] : memref<64x768xf32, #tpu.memory_space<vmem>>, vector<2x32xf32>
    %586 = vector.broadcast %541 : vector<1x32xf32> to vector<2x32xf32>
    %587 = arith.addf %586, %585 : vector<2x32xf32>
    %c10_484 = arith.constant 10 : index
    %c0_485 = arith.constant 0 : index
    %588 = vector.load %arg27[%c10_484, %c0_485] : memref<64x768xf32, #tpu.memory_space<vmem>>, vector<2x32xf32>
    %589 = arith.addf %587, %588 : vector<2x32xf32>
    %c0_486 = arith.constant 0 : index
    %c256_487 = arith.constant 256 : index
    %590 = vector.load %arg25[%c0_486, %c256_487] : memref<2x1024xf32, #tpu.memory_space<vmem>>, vector<2x32xf32>
    tpu.vector_store %arg25[%c0_486, %c256_487], %584 {strides = array<i32>} : memref<2x1024xf32, #tpu.memory_space<vmem>>, vector<2x32xf32>,
    %c0_488 = arith.constant 0 : index
    %c288 = arith.constant 288 : index
    %591 = vector.load %arg25[%c0_488, %c288] : memref<2x1024xf32, #tpu.memory_space<vmem>>, vector<2x32xf32>
    tpu.vector_store %arg25[%c0_488, %c288], %589 {strides = array<i32>} : memref<2x1024xf32, #tpu.memory_space<vmem>>, vector<2x32xf32>,
    %c10_489 = arith.constant 10 : index
    %c32_490 = arith.constant 32 : index
    %592 = vector.load %arg27[%c10_489, %c32_490] : memref<64x768xf32, #tpu.memory_space<vmem>>, vector<2x32xf32>
    %593 = vector.broadcast %541 : vector<1x32xf32> to vector<2x32xf32>
    %594 = arith.addf %593, %592 : vector<2x32xf32>
    %c10_491 = arith.constant 10 : index
    %c64_492 = arith.constant 64 : index
    %595 = vector.load %arg27[%c10_491, %c64_492] : memref<64x768xf32, #tpu.memory_space<vmem>>, vector<2x32xf32>
    %596 = vector.broadcast %541 : vector<1x32xf32> to vector<2x32xf32>
    %597 = arith.addf %596, %595 : vector<2x32xf32>
    %c12_493 = arith.constant 12 : index
    %c0_494 = arith.constant 0 : index
    %598 = vector.load %arg27[%c12_493, %c0_494] : memref<64x768xf32, #tpu.memory_space<vmem>>, vector<2x32xf32>
    %599 = arith.addf %597, %598 : vector<2x32xf32>
    %c0_495 = arith.constant 0 : index
    %c320 = arith.constant 320 : index
    %600 = vector.load %arg25[%c0_495, %c320] : memref<2x1024xf32, #tpu.memory_space<vmem>>, vector<2x32xf32>
    tpu.vector_store %arg25[%c0_495, %c320], %594 {strides = array<i32>} : memref<2x1024xf32, #tpu.memory_space<vmem>>, vector<2x32xf32>,
    %c0_496 = arith.constant 0 : index
    %c352 = arith.constant 352 : index
    %601 = vector.load %arg25[%c0_496, %c352] : memref<2x1024xf32, #tpu.memory_space<vmem>>, vector<2x32xf32>
    tpu.vector_store %arg25[%c0_496, %c352], %599 {strides = array<i32>} : memref<2x1024xf32, #tpu.memory_space<vmem>>, vector<2x32xf32>,
    %c12_497 = arith.constant 12 : index
    %c32_498 = arith.constant 32 : index
    %602 = vector.load %arg27[%c12_497, %c32_498] : memref<64x768xf32, #tpu.memory_space<vmem>>, vector<2x32xf32>
    %603 = vector.broadcast %541 : vector<1x32xf32> to vector<2x32xf32>
    %604 = arith.addf %603, %602 : vector<2x32xf32>
    %c12_499 = arith.constant 12 : index
    %c64_500 = arith.constant 64 : index
    %605 = vector.load %arg27[%c12_499, %c64_500] : memref<64x768xf32, #tpu.memory_space<vmem>>, vector<2x32xf32>
    %606 = vector.broadcast %541 : vector<1x32xf32> to vector<2x32xf32>
    %607 = arith.addf %606, %605 : vector<2x32xf32>
    %c14_501 = arith.constant 14 : index
    %c0_502 = arith.constant 0 : index
    %608 = vector.load %arg27[%c14_501, %c0_502] : memref<64x768xf32, #tpu.memory_space<vmem>>, vector<2x32xf32>
    %609 = arith.addf %607, %608 : vector<2x32xf32>
    %c0_503 = arith.constant 0 : index
    %c384 = arith.constant 384 : index
    %610 = vector.load %arg25[%c0_503, %c384] : memref<2x1024xf32, #tpu.memory_space<vmem>>, vector<2x32xf32>
    tpu.vector_store %arg25[%c0_503, %c384], %604 {strides = array<i32>} : memref<2x1024xf32, #tpu.memory_space<vmem>>, vector<2x32xf32>,
    %c0_504 = arith.constant 0 : index
    %c416 = arith.constant 416 : index
    %611 = vector.load %arg25[%c0_504, %c416] : memref<2x1024xf32, #tpu.memory_space<vmem>>, vector<2x32xf32>
    tpu.vector_store %arg25[%c0_504, %c416], %609 {strides = array<i32>} : memref<2x1024xf32, #tpu.memory_space<vmem>>, vector<2x32xf32>,
    %c14_505 = arith.constant 14 : index
    %c32_506 = arith.constant 32 : index
    %612 = vector.load %arg27[%c14_505, %c32_506] : memref<64x768xf32, #tpu.memory_space<vmem>>, vector<2x32xf32>
    %613 = vector.broadcast %541 : vector<1x32xf32> to vector<2x32xf32>
    %614 = arith.addf %613, %612 : vector<2x32xf32>
    %c14_507 = arith.constant 14 : index
    %c64_508 = arith.constant 64 : index
    %615 = vector.load %arg27[%c14_507, %c64_508] : memref<64x768xf32, #tpu.memory_space<vmem>>, vector<2x32xf32>
    %616 = vector.broadcast %541 : vector<1x32xf32> to vector<2x32xf32>
    %617 = arith.addf %616, %615 : vector<2x32xf32>
    %c16_509 = arith.constant 16 : index
    %c0_510 = arith.constant 0 : index
    %618 = vector.load %arg27[%c16_509, %c0_510] : memref<64x768xf32, #tpu.memory_space<vmem>>, vector<2x32xf32>
    %619 = arith.addf %617, %618 : vector<2x32xf32>
    %c0_511 = arith.constant 0 : index
    %c448 = arith.constant 448 : index
    %620 = vector.load %arg25[%c0_511, %c448] : memref<2x1024xf32, #tpu.memory_space<vmem>>, vector<2x32xf32>
    tpu.vector_store %arg25[%c0_511, %c448], %614 {strides = array<i32>} : memref<2x1024xf32, #tpu.memory_space<vmem>>, vector<2x32xf32>,
    %c0_512 = arith.constant 0 : index
    %c480 = arith.constant 480 : index
    %621 = vector.load %arg25[%c0_512, %c480] : memref<2x1024xf32, #tpu.memory_space<vmem>>, vector<2x32xf32>
    tpu.vector_store %arg25[%c0_512, %c480], %619 {strides = array<i32>} : memref<2x1024xf32, #tpu.memory_space<vmem>>, vector<2x32xf32>,
    %c16_513 = arith.constant 16 : index
    %c32_514 = arith.constant 32 : index
    %622 = vector.load %arg27[%c16_513, %c32_514] : memref<64x768xf32, #tpu.memory_space<vmem>>, vector<2x32xf32>
    %623 = vector.broadcast %541 : vector<1x32xf32> to vector<2x32xf32>
    %624 = arith.addf %623, %622 : vector<2x32xf32>
    %c16_515 = arith.constant 16 : index
    %c64_516 = arith.constant 64 : index
    %625 = vector.load %arg27[%c16_515, %c64_516] : memref<64x768xf32, #tpu.memory_space<vmem>>, vector<2x32xf32>
    %626 = vector.broadcast %541 : vector<1x32xf32> to vector<2x32xf32>
    %627 = arith.addf %626, %625 : vector<2x32xf32>
    %c18_517 = arith.constant 18 : index
    %c0_518 = arith.constant 0 : index
    %628 = vector.load %arg27[%c18_517, %c0_518] : memref<64x768xf32, #tpu.memory_space<vmem>>, vector<2x32xf32>
    %629 = arith.addf %627, %628 : vector<2x32xf32>
    %c0_519 = arith.constant 0 : index
    %c512_520 = arith.constant 512 : index
    %630 = vector.load %arg25[%c0_519, %c512_520] : memref<2x1024xf32, #tpu.memory_space<vmem>>, vector<2x32xf32>
    tpu.vector_store %arg25[%c0_519, %c512_520], %624 {strides = array<i32>} : memref<2x1024xf32, #tpu.memory_space<vmem>>, vector<2x32xf32>,
    %c0_521 = arith.constant 0 : index
    %c544 = arith.constant 544 : index
    %631 = vector.load %arg25[%c0_521, %c544] : memref<2x1024xf32, #tpu.memory_space<vmem>>, vector<2x32xf32>
    tpu.vector_store %arg25[%c0_521, %c544], %629 {strides = array<i32>} : memref<2x1024xf32, #tpu.memory_space<vmem>>, vector<2x32xf32>,
    %c18_522 = arith.constant 18 : index
    %c32_523 = arith.constant 32 : index
    %632 = vector.load %arg27[%c18_522, %c32_523] : memref<64x768xf32, #tpu.memory_space<vmem>>, vector<2x32xf32>
    %633 = vector.broadcast %541 : vector<1x32xf32> to vector<2x32xf32>
    %634 = arith.addf %633, %632 : vector<2x32xf32>
    %c18_524 = arith.constant 18 : index
    %c64_525 = arith.constant 64 : index
    %635 = vector.load %arg27[%c18_524, %c64_525] : memref<64x768xf32, #tpu.memory_space<vmem>>, vector<2x32xf32>
    %636 = vector.broadcast %541 : vector<1x32xf32> to vector<2x32xf32>
    %637 = arith.addf %636, %635 : vector<2x32xf32>
    %c20_526 = arith.constant 20 : index
    %c0_527 = arith.constant 0 : index
    %638 = vector.load %arg27[%c20_526, %c0_527] : memref<64x768xf32, #tpu.memory_space<vmem>>, vector<2x32xf32>
    %639 = arith.addf %637, %638 : vector<2x32xf32>
    %c0_528 = arith.constant 0 : index
    %c576 = arith.constant 576 : index
    %640 = vector.load %arg25[%c0_528, %c576] : memref<2x1024xf32, #tpu.memory_space<vmem>>, vector<2x32xf32>
    tpu.vector_store %arg25[%c0_528, %c576], %634 {strides = array<i32>} : memref<2x1024xf32, #tpu.memory_space<vmem>>, vector<2x32xf32>,
    %c0_529 = arith.constant 0 : index
    %c608 = arith.constant 608 : index
    %641 = vector.load %arg25[%c0_529, %c608] : memref<2x1024xf32, #tpu.memory_space<vmem>>, vector<2x32xf32>
    tpu.vector_store %arg25[%c0_529, %c608], %639 {strides = array<i32>} : memref<2x1024xf32, #tpu.memory_space<vmem>>, vector<2x32xf32>,
    %c20_530 = arith.constant 20 : index
    %c32_531 = arith.constant 32 : index
    %642 = vector.load %arg27[%c20_530, %c32_531] : memref<64x768xf32, #tpu.memory_space<vmem>>, vector<2x32xf32>
    %643 = vector.broadcast %541 : vector<1x32xf32> to vector<2x32xf32>
    %644 = arith.addf %643, %642 : vector<2x32xf32>
    %c20_532 = arith.constant 20 : index
    %c64_533 = arith.constant 64 : index
    %645 = vector.load %arg27[%c20_532, %c64_533] : memref<64x768xf32, #tpu.memory_space<vmem>>, vector<2x32xf32>
    %646 = vector.broadcast %541 : vector<1x32xf32> to vector<2x32xf32>
    %647 = arith.addf %646, %645 : vector<2x32xf32>
    %c22_534 = arith.constant 22 : index
    %c0_535 = arith.constant 0 : index
    %648 = vector.load %arg27[%c22_534, %c0_535] : memref<64x768xf32, #tpu.memory_space<vmem>>, vector<2x32xf32>
    %649 = arith.addf %647, %648 : vector<2x32xf32>
    %c0_536 = arith.constant 0 : index
    %c640 = arith.constant 640 : index
    %650 = vector.load %arg25[%c0_536, %c640] : memref<2x1024xf32, #tpu.memory_space<vmem>>, vector<2x32xf32>
    tpu.vector_store %arg25[%c0_536, %c640], %644 {strides = array<i32>} : memref<2x1024xf32, #tpu.memory_space<vmem>>, vector<2x32xf32>,
    %c0_537 = arith.constant 0 : index
    %c672 = arith.constant 672 : index
    %651 = vector.load %arg25[%c0_537, %c672] : memref<2x1024xf32, #tpu.memory_space<vmem>>, vector<2x32xf32>
    tpu.vector_store %arg25[%c0_537, %c672], %649 {strides = array<i32>} : memref<2x1024xf32, #tpu.memory_space<vmem>>, vector<2x32xf32>,
    %c22_538 = arith.constant 22 : index
    %c32_539 = arith.constant 32 : index
    %652 = vector.load %arg27[%c22_538, %c32_539] : memref<64x768xf32, #tpu.memory_space<vmem>>, vector<2x32xf32>
    %653 = vector.broadcast %541 : vector<1x32xf32> to vector<2x32xf32>
    %654 = arith.addf %653, %652 : vector<2x32xf32>
    %c22_540 = arith.constant 22 : index
    %c64_541 = arith.constant 64 : index
    %655 = vector.load %arg27[%c22_540, %c64_541] : memref<64x768xf32, #tpu.memory_space<vmem>>, vector<2x32xf32>
    %656 = vector.broadcast %541 : vector<1x32xf32> to vector<2x32xf32>
    %657 = arith.addf %656, %655 : vector<2x32xf32>
    %c24_542 = arith.constant 24 : index
    %c0_543 = arith.constant 0 : index
    %658 = vector.load %arg27[%c24_542, %c0_543] : memref<64x768xf32, #tpu.memory_space<vmem>>, vector<2x32xf32>
    %659 = arith.addf %657, %658 : vector<2x32xf32>
    %c0_544 = arith.constant 0 : index
    %c704 = arith.constant 704 : index
    %660 = vector.load %arg25[%c0_544, %c704] : memref<2x1024xf32, #tpu.memory_space<vmem>>, vector<2x32xf32>
    tpu.vector_store %arg25[%c0_544, %c704], %654 {strides = array<i32>} : memref<2x1024xf32, #tpu.memory_space<vmem>>, vector<2x32xf32>,
    %c0_545 = arith.constant 0 : index
    %c736 = arith.constant 736 : index
    %661 = vector.load %arg25[%c0_545, %c736] : memref<2x1024xf32, #tpu.memory_space<vmem>>, vector<2x32xf32>
    tpu.vector_store %arg25[%c0_545, %c736], %659 {strides = array<i32>} : memref<2x1024xf32, #tpu.memory_space<vmem>>, vector<2x32xf32>,
    %c24_546 = arith.constant 24 : index
    %c32_547 = arith.constant 32 : index
    %662 = vector.load %arg27[%c24_546, %c32_547] : memref<64x768xf32, #tpu.memory_space<vmem>>, vector<2x32xf32>
    %663 = vector.broadcast %541 : vector<1x32xf32> to vector<2x32xf32>
    %664 = arith.addf %663, %662 : vector<2x32xf32>
    %c24_548 = arith.constant 24 : index
    %c64_549 = arith.constant 64 : index
    %665 = vector.load %arg27[%c24_548, %c64_549] : memref<64x768xf32, #tpu.memory_space<vmem>>, vector<2x32xf32>
    %666 = vector.broadcast %541 : vector<1x32xf32> to vector<2x32xf32>
    %667 = arith.addf %666, %665 : vector<2x32xf32>
    %c26_550 = arith.constant 26 : index
    %c0_551 = arith.constant 0 : index
    %668 = vector.load %arg27[%c26_550, %c0_551] : memref<64x768xf32, #tpu.memory_space<vmem>>, vector<2x32xf32>
    %669 = arith.addf %667, %668 : vector<2x32xf32>
    %c0_552 = arith.constant 0 : index
    %c768 = arith.constant 768 : index
    %670 = vector.load %arg25[%c0_552, %c768] : memref<2x1024xf32, #tpu.memory_space<vmem>>, vector<2x32xf32>
    tpu.vector_store %arg25[%c0_552, %c768], %664 {strides = array<i32>} : memref<2x1024xf32, #tpu.memory_space<vmem>>, vector<2x32xf32>,
    %c0_553 = arith.constant 0 : index
    %c800 = arith.constant 800 : index
    %671 = vector.load %arg25[%c0_553, %c800] : memref<2x1024xf32, #tpu.memory_space<vmem>>, vector<2x32xf32>
    tpu.vector_store %arg25[%c0_553, %c800], %669 {strides = array<i32>} : memref<2x1024xf32, #tpu.memory_space<vmem>>, vector<2x32xf32>,
    %c26_554 = arith.constant 26 : index
    %c32_555 = arith.constant 32 : index
    %672 = vector.load %arg27[%c26_554, %c32_555] : memref<64x768xf32, #tpu.memory_space<vmem>>, vector<2x32xf32>
    %673 = vector.broadcast %541 : vector<1x32xf32> to vector<2x32xf32>
    %674 = arith.addf %673, %672 : vector<2x32xf32>
    %c26_556 = arith.constant 26 : index
    %c64_557 = arith.constant 64 : index
    %675 = vector.load %arg27[%c26_556, %c64_557] : memref<64x768xf32, #tpu.memory_space<vmem>>, vector<2x32xf32>
    %676 = vector.broadcast %541 : vector<1x32xf32> to vector<2x32xf32>
    %677 = arith.addf %676, %675 : vector<2x32xf32>
    %c28_558 = arith.constant 28 : index
    %c0_559 = arith.constant 0 : index
    %678 = vector.load %arg27[%c28_558, %c0_559] : memref<64x768xf32, #tpu.memory_space<vmem>>, vector<2x32xf32>
    %679 = arith.addf %677, %678 : vector<2x32xf32>
    %c0_560 = arith.constant 0 : index
    %c832 = arith.constant 832 : index
    %680 = vector.load %arg25[%c0_560, %c832] : memref<2x1024xf32, #tpu.memory_space<vmem>>, vector<2x32xf32>
    tpu.vector_store %arg25[%c0_560, %c832], %674 {strides = array<i32>} : memref<2x1024xf32, #tpu.memory_space<vmem>>, vector<2x32xf32>,
    %c0_561 = arith.constant 0 : index
    %c864 = arith.constant 864 : index
    %681 = vector.load %arg25[%c0_561, %c864] : memref<2x1024xf32, #tpu.memory_space<vmem>>, vector<2x32xf32>
    tpu.vector_store %arg25[%c0_561, %c864], %679 {strides = array<i32>} : memref<2x1024xf32, #tpu.memory_space<vmem>>, vector<2x32xf32>,
    %c28_562 = arith.constant 28 : index
    %c32_563 = arith.constant 32 : index
    %682 = vector.load %arg27[%c28_562, %c32_563] : memref<64x768xf32, #tpu.memory_space<vmem>>, vector<2x32xf32>
    %683 = vector.broadcast %541 : vector<1x32xf32> to vector<2x32xf32>
    %684 = arith.addf %683, %682 : vector<2x32xf32>
    %c28_564 = arith.constant 28 : index
    %c64_565 = arith.constant 64 : index
    %685 = vector.load %arg27[%c28_564, %c64_565] : memref<64x768xf32, #tpu.memory_space<vmem>>, vector<2x32xf32>
    %686 = vector.broadcast %541 : vector<1x32xf32> to vector<2x32xf32>
    %687 = arith.addf %686, %685 : vector<2x32xf32>
    %c30_566 = arith.constant 30 : index
    %c0_567 = arith.constant 0 : index
    %688 = vector.load %arg27[%c30_566, %c0_567] : memref<64x768xf32, #tpu.memory_space<vmem>>, vector<2x32xf32>
    %689 = arith.addf %687, %688 : vector<2x32xf32>
    %c0_568 = arith.constant 0 : index
    %c896 = arith.constant 896 : index
    %690 = vector.load %arg25[%c0_568, %c896] : memref<2x1024xf32, #tpu.memory_space<vmem>>, vector<2x32xf32>
    tpu.vector_store %arg25[%c0_568, %c896], %684 {strides = array<i32>} : memref<2x1024xf32, #tpu.memory_space<vmem>>, vector<2x32xf32>,
    %c0_569 = arith.constant 0 : index
    %c928 = arith.constant 928 : index
    %691 = vector.load %arg25[%c0_569, %c928] : memref<2x1024xf32, #tpu.memory_space<vmem>>, vector<2x32xf32>
    tpu.vector_store %arg25[%c0_569, %c928], %689 {strides = array<i32>} : memref<2x1024xf32, #tpu.memory_space<vmem>>, vector<2x32xf32>,
    %c30_570 = arith.constant 30 : index
    %c32_571 = arith.constant 32 : index
    %692 = vector.load %arg27[%c30_570, %c32_571] : memref<64x768xf32, #tpu.memory_space<vmem>>, vector<2x32xf32>
    %693 = vector.broadcast %541 : vector<1x32xf32> to vector<2x32xf32>
    %694 = arith.addf %693, %692 : vector<2x32xf32>
    %c30_572 = arith.constant 30 : index
    %c64_573 = arith.constant 64 : index
    %695 = vector.load %arg27[%c30_572, %c64_573] : memref<64x768xf32, #tpu.memory_space<vmem>>, vector<2x32xf32>
    %696 = vector.broadcast %541 : vector<1x32xf32> to vector<2x32xf32>
    %697 = arith.addf %696, %695 : vector<2x32xf32>
    %c0_574 = arith.constant 0 : index
    %c960 = arith.constant 960 : index
    %698 = vector.load %arg25[%c0_574, %c960] : memref<2x1024xf32, #tpu.memory_space<vmem>>, vector<2x32xf32>
    tpu.vector_store %arg25[%c0_574, %c960], %694 {strides = array<i32>} : memref<2x1024xf32, #tpu.memory_space<vmem>>, vector<2x32xf32>,
    %c0_575 = arith.constant 0 : index
    %c992 = arith.constant 992 : index
    %699 = vector.load %arg25[%c0_575, %c992] : memref<2x1024xf32, #tpu.memory_space<vmem>>, vector<2x32xf32>
    tpu.vector_store %arg25[%c0_575, %c992], %697 {strides = array<i32>} : memref<2x1024xf32, #tpu.memory_space<vmem>>, vector<2x32xf32>,
    return
  }
}

</mosaic_0001>

<llo_original>
// kernel: conv_autoencoder_forward.1
$region0: #{conv_autoencoder_forward.1}
  #allocation0 [shape = 'u32[]', space=smem, size = 0x4, offset = 0x4, fixed_abs, tag = 'smem constant byte address 0x4 - core index']
  #allocation1 [shape = 'u32[144,128]{1,0:T(1,128)}', space=vmem, size = 0x12000, scoped, tag = 'internal scratch']
  #allocation2 [shape = 'f32[64,768]{1,0:T(8,128)}', space=vmem, size = 0x30000, scoped, tag = 'scratch operand']
  #allocation3 [shape = 'f32[32,256]{1,0:T(8,128)}', space=vmem, size = 0x8000, scoped, tag = 'scratch operand']
  #allocation4 [shape = 'f32[16,256]{1,0:T(8,128)}', space=vmem, size = 0x4000, scoped, tag = 'scratch operand']
  #allocation5 [shape = 'f32[8,256]{1,0:T(8,128)}', space=vmem, size = 0x2000, scoped, tag = 'scratch operand']
  #allocation6 [shape = 'f32[16,256]{1,0:T(8,128)}', space=vmem, size = 0x4000, scoped, tag = 'scratch operand']
  #allocation7 [shape = 'f32[32,256]{1,0:T(8,128)}', space=vmem, size = 0x8000, scoped, tag = 'scratch operand']
  #allocation8 [shape = 'bf16[250,1024]{1,0:T(8,128)(2,1)}', space=vmem, size = 0x80000, scoped, tag = 'scratch operand']
  #allocation9 [shape = 'bf16[256,768]{1,0:T(16,128)(2,1)}', space=vmem, size = 0x60000, scoped, tag = 'scratch operand']
  #allocation10 [shape = 'bf16[256,768]{1,0:T(16,128)(2,1)}', space=vmem, size = 0x60000, scoped, tag = 'scratch operand']
  #allocation11 [shape = 'bf16[256,96]{1,0:T(16,128)(2,1)}', space=vmem, size = 0x10000, scoped, tag = 'scratch operand']
  #allocation12 [shape = 's32[4]{0}', space=sflag, size = 0x10, scoped, tag = 'scratch operand']
  #allocation20 [shape = 's32[]', space=sflag, size = 0x4, offset = 0, fixed_abs, tag = 'sflag constant byte address 0x0 - dummy sync flag']
  #allocation21 [shape = 's32[]', space=sflag, size = 0x4, offset = 0, fixed_abs, tag = 'sflag constant byte address 0x0 - dummy sync flag']
  #allocation22 [shape = 'u32[]', space=smem, size = 0x4, offset = 0x44, fixed_abs, tag = 'smem constant byte address 0x44 - assertion arg 0']
  #allocation23 [shape = 'u32[]', space=smem, size = 0x4, offset = 0x48, fixed_abs, tag = 'smem constant byte address 0x48 - assertion arg 1']
  #allocation24 [shape = 's32[]', space=sflag, size = 0x4, offset = 0, fixed_abs, tag = 'sflag constant byte address 0x0 - dummy sync flag']
  #allocation26 [shape = 's32[]', space=sflag, size = 0x4, offset = 0, fixed_abs, tag = 'sflag constant byte address 0x0 - dummy sync flag']
  #allocation28 [shape = 's32[]', space=sflag, size = 0x4, offset = 0, fixed_abs, tag = 'sflag constant byte address 0x0 - dummy sync flag']
  %s0 = inlined_call_operand.vmem [shape: f32[64,32], index: 0, kind: input, shape index: {}]
  %s1 = inlined_call_operand.vmem [shape: bf16[32,768], index: 1, kind: input, shape index: {}]
  %s2 = inlined_call_operand.vmem [shape: f32[1,256], index: 2, kind: input, shape index: {}]
  %s3 = inlined_call_operand.hbm [shape: bf16[256,768], index: 3, kind: input, shape index: {}]
  %s4 = inlined_call_operand.vmem [shape: f32[1,256], index: 4, kind: input, shape index: {}]
  %s5 = inlined_call_operand.hbm [shape: bf16[256,768], index: 5, kind: input, shape index: {}]
  %s6 = inlined_call_operand.vmem [shape: f32[1,256], index: 6, kind: input, shape index: {}]
  %s7 = inlined_call_operand.hbm [shape: bf16[1024,250], index: 7, kind: input, shape index: {}]
  %s8 = inlined_call_operand.vmem [shape: f32[1,250], index: 8, kind: input, shape index: {}]
  %s9 = inlined_call_operand.vmem [shape: bf16[250,50], index: 9, kind: input, shape index: {}]
  %s10 = inlined_call_operand.vmem [shape: f32[1,50], index: 10, kind: input, shape index: {}]
  %s11 = inlined_call_operand.vmem [shape: bf16[50,128], index: 11, kind: input, shape index: {}]
  %s12 = inlined_call_operand.vmem [shape: f32[1,128], index: 12, kind: input, shape index: {}]
  %s13 = inlined_call_operand.vmem [shape: bf16[128,50], index: 13, kind: input, shape index: {}]
  %s14 = inlined_call_operand.vmem [shape: f32[1,50], index: 14, kind: input, shape index: {}]
  %s15 = inlined_call_operand.vmem [shape: bf16[50,250], index: 15, kind: input, shape index: {}]
  %s16 = inlined_call_operand.vmem [shape: f32[1,250], index: 16, kind: input, shape index: {}]
  %s17 = inlined_call_operand.hbm [shape: bf16[250,1024], index: 17, kind: input, shape index: {}]
  %s18 = inlined_call_operand.vmem [shape: f32[1,1024], index: 18, kind: input, shape index: {}]
  %s19 = inlined_call_operand.hbm [shape: bf16[256,768], index: 19, kind: input, shape index: {}]
  %s20 = inlined_call_operand.vmem [shape: f32[1,256], index: 20, kind: input, shape index: {}]
  %s21 = inlined_call_operand.hbm [shape: bf16[256,768], index: 21, kind: input, shape index: {}]
  %s22 = inlined_call_operand.vmem [shape: f32[1,256], index: 22, kind: input, shape index: {}]
  %s23 = inlined_call_operand.vmem [shape: bf16[256,96], index: 23, kind: input, shape index: {}]
  %s24 = inlined_call_operand.vmem [shape: f32[1,32], index: 24, kind: input, shape index: {}]
  %s25 = inlined_call_operand.vmem [shape: f32[2,1024], index: 25, kind: output, shape index: {0}]
  %s26 = inlined_call_operand.hbm [shape: f32[2,128], index: 26, kind: output, shape index: {1}]
  %27 = xla_tuple %s25, %s26
  %s28 = sld [smem:[#allocation0]]
  $region152: #{conv_autoencoder_forward.1} parent=0
    _
  %s30 = ssub.s32 1, %s28
  %s31 = scalar_select 0, %s30, %s28
  $region1: #{conv_autoencoder_forward.1} parent=0
    #allocation13 [shape = 'u8[393216]{0}', space=vmem, size = 0x60000, scoped, tag = 'input window, operand 3, single buffered']
    #allocation14 [shape = 's32[1]{0}', space=sflag, size = 0x4, scoped, tag = 'scoped memory for conv_autoencoder_forward.1']
    #allocation15 [shape = 's32[1]{0}', space=sflag, size = 0x4, scoped, tag = 'scoped memory for conv_autoencoder_forward.1']
    #allocation16 [shape = 'u8[393216]{0}', space=vmem, size = 0x60000, scoped, tag = 'input window, operand 5, single buffered']
    #allocation17 [shape = 's32[1]{0}', space=sflag, size = 0x4, scoped, tag = 'scoped memory for conv_autoencoder_forward.1']
    #allocation18 [shape = 'u8[524288]{0}', space=vmem, size = 0x80000, scoped, tag = 'input window, operand 7, single buffered']
    #allocation19 [shape = 'u8[1024]{0}', space=vmem, size = 0x400, scoped, tag = 'output window, operand 1, single buffered']
    #allocation25 [shape = 'u32[9]{0}', space=smem, size = 0x24, scoped, tag = 'DMA stride descriptor']
    #allocation27 [shape = 'u32[9]{0}', space=smem, size = 0x24, scoped, tag = 'DMA stride descriptor']
    %32 = vsyncpa [#allocation14], 0
    %33 = vsyncpa [#allocation17], 0
    %34 = vsyncpa [#allocation15], 0
    // Predicated region
    $region2: #{conv_autoencoder_forward.1} parent=1 // pred_check
      _
    $region3: #{conv_autoencoder_forward.1} parent=1 // pred_check_branch
      %36 = sbr.rel (0) target = $region5
    $region4: #{conv_autoencoder_forward.1} parent=1 // pred_region
      _
    $region5: #{conv_autoencoder_forward.1} parent=1 // pred_fallthru
      _
    // Predicated region
    $region6: #{conv_autoencoder_forward.1} parent=1 // pred_check
      _
    $region7: #{conv_autoencoder_forward.1} parent=1 // pred_check_branch
      %38 = sbr.rel (0) target = $region9
    $region8: #{conv_autoencoder_forward.1} parent=1 // pred_region
      _
    $region9: #{conv_autoencoder_forward.1} parent=1 // pred_fallthru
      _
    // Predicated region
    $region10: #{conv_autoencoder_forward.1} parent=1 // pred_check
      _
    $region11: #{conv_autoencoder_forward.1} parent=1 // pred_check_branch
      %40 = sbr.rel (0) target = $region13
    $region12: #{conv_autoencoder_forward.1} parent=1 // pred_region
      _
    $region13: #{conv_autoencoder_forward.1} parent=1 // pred_fallthru
      _
    // Predicated region
    $region14: #{conv_autoencoder_forward.1} parent=1 // pred_check
      _
    $region15: #{conv_autoencoder_forward.1} parent=1 // pred_check_branch
      %42 = sbr.rel (0) target = $region17
    $region16: #{conv_autoencoder_forward.1} parent=1 // pred_region
      %s44 = ssub.s32 12288, 12288
      %45 = vsyncadd [#allocation14], %s44
      %s46 = sshll.u32 [#allocation13], 4
      %s47 = int_to_ptr.vmem [resolvable:$true] %s46
      %52 = dma.hbm_to_vmem [thread:$0]  %s3, 12288, %s47, [#allocation14], 384, 384, 24
    $region17: #{conv_autoencoder_forward.1} parent=1 // pred_fallthru
      _
    // Predicated region
    $region18: #{conv_autoencoder_forward.1} parent=1 // pred_check
      _
    $region19: #{conv_autoencoder_forward.1} parent=1 // pred_check_branch
      %54 = sbr.rel (0) target = $region21
    $region20: #{conv_autoencoder_forward.1} parent=1 // pred_region
      _
    $region21: #{conv_autoencoder_forward.1} parent=1 // pred_fallthru
      _
    // Predicated region
    $region22: #{conv_autoencoder_forward.1} parent=1 // pred_check
      _
    $region23: #{conv_autoencoder_forward.1} parent=1 // pred_check_branch
      %56 = sbr.rel (0) target = $region25
    $region24: #{conv_autoencoder_forward.1} parent=1 // pred_region
      %s58 = ssub.s32 12288, 12288
      %59 = vsyncadd [#allocation17], %s58
      %s60 = sshll.u32 [#allocation16], 4
      %s61 = int_to_ptr.vmem [resolvable:$true] %s60
      %66 = dma.hbm_to_vmem [thread:$0]  %s5, 12288, %s61, [#allocation17], 384, 384, 24
    $region25: #{conv_autoencoder_forward.1} parent=1 // pred_fallthru
      _
    // Predicated region
    $region26: #{conv_autoencoder_forward.1} parent=1 // pred_check
      _
    $region27: #{conv_autoencoder_forward.1} parent=1 // pred_check_branch
      %68 = sbr.rel (0) target = $region29
    $region28: #{conv_autoencoder_forward.1} parent=1 // pred_region
      _
    $region29: #{conv_autoencoder_forward.1} parent=1 // pred_fallthru
      _
    // Predicated region
    $region30: #{conv_autoencoder_forward.1} parent=1 // pred_check
      _
    $region31: #{conv_autoencoder_forward.1} parent=1 // pred_check_branch
      %70 = sbr.rel (0) target = $region33
    $region32: #{conv_autoencoder_forward.1} parent=1 // pred_region
      %s72 = ssub.s32 16384, 16384
      %73 = vsyncadd [#allocation17], %s72
      %s74 = sshll.u32 [#allocation18], 4
      %s75 = int_to_ptr.vmem [resolvable:$true] %s74
      %80 = dma.hbm_to_vmem [thread:$0]  %s7, 16384, %s75, [#allocation17], 128, 128, 8
    $region33: #{conv_autoencoder_forward.1} parent=1 // pred_fallthru
      _
    // Predicated region
    $region34: #{conv_autoencoder_forward.1} parent=1 // pred_check
      _
    $region35: #{conv_autoencoder_forward.1} parent=1 // pred_check_branch
      %82 = sbr.rel (0) target = $region37
    $region36: #{conv_autoencoder_forward.1} parent=1 // pred_region
      _
    $region37: #{conv_autoencoder_forward.1} parent=1 // pred_fallthru
      _
    // Predicated region
    $region38: #{conv_autoencoder_forward.1} parent=1 // pred_check
      _
    $region39: #{conv_autoencoder_forward.1} parent=1 // pred_check_branch
      %84 = sbr.rel (0) target = $region41
    $region40: #{conv_autoencoder_forward.1} parent=1 // pred_region
      _
    $region41: #{conv_autoencoder_forward.1} parent=1 // pred_fallthru
      _
    // Predicated region
    $region42: #{conv_autoencoder_forward.1} parent=1 // pred_check
      _
    $region43: #{conv_autoencoder_forward.1} parent=1 // pred_check_branch
      %86 = sbr.rel (0) target = $region45
    $region44: #{conv_autoencoder_forward.1} parent=1 // pred_region
      _
    $region45: #{conv_autoencoder_forward.1} parent=1 // pred_fallthru
      _
    // Predicated region
    $region46: #{conv_autoencoder_forward.1} parent=1 // pred_check
      _
    $region47: #{conv_autoencoder_forward.1} parent=1 // pred_check_branch
      %88 = sbr.rel (0) target = $region49
    $region48: #{conv_autoencoder_forward.1} parent=1 // pred_region
      _
    $region49: #{conv_autoencoder_forward.1} parent=1 // pred_fallthru
      _
    // Predicated region
    $region50: #{conv_autoencoder_forward.1} parent=1 // pred_check
      _
    $region51: #{conv_autoencoder_forward.1} parent=1 // pred_check_branch
      %90 = sbr.rel (0) target = $region53
    $region52: #{conv_autoencoder_forward.1} parent=1 // pred_region
      _
    $region53: #{conv_autoencoder_forward.1} parent=1 // pred_fallthru
      _
    // Predicated region
    $region54: #{conv_autoencoder_forward.1} parent=1 // pred_check
      _
    $region55: #{conv_autoencoder_forward.1} parent=1 // pred_check_branch
      %92 = sbr.rel (0) target = $region57
    $region56: #{conv_autoencoder_forward.1} parent=1 // pred_region
      _
    $region57: #{conv_autoencoder_forward.1} parent=1 // pred_fallthru
      _
    // Predicated region
    $region58: #{conv_autoencoder_forward.1} parent=1 // pred_check
      _
    $region59: #{conv_autoencoder_forward.1} parent=1 // pred_check_branch
      %94 = sbr.rel (0) target = $region61
    $region60: #{conv_autoencoder_forward.1} parent=1 // pred_region
      _
    $region61: #{conv_autoencoder_forward.1} parent=1 // pred_fallthru
      _
    // Predicated region
    $region62: #{conv_autoencoder_forward.1} parent=1 // pred_check
      _
    $region63: #{conv_autoencoder_forward.1} parent=1 // pred_check_branch
      %96 = sbr.rel (0) target = $region65
    $region64: #{conv_autoencoder_forward.1} parent=1 // pred_region
      _
    $region65: #{conv_autoencoder_forward.1} parent=1 // pred_fallthru
      _
    // Predicated region
    $region66: #{conv_autoencoder_forward.1} parent=1 // pred_check
      _
    $region67: #{conv_autoencoder_forward.1} parent=1 // pred_check_branch
      %98 = sbr.rel (0) target = $region69
    $region68: #{conv_autoencoder_forward.1} parent=1 // pred_region
      _
    $region69: #{conv_autoencoder_forward.1} parent=1 // pred_fallthru
      _
    // Predicated region
    $region70: #{conv_autoencoder_forward.1} parent=1 // pred_check
      _
    $region71: #{conv_autoencoder_forward.1} parent=1 // pred_check_branch
      %100 = sbr.rel (0) target = $region73
    $region72: #{conv_autoencoder_forward.1} parent=1 // pred_region
      _
    $region73: #{conv_autoencoder_forward.1} parent=1 // pred_fallthru
      _
    // Predicated region
    $region74: #{conv_autoencoder_forward.1} parent=1 // pred_check
      _
    $region75: #{conv_autoencoder_forward.1} parent=1 // pred_check_branch
      %102 = sbr.rel (0) target = $region77
    $region76: #{conv_autoencoder_forward.1} parent=1 // pred_region
      _
    $region77: #{conv_autoencoder_forward.1} parent=1 // pred_fallthru
      _
    // Predicated region
    $region78: #{conv_autoencoder_forward.1} parent=1 // pred_check
      _
    $region79: #{conv_autoencoder_forward.1} parent=1 // pred_check_branch
      %104 = sbr.rel (0) target = $region81
    $region80: #{conv_autoencoder_forward.1} parent=1 // pred_region
      _
    $region81: #{conv_autoencoder_forward.1} parent=1 // pred_fallthru
      _
    // Predicated region
    $region82: #{conv_autoencoder_forward.1} parent=1 // pred_check
      _
    $region83: #{conv_autoencoder_forward.1} parent=1 // pred_check_branch
      %106 = sbr.rel (0) target = $region85
    $region84: #{conv_autoencoder_forward.1} parent=1 // pred_region
      _
    $region85: #{conv_autoencoder_forward.1} parent=1 // pred_fallthru
      _
    // Predicated region
    $region86: #{conv_autoencoder_forward.1} parent=1 // pred_check
      _
    $region87: #{conv_autoencoder_forward.1} parent=1 // pred_check_branch
      %108 = sbr.rel (0) target = $region89
    $region88: #{conv_autoencoder_forward.1} parent=1 // pred_region
      %109 = dma.done [#allocation14], 12288
    $region89: #{conv_autoencoder_forward.1} parent=1 // pred_fallthru
      _
    // Predicated region
    $region90: #{conv_autoencoder_forward.1} parent=1 // pred_check
      _
    $region91: #{conv_autoencoder_forward.1} parent=1 // pred_check_branch
      %111 = sbr.rel (0) target = $region93
    $region92: #{conv_autoencoder_forward.1} parent=1 // pred_region
      %112 = dma.done [#allocation17], 12288
    $region93: #{conv_autoencoder_forward.1} parent=1 // pred_fallthru
      _
    // Predicated region
    $region94: #{conv_autoencoder_forward.1} parent=1 // pred_check
      _
    $region95: #{conv_autoencoder_forward.1} parent=1 // pred_check_branch
      %114 = sbr.rel (0) target = $region97
    $region96: #{conv_autoencoder_forward.1} parent=1 // pred_region
      %115 = dma.done [#allocation17], 16384
    $region97: #{conv_autoencoder_forward.1} parent=1 // pred_fallthru
      _
    // Predicated region
    $region98: #{conv_autoencoder_forward.1} parent=1 // pred_check
      _
    $region99: #{conv_autoencoder_forward.1} parent=1 // pred_check_branch
      %118 = sbr.rel target = $region101
    $region100: #{conv_autoencoder_forward.1} parent=1 // pred_region
      %119 = sst [smem:[#allocation22]] [#allocation21]
      %120 = sst [smem:[#allocation23]] [#allocation20]
    $region101: #{conv_autoencoder_forward.1} parent=1 // pred_fallthru
      _
    %122 = shalt.err (0)
    %s124 = sshll.u32 [#allocation8], 4
    %s125 = int_to_ptr.vmem [resolvable:$true] %s124
    %127 = dma.hbm_to_vmem [thread:$0]  %s17, 16384, %s125, [#allocation12]
    %s128 = scalar_lea.sflag [#allocation12], 1
    %s130 = sshll.u32 1, 14
    %s131 = sxor.u32 4294967295, %s130
    %s133 = sld [smem:[#allocation0]]
    %s134 = sadd.s32 2, %s133
    %s136 = sshll.u32 7, 26
    %s137 = sxor.u32 4294967295, %s136
    %s138 = sand.u32 0, %s137
    %s139 = sshll.u32 %s134, 26
    %s140 = sor.u32 %s138, %s139
    %s141 = sshll.u32 [#allocation9], 4
    %s142 = int_to_ptr.vmem [resolvable:$true] %s141
    %145 = sst [smem:[#allocation25]] 768
    %s146 = scalar_lea.smem [#allocation25], 1
    %147 = sst [smem:[%s146]] 768
    %s148 = scalar_lea.smem [#allocation25], 2
    %149 = sst [smem:[%s148]] 6
    %s150 = scalar_lea.smem [#allocation25], 3
    %151 = sst [smem:[%s150]] 64
    %s152 = scalar_lea.smem [#allocation25], 4
    %153 = sst [smem:[%s152]] 128
    %s154 = scalar_lea.smem [#allocation25], 5
    %155 = sst [smem:[%s154]] 2
    %s156 = scalar_lea.smem [#allocation25], 6
    %157 = sst [smem:[%s156]] 384
    %s158 = scalar_lea.smem [#allocation25], 7
    %159 = sst [smem:[%s158]] 64
    %s160 = scalar_lea.smem [#allocation25], 8
    %161 = sst [smem:[%s160]] 4
    %163 = dma.general %s19, 12288, %s142, %s128, [#allocation24], [#allocation25], %s140, 0
    %s164 = scalar_lea.sflag [#allocation12], 2
    %s166 = sshll.u32 1, 14
    %s167 = sxor.u32 4294967295, %s166
    %s169 = sadd.s32 2, %s133
    %s171 = sshll.u32 7, 26
    %s172 = sxor.u32 4294967295, %s171
    %s173 = sand.u32 0, %s172
    %s174 = sshll.u32 %s169, 26
    %s175 = sor.u32 %s173, %s174
    %s176 = sshll.u32 [#allocation10], 4
    %s177 = int_to_ptr.vmem [resolvable:$true] %s176
    %180 = sst [smem:[#allocation27]] 768
    %s181 = scalar_lea.smem [#allocation27], 1
    %182 = sst [smem:[%s181]] 768
    %s183 = scalar_lea.smem [#allocation27], 2
    %184 = sst [smem:[%s183]] 6
    %s185 = scalar_lea.smem [#allocation27], 3
    %186 = sst [smem:[%s185]] 64
    %s187 = scalar_lea.smem [#allocation27], 4
    %188 = sst [smem:[%s187]] 128
    %s189 = scalar_lea.smem [#allocation27], 5
    %190 = sst [smem:[%s189]] 2
    %s191 = scalar_lea.smem [#allocation27], 6
    %192 = sst [smem:[%s191]] 384
    %s193 = scalar_lea.smem [#allocation27], 7
    %194 = sst [smem:[%s193]] 64
    %s195 = scalar_lea.smem [#allocation27], 8
    %196 = sst [smem:[%s195]] 4
    %198 = dma.general %s21, 12288, %s177, %s164, [#allocation26], [#allocation27], %s175, 0
    %s199 = scalar_lea.sflag [#allocation12], 3
    %p201 = scmp.lt.u32.totalorder 128, 8
    %p202 = pneg %p201
    // Predicated region
    $region102: #{conv_autoencoder_forward.1} parent=1 // pred_check
      _
    $region103: #{conv_autoencoder_forward.1} parent=1 // pred_check_branch
      %204 = sbr.rel (%p201) target = $region105
    $region104: #{conv_autoencoder_forward.1} parent=1 // pred_region
      %s219 = sand.u32 128, 7
      %p220 = scmp.eq.s32.totalorder %s219, 0
      // Predicated region
      $region117: #{conv_autoencoder_forward.1} parent=104 // pred_check
        %p221 = pneg %p220
      $region118: #{conv_autoencoder_forward.1} parent=104 // pred_check_branch
        %223 = sbr.rel (%p221) target = $region120
      $region119: #{conv_autoencoder_forward.1} parent=104 // pred_region
        loop: start=0, step=1, limit=1
        $region121: #{conv_autoencoder_forward.1} parent=119 // loop_pre_header
          _
        $region122: #{conv_autoencoder_forward.1} parent=119 // loop_header
          %s225 = sphi 0, %s229
          %p226 = scmp.ge.s32.totalorder %s225, 1
          %s230 = sphi %s23, %s23
          %s231 = sphi [#allocation11], [#allocation11]
        $region123: #{conv_autoencoder_forward.1} parent=119 // loop_header_branch
          %228 = sbr.rel (%p226) target = $region127
        $region124: #{conv_autoencoder_forward.1} parent=119 // loop_body
          %v232 = vld [vmem:[%s230] sm:$0xff]
          %233 = vst [vmem:[%s231] sm:$0xff] %v232
          %v234 = vld [vmem:[%s230 + $0x8] sm:$0xff]
          %235 = vst [vmem:[%s231 + $0x8] sm:$0xff] %v234
          %v236 = vld [vmem:[%s230 + $0x10] sm:$0xff]
          %237 = vst [vmem:[%s231 + $0x10] sm:$0xff] %v236
          %v238 = vld [vmem:[%s230 + $0x18] sm:$0xff]
          %239 = vst [vmem:[%s231 + $0x18] sm:$0xff] %v238
          %v240 = vld [vmem:[%s230 + $0x20] sm:$0xff]
          %241 = vst [vmem:[%s231 + $0x20] sm:$0xff] %v240
          %v242 = vld [vmem:[%s230 + $0x28] sm:$0xff]
          %243 = vst [vmem:[%s231 + $0x28] sm:$0xff] %v242
          %v244 = vld [vmem:[%s230 + $0x30] sm:$0xff]
          %245 = vst [vmem:[%s231 + $0x30] sm:$0xff] %v244
          %v246 = vld [vmem:[%s230 + $0x38] sm:$0xff]
          %247 = vst [vmem:[%s231 + $0x38] sm:$0xff] %v246
          %v248 = vld [vmem:[%s230 + $0x40] sm:$0xff]
          %249 = vst [vmem:[%s231 + $0x40] sm:$0xff] %v248
          %v250 = vld [vmem:[%s230 + $0x48] sm:$0xff]
          %251 = vst [vmem:[%s231 + $0x48] sm:$0xff] %v250
          %v252 = vld [vmem:[%s230 + $0x50] sm:$0xff]
          %253 = vst [vmem:[%s231 + $0x50] sm:$0xff] %v252
          %v254 = vld [vmem:[%s230 + $0x58] sm:$0xff]
          %255 = vst [vmem:[%s231 + $0x58] sm:$0xff] %v254
          %v256 = vld [vmem:[%s230 + $0x60] sm:$0xff]
          %257 = vst [vmem:[%s231 + $0x60] sm:$0xff] %v256
          %v258 = vld [vmem:[%s230 + $0x68] sm:$0xff]
          %259 = vst [vmem:[%s231 + $0x68] sm:$0xff] %v258
          %v260 = vld [vmem:[%s230 + $0x70] sm:$0xff]
          %261 = vst [vmem:[%s231 + $0x70] sm:$0xff] %v260
          %v262 = vld [vmem:[%s230 + $0x78] sm:$0xff]
          %263 = vst [vmem:[%s231 + $0x78] sm:$0xff] %v262
        $region125: #{conv_autoencoder_forward.1} parent=119 // loop_footer
          %s229 = sadd.s32 1, %s225
        $region126: #{conv_autoencoder_forward.1} parent=119 // loop_footer_branch
          %224 = sbr.rel target = $region122
        $region127: #{conv_autoencoder_forward.1} parent=119 // loop_exit
          _
      $region120: #{conv_autoencoder_forward.1} parent=104 // pred_fallthru
        _
      %p264 = pneg %p220
      // Predicated region
      $region128: #{conv_autoencoder_forward.1} parent=104 // pred_check
        _
      $region129: #{conv_autoencoder_forward.1} parent=104 // pred_check_branch
        %266 = sbr.rel (%p220) target = $region131
      $region130: #{conv_autoencoder_forward.1} parent=104 // pred_region
        %s267 = sand.u32 128, 7
      $region131: #{conv_autoencoder_forward.1} parent=104 // pred_fallthru
        _
    $region105: #{conv_autoencoder_forward.1} parent=1 // pred_fallthru
      _
    // Predicated region
    $region106: #{conv_autoencoder_forward.1} parent=1 // pred_check
      %p205 = pneg %p201
    $region107: #{conv_autoencoder_forward.1} parent=1 // pred_check_branch
      %207 = sbr.rel (%p205) target = $region109
    $region108: #{conv_autoencoder_forward.1} parent=1 // pred_region
      %s208 = sshllo.u32 0, 128
      loop: start=0, step=1, limit=1
      $region110: #{conv_autoencoder_forward.1} parent=108 // loop_pre_header
        _
      $region111: #{conv_autoencoder_forward.1} parent=108 // loop_header
        %s210 = sphi 0, %s214
        %p211 = scmp.ge.s32.totalorder %s210, 1
        %s215 = sphi %s23, %s23
        %s216 = sphi [#allocation11], [#allocation11]
      $region112: #{conv_autoencoder_forward.1} parent=108 // loop_header_branch
        %213 = sbr.rel (%p211) target = $region116
      $region113: #{conv_autoencoder_forward.1} parent=108 // loop_body
        %v217 = vld [vmem:[%s215] sm:%s208]
        %218 = vst [vmem:[%s216] sm:%s208] %v217
      $region114: #{conv_autoencoder_forward.1} parent=108 // loop_footer
        %s214 = sadd.s32 1, %s210
      $region115: #{conv_autoencoder_forward.1} parent=108 // loop_footer_branch
        %209 = sbr.rel target = $region111
      $region116: #{conv_autoencoder_forward.1} parent=108 // loop_exit
        _
    $region109: #{conv_autoencoder_forward.1} parent=1 // pred_fallthru
      _
    // Predicated region
    $region132: #{conv_autoencoder_forward.1} parent=1 // pred_check
      _
    $region133: #{conv_autoencoder_forward.1} parent=1 // pred_check_branch
      %270 = sbr.rel (0) target = $region135
    $region134: #{conv_autoencoder_forward.1} parent=1 // pred_region
      %271 = vsyncadd %s199, 2048
    $region135: #{conv_autoencoder_forward.1} parent=1 // pred_fallthru
      _
    %v272 = vld [vmem:[%s0] sm:$0xff]
    %v273 = vld [vmem:[%s0 + $0x8] sm:$0xff]
    %v274 = vld [vmem:[%s0 + $0x10] sm:$0xff]
    %v275 = vld [vmem:[%s0 + $0x18] sm:$0xff]
    %v276 = vld [vmem:[%s0 + $0x20] sm:$0xff]
    %v277 = vld [vmem:[%s0 + $0x28] sm:$0xff]
    %v278 = vld [vmem:[%s0 + $0x30] sm:$0xff]
    %v279 = vld [vmem:[%s0 + $0x38] sm:$0xff]
    %v280 = vpack.c.bf16 %v273, %v272
    %v281 = vpack.c.bf16 %v275, %v274
    %v282 = vpack.c.bf16 %v277, %v276
    %v283 = vpack.c.bf16 %v279, %v278
    %v284 = vld [vmem:[%s1] sm:$0xff]
    %v285 = vld [vmem:[%s1 + $0x8] sm:$0xff]
    %v286 = vld [vmem:[%s1 + $0x10] sm:$0xff]
    %v287 = vld [vmem:[%s1 + $0x18] sm:$0xff]
    %v288 = vld [vmem:[%s1 + $0x20] sm:$0xff]
    %v289 = vld [vmem:[%s1 + $0x28] sm:$0xff]
    %v290 = vld [vmem:[%s1 + $0x30] sm:$0xff]
    %v291 = vld [vmem:[%s1 + $0x38] sm:$0xff]
    %v292 = vld [vmem:[%s1 + $0x40] sm:$0xff]
    %v293 = vld [vmem:[%s1 + $0x48] sm:$0xff]
    %v294 = vld [vmem:[%s1 + $0x50] sm:$0xff]
    %v295 = vld [vmem:[%s1 + $0x58] sm:$0xff]
    %v308 = vunpack.c.l.b16 %v284
    %v309 = vunpack.c.h.b16 %v284
    %v310 = vunpack.c.l.b16 %v285
    %v311 = vunpack.c.h.b16 %v285
    %v312 = vunpack.c.l.b16 %v286
    %v313 = vunpack.c.h.b16 %v286
    %v314 = vunpack.c.l.b16 %v287
    %v315 = vunpack.c.h.b16 %v287
    %v316 = vunpack.c.l.b16 %v288
    %v317 = vunpack.c.h.b16 %v288
    %v318 = vunpack.c.l.b16 %v289
    %v319 = vunpack.c.h.b16 %v289
    %v320 = vunpack.c.l.b16 %v290
    %v321 = vunpack.c.h.b16 %v290
    %v322 = vunpack.c.l.b16 %v291
    %v323 = vunpack.c.h.b16 %v291
    %v324 = vunpack.c.l.b16 %v292
    %v325 = vunpack.c.h.b16 %v292
    %v326 = vunpack.c.l.b16 %v293
    %v327 = vunpack.c.h.b16 %v293
    %v328 = vunpack.c.l.b16 %v294
    %v329 = vunpack.c.h.b16 %v294
    %v330 = vunpack.c.l.b16 %v295
    %v331 = vunpack.c.h.b16 %v295
    %v332 = vpack.c.b16 %v314, %v308
    %v333 = vpack.c.b16 %v315, %v309
    %v334 = vpack.c.b16 %v316, %v310
    %v335 = vpack.c.b16 %v317, %v311
    %v336 = vpack.c.b16 %v318, %v312
    %v337 = vpack.c.b16 %v319, %v313
    %v338 = vpack.c.b16 %v326, %v320
    %v339 = vpack.c.b16 %v327, %v321
    %v340 = vpack.c.b16 %v328, %v322
    %v341 = vpack.c.b16 %v329, %v323
    %v342 = vpack.c.b16 %v330, %v324
    %v343 = vpack.c.b16 %v331, %v325
    %vm356 = vcmask 261120
    %v358 = vsel %vm356, %v280, 0
    %v361 = vsel %vm356, %v281, 0
    %v364 = vsel %vm356, %v282, 0
    %v367 = vsel %vm356, %v283, 0
    %369 = vmatprep.subr.bf16.mxu0 %v333
    %370 = vmatpush1.bf16.msra.mxu0 %v332
    %371 = vmatprep.subr.bf16.mxu0 %v339
    %372 = vmatpush1.bf16.msra.mxu0 %v338
    %373 = vmatprep.subr.bf16.mxu0 0
    %374 = vmatpush1.bf16.msra.mxu0 0
    %375 = vmatprep.subr.bf16.mxu0 0
    %376 = vmatpush1.bf16.msra.mxu0 0
    %377 = vmatprep.subr.bf16.mxu0 0
    %378 = vmatpush1.bf16.msra.mxu0 0
    %379 = vmatprep.subr.bf16.mxu0 0
    %380 = vmatpush1.bf16.msra.mxu0 0
    %381 = vmatprep.subr.bf16.mxu0 0
    %382 = vmatpush1.bf16.msra.mxu0 0
    %383 = vmatprep.subr.bf16.mxu0 0
    %384 = vmatpush1.bf16.msra.mxu0 0
    %385 = vmatprep.subr.bf16.mxu0 0
    %386 = vmatpush1.bf16.msra.mxu0 0
    %387 = vmatprep.subr.bf16.mxu0 0
    %388 = vmatpush1.bf16.msra.mxu0 0
    %389 = vmatprep.subr.bf16.mxu0 0
    %390 = vmatpush1.bf16.msra.mxu0 0
    %391 = vmatprep.subr.bf16.mxu0 0
    %392 = vmatpush1.bf16.msra.mxu0 0
    %393 = vmatprep.subr.bf16.mxu0 0
    %394 = vmatpush1.bf16.msra.mxu0 0
    %395 = vmatprep.subr.bf16.mxu0 0
    %396 = vmatpush1.bf16.msra.mxu0 0
    %397 = vmatprep.subr.bf16.mxu0 0
    %398 = vmatpush1.bf16.msra.mxu0 0
    %399 = vmatprep.subr.bf16.mxu0 0
    %400 = vmatpush1.bf16.msra.mxu0 0
    %401 = vmatprep.mubr.bf16.mxu0 0
    %402 = vmatmul.mubr.bf16.gmra.mrb[0].mxu0 %v358
    %v403 = vpop.f32.mrb[0].mxu0
    %v404 = vadd.f32 0.0, %v403
    %v405 = vpop.f32.mrb[0].mxu0
    %v406 = vadd.f32 0.0, %v405
    %v407 = vpop.f32.mrb[0].mxu0
    %v408 = vadd.f32 0.0, %v407
    %v409 = vpop.f32.mrb[0].mxu0
    %v410 = vadd.f32 0.0, %v409
    %411 = vmatprep.mubr.bf16.mxu0 0
    %412 = vmatmul.mubr.bf16.gmra.mrb[0].mxu0 %v361
    %v413 = vpop.f32.mrb[0].mxu0
    %v414 = vadd.f32 0.0, %v413
    %v415 = vpop.f32.mrb[0].mxu0
    %v416 = vadd.f32 0.0, %v415
    %v417 = vpop.f32.mrb[0].mxu0
    %v418 = vadd.f32 0.0, %v417
    %v419 = vpop.f32.mrb[0].mxu0
    %v420 = vadd.f32 0.0, %v419
    %421 = vmatprep.mubr.bf16.mxu0 0
    %422 = vmatmul.mubr.bf16.gmra.mrb[0].mxu0 %v364
    %v423 = vpop.f32.mrb[0].mxu0
    %v424 = vadd.f32 0.0, %v423
    %v425 = vpop.f32.mrb[0].mxu0
    %v426 = vadd.f32 0.0, %v425
    %v427 = vpop.f32.mrb[0].mxu0
    %v428 = vadd.f32 0.0, %v427
    %v429 = vpop.f32.mrb[0].mxu0
    %v430 = vadd.f32 0.0, %v429
    %431 = vmatprep.mubr.bf16.mxu0 0
    %432 = vmatmul.mubr.bf16.gmra.mrb[0].mxu0 %v367
    %v433 = vpop.f32.mrb[0].mxu0
    %v434 = vadd.f32 0.0, %v433
    %v435 = vpop.f32.mrb[0].mxu0
    %v436 = vadd.f32 0.0, %v435
    %v437 = vpop.f32.mrb[0].mxu0
    %v438 = vadd.f32 0.0, %v437
    %v439 = vpop.f32.mrb[0].mxu0
    %v440 = vadd.f32 0.0, %v439
    %441 = vdwg.mxu0
    %442 = vmatprep.subr.bf16.mxu0 %v335
    %443 = vmatpush1.bf16.msra.mxu0 %v334
    %444 = vmatprep.subr.bf16.mxu0 %v341
    %445 = vmatpush1.bf16.msra.mxu0 %v340
    %446 = vmatprep.subr.bf16.mxu0 0
    %447 = vmatpush1.bf16.msra.mxu0 0
    %448 = vmatprep.subr.bf16.mxu0 0
    %449 = vmatpush1.bf16.msra.mxu0 0
    %450 = vmatprep.subr.bf16.mxu0 0
    %451 = vmatpush1.bf16.msra.mxu0 0
    %452 = vmatprep.subr.bf16.mxu0 0
    %453 = vmatpush1.bf16.msra.mxu0 0
    %454 = vmatprep.subr.bf16.mxu0 0
    %455 = vmatpush1.bf16.msra.mxu0 0
    %456 = vmatprep.subr.bf16.mxu0 0
    %457 = vmatpush1.bf16.msra.mxu0 0
    %458 = vmatprep.subr.bf16.mxu0 0
    %459 = vmatpush1.bf16.msra.mxu0 0
    %460 = vmatprep.subr.bf16.mxu0 0
    %461 = vmatpush1.bf16.msra.mxu0 0
    %462 = vmatprep.subr.bf16.mxu0 0
    %463 = vmatpush1.bf16.msra.mxu0 0
    %464 = vmatprep.subr.bf16.mxu0 0
    %465 = vmatpush1.bf16.msra.mxu0 0
    %466 = vmatprep.subr.bf16.mxu0 0
    %467 = vmatpush1.bf16.msra.mxu0 0
    %468 = vmatprep.subr.bf16.mxu0 0
    %469 = vmatpush1.bf16.msra.mxu0 0
    %470 = vmatprep.subr.bf16.mxu0 0
    %471 = vmatpush1.bf16.msra.mxu0 0
    %472 = vmatprep.subr.bf16.mxu0 0
    %473 = vmatpush1.bf16.msra.mxu0 0
    %474 = vmatprep.mubr.bf16.mxu0 0
    %475 = vmatmul.mubr.bf16.gmra.mrb[0].mxu0 %v358
    %v476 = vpop.f32.mrb[0].mxu0
    %v477 = vadd.f32 0.0, %v476
    %v478 = vpop.f32.mrb[0].mxu0
    %v479 = vadd.f32 0.0, %v478
    %v480 = vpop.f32.mrb[0].mxu0
    %v481 = vadd.f32 0.0, %v480
    %v482 = vpop.f32.mrb[0].mxu0
    %v483 = vadd.f32 0.0, %v482
    %484 = vmatprep.mubr.bf16.mxu0 0
    %485 = vmatmul.mubr.bf16.gmra.mrb[0].mxu0 %v361
    %v486 = vpop.f32.mrb[0].mxu0
    %v487 = vadd.f32 0.0, %v486
    %v488 = vpop.f32.mrb[0].mxu0
    %v489 = vadd.f32 0.0, %v488
    %v490 = vpop.f32.mrb[0].mxu0
    %v491 = vadd.f32 0.0, %v490
    %v492 = vpop.f32.mrb[0].mxu0
    %v493 = vadd.f32 0.0, %v492
    %494 = vmatprep.mubr.bf16.mxu0 0
    %495 = vmatmul.mubr.bf16.gmra.mrb[0].mxu0 %v364
    %v496 = vpop.f32.mrb[0].mxu0
    %v497 = vadd.f32 0.0, %v496
    %v498 = vpop.f32.mrb[0].mxu0
    %v499 = vadd.f32 0.0, %v498
    %v500 = vpop.f32.mrb[0].mxu0
    %v501 = vadd.f32 0.0, %v500
    %v502 = vpop.f32.mrb[0].mxu0
    %v503 = vadd.f32 0.0, %v502
    %504 = vmatprep.mubr.bf16.mxu0 0
    %505 = vmatmul.mubr.bf16.gmra.mrb[0].mxu0 %v367
    %v506 = vpop.f32.mrb[0].mxu0
    %v507 = vadd.f32 0.0, %v506
    %v508 = vpop.f32.mrb[0].mxu0
    %v509 = vadd.f32 0.0, %v508
    %v510 = vpop.f32.mrb[0].mxu0
    %v511 = vadd.f32 0.0, %v510
    %v512 = vpop.f32.mrb[0].mxu0
    %v513 = vadd.f32 0.0, %v512
    %514 = vdwg.mxu0
    %515 = vmatprep.subr.bf16.mxu0 %v337
    %516 = vmatpush1.bf16.msra.mxu0 %v336
    %517 = vmatprep.subr.bf16.mxu0 %v343
    %518 = vmatpush1.bf16.msra.mxu0 %v342
    %519 = vmatprep.subr.bf16.mxu0 0
    %520 = vmatpush1.bf16.msra.mxu0 0
    %521 = vmatprep.subr.bf16.mxu0 0
    %522 = vmatpush1.bf16.msra.mxu0 0
    %523 = vmatprep.subr.bf16.mxu0 0
    %524 = vmatpush1.bf16.msra.mxu0 0
    %525 = vmatprep.subr.bf16.mxu0 0
    %526 = vmatpush1.bf16.msra.mxu0 0
    %527 = vmatprep.subr.bf16.mxu0 0
    %528 = vmatpush1.bf16.msra.mxu0 0
    %529 = vmatprep.subr.bf16.mxu0 0
    %530 = vmatpush1.bf16.msra.mxu0 0
    %531 = vmatprep.subr.bf16.mxu0 0
    %532 = vmatpush1.bf16.msra.mxu0 0
    %533 = vmatprep.subr.bf16.mxu0 0
    %534 = vmatpush1.bf16.msra.mxu0 0
    %535 = vmatprep.subr.bf16.mxu0 0
    %536 = vmatpush1.bf16.msra.mxu0 0
    %537 = vmatprep.subr.bf16.mxu0 0
    %538 = vmatpush1.bf16.msra.mxu0 0
    %539 = vmatprep.subr.bf16.mxu0 0
    %540 = vmatpush1.bf16.msra.mxu0 0
    %541 = vmatprep.subr.bf16.mxu0 0
    %542 = vmatpush1.bf16.msra.mxu0 0
    %543 = vmatprep.subr.bf16.mxu0 0
    %544 = vmatpush1.bf16.msra.mxu0 0
    %545 = vmatprep.subr.bf16.mxu0 0
    %546 = vmatpush1.bf16.msra.mxu0 0
    %547 = vmatprep.mubr.bf16.mxu0 0
    %548 = vmatmul.mubr.bf16.gmra.mrb[0].mxu0 %v358
    %v549 = vpop.f32.mrb[0].mxu0
    %v550 = vadd.f32 0.0, %v549
    %v551 = vpop.f32.mrb[0].mxu0
    %v552 = vadd.f32 0.0, %v551
    %v553 = vpop.f32.mrb[0].mxu0
    %v554 = vadd.f32 0.0, %v553
    %v555 = vpop.f32.mrb[0].mxu0
    %v556 = vadd.f32 0.0, %v555
    %557 = vmatprep.mubr.bf16.mxu0 0
    %558 = vmatmul.mubr.bf16.gmra.mrb[0].mxu0 %v361
    %v559 = vpop.f32.mrb[0].mxu0
    %v560 = vadd.f32 0.0, %v559
    %v561 = vpop.f32.mrb[0].mxu0
    %v562 = vadd.f32 0.0, %v561
    %v563 = vpop.f32.mrb[0].mxu0
    %v564 = vadd.f32 0.0, %v563
    %v565 = vpop.f32.mrb[0].mxu0
    %v566 = vadd.f32 0.0, %v565
    %567 = vmatprep.mubr.bf16.mxu0 0
    %568 = vmatmul.mubr.bf16.gmra.mrb[0].mxu0 %v364
    %v569 = vpop.f32.mrb[0].mxu0
    %v570 = vadd.f32 0.0, %v569
    %v571 = vpop.f32.mrb[0].mxu0
    %v572 = vadd.f32 0.0, %v571
    %v573 = vpop.f32.mrb[0].mxu0
    %v574 = vadd.f32 0.0, %v573
    %v575 = vpop.f32.mrb[0].mxu0
    %v576 = vadd.f32 0.0, %v575
    %577 = vmatprep.mubr.bf16.mxu0 0
    %578 = vmatmul.mubr.bf16.gmra.mrb[0].mxu0 %v367
    %v579 = vpop.f32.mrb[0].mxu0
    %v580 = vadd.f32 0.0, %v579
    %v581 = vpop.f32.mrb[0].mxu0
    %v582 = vadd.f32 0.0, %v581
    %v583 = vpop.f32.mrb[0].mxu0
    %v584 = vadd.f32 0.0, %v583
    %v585 = vpop.f32.mrb[0].mxu0
    %v586 = vadd.f32 0.0, %v585
    %587 = vdwg.mxu0
    %588 = vst [vmem:[#allocation2] sm:$0xff] %v404
    %589 = vst [vmem:[#allocation2 + $0x8] sm:$0xff] %v406
    %590 = vst [vmem:[#allocation2 + $0x10] sm:$0xff] %v477
    %591 = vst [vmem:[#allocation2 + $0x18] sm:$0xff] %v479
    %592 = vst [vmem:[#allocation2 + $0x20] sm:$0xff] %v550
    %593 = vst [vmem:[#allocation2 + $0x28] sm:$0xff] %v552
    %594 = vst [vmem:[#allocation2 + $0x30] sm:$0xff] %v408
    %595 = vst [vmem:[#allocation2 + $0x38] sm:$0xff] %v410
    %596 = vst [vmem:[#allocation2 + $0x40] sm:$0xff] %v481
    %597 = vst [vmem:[#allocation2 + $0x48] sm:$0xff] %v483
    %598 = vst [vmem:[#allocation2 + $0x50] sm:$0xff] %v554
    %599 = vst [vmem:[#allocation2 + $0x58] sm:$0xff] %v556
    %600 = vst [vmem:[#allocation2 + $0x60] sm:$0xff] %v414
    %601 = vst [vmem:[#allocation2 + $0x68] sm:$0xff] %v416
    %602 = vst [vmem:[#allocation2 + $0x70] sm:$0xff] %v487
    %603 = vst [vmem:[#allocation2 + $0x78] sm:$0xff] %v489
    %604 = vst [vmem:[#allocation2 + $0x80] sm:$0xff] %v560
    %605 = vst [vmem:[#allocation2 + $0x88] sm:$0xff] %v562
    %606 = vst [vmem:[#allocation2 + $0x90] sm:$0xff] %v418
    %607 = vst [vmem:[#allocation2 + $0x98] sm:$0xff] %v420
    %608 = vst [vmem:[#allocation2 + $0xa0] sm:$0xff] %v491
    %609 = vst [vmem:[#allocation2 + $0xa8] sm:$0xff] %v493
    %610 = vst [vmem:[#allocation2 + $0xb0] sm:$0xff] %v564
    %611 = vst [vmem:[#allocation2 + $0xb8] sm:$0xff] %v566
    %612 = vst [vmem:[#allocation2 + $0xc0] sm:$0xff] %v424
    %613 = vst [vmem:[#allocation2 + $0xc8] sm:$0xff] %v426
    %614 = vst [vmem:[#allocation2 + $0xd0] sm:$0xff] %v497
    %615 = vst [vmem:[#allocation2 + $0xd8] sm:$0xff] %v499
    %616 = vst [vmem:[#allocation2 + $0xe0] sm:$0xff] %v570
    %617 = vst [vmem:[#allocation2 + $0xe8] sm:$0xff] %v572
    %618 = vst [vmem:[#allocation2 + $0xf0] sm:$0xff] %v428
    %619 = vst [vmem:[#allocation2 + $0xf8] sm:$0xff] %v430
    %620 = vst [vmem:[#allocation2 + $0x100] sm:$0xff] %v501
    %621 = vst [vmem:[#allocation2 + $0x108] sm:$0xff] %v503
    %622 = vst [vmem:[#allocation2 + $0x110] sm:$0xff] %v574
    %623 = vst [vmem:[#allocation2 + $0x118] sm:$0xff] %v576
    %624 = vst [vmem:[#allocation2 + $0x120] sm:$0xff] %v434
    %625 = vst [vmem:[#allocation2 + $0x128] sm:$0xff] %v436
    %626 = vst [vmem:[#allocation2 + $0x130] sm:$0xff] %v507
    %627 = vst [vmem:[#allocation2 + $0x138] sm:$0xff] %v509
    %628 = vst [vmem:[#allocation2 + $0x140] sm:$0xff] %v580
    %629 = vst [vmem:[#allocation2 + $0x148] sm:$0xff] %v582
    %630 = vst [vmem:[#allocation2 + $0x150] sm:$0xff] %v438
    %631 = vst [vmem:[#allocation2 + $0x158] sm:$0xff] %v440
    %632 = vst [vmem:[#allocation2 + $0x160] sm:$0xff] %v511
    %633 = vst [vmem:[#allocation2 + $0x168] sm:$0xff] %v513
    %634 = vst [vmem:[#allocation2 + $0x170] sm:$0xff] %v584
    %635 = vst [vmem:[#allocation2 + $0x178] sm:$0xff] %v586
    %v636 = vld [vmem:[%s2] sm:$0x3]
    %v637 = vld [vmem:[#allocation2 + $0x10] sm:$0x3]
    %v638 = vld [vmem:[#allocation2 + $0x18] sm:$0x3]
    %v640 = vlaneseq
    %v641 = vshrl.u32 %v640, 7
    %v642 = vsub.s32 0, %v641
    %v643 = vrot.slane %v636, %v642
    %v644 = vlaneseq
    %v645 = vshrl.u32 %v644, 7
    %v646 = vsub.s32 1, %v645
    %v647 = vrot.slane %v636, %v646
    %v650 = vadd.f32 %v643, %v637
    %v651 = vadd.f32 %v647, %v638
    %v652 = vld [vmem:[#allocation2 + $0x20] sm:$0xc]
    %v653 = vld [vmem:[#allocation2 + $0x28] sm:$0xc]
    %v656 = vrot.slane %v652, 2
    %v657 = vrot.slane %v653, 2
    %v660 = vadd.f32 %v650, %v656
    %v661 = vadd.f32 %v651, %v657
    %v662 = vmax.f32 %v660, 0.0
    %v663 = vmax.f32 %v661, 0.0
    %664 = vst [vmem:[#allocation3] sm:$0x3] %v662
    %665 = vst [vmem:[#allocation3 + $0x8] sm:$0x3] %v663
    %v666 = vld [vmem:[#allocation2 + $0x10] sm:$0x30]
    %v667 = vld [vmem:[#allocation2 + $0x18] sm:$0x30]
    %v668 = vadd.f32 %v643, %v666
    %v669 = vadd.f32 %v647, %v667
    %v670 = vld [vmem:[#allocation2 + $0x20] sm:$0xc0]
    %v671 = vld [vmem:[#allocation2 + $0x28] sm:$0xc0]
    %v674 = vrot.slane %v670, 2
    %v675 = vrot.slane %v671, 2
    %v678 = vadd.f32 %v668, %v674
    %v679 = vadd.f32 %v669, %v675
    %v680 = vld [vmem:[#allocation2] sm:$0xc]
    %v681 = vld [vmem:[#allocation2 + $0x8] sm:$0xc]
    %v684 = vrot.slane %v680, 6
    %v685 = vrot.slane %v681, 6
    %v688 = vadd.f32 %v678, %v684
    %v689 = vadd.f32 %v679, %v685
    %v690 = vmax.f32 %v688, 0.0
    %v691 = vmax.f32 %v689, 0.0
    %v694 = vrot.slane %v690, 2
    %v695 = vrot.slane %v691, 2
    %698 = vst [vmem:[#allocation3] sm:$0xc] %v694
    %699 = vst [vmem:[#allocation3 + $0x8] sm:$0xc] %v695
    %v700 = vld [vmem:[#allocation2 + $0x40] sm:$0x3]
    %v701 = vld [vmem:[#allocation2 + $0x48] sm:$0x3]
    %v702 = vadd.f32 %v643, %v700
    %v703 = vadd.f32 %v647, %v701
    %v704 = vld [vmem:[#allocation2 + $0x50] sm:$0xc]
    %v705 = vld [vmem:[#allocation2 + $0x58] sm:$0xc]
    %v708 = vrot.slane %v704, 2
    %v709 = vrot.slane %v705, 2
    %v712 = vadd.f32 %v702, %v708
    %v713 = vadd.f32 %v703, %v709
    %v714 = vld [vmem:[#allocation2] sm:$0xc0]
    %v715 = vld [vmem:[#allocation2 + $0x8] sm:$0xc0]
    %v718 = vrot.slane %v714, 6
    %v719 = vrot.slane %v715, 6
    %v722 = vadd.f32 %v712, %v718
    %v723 = vadd.f32 %v713, %v719
    %v724 = vmax.f32 %v722, 0.0
    %v725 = vmax.f32 %v723, 0.0
    %v728 = vrot.slane %v724, 4
    %v729 = vrot.slane %v725, 4
    %732 = vst [vmem:[#allocation3] sm:$0x30] %v728
    %733 = vst [vmem:[#allocation3 + $0x8] sm:$0x30] %v729
    %v734 = vld [vmem:[#allocation2 + $0x40] sm:$0x30]
    %v735 = vld [vmem:[#allocation2 + $0x48] sm:$0x30]
    %v736 = vadd.f32 %v643, %v734
    %v737 = vadd.f32 %v647, %v735
    %v738 = vld [vmem:[#allocation2 + $0x50] sm:$0xc0]
    %v739 = vld [vmem:[#allocation2 + $0x58] sm:$0xc0]
    %v742 = vrot.slane %v738, 2
    %v743 = vrot.slane %v739, 2
    %v746 = vadd.f32 %v736, %v742
    %v747 = vadd.f32 %v737, %v743
    %v748 = vld [vmem:[#allocation2 + $0x30] sm:$0xc]
    %v749 = vld [vmem:[#allocation2 + $0x38] sm:$0xc]
    %v752 = vrot.slane %v748, 6
    %v753 = vrot.slane %v749, 6
    %v756 = vadd.f32 %v746, %v752
    %v757 = vadd.f32 %v747, %v753
    %v758 = vmax.f32 %v756, 0.0
    %v759 = vmax.f32 %v757, 0.0
    %v762 = vrot.slane %v758, 6
    %v763 = vrot.slane %v759, 6
    %766 = vst [vmem:[#allocation3] sm:$0xc0] %v762
    %767 = vst [vmem:[#allocation3 + $0x8] sm:$0xc0] %v763
    %v768 = vld [vmem:[#allocation2 + $0x70] sm:$0x3]
    %v769 = vld [vmem:[#allocation2 + $0x78] sm:$0x3]
    %v770 = vadd.f32 %v643, %v768
    %v771 = vadd.f32 %v647, %v769
    %v772 = vld [vmem:[#allocation2 + $0x80] sm:$0xc]
    %v773 = vld [vmem:[#allocation2 + $0x88] sm:$0xc]
    %v776 = vrot.slane %v772, 2
    %v777 = vrot.slane %v773, 2
    %v780 = vadd.f32 %v770, %v776
    %v781 = vadd.f32 %v771, %v777
    %v782 = vld [vmem:[#allocation2 + $0x30] sm:$0xc0]
    %v783 = vld [vmem:[#allocation2 + $0x38] sm:$0xc0]
    %v786 = vrot.slane %v782, 6
    %v787 = vrot.slane %v783, 6
    %v790 = vadd.f32 %v780, %v786
    %v791 = vadd.f32 %v781, %v787
    %v792 = vmax.f32 %v790, 0.0
    %v793 = vmax.f32 %v791, 0.0
    %794 = vst [vmem:[#allocation3 + $0x10] sm:$0x3] %v792
    %795 = vst [vmem:[#allocation3 + $0x18] sm:$0x3] %v793
    %v796 = vld [vmem:[#allocation2 + $0x70] sm:$0x30]
    %v797 = vld [vmem:[#allocation2 + $0x78] sm:$0x30]
    %v798 = vadd.f32 %v643, %v796
    %v799 = vadd.f32 %v647, %v797
    %v800 = vld [vmem:[#allocation2 + $0x80] sm:$0xc0]
    %v801 = vld [vmem:[#allocation2 + $0x88] sm:$0xc0]
    %v804 = vrot.slane %v800, 2
    %v805 = vrot.slane %v801, 2
    %v808 = vadd.f32 %v798, %v804
    %v809 = vadd.f32 %v799, %v805
    %v810 = vld [vmem:[#allocation2 + $0x60] sm:$0xc]
    %v811 = vld [vmem:[#allocation2 + $0x68] sm:$0xc]
    %v814 = vrot.slane %v810, 6
    %v815 = vrot.slane %v811, 6
    %v818 = vadd.f32 %v808, %v814
    %v819 = vadd.f32 %v809, %v815
    %v820 = vmax.f32 %v818, 0.0
    %v821 = vmax.f32 %v819, 0.0
    %v824 = vrot.slane %v820, 2
    %v825 = vrot.slane %v821, 2
    %828 = vst [vmem:[#allocation3 + $0x10] sm:$0xc] %v824
    %829 = vst [vmem:[#allocation3 + $0x18] sm:$0xc] %v825
    %v830 = vld [vmem:[#allocation2 + $0xa0] sm:$0x3]
    %v831 = vld [vmem:[#allocation2 + $0xa8] sm:$0x3]
    %v832 = vadd.f32 %v643, %v830
    %v833 = vadd.f32 %v647, %v831
    %v834 = vld [vmem:[#allocation2 + $0xb0] sm:$0xc]
    %v835 = vld [vmem:[#allocation2 + $0xb8] sm:$0xc]
    %v838 = vrot.slane %v834, 2
    %v839 = vrot.slane %v835, 2
    %v842 = vadd.f32 %v832, %v838
    %v843 = vadd.f32 %v833, %v839
    %v844 = vld [vmem:[#allocation2 + $0x60] sm:$0xc0]
    %v845 = vld [vmem:[#allocation2 + $0x68] sm:$0xc0]
    %v848 = vrot.slane %v844, 6
    %v849 = vrot.slane %v845, 6
    %v852 = vadd.f32 %v842, %v848
    %v853 = vadd.f32 %v843, %v849
    %v854 = vmax.f32 %v852, 0.0
    %v855 = vmax.f32 %v853, 0.0
    %v858 = vrot.slane %v854, 4
    %v859 = vrot.slane %v855, 4
    %862 = vst [vmem:[#allocation3 + $0x10] sm:$0x30] %v858
    %863 = vst [vmem:[#allocation3 + $0x18] sm:$0x30] %v859
    %v864 = vld [vmem:[#allocation2 + $0xa0] sm:$0x30]
    %v865 = vld [vmem:[#allocation2 + $0xa8] sm:$0x30]
    %v866 = vadd.f32 %v643, %v864
    %v867 = vadd.f32 %v647, %v865
    %v868 = vld [vmem:[#allocation2 + $0xb0] sm:$0xc0]
    %v869 = vld [vmem:[#allocation2 + $0xb8] sm:$0xc0]
    %v872 = vrot.slane %v868, 2
    %v873 = vrot.slane %v869, 2
    %v876 = vadd.f32 %v866, %v872
    %v877 = vadd.f32 %v867, %v873
    %v878 = vld [vmem:[#allocation2 + $0x90] sm:$0xc]
    %v879 = vld [vmem:[#allocation2 + $0x98] sm:$0xc]
    %v882 = vrot.slane %v878, 6
    %v883 = vrot.slane %v879, 6
    %v886 = vadd.f32 %v876, %v882
    %v887 = vadd.f32 %v877, %v883
    %v888 = vmax.f32 %v886, 0.0
    %v889 = vmax.f32 %v887, 0.0
    %v892 = vrot.slane %v888, 6
    %v893 = vrot.slane %v889, 6
    %896 = vst [vmem:[#allocation3 + $0x10] sm:$0xc0] %v892
    %897 = vst [vmem:[#allocation3 + $0x18] sm:$0xc0] %v893
    %v898 = vld [vmem:[#allocation2 + $0xd0] sm:$0x3]
    %v899 = vld [vmem:[#allocation2 + $0xd8] sm:$0x3]
    %v900 = vadd.f32 %v643, %v898
    %v901 = vadd.f32 %v647, %v899
    %v902 = vld [vmem:[#allocation2 + $0xe0] sm:$0xc]
    %v903 = vld [vmem:[#allocation2 + $0xe8] sm:$0xc]
    %v906 = vrot.slane %v902, 2
    %v907 = vrot.slane %v903, 2
    %v910 = vadd.f32 %v900, %v906
    %v911 = vadd.f32 %v901, %v907
    %v912 = vld [vmem:[#allocation2 + $0x90] sm:$0xc0]
    %v913 = vld [vmem:[#allocation2 + $0x98] sm:$0xc0]
    %v916 = vrot.slane %v912, 6
    %v917 = vrot.slane %v913, 6
    %v920 = vadd.f32 %v910, %v916
    %v921 = vadd.f32 %v911, %v917
    %v922 = vmax.f32 %v920, 0.0
    %v923 = vmax.f32 %v921, 0.0
    %924 = vst [vmem:[#allocation3 + $0x20] sm:$0x3] %v922
    %925 = vst [vmem:[#allocation3 + $0x28] sm:$0x3] %v923
    %v926 = vld [vmem:[#allocation2 + $0xd0] sm:$0x30]
    %v927 = vld [vmem:[#allocation2 + $0xd8] sm:$0x30]
    %v928 = vadd.f32 %v643, %v926
    %v929 = vadd.f32 %v647, %v927
    %v930 = vld [vmem:[#allocation2 + $0xe0] sm:$0xc0]
    %v931 = vld [vmem:[#allocation2 + $0xe8] sm:$0xc0]
    %v934 = vrot.slane %v930, 2
    %v935 = vrot.slane %v931, 2
    %v938 = vadd.f32 %v928, %v934
    %v939 = vadd.f32 %v929, %v935
    %v940 = vld [vmem:[#allocation2 + $0xc0] sm:$0xc]
    %v941 = vld [vmem:[#allocation2 + $0xc8] sm:$0xc]
    %v944 = vrot.slane %v940, 6
    %v945 = vrot.slane %v941, 6
    %v948 = vadd.f32 %v938, %v944
    %v949 = vadd.f32 %v939, %v945
    %v950 = vmax.f32 %v948, 0.0
    %v951 = vmax.f32 %v949, 0.0
    %v954 = vrot.slane %v950, 2
    %v955 = vrot.slane %v951, 2
    %958 = vst [vmem:[#allocation3 + $0x20] sm:$0xc] %v954
    %959 = vst [vmem:[#allocation3 + $0x28] sm:$0xc] %v955
    %v960 = vld [vmem:[#allocation2 + $0x100] sm:$0x3]
    %v961 = vld [vmem:[#allocation2 + $0x108] sm:$0x3]
    %v962 = vadd.f32 %v643, %v960
    %v963 = vadd.f32 %v647, %v961
    %v964 = vld [vmem:[#allocation2 + $0x110] sm:$0xc]
    %v965 = vld [vmem:[#allocation2 + $0x118] sm:$0xc]
    %v968 = vrot.slane %v964, 2
    %v969 = vrot.slane %v965, 2
    %v972 = vadd.f32 %v962, %v968
    %v973 = vadd.f32 %v963, %v969
    %v974 = vld [vmem:[#allocation2 + $0xc0] sm:$0xc0]
    %v975 = vld [vmem:[#allocation2 + $0xc8] sm:$0xc0]
    %v978 = vrot.slane %v974, 6
    %v979 = vrot.slane %v975, 6
    %v982 = vadd.f32 %v972, %v978
    %v983 = vadd.f32 %v973, %v979
    %v984 = vmax.f32 %v982, 0.0
    %v985 = vmax.f32 %v983, 0.0
    %v988 = vrot.slane %v984, 4
    %v989 = vrot.slane %v985, 4
    %992 = vst [vmem:[#allocation3 + $0x20] sm:$0x30] %v988
    %993 = vst [vmem:[#allocation3 + $0x28] sm:$0x30] %v989
    %v994 = vld [vmem:[#allocation2 + $0x100] sm:$0x30]
    %v995 = vld [vmem:[#allocation2 + $0x108] sm:$0x30]
    %v996 = vadd.f32 %v643, %v994
    %v997 = vadd.f32 %v647, %v995
    %v998 = vld [vmem:[#allocation2 + $0x110] sm:$0xc0]
    %v999 = vld [vmem:[#allocation2 + $0x118] sm:$0xc0]
    %v1002 = vrot.slane %v998, 2
    %v1003 = vrot.slane %v999, 2
    %v1006 = vadd.f32 %v996, %v1002
    %v1007 = vadd.f32 %v997, %v1003
    %v1008 = vld [vmem:[#allocation2 + $0xf0] sm:$0xc]
    %v1009 = vld [vmem:[#allocation2 + $0xf8] sm:$0xc]
    %v1012 = vrot.slane %v1008, 6
    %v1013 = vrot.slane %v1009, 6
    %v1016 = vadd.f32 %v1006, %v1012
    %v1017 = vadd.f32 %v1007, %v1013
    %v1018 = vmax.f32 %v1016, 0.0
    %v1019 = vmax.f32 %v1017, 0.0
    %v1022 = vrot.slane %v1018, 6
    %v1023 = vrot.slane %v1019, 6
    %1026 = vst [vmem:[#allocation3 + $0x20] sm:$0xc0] %v1022
    %1027 = vst [vmem:[#allocation3 + $0x28] sm:$0xc0] %v1023
    %v1028 = vld [vmem:[#allocation2 + $0x130] sm:$0x3]
    %v1029 = vld [vmem:[#allocation2 + $0x138] sm:$0x3]
    %v1030 = vadd.f32 %v643, %v1028
    %v1031 = vadd.f32 %v647, %v1029
    %v1032 = vld [vmem:[#allocation2 + $0x140] sm:$0xc]
    %v1033 = vld [vmem:[#allocation2 + $0x148] sm:$0xc]
    %v1036 = vrot.slane %v1032, 2
    %v1037 = vrot.slane %v1033, 2
    %v1040 = vadd.f32 %v1030, %v1036
    %v1041 = vadd.f32 %v1031, %v1037
    %v1042 = vld [vmem:[#allocation2 + $0xf0] sm:$0xc0]
    %v1043 = vld [vmem:[#allocation2 + $0xf8] sm:$0xc0]
    %v1046 = vrot.slane %v1042, 6
    %v1047 = vrot.slane %v1043, 6
    %v1050 = vadd.f32 %v1040, %v1046
    %v1051 = vadd.f32 %v1041, %v1047
    %v1052 = vmax.f32 %v1050, 0.0
    %v1053 = vmax.f32 %v1051, 0.0
    %1054 = vst [vmem:[#allocation3 + $0x30] sm:$0x3] %v1052
    %1055 = vst [vmem:[#allocation3 + $0x38] sm:$0x3] %v1053
    %v1056 = vld [vmem:[#allocation2 + $0x130] sm:$0x30]
    %v1057 = vld [vmem:[#allocation2 + $0x138] sm:$0x30]
    %v1058 = vadd.f32 %v643, %v1056
    %v1059 = vadd.f32 %v647, %v1057
    %v1060 = vld [vmem:[#allocation2 + $0x140] sm:$0xc0]
    %v1061 = vld [vmem:[#allocation2 + $0x148] sm:$0xc0]
    %v1064 = vrot.slane %v1060, 2
    %v1065 = vrot.slane %v1061, 2
    %v1068 = vadd.f32 %v1058, %v1064
    %v1069 = vadd.f32 %v1059, %v1065
    %v1070 = vld [vmem:[#allocation2 + $0x120] sm:$0xc]
    %v1071 = vld [vmem:[#allocation2 + $0x128] sm:$0xc]
    %v1074 = vrot.slane %v1070, 6
    %v1075 = vrot.slane %v1071, 6
    %v1078 = vadd.f32 %v1068, %v1074
    %v1079 = vadd.f32 %v1069, %v1075
    %v1080 = vmax.f32 %v1078, 0.0
    %v1081 = vmax.f32 %v1079, 0.0
    %v1084 = vrot.slane %v1080, 2
    %v1085 = vrot.slane %v1081, 2
    %1088 = vst [vmem:[#allocation3 + $0x30] sm:$0xc] %v1084
    %1089 = vst [vmem:[#allocation3 + $0x38] sm:$0xc] %v1085
    %v1090 = vld [vmem:[#allocation2 + $0x160] sm:$0x3]
    %v1091 = vld [vmem:[#allocation2 + $0x168] sm:$0x3]
    %v1092 = vadd.f32 %v643, %v1090
    %v1093 = vadd.f32 %v647, %v1091
    %v1094 = vld [vmem:[#allocation2 + $0x170] sm:$0xc]
    %v1095 = vld [vmem:[#allocation2 + $0x178] sm:$0xc]
    %v1098 = vrot.slane %v1094, 2
    %v1099 = vrot.slane %v1095, 2
    %v1102 = vadd.f32 %v1092, %v1098
    %v1103 = vadd.f32 %v1093, %v1099
    %v1104 = vld [vmem:[#allocation2 + $0x120] sm:$0xc0]
    %v1105 = vld [vmem:[#allocation2 + $0x128] sm:$0xc0]
    %v1108 = vrot.slane %v1104, 6
    %v1109 = vrot.slane %v1105, 6
    %v1112 = vadd.f32 %v1102, %v1108
    %v1113 = vadd.f32 %v1103, %v1109
    %v1114 = vmax.f32 %v1112, 0.0
    %v1115 = vmax.f32 %v1113, 0.0
    %v1118 = vrot.slane %v1114, 4
    %v1119 = vrot.slane %v1115, 4
    %1122 = vst [vmem:[#allocation3 + $0x30] sm:$0x30] %v1118
    %1123 = vst [vmem:[#allocation3 + $0x38] sm:$0x30] %v1119
    %v1124 = vld [vmem:[#allocation2 + $0x160] sm:$0x30]
    %v1125 = vld [vmem:[#allocation2 + $0x168] sm:$0x30]
    %v1126 = vadd.f32 %v643, %v1124
    %v1127 = vadd.f32 %v647, %v1125
    %v1128 = vld [vmem:[#allocation2 + $0x170] sm:$0xc0]
    %v1129 = vld [vmem:[#allocation2 + $0x178] sm:$0xc0]
    %v1132 = vrot.slane %v1128, 2
    %v1133 = vrot.slane %v1129, 2
    %v1136 = vadd.f32 %v1126, %v1132
    %v1137 = vadd.f32 %v1127, %v1133
    %v1138 = vld [vmem:[#allocation2 + $0x150] sm:$0xc]
    %v1139 = vld [vmem:[#allocation2 + $0x158] sm:$0xc]
    %v1142 = vrot.slane %v1138, 6
    %v1143 = vrot.slane %v1139, 6
    %v1146 = vadd.f32 %v1136, %v1142
    %v1147 = vadd.f32 %v1137, %v1143
    %v1148 = vmax.f32 %v1146, 0.0
    %v1149 = vmax.f32 %v1147, 0.0
    %v1152 = vrot.slane %v1148, 6
    %v1153 = vrot.slane %v1149, 6
    %1156 = vst [vmem:[#allocation3 + $0x30] sm:$0xc0] %v1152
    %1157 = vst [vmem:[#allocation3 + $0x38] sm:$0xc0] %v1153
    %v1158 = vld [vmem:[#allocation3] sm:$0xff]
    %v1159 = vld [vmem:[#allocation3 + $0x8] sm:$0xff]
    %v1160 = vld [vmem:[#allocation3 + $0x10] sm:$0xff]
    %v1161 = vld [vmem:[#allocation3 + $0x18] sm:$0xff]
    %v1162 = vld [vmem:[#allocation3 + $0x20] sm:$0xff]
    %v1163 = vld [vmem:[#allocation3 + $0x28] sm:$0xff]
    %v1164 = vld [vmem:[#allocation3 + $0x30] sm:$0xff]
    %v1165 = vld [vmem:[#allocation3 + $0x38] sm:$0xff]
    %v1166 = vpack.c.bf16 %v1160, %v1158
    %v1167 = vpack.c.bf16 %v1161, %v1159
    %v1168 = vpack.c.bf16 %v1164, %v1162
    %v1169 = vpack.c.bf16 %v1165, %v1163
    %v1170 = vld [vmem:[#allocation13] sm:$0xff]
    %v1171 = vld [vmem:[#allocation13 + $0x8] sm:$0xff]
    %v1172 = vld [vmem:[#allocation13 + $0x10] sm:$0xff]
    %v1173 = vld [vmem:[#allocation13 + $0x18] sm:$0xff]
    %v1174 = vld [vmem:[#allocation13 + $0x20] sm:$0xff]
    %v1175 = vld [vmem:[#allocation13 + $0x28] sm:$0xff]
    %v1176 = vld [vmem:[#allocation13 + $0x30] sm:$0xff]
    %v1177 = vld [vmem:[#allocation13 + $0x38] sm:$0xff]
    %v1178 = vld [vmem:[#allocation13 + $0x40] sm:$0xff]
    %v1179 = vld [vmem:[#allocation13 + $0x48] sm:$0xff]
    %v1180 = vld [vmem:[#allocation13 + $0x50] sm:$0xff]
    %v1181 = vld [vmem:[#allocation13 + $0x58] sm:$0xff]
    %v1182 = vld [vmem:[#allocation13 + $0x60] sm:$0xff]
    %v1183 = vld [vmem:[#allocation13 + $0x68] sm:$0xff]
    %v1184 = vld [vmem:[#allocation13 + $0x70] sm:$0xff]
    %v1185 = vld [vmem:[#allocation13 + $0x78] sm:$0xff]
    %v1186 = vld [vmem:[#allocation13 + $0x80] sm:$0xff]
    %v1187 = vld [vmem:[#allocation13 + $0x88] sm:$0xff]
    %v1188 = vld [vmem:[#allocation13 + $0x90] sm:$0xff]
    %v1189 = vld [vmem:[#allocation13 + $0x98] sm:$0xff]
    %v1190 = vld [vmem:[#allocation13 + $0xa0] sm:$0xff]
    %v1191 = vld [vmem:[#allocation13 + $0xa8] sm:$0xff]
    %v1192 = vld [vmem:[#allocation13 + $0xb0] sm:$0xff]
    %v1193 = vld [vmem:[#allocation13 + $0xb8] sm:$0xff]
    %v1194 = vld [vmem:[#allocation13 + $0xc0] sm:$0xff]
    %v1195 = vld [vmem:[#allocation13 + $0xc8] sm:$0xff]
    %v1196 = vld [vmem:[#allocation13 + $0xd0] sm:$0xff]
    %v1197 = vld [vmem:[#allocation13 + $0xd8] sm:$0xff]
    %v1198 = vld [vmem:[#allocation13 + $0xe0] sm:$0xff]
    %v1199 = vld [vmem:[#allocation13 + $0xe8] sm:$0xff]
    %v1200 = vld [vmem:[#allocation13 + $0xf0] sm:$0xff]
    %v1201 = vld [vmem:[#allocation13 + $0xf8] sm:$0xff]
    %v1202 = vld [vmem:[#allocation13 + $0x100] sm:$0xff]
    %v1203 = vld [vmem:[#allocation13 + $0x108] sm:$0xff]
    %v1204 = vld [vmem:[#allocation13 + $0x110] sm:$0xff]
    %v1205 = vld [vmem:[#allocation13 + $0x118] sm:$0xff]
    %v1206 = vld [vmem:[#allocation13 + $0x120] sm:$0xff]
    %v1207 = vld [vmem:[#allocation13 + $0x128] sm:$0xff]
    %v1208 = vld [vmem:[#allocation13 + $0x130] sm:$0xff]
    %v1209 = vld [vmem:[#allocation13 + $0x138] sm:$0xff]
    %v1210 = vld [vmem:[#allocation13 + $0x140] sm:$0xff]
    %v1211 = vld [vmem:[#allocation13 + $0x148] sm:$0xff]
    %v1212 = vld [vmem:[#allocation13 + $0x150] sm:$0xff]
    %v1213 = vld [vmem:[#allocation13 + $0x158] sm:$0xff]
    %v1214 = vld [vmem:[#allocation13 + $0x160] sm:$0xff]
    %v1215 = vld [vmem:[#allocation13 + $0x168] sm:$0xff]
    %v1216 = vld [vmem:[#allocation13 + $0x170] sm:$0xff]
    %v1217 = vld [vmem:[#allocation13 + $0x178] sm:$0xff]
    %v1218 = vld [vmem:[#allocation13 + $0x180] sm:$0xff]
    %v1219 = vld [vmem:[#allocation13 + $0x188] sm:$0xff]
    %v1220 = vld [vmem:[#allocation13 + $0x190] sm:$0xff]
    %v1221 = vld [vmem:[#allocation13 + $0x198] sm:$0xff]
    %v1222 = vld [vmem:[#allocation13 + $0x1a0] sm:$0xff]
    %v1223 = vld [vmem:[#allocation13 + $0x1a8] sm:$0xff]
    %v1224 = vld [vmem:[#allocation13 + $0x1b0] sm:$0xff]
    %v1225 = vld [vmem:[#allocation13 + $0x1b8] sm:$0xff]
    %v1226 = vld [vmem:[#allocation13 + $0x1c0] sm:$0xff]
    %v1227 = vld [vmem:[#allocation13 + $0x1c8] sm:$0xff]
    %v1228 = vld [vmem:[#allocation13 + $0x1d0] sm:$0xff]
    %v1229 = vld [vmem:[#allocation13 + $0x1d8] sm:$0xff]
    %v1230 = vld [vmem:[#allocation13 + $0x1e0] sm:$0xff]
    %v1231 = vld [vmem:[#allocation13 + $0x1e8] sm:$0xff]
    %v1232 = vld [vmem:[#allocation13 + $0x1f0] sm:$0xff]
    %v1233 = vld [vmem:[#allocation13 + $0x1f8] sm:$0xff]
    %v1234 = vld [vmem:[#allocation13 + $0x200] sm:$0xff]
    %v1235 = vld [vmem:[#allocation13 + $0x208] sm:$0xff]
    %v1236 = vld [vmem:[#allocation13 + $0x210] sm:$0xff]
    %v1237 = vld [vmem:[#allocation13 + $0x218] sm:$0xff]
    %v1238 = vld [vmem:[#allocation13 + $0x220] sm:$0xff]
    %v1239 = vld [vmem:[#allocation13 + $0x228] sm:$0xff]
    %v1240 = vld [vmem:[#allocation13 + $0x230] sm:$0xff]
    %v1241 = vld [vmem:[#allocation13 + $0x238] sm:$0xff]
    %v1242 = vld [vmem:[#allocation13 + $0x240] sm:$0xff]
    %v1243 = vld [vmem:[#allocation13 + $0x248] sm:$0xff]
    %v1244 = vld [vmem:[#allocation13 + $0x250] sm:$0xff]
    %v1245 = vld [vmem:[#allocation13 + $0x258] sm:$0xff]
    %v1246 = vld [vmem:[#allocation13 + $0x260] sm:$0xff]
    %v1247 = vld [vmem:[#allocation13 + $0x268] sm:$0xff]
    %v1248 = vld [vmem:[#allocation13 + $0x270] sm:$0xff]
    %v1249 = vld [vmem:[#allocation13 + $0x278] sm:$0xff]
    %v1250 = vld [vmem:[#allocation13 + $0x280] sm:$0xff]
    %v1251 = vld [vmem:[#allocation13 + $0x288] sm:$0xff]
    %v1252 = vld [vmem:[#allocation13 + $0x290] sm:$0xff]
    %v1253 = vld [vmem:[#allocation13 + $0x298] sm:$0xff]
    %v1254 = vld [vmem:[#allocation13 + $0x2a0] sm:$0xff]
    %v1255 = vld [vmem:[#allocation13 + $0x2a8] sm:$0xff]
    %v1256 = vld [vmem:[#allocation13 + $0x2b0] sm:$0xff]
    %v1257 = vld [vmem:[#allocation13 + $0x2b8] sm:$0xff]
    %v1258 = vld [vmem:[#allocation13 + $0x2c0] sm:$0xff]
    %v1259 = vld [vmem:[#allocation13 + $0x2c8] sm:$0xff]
    %v1260 = vld [vmem:[#allocation13 + $0x2d0] sm:$0xff]
    %v1261 = vld [vmem:[#allocation13 + $0x2d8] sm:$0xff]
    %v1262 = vld [vmem:[#allocation13 + $0x2e0] sm:$0xff]
    %v1263 = vld [vmem:[#allocation13 + $0x2e8] sm:$0xff]
    %v1264 = vld [vmem:[#allocation13 + $0x2f0] sm:$0xff]
    %v1265 = vld [vmem:[#allocation13 + $0x2f8] sm:$0xff]
    %v1362 = vunpack.c.l.b16 %v1170
    %v1363 = vunpack.c.h.b16 %v1170
    %v1364 = vunpack.c.l.b16 %v1171
    %v1365 = vunpack.c.h.b16 %v1171
    %v1366 = vunpack.c.l.b16 %v1172
    %v1367 = vunpack.c.h.b16 %v1172
    %v1368 = vunpack.c.l.b16 %v1173
    %v1369 = vunpack.c.h.b16 %v1173
    %v1370 = vunpack.c.l.b16 %v1174
    %v1371 = vunpack.c.h.b16 %v1174
    %v1372 = vunpack.c.l.b16 %v1175
    %v1373 = vunpack.c.h.b16 %v1175
    %v1374 = vunpack.c.l.b16 %v1176
    %v1375 = vunpack.c.h.b16 %v1176
    %v1376 = vunpack.c.l.b16 %v1177
    %v1377 = vunpack.c.h.b16 %v1177
    %v1378 = vunpack.c.l.b16 %v1178
    %v1379 = vunpack.c.h.b16 %v1178
    %v1380 = vunpack.c.l.b16 %v1179
    %v1381 = vunpack.c.h.b16 %v1179
    %v1382 = vunpack.c.l.b16 %v1180
    %v1383 = vunpack.c.h.b16 %v1180
    %v1384 = vunpack.c.l.b16 %v1181
    %v1385 = vunpack.c.h.b16 %v1181
    %v1386 = vunpack.c.l.b16 %v1182
    %v1387 = vunpack.c.h.b16 %v1182
    %v1388 = vunpack.c.l.b16 %v1183
    %v1389 = vunpack.c.h.b16 %v1183
    %v1390 = vunpack.c.l.b16 %v1184
    %v1391 = vunpack.c.h.b16 %v1184
    %v1392 = vunpack.c.l.b16 %v1185
    %v1393 = vunpack.c.h.b16 %v1185
    %v1394 = vunpack.c.l.b16 %v1186
    %v1395 = vunpack.c.h.b16 %v1186
    %v1396 = vunpack.c.l.b16 %v1187
    %v1397 = vunpack.c.h.b16 %v1187
    %v1398 = vunpack.c.l.b16 %v1188
    %v1399 = vunpack.c.h.b16 %v1188
    %v1400 = vunpack.c.l.b16 %v1189
    %v1401 = vunpack.c.h.b16 %v1189
    %v1402 = vunpack.c.l.b16 %v1190
    %v1403 = vunpack.c.h.b16 %v1190
    %v1404 = vunpack.c.l.b16 %v1191
    %v1405 = vunpack.c.h.b16 %v1191
    %v1406 = vunpack.c.l.b16 %v1192
    %v1407 = vunpack.c.h.b16 %v1192
    %v1408 = vunpack.c.l.b16 %v1193
    %v1409 = vunpack.c.h.b16 %v1193
    %v1410 = vunpack.c.l.b16 %v1194
    %v1411 = vunpack.c.h.b16 %v1194
    %v1412 = vunpack.c.l.b16 %v1195
    %v1413 = vunpack.c.h.b16 %v1195
    %v1414 = vunpack.c.l.b16 %v1196
    %v1415 = vunpack.c.h.b16 %v1196
    %v1416 = vunpack.c.l.b16 %v1197
    %v1417 = vunpack.c.h.b16 %v1197
    %v1418 = vunpack.c.l.b16 %v1198
    %v1419 = vunpack.c.h.b16 %v1198
    %v1420 = vunpack.c.l.b16 %v1199
    %v1421 = vunpack.c.h.b16 %v1199
    %v1422 = vunpack.c.l.b16 %v1200
    %v1423 = vunpack.c.h.b16 %v1200
    %v1424 = vunpack.c.l.b16 %v1201
    %v1425 = vunpack.c.h.b16 %v1201
    %v1426 = vunpack.c.l.b16 %v1202
    %v1427 = vunpack.c.h.b16 %v1202
    %v1428 = vunpack.c.l.b16 %v1203
    %v1429 = vunpack.c.h.b16 %v1203
    %v1430 = vunpack.c.l.b16 %v1204
    %v1431 = vunpack.c.h.b16 %v1204
    %v1432 = vunpack.c.l.b16 %v1205
    %v1433 = vunpack.c.h.b16 %v1205
    %v1434 = vunpack.c.l.b16 %v1206
    %v1435 = vunpack.c.h.b16 %v1206
    %v1436 = vunpack.c.l.b16 %v1207
    %v1437 = vunpack.c.h.b16 %v1207
    %v1438 = vunpack.c.l.b16 %v1208
    %v1439 = vunpack.c.h.b16 %v1208
    %v1440 = vunpack.c.l.b16 %v1209
    %v1441 = vunpack.c.h.b16 %v1209
    %v1442 = vunpack.c.l.b16 %v1210
    %v1443 = vunpack.c.h.b16 %v1210
    %v1444 = vunpack.c.l.b16 %v1211
    %v1445 = vunpack.c.h.b16 %v1211
    %v1446 = vunpack.c.l.b16 %v1212
    %v1447 = vunpack.c.h.b16 %v1212
    %v1448 = vunpack.c.l.b16 %v1213
    %v1449 = vunpack.c.h.b16 %v1213
    %v1450 = vunpack.c.l.b16 %v1214
    %v1451 = vunpack.c.h.b16 %v1214
    %v1452 = vunpack.c.l.b16 %v1215
    %v1453 = vunpack.c.h.b16 %v1215
    %v1454 = vunpack.c.l.b16 %v1216
    %v1455 = vunpack.c.h.b16 %v1216
    %v1456 = vunpack.c.l.b16 %v1217
    %v1457 = vunpack.c.h.b16 %v1217
    %v1458 = vunpack.c.l.b16 %v1218
    %v1459 = vunpack.c.h.b16 %v1218
    %v1460 = vunpack.c.l.b16 %v1219
    %v1461 = vunpack.c.h.b16 %v1219
    %v1462 = vunpack.c.l.b16 %v1220
    %v1463 = vunpack.c.h.b16 %v1220
    %v1464 = vunpack.c.l.b16 %v1221
    %v1465 = vunpack.c.h.b16 %v1221
    %v1466 = vunpack.c.l.b16 %v1222
    %v1467 = vunpack.c.h.b16 %v1222
    %v1468 = vunpack.c.l.b16 %v1223
    %v1469 = vunpack.c.h.b16 %v1223
    %v1470 = vunpack.c.l.b16 %v1224
    %v1471 = vunpack.c.h.b16 %v1224
    %v1472 = vunpack.c.l.b16 %v1225
    %v1473 = vunpack.c.h.b16 %v1225
    %v1474 = vunpack.c.l.b16 %v1226
    %v1475 = vunpack.c.h.b16 %v1226
    %v1476 = vunpack.c.l.b16 %v1227
    %v1477 = vunpack.c.h.b16 %v1227
    %v1478 = vunpack.c.l.b16 %v1228
    %v1479 = vunpack.c.h.b16 %v1228
    %v1480 = vunpack.c.l.b16 %v1229
    %v1481 = vunpack.c.h.b16 %v1229
    %v1482 = vunpack.c.l.b16 %v1230
    %v1483 = vunpack.c.h.b16 %v1230
    %v1484 = vunpack.c.l.b16 %v1231
    %v1485 = vunpack.c.h.b16 %v1231
    %v1486 = vunpack.c.l.b16 %v1232
    %v1487 = vunpack.c.h.b16 %v1232
    %v1488 = vunpack.c.l.b16 %v1233
    %v1489 = vunpack.c.h.b16 %v1233
    %v1490 = vunpack.c.l.b16 %v1234
    %v1491 = vunpack.c.h.b16 %v1234
    %v1492 = vunpack.c.l.b16 %v1235
    %v1493 = vunpack.c.h.b16 %v1235
    %v1494 = vunpack.c.l.b16 %v1236
    %v1495 = vunpack.c.h.b16 %v1236
    %v1496 = vunpack.c.l.b16 %v1237
    %v1497 = vunpack.c.h.b16 %v1237
    %v1498 = vunpack.c.l.b16 %v1238
    %v1499 = vunpack.c.h.b16 %v1238
    %v1500 = vunpack.c.l.b16 %v1239
    %v1501 = vunpack.c.h.b16 %v1239
    %v1502 = vunpack.c.l.b16 %v1240
    %v1503 = vunpack.c.h.b16 %v1240
    %v1504 = vunpack.c.l.b16 %v1241
    %v1505 = vunpack.c.h.b16 %v1241
    %v1506 = vunpack.c.l.b16 %v1242
    %v1507 = vunpack.c.h.b16 %v1242
    %v1508 = vunpack.c.l.b16 %v1243
    %v1509 = vunpack.c.h.b16 %v1243
    %v1510 = vunpack.c.l.b16 %v1244
    %v1511 = vunpack.c.h.b16 %v1244
    %v1512 = vunpack.c.l.b16 %v1245
    %v1513 = vunpack.c.h.b16 %v1245
    %v1514 = vunpack.c.l.b16 %v1246
    %v1515 = vunpack.c.h.b16 %v1246
    %v1516 = vunpack.c.l.b16 %v1247
    %v1517 = vunpack.c.h.b16 %v1247
    %v1518 = vunpack.c.l.b16 %v1248
    %v1519 = vunpack.c.h.b16 %v1248
    %v1520 = vunpack.c.l.b16 %v1249
    %v1521 = vunpack.c.h.b16 %v1249
    %v1522 = vunpack.c.l.b16 %v1250
    %v1523 = vunpack.c.h.b16 %v1250
    %v1524 = vunpack.c.l.b16 %v1251
    %v1525 = vunpack.c.h.b16 %v1251
    %v1526 = vunpack.c.l.b16 %v1252
    %v1527 = vunpack.c.h.b16 %v1252
    %v1528 = vunpack.c.l.b16 %v1253
    %v1529 = vunpack.c.h.b16 %v1253
    %v1530 = vunpack.c.l.b16 %v1254
    %v1531 = vunpack.c.h.b16 %v1254
    %v1532 = vunpack.c.l.b16 %v1255
    %v1533 = vunpack.c.h.b16 %v1255
    %v1534 = vunpack.c.l.b16 %v1256
    %v1535 = vunpack.c.h.b16 %v1256
    %v1536 = vunpack.c.l.b16 %v1257
    %v1537 = vunpack.c.h.b16 %v1257
    %v1538 = vunpack.c.l.b16 %v1258
    %v1539 = vunpack.c.h.b16 %v1258
    %v1540 = vunpack.c.l.b16 %v1259
    %v1541 = vunpack.c.h.b16 %v1259
    %v1542 = vunpack.c.l.b16 %v1260
    %v1543 = vunpack.c.h.b16 %v1260
    %v1544 = vunpack.c.l.b16 %v1261
    %v1545 = vunpack.c.h.b16 %v1261
    %v1546 = vunpack.c.l.b16 %v1262
    %v1547 = vunpack.c.h.b16 %v1262
    %v1548 = vunpack.c.l.b16 %v1263
    %v1549 = vunpack.c.h.b16 %v1263
    %v1550 = vunpack.c.l.b16 %v1264
    %v1551 = vunpack.c.h.b16 %v1264
    %v1552 = vunpack.c.l.b16 %v1265
    %v1553 = vunpack.c.h.b16 %v1265
    %v1554 = vpack.c.b16 %v1368, %v1362
    %v1555 = vpack.c.b16 %v1369, %v1363
    %v1556 = vpack.c.b16 %v1370, %v1364
    %v1557 = vpack.c.b16 %v1371, %v1365
    %v1558 = vpack.c.b16 %v1372, %v1366
    %v1559 = vpack.c.b16 %v1373, %v1367
    %v1560 = vpack.c.b16 %v1380, %v1374
    %v1561 = vpack.c.b16 %v1381, %v1375
    %v1562 = vpack.c.b16 %v1382, %v1376
    %v1563 = vpack.c.b16 %v1383, %v1377
    %v1564 = vpack.c.b16 %v1384, %v1378
    %v1565 = vpack.c.b16 %v1385, %v1379
    %v1566 = vpack.c.b16 %v1392, %v1386
    %v1567 = vpack.c.b16 %v1393, %v1387
    %v1568 = vpack.c.b16 %v1394, %v1388
    %v1569 = vpack.c.b16 %v1395, %v1389
    %v1570 = vpack.c.b16 %v1396, %v1390
    %v1571 = vpack.c.b16 %v1397, %v1391
    %v1572 = vpack.c.b16 %v1404, %v1398
    %v1573 = vpack.c.b16 %v1405, %v1399
    %v1574 = vpack.c.b16 %v1406, %v1400
    %v1575 = vpack.c.b16 %v1407, %v1401
    %v1576 = vpack.c.b16 %v1408, %v1402
    %v1577 = vpack.c.b16 %v1409, %v1403
    %v1578 = vpack.c.b16 %v1416, %v1410
    %v1579 = vpack.c.b16 %v1417, %v1411
    %v1580 = vpack.c.b16 %v1418, %v1412
    %v1581 = vpack.c.b16 %v1419, %v1413
    %v1582 = vpack.c.b16 %v1420, %v1414
    %v1583 = vpack.c.b16 %v1421, %v1415
    %v1584 = vpack.c.b16 %v1428, %v1422
    %v1585 = vpack.c.b16 %v1429, %v1423
    %v1586 = vpack.c.b16 %v1430, %v1424
    %v1587 = vpack.c.b16 %v1431, %v1425
    %v1588 = vpack.c.b16 %v1432, %v1426
    %v1589 = vpack.c.b16 %v1433, %v1427
    %v1590 = vpack.c.b16 %v1440, %v1434
    %v1591 = vpack.c.b16 %v1441, %v1435
    %v1592 = vpack.c.b16 %v1442, %v1436
    %v1593 = vpack.c.b16 %v1443, %v1437
    %v1594 = vpack.c.b16 %v1444, %v1438
    %v1595 = vpack.c.b16 %v1445, %v1439
    %v1596 = vpack.c.b16 %v1452, %v1446
    %v1597 = vpack.c.b16 %v1453, %v1447
    %v1598 = vpack.c.b16 %v1454, %v1448
    %v1599 = vpack.c.b16 %v1455, %v1449
    %v1600 = vpack.c.b16 %v1456, %v1450
    %v1601 = vpack.c.b16 %v1457, %v1451
    %v1602 = vpack.c.b16 %v1464, %v1458
    %v1603 = vpack.c.b16 %v1465, %v1459
    %v1604 = vpack.c.b16 %v1466, %v1460
    %v1605 = vpack.c.b16 %v1467, %v1461
    %v1606 = vpack.c.b16 %v1468, %v1462
    %v1607 = vpack.c.b16 %v1469, %v1463
    %v1608 = vpack.c.b16 %v1476, %v1470
    %v1609 = vpack.c.b16 %v1477, %v1471
    %v1610 = vpack.c.b16 %v1478, %v1472
    %v1611 = vpack.c.b16 %v1479, %v1473
    %v1612 = vpack.c.b16 %v1480, %v1474
    %v1613 = vpack.c.b16 %v1481, %v1475
    %v1614 = vpack.c.b16 %v1488, %v1482
    %v1615 = vpack.c.b16 %v1489, %v1483
    %v1616 = vpack.c.b16 %v1490, %v1484
    %v1617 = vpack.c.b16 %v1491, %v1485
    %v1618 = vpack.c.b16 %v1492, %v1486
    %v1619 = vpack.c.b16 %v1493, %v1487
    %v1620 = vpack.c.b16 %v1500, %v1494
    %v1621 = vpack.c.b16 %v1501, %v1495
    %v1622 = vpack.c.b16 %v1502, %v1496
    %v1623 = vpack.c.b16 %v1503, %v1497
    %v1624 = vpack.c.b16 %v1504, %v1498
    %v1625 = vpack.c.b16 %v1505, %v1499
    %v1626 = vpack.c.b16 %v1512, %v1506
    %v1627 = vpack.c.b16 %v1513, %v1507
    %v1628 = vpack.c.b16 %v1514, %v1508
    %v1629 = vpack.c.b16 %v1515, %v1509
    %v1630 = vpack.c.b16 %v1516, %v1510
    %v1631 = vpack.c.b16 %v1517, %v1511
    %v1632 = vpack.c.b16 %v1524, %v1518
    %v1633 = vpack.c.b16 %v1525, %v1519
    %v1634 = vpack.c.b16 %v1526, %v1520
    %v1635 = vpack.c.b16 %v1527, %v1521
    %v1636 = vpack.c.b16 %v1528, %v1522
    %v1637 = vpack.c.b16 %v1529, %v1523
    %v1638 = vpack.c.b16 %v1536, %v1530
    %v1639 = vpack.c.b16 %v1537, %v1531
    %v1640 = vpack.c.b16 %v1538, %v1532
    %v1641 = vpack.c.b16 %v1539, %v1533
    %v1642 = vpack.c.b16 %v1540, %v1534
    %v1643 = vpack.c.b16 %v1541, %v1535
    %v1644 = vpack.c.b16 %v1548, %v1542
    %v1645 = vpack.c.b16 %v1549, %v1543
    %v1646 = vpack.c.b16 %v1550, %v1544
    %v1647 = vpack.c.b16 %v1551, %v1545
    %v1648 = vpack.c.b16 %v1552, %v1546
    %v1649 = vpack.c.b16 %v1553, %v1547
    %1746 = vmatprep.subr.bf16.mxu0 %v1555
    %1747 = vmatpush1.bf16.msra.mxu0 %v1554
    %1748 = vmatprep.subr.bf16.mxu0 %v1561
    %1749 = vmatpush1.bf16.msra.mxu0 %v1560
    %1750 = vmatprep.subr.bf16.mxu0 %v1567
    %1751 = vmatpush1.bf16.msra.mxu0 %v1566
    %1752 = vmatprep.subr.bf16.mxu0 %v1573
    %1753 = vmatpush1.bf16.msra.mxu0 %v1572
    %1754 = vmatprep.subr.bf16.mxu0 %v1579
    %1755 = vmatpush1.bf16.msra.mxu0 %v1578
    %1756 = vmatprep.subr.bf16.mxu0 %v1585
    %1757 = vmatpush1.bf16.msra.mxu0 %v1584
    %1758 = vmatprep.subr.bf16.mxu0 %v1591
    %1759 = vmatpush1.bf16.msra.mxu0 %v1590
    %1760 = vmatprep.subr.bf16.mxu0 %v1597
    %1761 = vmatpush1.bf16.msra.mxu0 %v1596
    %1762 = vmatprep.subr.bf16.mxu0 %v1603
    %1763 = vmatpush1.bf16.msra.mxu0 %v1602
    %1764 = vmatprep.subr.bf16.mxu0 %v1609
    %1765 = vmatpush1.bf16.msra.mxu0 %v1608
    %1766 = vmatprep.subr.bf16.mxu0 %v1615
    %1767 = vmatpush1.bf16.msra.mxu0 %v1614
    %1768 = vmatprep.subr.bf16.mxu0 %v1621
    %1769 = vmatpush1.bf16.msra.mxu0 %v1620
    %1770 = vmatprep.subr.bf16.mxu0 %v1627
    %1771 = vmatpush1.bf16.msra.mxu0 %v1626
    %1772 = vmatprep.subr.bf16.mxu0 %v1633
    %1773 = vmatpush1.bf16.msra.mxu0 %v1632
    %1774 = vmatprep.subr.bf16.mxu0 %v1639
    %1775 = vmatpush1.bf16.msra.mxu0 %v1638
    %1776 = vmatprep.subr.bf16.mxu0 %v1645
    %1777 = vmatpush1.bf16.msra.mxu0 %v1644
    %1778 = vmatprep.mubr.bf16.mxu0 %v1167
    %1779 = vmatmul.mubr.bf16.gmra.mrb[0].mxu0 %v1166
    %v1780 = vpop.f32.mrb[0].mxu0
    %v1781 = vadd.f32 0.0, %v1780
    %v1782 = vpop.f32.mrb[0].mxu0
    %v1783 = vadd.f32 0.0, %v1782
    %v1784 = vpop.f32.mrb[0].mxu0
    %v1785 = vadd.f32 0.0, %v1784
    %v1786 = vpop.f32.mrb[0].mxu0
    %v1787 = vadd.f32 0.0, %v1786
    %1788 = vmatprep.mubr.bf16.mxu0 %v1169
    %1789 = vmatmul.mubr.bf16.gmra.mrb[0].mxu0 %v1168
    %v1790 = vpop.f32.mrb[0].mxu0
    %v1791 = vadd.f32 0.0, %v1790
    %v1792 = vpop.f32.mrb[0].mxu0
    %v1793 = vadd.f32 0.0, %v1792
    %v1794 = vpop.f32.mrb[0].mxu0
    %v1795 = vadd.f32 0.0, %v1794
    %v1796 = vpop.f32.mrb[0].mxu0
    %v1797 = vadd.f32 0.0, %v1796
    %1798 = vdwg.mxu0
    %1799 = vmatprep.subr.bf16.mxu0 %v1557
    %1800 = vmatpush1.bf16.msra.mxu0 %v1556
    %1801 = vmatprep.subr.bf16.mxu0 %v1563
    %1802 = vmatpush1.bf16.msra.mxu0 %v1562
    %1803 = vmatprep.subr.bf16.mxu0 %v1569
    %1804 = vmatpush1.bf16.msra.mxu0 %v1568
    %1805 = vmatprep.subr.bf16.mxu0 %v1575
    %1806 = vmatpush1.bf16.msra.mxu0 %v1574
    %1807 = vmatprep.subr.bf16.mxu0 %v1581
    %1808 = vmatpush1.bf16.msra.mxu0 %v1580
    %1809 = vmatprep.subr.bf16.mxu0 %v1587
    %1810 = vmatpush1.bf16.msra.mxu0 %v1586
    %1811 = vmatprep.subr.bf16.mxu0 %v1593
    %1812 = vmatpush1.bf16.msra.mxu0 %v1592
    %1813 = vmatprep.subr.bf16.mxu0 %v1599
    %1814 = vmatpush1.bf16.msra.mxu0 %v1598
    %1815 = vmatprep.subr.bf16.mxu0 %v1605
    %1816 = vmatpush1.bf16.msra.mxu0 %v1604
    %1817 = vmatprep.subr.bf16.mxu0 %v1611
    %1818 = vmatpush1.bf16.msra.mxu0 %v1610
    %1819 = vmatprep.subr.bf16.mxu0 %v1617
    %1820 = vmatpush1.bf16.msra.mxu0 %v1616
    %1821 = vmatprep.subr.bf16.mxu0 %v1623
    %1822 = vmatpush1.bf16.msra.mxu0 %v1622
    %1823 = vmatprep.subr.bf16.mxu0 %v1629
    %1824 = vmatpush1.bf16.msra.mxu0 %v1628
    %1825 = vmatprep.subr.bf16.mxu0 %v1635
    %1826 = vmatpush1.bf16.msra.mxu0 %v1634
    %1827 = vmatprep.subr.bf16.mxu0 %v1641
    %1828 = vmatpush1.bf16.msra.mxu0 %v1640
    %1829 = vmatprep.subr.bf16.mxu0 %v1647
    %1830 = vmatpush1.bf16.msra.mxu0 %v1646
    %1831 = vmatprep.mubr.bf16.mxu0 %v1167
    %1832 = vmatmul.mubr.bf16.gmra.mrb[0].mxu0 %v1166
    %v1833 = vpop.f32.mrb[0].mxu0
    %v1834 = vadd.f32 0.0, %v1833
    %v1835 = vpop.f32.mrb[0].mxu0
    %v1836 = vadd.f32 0.0, %v1835
    %v1837 = vpop.f32.mrb[0].mxu0
    %v1838 = vadd.f32 0.0, %v1837
    %v1839 = vpop.f32.mrb[0].mxu0
    %v1840 = vadd.f32 0.0, %v1839
    %1841 = vmatprep.mubr.bf16.mxu0 %v1169
    %1842 = vmatmul.mubr.bf16.gmra.mrb[0].mxu0 %v1168
    %v1843 = vpop.f32.mrb[0].mxu0
    %v1844 = vadd.f32 0.0, %v1843
    %v1845 = vpop.f32.mrb[0].mxu0
    %v1846 = vadd.f32 0.0, %v1845
    %v1847 = vpop.f32.mrb[0].mxu0
    %v1848 = vadd.f32 0.0, %v1847
    %v1849 = vpop.f32.mrb[0].mxu0
    %v1850 = vadd.f32 0.0, %v1849
    %1851 = vdwg.mxu0
    %1852 = vmatprep.subr.bf16.mxu0 %v1559
    %1853 = vmatpush1.bf16.msra.mxu0 %v1558
    %1854 = vmatprep.subr.bf16.mxu0 %v1565
    %1855 = vmatpush1.bf16.msra.mxu0 %v1564
    %1856 = vmatprep.subr.bf16.mxu0 %v1571
    %1857 = vmatpush1.bf16.msra.mxu0 %v1570
    %1858 = vmatprep.subr.bf16.mxu0 %v1577
    %1859 = vmatpush1.bf16.msra.mxu0 %v1576
    %1860 = vmatprep.subr.bf16.mxu0 %v1583
    %1861 = vmatpush1.bf16.msra.mxu0 %v1582
    %1862 = vmatprep.subr.bf16.mxu0 %v1589
    %1863 = vmatpush1.bf16.msra.mxu0 %v1588
    %1864 = vmatprep.subr.bf16.mxu0 %v1595
    %1865 = vmatpush1.bf16.msra.mxu0 %v1594
    %1866 = vmatprep.subr.bf16.mxu0 %v1601
    %1867 = vmatpush1.bf16.msra.mxu0 %v1600
    %1868 = vmatprep.subr.bf16.mxu0 %v1607
    %1869 = vmatpush1.bf16.msra.mxu0 %v1606
    %1870 = vmatprep.subr.bf16.mxu0 %v1613
    %1871 = vmatpush1.bf16.msra.mxu0 %v1612
    %1872 = vmatprep.subr.bf16.mxu0 %v1619
    %1873 = vmatpush1.bf16.msra.mxu0 %v1618
    %1874 = vmatprep.subr.bf16.mxu0 %v1625
    %1875 = vmatpush1.bf16.msra.mxu0 %v1624
    %1876 = vmatprep.subr.bf16.mxu0 %v1631
    %1877 = vmatpush1.bf16.msra.mxu0 %v1630
    %1878 = vmatprep.subr.bf16.mxu0 %v1637
    %1879 = vmatpush1.bf16.msra.mxu0 %v1636
    %1880 = vmatprep.subr.bf16.mxu0 %v1643
    %1881 = vmatpush1.bf16.msra.mxu0 %v1642
    %1882 = vmatprep.subr.bf16.mxu0 %v1649
    %1883 = vmatpush1.bf16.msra.mxu0 %v1648
    %1884 = vmatprep.mubr.bf16.mxu0 %v1167
    %1885 = vmatmul.mubr.bf16.gmra.mrb[0].mxu0 %v1166
    %v1886 = vpop.f32.mrb[0].mxu0
    %v1887 = vadd.f32 0.0, %v1886
    %v1888 = vpop.f32.mrb[0].mxu0
    %v1889 = vadd.f32 0.0, %v1888
    %v1890 = vpop.f32.mrb[0].mxu0
    %v1891 = vadd.f32 0.0, %v1890
    %v1892 = vpop.f32.mrb[0].mxu0
    %v1893 = vadd.f32 0.0, %v1892
    %1894 = vmatprep.mubr.bf16.mxu0 %v1169
    %1895 = vmatmul.mubr.bf16.gmra.mrb[0].mxu0 %v1168
    %v1896 = vpop.f32.mrb[0].mxu0
    %v1897 = vadd.f32 0.0, %v1896
    %v1898 = vpop.f32.mrb[0].mxu0
    %v1899 = vadd.f32 0.0, %v1898
    %v1900 = vpop.f32.mrb[0].mxu0
    %v1901 = vadd.f32 0.0, %v1900
    %v1902 = vpop.f32.mrb[0].mxu0
    %v1903 = vadd.f32 0.0, %v1902
    %1904 = vdwg.mxu0
    %1905 = vst [vmem:[#allocation2] sm:$0xff] %v1781
    %1906 = vst [vmem:[#allocation2 + $0x8] sm:$0xff] %v1783
    %1907 = vst [vmem:[#allocation2 + $0x10] sm:$0xff] %v1834
    %1908 = vst [vmem:[#allocation2 + $0x18] sm:$0xff] %v1836
    %1909 = vst [vmem:[#allocation2 + $0x20] sm:$0xff] %v1887
    %1910 = vst [vmem:[#allocation2 + $0x28] sm:$0xff] %v1889
    %1911 = vst [vmem:[#allocation2 + $0x30] sm:$0xff] %v1785
    %1912 = vst [vmem:[#allocation2 + $0x38] sm:$0xff] %v1787
    %1913 = vst [vmem:[#allocation2 + $0x40] sm:$0xff] %v1838
    %1914 = vst [vmem:[#allocation2 + $0x48] sm:$0xff] %v1840
    %1915 = vst [vmem:[#allocation2 + $0x50] sm:$0xff] %v1891
    %1916 = vst [vmem:[#allocation2 + $0x58] sm:$0xff] %v1893
    %1917 = vst [vmem:[#allocation2 + $0x60] sm:$0xff] %v1791
    %1918 = vst [vmem:[#allocation2 + $0x68] sm:$0xff] %v1793
    %1919 = vst [vmem:[#allocation2 + $0x70] sm:$0xff] %v1844
    %1920 = vst [vmem:[#allocation2 + $0x78] sm:$0xff] %v1846
    %1921 = vst [vmem:[#allocation2 + $0x80] sm:$0xff] %v1897
    %1922 = vst [vmem:[#allocation2 + $0x88] sm:$0xff] %v1899
    %1923 = vst [vmem:[#allocation2 + $0x90] sm:$0xff] %v1795
    %1924 = vst [vmem:[#allocation2 + $0x98] sm:$0xff] %v1797
    %1925 = vst [vmem:[#allocation2 + $0xa0] sm:$0xff] %v1848
    %1926 = vst [vmem:[#allocation2 + $0xa8] sm:$0xff] %v1850
    %1927 = vst [vmem:[#allocation2 + $0xb0] sm:$0xff] %v1901
    %1928 = vst [vmem:[#allocation2 + $0xb8] sm:$0xff] %v1903
    %v1929 = vld [vmem:[%s4] sm:$0x3]
    %v1930 = vld [vmem:[#allocation2 + $0x10] sm:$0x3]
    %v1931 = vld [vmem:[#allocation2 + $0x18] sm:$0x3]
    %v1933 = vlaneseq
    %v1934 = vshrl.u32 %v1933, 7
    %v1935 = vsub.s32 0, %v1934
    %v1936 = vrot.slane %v1929, %v1935
    %v1937 = vlaneseq
    %v1938 = vshrl.u32 %v1937, 7
    %v1939 = vsub.s32 1, %v1938
    %v1940 = vrot.slane %v1929, %v1939
    %v1943 = vadd.f32 %v1936, %v1930
    %v1944 = vadd.f32 %v1940, %v1931
    %v1945 = vld [vmem:[#allocation2 + $0x20] sm:$0xc]
    %v1946 = vld [vmem:[#allocation2 + $0x28] sm:$0xc]
    %v1949 = vrot.slane %v1945, 2
    %v1950 = vrot.slane %v1946, 2
    %v1953 = vadd.f32 %v1943, %v1949
    %v1954 = vadd.f32 %v1944, %v1950
    %v1955 = vmax.f32 %v1953, 0.0
    %v1956 = vmax.f32 %v1954, 0.0
    %1957 = vst [vmem:[#allocation4] sm:$0x3] %v1955
    %1958 = vst [vmem:[#allocation4 + $0x8] sm:$0x3] %v1956
    %v1959 = vld [vmem:[#allocation2 + $0x10] sm:$0x30]
    %v1960 = vld [vmem:[#allocation2 + $0x18] sm:$0x30]
    %v1961 = vadd.f32 %v1936, %v1959
    %v1962 = vadd.f32 %v1940, %v1960
    %v1963 = vld [vmem:[#allocation2 + $0x20] sm:$0xc0]
    %v1964 = vld [vmem:[#allocation2 + $0x28] sm:$0xc0]
    %v1967 = vrot.slane %v1963, 2
    %v1968 = vrot.slane %v1964, 2
    %v1971 = vadd.f32 %v1961, %v1967
    %v1972 = vadd.f32 %v1962, %v1968
    %v1973 = vld [vmem:[#allocation2] sm:$0xc]
    %v1974 = vld [vmem:[#allocation2 + $0x8] sm:$0xc]
    %v1977 = vrot.slane %v1973, 6
    %v1978 = vrot.slane %v1974, 6
    %v1981 = vadd.f32 %v1971, %v1977
    %v1982 = vadd.f32 %v1972, %v1978
    %v1983 = vmax.f32 %v1981, 0.0
    %v1984 = vmax.f32 %v1982, 0.0
    %v1987 = vrot.slane %v1983, 2
    %v1988 = vrot.slane %v1984, 2
    %1991 = vst [vmem:[#allocation4] sm:$0xc] %v1987
    %1992 = vst [vmem:[#allocation4 + $0x8] sm:$0xc] %v1988
    %v1993 = vld [vmem:[#allocation2 + $0x40] sm:$0x3]
    %v1994 = vld [vmem:[#allocation2 + $0x48] sm:$0x3]
    %v1995 = vadd.f32 %v1936, %v1993
    %v1996 = vadd.f32 %v1940, %v1994
    %v1997 = vld [vmem:[#allocation2 + $0x50] sm:$0xc]
    %v1998 = vld [vmem:[#allocation2 + $0x58] sm:$0xc]
    %v2001 = vrot.slane %v1997, 2
    %v2002 = vrot.slane %v1998, 2
    %v2005 = vadd.f32 %v1995, %v2001
    %v2006 = vadd.f32 %v1996, %v2002
    %v2007 = vld [vmem:[#allocation2] sm:$0xc0]
    %v2008 = vld [vmem:[#allocation2 + $0x8] sm:$0xc0]
    %v2011 = vrot.slane %v2007, 6
    %v2012 = vrot.slane %v2008, 6
    %v2015 = vadd.f32 %v2005, %v2011
    %v2016 = vadd.f32 %v2006, %v2012
    %v2017 = vmax.f32 %v2015, 0.0
    %v2018 = vmax.f32 %v2016, 0.0
    %v2021 = vrot.slane %v2017, 4
    %v2022 = vrot.slane %v2018, 4
    %2025 = vst [vmem:[#allocation4] sm:$0x30] %v2021
    %2026 = vst [vmem:[#allocation4 + $0x8] sm:$0x30] %v2022
    %v2027 = vld [vmem:[#allocation2 + $0x40] sm:$0x30]
    %v2028 = vld [vmem:[#allocation2 + $0x48] sm:$0x30]
    %v2029 = vadd.f32 %v1936, %v2027
    %v2030 = vadd.f32 %v1940, %v2028
    %v2031 = vld [vmem:[#allocation2 + $0x50] sm:$0xc0]
    %v2032 = vld [vmem:[#allocation2 + $0x58] sm:$0xc0]
    %v2035 = vrot.slane %v2031, 2
    %v2036 = vrot.slane %v2032, 2
    %v2039 = vadd.f32 %v2029, %v2035
    %v2040 = vadd.f32 %v2030, %v2036
    %v2041 = vld [vmem:[#allocation2 + $0x30] sm:$0xc]
    %v2042 = vld [vmem:[#allocation2 + $0x38] sm:$0xc]
    %v2045 = vrot.slane %v2041, 6
    %v2046 = vrot.slane %v2042, 6
    %v2049 = vadd.f32 %v2039, %v2045
    %v2050 = vadd.f32 %v2040, %v2046
    %v2051 = vmax.f32 %v2049, 0.0
    %v2052 = vmax.f32 %v2050, 0.0
    %v2055 = vrot.slane %v2051, 6
    %v2056 = vrot.slane %v2052, 6
    %2059 = vst [vmem:[#allocation4] sm:$0xc0] %v2055
    %2060 = vst [vmem:[#allocation4 + $0x8] sm:$0xc0] %v2056
    %v2061 = vld [vmem:[#allocation2 + $0x70] sm:$0x3]
    %v2062 = vld [vmem:[#allocation2 + $0x78] sm:$0x3]
    %v2063 = vadd.f32 %v1936, %v2061
    %v2064 = vadd.f32 %v1940, %v2062
    %v2065 = vld [vmem:[#allocation2 + $0x80] sm:$0xc]
    %v2066 = vld [vmem:[#allocation2 + $0x88] sm:$0xc]
    %v2069 = vrot.slane %v2065, 2
    %v2070 = vrot.slane %v2066, 2
    %v2073 = vadd.f32 %v2063, %v2069
    %v2074 = vadd.f32 %v2064, %v2070
    %v2075 = vld [vmem:[#allocation2 + $0x30] sm:$0xc0]
    %v2076 = vld [vmem:[#allocation2 + $0x38] sm:$0xc0]
    %v2079 = vrot.slane %v2075, 6
    %v2080 = vrot.slane %v2076, 6
    %v2083 = vadd.f32 %v2073, %v2079
    %v2084 = vadd.f32 %v2074, %v2080
    %v2085 = vmax.f32 %v2083, 0.0
    %v2086 = vmax.f32 %v2084, 0.0
    %2087 = vst [vmem:[#allocation4 + $0x10] sm:$0x3] %v2085
    %2088 = vst [vmem:[#allocation4 + $0x18] sm:$0x3] %v2086
    %v2089 = vld [vmem:[#allocation2 + $0x70] sm:$0x30]
    %v2090 = vld [vmem:[#allocation2 + $0x78] sm:$0x30]
    %v2091 = vadd.f32 %v1936, %v2089
    %v2092 = vadd.f32 %v1940, %v2090
    %v2093 = vld [vmem:[#allocation2 + $0x80] sm:$0xc0]
    %v2094 = vld [vmem:[#allocation2 + $0x88] sm:$0xc0]
    %v2097 = vrot.slane %v2093, 2
    %v2098 = vrot.slane %v2094, 2
    %v2101 = vadd.f32 %v2091, %v2097
    %v2102 = vadd.f32 %v2092, %v2098
    %v2103 = vld [vmem:[#allocation2 + $0x60] sm:$0xc]
    %v2104 = vld [vmem:[#allocation2 + $0x68] sm:$0xc]
    %v2107 = vrot.slane %v2103, 6
    %v2108 = vrot.slane %v2104, 6
    %v2111 = vadd.f32 %v2101, %v2107
    %v2112 = vadd.f32 %v2102, %v2108
    %v2113 = vmax.f32 %v2111, 0.0
    %v2114 = vmax.f32 %v2112, 0.0
    %v2117 = vrot.slane %v2113, 2
    %v2118 = vrot.slane %v2114, 2
    %2121 = vst [vmem:[#allocation4 + $0x10] sm:$0xc] %v2117
    %2122 = vst [vmem:[#allocation4 + $0x18] sm:$0xc] %v2118
    %v2123 = vld [vmem:[#allocation2 + $0xa0] sm:$0x3]
    %v2124 = vld [vmem:[#allocation2 + $0xa8] sm:$0x3]
    %v2125 = vadd.f32 %v1936, %v2123
    %v2126 = vadd.f32 %v1940, %v2124
    %v2127 = vld [vmem:[#allocation2 + $0xb0] sm:$0xc]
    %v2128 = vld [vmem:[#allocation2 + $0xb8] sm:$0xc]
    %v2131 = vrot.slane %v2127, 2
    %v2132 = vrot.slane %v2128, 2
    %v2135 = vadd.f32 %v2125, %v2131
    %v2136 = vadd.f32 %v2126, %v2132
    %v2137 = vld [vmem:[#allocation2 + $0x60] sm:$0xc0]
    %v2138 = vld [vmem:[#allocation2 + $0x68] sm:$0xc0]
    %v2141 = vrot.slane %v2137, 6
    %v2142 = vrot.slane %v2138, 6
    %v2145 = vadd.f32 %v2135, %v2141
    %v2146 = vadd.f32 %v2136, %v2142
    %v2147 = vmax.f32 %v2145, 0.0
    %v2148 = vmax.f32 %v2146, 0.0
    %v2151 = vrot.slane %v2147, 4
    %v2152 = vrot.slane %v2148, 4
    %2155 = vst [vmem:[#allocation4 + $0x10] sm:$0x30] %v2151
    %2156 = vst [vmem:[#allocation4 + $0x18] sm:$0x30] %v2152
    %v2157 = vld [vmem:[#allocation2 + $0xa0] sm:$0x30]
    %v2158 = vld [vmem:[#allocation2 + $0xa8] sm:$0x30]
    %v2159 = vadd.f32 %v1936, %v2157
    %v2160 = vadd.f32 %v1940, %v2158
    %v2161 = vld [vmem:[#allocation2 + $0xb0] sm:$0xc0]
    %v2162 = vld [vmem:[#allocation2 + $0xb8] sm:$0xc0]
    %v2165 = vrot.slane %v2161, 2
    %v2166 = vrot.slane %v2162, 2
    %v2169 = vadd.f32 %v2159, %v2165
    %v2170 = vadd.f32 %v2160, %v2166
    %v2171 = vld [vmem:[#allocation2 + $0x90] sm:$0xc]
    %v2172 = vld [vmem:[#allocation2 + $0x98] sm:$0xc]
    %v2175 = vrot.slane %v2171, 6
    %v2176 = vrot.slane %v2172, 6
    %v2179 = vadd.f32 %v2169, %v2175
    %v2180 = vadd.f32 %v2170, %v2176
    %v2181 = vmax.f32 %v2179, 0.0
    %v2182 = vmax.f32 %v2180, 0.0
    %v2185 = vrot.slane %v2181, 6
    %v2186 = vrot.slane %v2182, 6
    %2189 = vst [vmem:[#allocation4 + $0x10] sm:$0xc0] %v2185
    %2190 = vst [vmem:[#allocation4 + $0x18] sm:$0xc0] %v2186
    %v2191 = vld [vmem:[#allocation4] sm:$0xff]
    %v2192 = vld [vmem:[#allocation4 + $0x8] sm:$0xff]
    %v2193 = vld [vmem:[#allocation4 + $0x10] sm:$0xff]
    %v2194 = vld [vmem:[#allocation4 + $0x18] sm:$0xff]
    %v2195 = vpack.c.bf16 %v2193, %v2191
    %v2196 = vpack.c.bf16 %v2194, %v2192
    %v2197 = vld [vmem:[#allocation16] sm:$0xff]
    %v2198 = vld [vmem:[#allocation16 + $0x8] sm:$0xff]
    %v2199 = vld [vmem:[#allocation16 + $0x10] sm:$0xff]
    %v2200 = vld [vmem:[#allocation16 + $0x18] sm:$0xff]
    %v2201 = vld [vmem:[#allocation16 + $0x20] sm:$0xff]
    %v2202 = vld [vmem:[#allocation16 + $0x28] sm:$0xff]
    %v2203 = vld [vmem:[#allocation16 + $0x30] sm:$0xff]
    %v2204 = vld [vmem:[#allocation16 + $0x38] sm:$0xff]
    %v2205 = vld [vmem:[#allocation16 + $0x40] sm:$0xff]
    %v2206 = vld [vmem:[#allocation16 + $0x48] sm:$0xff]
    %v2207 = vld [vmem:[#allocation16 + $0x50] sm:$0xff]
    %v2208 = vld [vmem:[#allocation16 + $0x58] sm:$0xff]
    %v2209 = vld [vmem:[#allocation16 + $0x60] sm:$0xff]
    %v2210 = vld [vmem:[#allocation16 + $0x68] sm:$0xff]
    %v2211 = vld [vmem:[#allocation16 + $0x70] sm:$0xff]
    %v2212 = vld [vmem:[#allocation16 + $0x78] sm:$0xff]
    %v2213 = vld [vmem:[#allocation16 + $0x80] sm:$0xff]
    %v2214 = vld [vmem:[#allocation16 + $0x88] sm:$0xff]
    %v2215 = vld [vmem:[#allocation16 + $0x90] sm:$0xff]
    %v2216 = vld [vmem:[#allocation16 + $0x98] sm:$0xff]
    %v2217 = vld [vmem:[#allocation16 + $0xa0] sm:$0xff]
    %v2218 = vld [vmem:[#allocation16 + $0xa8] sm:$0xff]
    %v2219 = vld [vmem:[#allocation16 + $0xb0] sm:$0xff]
    %v2220 = vld [vmem:[#allocation16 + $0xb8] sm:$0xff]
    %v2221 = vld [vmem:[#allocation16 + $0xc0] sm:$0xff]
    %v2222 = vld [vmem:[#allocation16 + $0xc8] sm:$0xff]
    %v2223 = vld [vmem:[#allocation16 + $0xd0] sm:$0xff]
    %v2224 = vld [vmem:[#allocation16 + $0xd8] sm:$0xff]
    %v2225 = vld [vmem:[#allocation16 + $0xe0] sm:$0xff]
    %v2226 = vld [vmem:[#allocation16 + $0xe8] sm:$0xff]
    %v2227 = vld [vmem:[#allocation16 + $0xf0] sm:$0xff]
    %v2228 = vld [vmem:[#allocation16 + $0xf8] sm:$0xff]
    %v2229 = vld [vmem:[#allocation16 + $0x100] sm:$0xff]
    %v2230 = vld [vmem:[#allocation16 + $0x108] sm:$0xff]
    %v2231 = vld [vmem:[#allocation16 + $0x110] sm:$0xff]
    %v2232 = vld [vmem:[#allocation16 + $0x118] sm:$0xff]
    %v2233 = vld [vmem:[#allocation16 + $0x120] sm:$0xff]
    %v2234 = vld [vmem:[#allocation16 + $0x128] sm:$0xff]
    %v2235 = vld [vmem:[#allocation16 + $0x130] sm:$0xff]
    %v2236 = vld [vmem:[#allocation16 + $0x138] sm:$0xff]
    %v2237 = vld [vmem:[#allocation16 + $0x140] sm:$0xff]
    %v2238 = vld [vmem:[#allocation16 + $0x148] sm:$0xff]
    %v2239 = vld [vmem:[#allocation16 + $0x150] sm:$0xff]
    %v2240 = vld [vmem:[#allocation16 + $0x158] sm:$0xff]
    %v2241 = vld [vmem:[#allocation16 + $0x160] sm:$0xff]
    %v2242 = vld [vmem:[#allocation16 + $0x168] sm:$0xff]
    %v2243 = vld [vmem:[#allocation16 + $0x170] sm:$0xff]
    %v2244 = vld [vmem:[#allocation16 + $0x178] sm:$0xff]
    %v2245 = vld [vmem:[#allocation16 + $0x180] sm:$0xff]
    %v2246 = vld [vmem:[#allocation16 + $0x188] sm:$0xff]
    %v2247 = vld [vmem:[#allocation16 + $0x190] sm:$0xff]
    %v2248 = vld [vmem:[#allocation16 + $0x198] sm:$0xff]
    %v2249 = vld [vmem:[#allocation16 + $0x1a0] sm:$0xff]
    %v2250 = vld [vmem:[#allocation16 + $0x1a8] sm:$0xff]
    %v2251 = vld [vmem:[#allocation16 + $0x1b0] sm:$0xff]
    %v2252 = vld [vmem:[#allocation16 + $0x1b8] sm:$0xff]
    %v2253 = vld [vmem:[#allocation16 + $0x1c0] sm:$0xff]
    %v2254 = vld [vmem:[#allocation16 + $0x1c8] sm:$0xff]
    %v2255 = vld [vmem:[#allocation16 + $0x1d0] sm:$0xff]
    %v2256 = vld [vmem:[#allocation16 + $0x1d8] sm:$0xff]
    %v2257 = vld [vmem:[#allocation16 + $0x1e0] sm:$0xff]
    %v2258 = vld [vmem:[#allocation16 + $0x1e8] sm:$0xff]
    %v2259 = vld [vmem:[#allocation16 + $0x1f0] sm:$0xff]
    %v2260 = vld [vmem:[#allocation16 + $0x1f8] sm:$0xff]
    %v2261 = vld [vmem:[#allocation16 + $0x200] sm:$0xff]
    %v2262 = vld [vmem:[#allocation16 + $0x208] sm:$0xff]
    %v2263 = vld [vmem:[#allocation16 + $0x210] sm:$0xff]
    %v2264 = vld [vmem:[#allocation16 + $0x218] sm:$0xff]
    %v2265 = vld [vmem:[#allocation16 + $0x220] sm:$0xff]
    %v2266 = vld [vmem:[#allocation16 + $0x228] sm:$0xff]
    %v2267 = vld [vmem:[#allocation16 + $0x230] sm:$0xff]
    %v2268 = vld [vmem:[#allocation16 + $0x238] sm:$0xff]
    %v2269 = vld [vmem:[#allocation16 + $0x240] sm:$0xff]
    %v2270 = vld [vmem:[#allocation16 + $0x248] sm:$0xff]
    %v2271 = vld [vmem:[#allocation16 + $0x250] sm:$0xff]
    %v2272 = vld [vmem:[#allocation16 + $0x258] sm:$0xff]
    %v2273 = vld [vmem:[#allocation16 + $0x260] sm:$0xff]
    %v2274 = vld [vmem:[#allocation16 + $0x268] sm:$0xff]
    %v2275 = vld [vmem:[#allocation16 + $0x270] sm:$0xff]
    %v2276 = vld [vmem:[#allocation16 + $0x278] sm:$0xff]
    %v2277 = vld [vmem:[#allocation16 + $0x280] sm:$0xff]
    %v2278 = vld [vmem:[#allocation16 + $0x288] sm:$0xff]
    %v2279 = vld [vmem:[#allocation16 + $0x290] sm:$0xff]
    %v2280 = vld [vmem:[#allocation16 + $0x298] sm:$0xff]
    %v2281 = vld [vmem:[#allocation16 + $0x2a0] sm:$0xff]
    %v2282 = vld [vmem:[#allocation16 + $0x2a8] sm:$0xff]
    %v2283 = vld [vmem:[#allocation16 + $0x2b0] sm:$0xff]
    %v2284 = vld [vmem:[#allocation16 + $0x2b8] sm:$0xff]
    %v2285 = vld [vmem:[#allocation16 + $0x2c0] sm:$0xff]
    %v2286 = vld [vmem:[#allocation16 + $0x2c8] sm:$0xff]
    %v2287 = vld [vmem:[#allocation16 + $0x2d0] sm:$0xff]
    %v2288 = vld [vmem:[#allocation16 + $0x2d8] sm:$0xff]
    %v2289 = vld [vmem:[#allocation16 + $0x2e0] sm:$0xff]
    %v2290 = vld [vmem:[#allocation16 + $0x2e8] sm:$0xff]
    %v2291 = vld [vmem:[#allocation16 + $0x2f0] sm:$0xff]
    %v2292 = vld [vmem:[#allocation16 + $0x2f8] sm:$0xff]
    %v2389 = vunpack.c.l.b16 %v2197
    %v2390 = vunpack.c.h.b16 %v2197
    %v2391 = vunpack.c.l.b16 %v2198
    %v2392 = vunpack.c.h.b16 %v2198
    %v2393 = vunpack.c.l.b16 %v2199
    %v2394 = vunpack.c.h.b16 %v2199
    %v2395 = vunpack.c.l.b16 %v2200
    %v2396 = vunpack.c.h.b16 %v2200
    %v2397 = vunpack.c.l.b16 %v2201
    %v2398 = vunpack.c.h.b16 %v2201
    %v2399 = vunpack.c.l.b16 %v2202
    %v2400 = vunpack.c.h.b16 %v2202
    %v2401 = vunpack.c.l.b16 %v2203
    %v2402 = vunpack.c.h.b16 %v2203
    %v2403 = vunpack.c.l.b16 %v2204
    %v2404 = vunpack.c.h.b16 %v2204
    %v2405 = vunpack.c.l.b16 %v2205
    %v2406 = vunpack.c.h.b16 %v2205
    %v2407 = vunpack.c.l.b16 %v2206
    %v2408 = vunpack.c.h.b16 %v2206
    %v2409 = vunpack.c.l.b16 %v2207
    %v2410 = vunpack.c.h.b16 %v2207
    %v2411 = vunpack.c.l.b16 %v2208
    %v2412 = vunpack.c.h.b16 %v2208
    %v2413 = vunpack.c.l.b16 %v2209
    %v2414 = vunpack.c.h.b16 %v2209
    %v2415 = vunpack.c.l.b16 %v2210
    %v2416 = vunpack.c.h.b16 %v2210
    %v2417 = vunpack.c.l.b16 %v2211
    %v2418 = vunpack.c.h.b16 %v2211
    %v2419 = vunpack.c.l.b16 %v2212
    %v2420 = vunpack.c.h.b16 %v2212
    %v2421 = vunpack.c.l.b16 %v2213
    %v2422 = vunpack.c.h.b16 %v2213
    %v2423 = vunpack.c.l.b16 %v2214
    %v2424 = vunpack.c.h.b16 %v2214
    %v2425 = vunpack.c.l.b16 %v2215
    %v2426 = vunpack.c.h.b16 %v2215
    %v2427 = vunpack.c.l.b16 %v2216
    %v2428 = vunpack.c.h.b16 %v2216
    %v2429 = vunpack.c.l.b16 %v2217
    %v2430 = vunpack.c.h.b16 %v2217
    %v2431 = vunpack.c.l.b16 %v2218
    %v2432 = vunpack.c.h.b16 %v2218
    %v2433 = vunpack.c.l.b16 %v2219
    %v2434 = vunpack.c.h.b16 %v2219
    %v2435 = vunpack.c.l.b16 %v2220
    %v2436 = vunpack.c.h.b16 %v2220
    %v2437 = vunpack.c.l.b16 %v2221
    %v2438 = vunpack.c.h.b16 %v2221
    %v2439 = vunpack.c.l.b16 %v2222
    %v2440 = vunpack.c.h.b16 %v2222
    %v2441 = vunpack.c.l.b16 %v2223
    %v2442 = vunpack.c.h.b16 %v2223
    %v2443 = vunpack.c.l.b16 %v2224
    %v2444 = vunpack.c.h.b16 %v2224
    %v2445 = vunpack.c.l.b16 %v2225
    %v2446 = vunpack.c.h.b16 %v2225
    %v2447 = vunpack.c.l.b16 %v2226
    %v2448 = vunpack.c.h.b16 %v2226
    %v2449 = vunpack.c.l.b16 %v2227
    %v2450 = vunpack.c.h.b16 %v2227
    %v2451 = vunpack.c.l.b16 %v2228
    %v2452 = vunpack.c.h.b16 %v2228
    %v2453 = vunpack.c.l.b16 %v2229
    %v2454 = vunpack.c.h.b16 %v2229
    %v2455 = vunpack.c.l.b16 %v2230
    %v2456 = vunpack.c.h.b16 %v2230
    %v2457 = vunpack.c.l.b16 %v2231
    %v2458 = vunpack.c.h.b16 %v2231
    %v2459 = vunpack.c.l.b16 %v2232
    %v2460 = vunpack.c.h.b16 %v2232
    %v2461 = vunpack.c.l.b16 %v2233
    %v2462 = vunpack.c.h.b16 %v2233
    %v2463 = vunpack.c.l.b16 %v2234
    %v2464 = vunpack.c.h.b16 %v2234
    %v2465 = vunpack.c.l.b16 %v2235
    %v2466 = vunpack.c.h.b16 %v2235
    %v2467 = vunpack.c.l.b16 %v2236
    %v2468 = vunpack.c.h.b16 %v2236
    %v2469 = vunpack.c.l.b16 %v2237
    %v2470 = vunpack.c.h.b16 %v2237
    %v2471 = vunpack.c.l.b16 %v2238
    %v2472 = vunpack.c.h.b16 %v2238
    %v2473 = vunpack.c.l.b16 %v2239
    %v2474 = vunpack.c.h.b16 %v2239
    %v2475 = vunpack.c.l.b16 %v2240
    %v2476 = vunpack.c.h.b16 %v2240
    %v2477 = vunpack.c.l.b16 %v2241
    %v2478 = vunpack.c.h.b16 %v2241
    %v2479 = vunpack.c.l.b16 %v2242
    %v2480 = vunpack.c.h.b16 %v2242
    %v2481 = vunpack.c.l.b16 %v2243
    %v2482 = vunpack.c.h.b16 %v2243
    %v2483 = vunpack.c.l.b16 %v2244
    %v2484 = vunpack.c.h.b16 %v2244
    %v2485 = vunpack.c.l.b16 %v2245
    %v2486 = vunpack.c.h.b16 %v2245
    %v2487 = vunpack.c.l.b16 %v2246
    %v2488 = vunpack.c.h.b16 %v2246
    %v2489 = vunpack.c.l.b16 %v2247
    %v2490 = vunpack.c.h.b16 %v2247
    %v2491 = vunpack.c.l.b16 %v2248
    %v2492 = vunpack.c.h.b16 %v2248
    %v2493 = vunpack.c.l.b16 %v2249
    %v2494 = vunpack.c.h.b16 %v2249
    %v2495 = vunpack.c.l.b16 %v2250
    %v2496 = vunpack.c.h.b16 %v2250
    %v2497 = vunpack.c.l.b16 %v2251
    %v2498 = vunpack.c.h.b16 %v2251
    %v2499 = vunpack.c.l.b16 %v2252
    %v2500 = vunpack.c.h.b16 %v2252
    %v2501 = vunpack.c.l.b16 %v2253
    %v2502 = vunpack.c.h.b16 %v2253
    %v2503 = vunpack.c.l.b16 %v2254
    %v2504 = vunpack.c.h.b16 %v2254
    %v2505 = vunpack.c.l.b16 %v2255
    %v2506 = vunpack.c.h.b16 %v2255
    %v2507 = vunpack.c.l.b16 %v2256
    %v2508 = vunpack.c.h.b16 %v2256
    %v2509 = vunpack.c.l.b16 %v2257
    %v2510 = vunpack.c.h.b16 %v2257
    %v2511 = vunpack.c.l.b16 %v2258
    %v2512 = vunpack.c.h.b16 %v2258
    %v2513 = vunpack.c.l.b16 %v2259
    %v2514 = vunpack.c.h.b16 %v2259
    %v2515 = vunpack.c.l.b16 %v2260
    %v2516 = vunpack.c.h.b16 %v2260
    %v2517 = vunpack.c.l.b16 %v2261
    %v2518 = vunpack.c.h.b16 %v2261
    %v2519 = vunpack.c.l.b16 %v2262
    %v2520 = vunpack.c.h.b16 %v2262
    %v2521 = vunpack.c.l.b16 %v2263
    %v2522 = vunpack.c.h.b16 %v2263
    %v2523 = vunpack.c.l.b16 %v2264
    %v2524 = vunpack.c.h.b16 %v2264
    %v2525 = vunpack.c.l.b16 %v2265
    %v2526 = vunpack.c.h.b16 %v2265
    %v2527 = vunpack.c.l.b16 %v2266
    %v2528 = vunpack.c.h.b16 %v2266
    %v2529 = vunpack.c.l.b16 %v2267
    %v2530 = vunpack.c.h.b16 %v2267
    %v2531 = vunpack.c.l.b16 %v2268
    %v2532 = vunpack.c.h.b16 %v2268
    %v2533 = vunpack.c.l.b16 %v2269
    %v2534 = vunpack.c.h.b16 %v2269
    %v2535 = vunpack.c.l.b16 %v2270
    %v2536 = vunpack.c.h.b16 %v2270
    %v2537 = vunpack.c.l.b16 %v2271
    %v2538 = vunpack.c.h.b16 %v2271
    %v2539 = vunpack.c.l.b16 %v2272
    %v2540 = vunpack.c.h.b16 %v2272
    %v2541 = vunpack.c.l.b16 %v2273
    %v2542 = vunpack.c.h.b16 %v2273
    %v2543 = vunpack.c.l.b16 %v2274
    %v2544 = vunpack.c.h.b16 %v2274
    %v2545 = vunpack.c.l.b16 %v2275
    %v2546 = vunpack.c.h.b16 %v2275
    %v2547 = vunpack.c.l.b16 %v2276
    %v2548 = vunpack.c.h.b16 %v2276
    %v2549 = vunpack.c.l.b16 %v2277
    %v2550 = vunpack.c.h.b16 %v2277
    %v2551 = vunpack.c.l.b16 %v2278
    %v2552 = vunpack.c.h.b16 %v2278
    %v2553 = vunpack.c.l.b16 %v2279
    %v2554 = vunpack.c.h.b16 %v2279
    %v2555 = vunpack.c.l.b16 %v2280
    %v2556 = vunpack.c.h.b16 %v2280
    %v2557 = vunpack.c.l.b16 %v2281
    %v2558 = vunpack.c.h.b16 %v2281
    %v2559 = vunpack.c.l.b16 %v2282
    %v2560 = vunpack.c.h.b16 %v2282
    %v2561 = vunpack.c.l.b16 %v2283
    %v2562 = vunpack.c.h.b16 %v2283
    %v2563 = vunpack.c.l.b16 %v2284
    %v2564 = vunpack.c.h.b16 %v2284
    %v2565 = vunpack.c.l.b16 %v2285
    %v2566 = vunpack.c.h.b16 %v2285
    %v2567 = vunpack.c.l.b16 %v2286
    %v2568 = vunpack.c.h.b16 %v2286
    %v2569 = vunpack.c.l.b16 %v2287
    %v2570 = vunpack.c.h.b16 %v2287
    %v2571 = vunpack.c.l.b16 %v2288
    %v2572 = vunpack.c.h.b16 %v2288
    %v2573 = vunpack.c.l.b16 %v2289
    %v2574 = vunpack.c.h.b16 %v2289
    %v2575 = vunpack.c.l.b16 %v2290
    %v2576 = vunpack.c.h.b16 %v2290
    %v2577 = vunpack.c.l.b16 %v2291
    %v2578 = vunpack.c.h.b16 %v2291
    %v2579 = vunpack.c.l.b16 %v2292
    %v2580 = vunpack.c.h.b16 %v2292
    %v2581 = vpack.c.b16 %v2395, %v2389
    %v2582 = vpack.c.b16 %v2396, %v2390
    %v2583 = vpack.c.b16 %v2397, %v2391
    %v2584 = vpack.c.b16 %v2398, %v2392
    %v2585 = vpack.c.b16 %v2399, %v2393
    %v2586 = vpack.c.b16 %v2400, %v2394
    %v2587 = vpack.c.b16 %v2407, %v2401
    %v2588 = vpack.c.b16 %v2408, %v2402
    %v2589 = vpack.c.b16 %v2409, %v2403
    %v2590 = vpack.c.b16 %v2410, %v2404
    %v2591 = vpack.c.b16 %v2411, %v2405
    %v2592 = vpack.c.b16 %v2412, %v2406
    %v2593 = vpack.c.b16 %v2419, %v2413
    %v2594 = vpack.c.b16 %v2420, %v2414
    %v2595 = vpack.c.b16 %v2421, %v2415
    %v2596 = vpack.c.b16 %v2422, %v2416
    %v2597 = vpack.c.b16 %v2423, %v2417
    %v2598 = vpack.c.b16 %v2424, %v2418
    %v2599 = vpack.c.b16 %v2431, %v2425
    %v2600 = vpack.c.b16 %v2432, %v2426
    %v2601 = vpack.c.b16 %v2433, %v2427
    %v2602 = vpack.c.b16 %v2434, %v2428
    %v2603 = vpack.c.b16 %v2435, %v2429
    %v2604 = vpack.c.b16 %v2436, %v2430
    %v2605 = vpack.c.b16 %v2443, %v2437
    %v2606 = vpack.c.b16 %v2444, %v2438
    %v2607 = vpack.c.b16 %v2445, %v2439
    %v2608 = vpack.c.b16 %v2446, %v2440
    %v2609 = vpack.c.b16 %v2447, %v2441
    %v2610 = vpack.c.b16 %v2448, %v2442
    %v2611 = vpack.c.b16 %v2455, %v2449
    %v2612 = vpack.c.b16 %v2456, %v2450
    %v2613 = vpack.c.b16 %v2457, %v2451
    %v2614 = vpack.c.b16 %v2458, %v2452
    %v2615 = vpack.c.b16 %v2459, %v2453
    %v2616 = vpack.c.b16 %v2460, %v2454
    %v2617 = vpack.c.b16 %v2467, %v2461
    %v2618 = vpack.c.b16 %v2468, %v2462
    %v2619 = vpack.c.b16 %v2469, %v2463
    %v2620 = vpack.c.b16 %v2470, %v2464
    %v2621 = vpack.c.b16 %v2471, %v2465
    %v2622 = vpack.c.b16 %v2472, %v2466
    %v2623 = vpack.c.b16 %v2479, %v2473
    %v2624 = vpack.c.b16 %v2480, %v2474
    %v2625 = vpack.c.b16 %v2481, %v2475
    %v2626 = vpack.c.b16 %v2482, %v2476
    %v2627 = vpack.c.b16 %v2483, %v2477
    %v2628 = vpack.c.b16 %v2484, %v2478
    %v2629 = vpack.c.b16 %v2491, %v2485
    %v2630 = vpack.c.b16 %v2492, %v2486
    %v2631 = vpack.c.b16 %v2493, %v2487
    %v2632 = vpack.c.b16 %v2494, %v2488
    %v2633 = vpack.c.b16 %v2495, %v2489
    %v2634 = vpack.c.b16 %v2496, %v2490
    %v2635 = vpack.c.b16 %v2503, %v2497
    %v2636 = vpack.c.b16 %v2504, %v2498
    %v2637 = vpack.c.b16 %v2505, %v2499
    %v2638 = vpack.c.b16 %v2506, %v2500
    %v2639 = vpack.c.b16 %v2507, %v2501
    %v2640 = vpack.c.b16 %v2508, %v2502
    %v2641 = vpack.c.b16 %v2515, %v2509
    %v2642 = vpack.c.b16 %v2516, %v2510
    %v2643 = vpack.c.b16 %v2517, %v2511
    %v2644 = vpack.c.b16 %v2518, %v2512
    %v2645 = vpack.c.b16 %v2519, %v2513
    %v2646 = vpack.c.b16 %v2520, %v2514
    %v2647 = vpack.c.b16 %v2527, %v2521
    %v2648 = vpack.c.b16 %v2528, %v2522
    %v2649 = vpack.c.b16 %v2529, %v2523
    %v2650 = vpack.c.b16 %v2530, %v2524
    %v2651 = vpack.c.b16 %v2531, %v2525
    %v2652 = vpack.c.b16 %v2532, %v2526
    %v2653 = vpack.c.b16 %v2539, %v2533
    %v2654 = vpack.c.b16 %v2540, %v2534
    %v2655 = vpack.c.b16 %v2541, %v2535
    %v2656 = vpack.c.b16 %v2542, %v2536
    %v2657 = vpack.c.b16 %v2543, %v2537
    %v2658 = vpack.c.b16 %v2544, %v2538
    %v2659 = vpack.c.b16 %v2551, %v2545
    %v2660 = vpack.c.b16 %v2552, %v2546
    %v2661 = vpack.c.b16 %v2553, %v2547
    %v2662 = vpack.c.b16 %v2554, %v2548
    %v2663 = vpack.c.b16 %v2555, %v2549
    %v2664 = vpack.c.b16 %v2556, %v2550
    %v2665 = vpack.c.b16 %v2563, %v2557
    %v2666 = vpack.c.b16 %v2564, %v2558
    %v2667 = vpack.c.b16 %v2565, %v2559
    %v2668 = vpack.c.b16 %v2566, %v2560
    %v2669 = vpack.c.b16 %v2567, %v2561
    %v2670 = vpack.c.b16 %v2568, %v2562
    %v2671 = vpack.c.b16 %v2575, %v2569
    %v2672 = vpack.c.b16 %v2576, %v2570
    %v2673 = vpack.c.b16 %v2577, %v2571
    %v2674 = vpack.c.b16 %v2578, %v2572
    %v2675 = vpack.c.b16 %v2579, %v2573
    %v2676 = vpack.c.b16 %v2580, %v2574
    %2773 = vmatprep.subr.bf16.mxu0 %v2582
    %2774 = vmatpush1.bf16.msra.mxu0 %v2581
    %2775 = vmatprep.subr.bf16.mxu0 %v2588
    %2776 = vmatpush1.bf16.msra.mxu0 %v2587
    %2777 = vmatprep.subr.bf16.mxu0 %v2594
    %2778 = vmatpush1.bf16.msra.mxu0 %v2593
    %2779 = vmatprep.subr.bf16.mxu0 %v2600
    %2780 = vmatpush1.bf16.msra.mxu0 %v2599
    %2781 = vmatprep.subr.bf16.mxu0 %v2606
    %2782 = vmatpush1.bf16.msra.mxu0 %v2605
    %2783 = vmatprep.subr.bf16.mxu0 %v2612
    %2784 = vmatpush1.bf16.msra.mxu0 %v2611
    %2785 = vmatprep.subr.bf16.mxu0 %v2618
    %2786 = vmatpush1.bf16.msra.mxu0 %v2617
    %2787 = vmatprep.subr.bf16.mxu0 %v2624
    %2788 = vmatpush1.bf16.msra.mxu0 %v2623
    %2789 = vmatprep.subr.bf16.mxu0 %v2630
    %2790 = vmatpush1.bf16.msra.mxu0 %v2629
    %2791 = vmatprep.subr.bf16.mxu0 %v2636
    %2792 = vmatpush1.bf16.msra.mxu0 %v2635
    %2793 = vmatprep.subr.bf16.mxu0 %v2642
    %2794 = vmatpush1.bf16.msra.mxu0 %v2641
    %2795 = vmatprep.subr.bf16.mxu0 %v2648
    %2796 = vmatpush1.bf16.msra.mxu0 %v2647
    %2797 = vmatprep.subr.bf16.mxu0 %v2654
    %2798 = vmatpush1.bf16.msra.mxu0 %v2653
    %2799 = vmatprep.subr.bf16.mxu0 %v2660
    %2800 = vmatpush1.bf16.msra.mxu0 %v2659
    %2801 = vmatprep.subr.bf16.mxu0 %v2666
    %2802 = vmatpush1.bf16.msra.mxu0 %v2665
    %2803 = vmatprep.subr.bf16.mxu0 %v2672
    %2804 = vmatpush1.bf16.msra.mxu0 %v2671
    %2805 = vmatprep.mubr.bf16.mxu0 %v2196
    %2806 = vmatmul.mubr.bf16.gmra.mrb[0].mxu0 %v2195
    %v2807 = vpop.f32.mrb[0].mxu0
    %v2808 = vadd.f32 0.0, %v2807
    %v2809 = vpop.f32.mrb[0].mxu0
    %v2810 = vadd.f32 0.0, %v2809
    %v2811 = vpop.f32.mrb[0].mxu0
    %v2812 = vadd.f32 0.0, %v2811
    %v2813 = vpop.f32.mrb[0].mxu0
    %v2814 = vadd.f32 0.0, %v2813
    %2815 = vdwg.mxu0
    %2816 = vmatprep.subr.bf16.mxu0 %v2584
    %2817 = vmatpush1.bf16.msra.mxu0 %v2583
    %2818 = vmatprep.subr.bf16.mxu0 %v2590
    %2819 = vmatpush1.bf16.msra.mxu0 %v2589
    %2820 = vmatprep.subr.bf16.mxu0 %v2596
    %2821 = vmatpush1.bf16.msra.mxu0 %v2595
    %2822 = vmatprep.subr.bf16.mxu0 %v2602
    %2823 = vmatpush1.bf16.msra.mxu0 %v2601
    %2824 = vmatprep.subr.bf16.mxu0 %v2608
    %2825 = vmatpush1.bf16.msra.mxu0 %v2607
    %2826 = vmatprep.subr.bf16.mxu0 %v2614
    %2827 = vmatpush1.bf16.msra.mxu0 %v2613
    %2828 = vmatprep.subr.bf16.mxu0 %v2620
    %2829 = vmatpush1.bf16.msra.mxu0 %v2619
    %2830 = vmatprep.subr.bf16.mxu0 %v2626
    %2831 = vmatpush1.bf16.msra.mxu0 %v2625
    %2832 = vmatprep.subr.bf16.mxu0 %v2632
    %2833 = vmatpush1.bf16.msra.mxu0 %v2631
    %2834 = vmatprep.subr.bf16.mxu0 %v2638
    %2835 = vmatpush1.bf16.msra.mxu0 %v2637
    %2836 = vmatprep.subr.bf16.mxu0 %v2644
    %2837 = vmatpush1.bf16.msra.mxu0 %v2643
    %2838 = vmatprep.subr.bf16.mxu0 %v2650
    %2839 = vmatpush1.bf16.msra.mxu0 %v2649
    %2840 = vmatprep.subr.bf16.mxu0 %v2656
    %2841 = vmatpush1.bf16.msra.mxu0 %v2655
    %2842 = vmatprep.subr.bf16.mxu0 %v2662
    %2843 = vmatpush1.bf16.msra.mxu0 %v2661
    %2844 = vmatprep.subr.bf16.mxu0 %v2668
    %2845 = vmatpush1.bf16.msra.mxu0 %v2667
    %2846 = vmatprep.subr.bf16.mxu0 %v2674
    %2847 = vmatpush1.bf16.msra.mxu0 %v2673
    %2848 = vmatprep.mubr.bf16.mxu0 %v2196
    %2849 = vmatmul.mubr.bf16.gmra.mrb[0].mxu0 %v2195
    %v2850 = vpop.f32.mrb[0].mxu0
    %v2851 = vadd.f32 0.0, %v2850
    %v2852 = vpop.f32.mrb[0].mxu0
    %v2853 = vadd.f32 0.0, %v2852
    %v2854 = vpop.f32.mrb[0].mxu0
    %v2855 = vadd.f32 0.0, %v2854
    %v2856 = vpop.f32.mrb[0].mxu0
    %v2857 = vadd.f32 0.0, %v2856
    %2858 = vdwg.mxu0
    %2859 = vmatprep.subr.bf16.mxu0 %v2586
    %2860 = vmatpush1.bf16.msra.mxu0 %v2585
    %2861 = vmatprep.subr.bf16.mxu0 %v2592
    %2862 = vmatpush1.bf16.msra.mxu0 %v2591
    %2863 = vmatprep.subr.bf16.mxu0 %v2598
    %2864 = vmatpush1.bf16.msra.mxu0 %v2597
    %2865 = vmatprep.subr.bf16.mxu0 %v2604
    %2866 = vmatpush1.bf16.msra.mxu0 %v2603
    %2867 = vmatprep.subr.bf16.mxu0 %v2610
    %2868 = vmatpush1.bf16.msra.mxu0 %v2609
    %2869 = vmatprep.subr.bf16.mxu0 %v2616
    %2870 = vmatpush1.bf16.msra.mxu0 %v2615
    %2871 = vmatprep.subr.bf16.mxu0 %v2622
    %2872 = vmatpush1.bf16.msra.mxu0 %v2621
    %2873 = vmatprep.subr.bf16.mxu0 %v2628
    %2874 = vmatpush1.bf16.msra.mxu0 %v2627
    %2875 = vmatprep.subr.bf16.mxu0 %v2634
    %2876 = vmatpush1.bf16.msra.mxu0 %v2633
    %2877 = vmatprep.subr.bf16.mxu0 %v2640
    %2878 = vmatpush1.bf16.msra.mxu0 %v2639
    %2879 = vmatprep.subr.bf16.mxu0 %v2646
    %2880 = vmatpush1.bf16.msra.mxu0 %v2645
    %2881 = vmatprep.subr.bf16.mxu0 %v2652
    %2882 = vmatpush1.bf16.msra.mxu0 %v2651
    %2883 = vmatprep.subr.bf16.mxu0 %v2658
    %2884 = vmatpush1.bf16.msra.mxu0 %v2657
    %2885 = vmatprep.subr.bf16.mxu0 %v2664
    %2886 = vmatpush1.bf16.msra.mxu0 %v2663
    %2887 = vmatprep.subr.bf16.mxu0 %v2670
    %2888 = vmatpush1.bf16.msra.mxu0 %v2669
    %2889 = vmatprep.subr.bf16.mxu0 %v2676
    %2890 = vmatpush1.bf16.msra.mxu0 %v2675
    %2891 = vmatprep.mubr.bf16.mxu0 %v2196
    %2892 = vmatmul.mubr.bf16.gmra.mrb[0].mxu0 %v2195
    %v2893 = vpop.f32.mrb[0].mxu0
    %v2894 = vadd.f32 0.0, %v2893
    %v2895 = vpop.f32.mrb[0].mxu0
    %v2896 = vadd.f32 0.0, %v2895
    %v2897 = vpop.f32.mrb[0].mxu0
    %v2898 = vadd.f32 0.0, %v2897
    %v2899 = vpop.f32.mrb[0].mxu0
    %v2900 = vadd.f32 0.0, %v2899
    %2901 = vdwg.mxu0
    %2902 = vst [vmem:[#allocation2] sm:$0xff] %v2808
    %2903 = vst [vmem:[#allocation2 + $0x8] sm:$0xff] %v2810
    %2904 = vst [vmem:[#allocation2 + $0x10] sm:$0xff] %v2851
    %2905 = vst [vmem:[#allocation2 + $0x18] sm:$0xff] %v2853
    %2906 = vst [vmem:[#allocation2 + $0x20] sm:$0xff] %v2894
    %2907 = vst [vmem:[#allocation2 + $0x28] sm:$0xff] %v2896
    %2908 = vst [vmem:[#allocation2 + $0x30] sm:$0xff] %v2812
    %2909 = vst [vmem:[#allocation2 + $0x38] sm:$0xff] %v2814
    %2910 = vst [vmem:[#allocation2 + $0x40] sm:$0xff] %v2855
    %2911 = vst [vmem:[#allocation2 + $0x48] sm:$0xff] %v2857
    %2912 = vst [vmem:[#allocation2 + $0x50] sm:$0xff] %v2898
    %2913 = vst [vmem:[#allocation2 + $0x58] sm:$0xff] %v2900
    %v2914 = vld [vmem:[%s6] sm:$0x3]
    %v2915 = vld [vmem:[#allocation2 + $0x10] sm:$0x3]
    %v2916 = vld [vmem:[#allocation2 + $0x18] sm:$0x3]
    %v2918 = vlaneseq
    %v2919 = vshrl.u32 %v2918, 7
    %v2920 = vsub.s32 0, %v2919
    %v2921 = vrot.slane %v2914, %v2920
    %v2922 = vlaneseq
    %v2923 = vshrl.u32 %v2922, 7
    %v2924 = vsub.s32 1, %v2923
    %v2925 = vrot.slane %v2914, %v2924
    %v2928 = vadd.f32 %v2921, %v2915
    %v2929 = vadd.f32 %v2925, %v2916
    %v2930 = vld [vmem:[#allocation2 + $0x20] sm:$0xc]
    %v2931 = vld [vmem:[#allocation2 + $0x28] sm:$0xc]
    %v2934 = vrot.slane %v2930, 2
    %v2935 = vrot.slane %v2931, 2
    %v2938 = vadd.f32 %v2928, %v2934
    %v2939 = vadd.f32 %v2929, %v2935
    %v2940 = vmax.f32 %v2938, 0.0
    %v2941 = vmax.f32 %v2939, 0.0
    %v2942 = vld [vmem:[#allocation2 + $0x10] sm:$0x30]
    %v2943 = vld [vmem:[#allocation2 + $0x18] sm:$0x30]
    %v2944 = vadd.f32 %v2921, %v2942
    %v2945 = vadd.f32 %v2925, %v2943
    %v2946 = vld [vmem:[#allocation2 + $0x20] sm:$0xc0]
    %v2947 = vld [vmem:[#allocation2 + $0x28] sm:$0xc0]
    %v2950 = vrot.slane %v2946, 2
    %v2951 = vrot.slane %v2947, 2
    %v2954 = vadd.f32 %v2944, %v2950
    %v2955 = vadd.f32 %v2945, %v2951
    %v2956 = vld [vmem:[#allocation2] sm:$0xc]
    %v2957 = vld [vmem:[#allocation2 + $0x8] sm:$0xc]
    %v2960 = vrot.slane %v2956, 6
    %v2961 = vrot.slane %v2957, 6
    %v2964 = vadd.f32 %v2954, %v2960
    %v2965 = vadd.f32 %v2955, %v2961
    %v2966 = vmax.f32 %v2964, 0.0
    %v2967 = vmax.f32 %v2965, 0.0
    %v2968 = vld [vmem:[#allocation2 + $0x40] sm:$0x3]
    %v2969 = vld [vmem:[#allocation2 + $0x48] sm:$0x3]
    %v2970 = vadd.f32 %v2921, %v2968
    %v2971 = vadd.f32 %v2925, %v2969
    %v2972 = vld [vmem:[#allocation2 + $0x50] sm:$0xc]
    %v2973 = vld [vmem:[#allocation2 + $0x58] sm:$0xc]
    %v2976 = vrot.slane %v2972, 2
    %v2977 = vrot.slane %v2973, 2
    %v2980 = vadd.f32 %v2970, %v2976
    %v2981 = vadd.f32 %v2971, %v2977
    %v2982 = vld [vmem:[#allocation2] sm:$0xc0]
    %v2983 = vld [vmem:[#allocation2 + $0x8] sm:$0xc0]
    %v2986 = vrot.slane %v2982, 6
    %v2987 = vrot.slane %v2983, 6
    %v2990 = vadd.f32 %v2980, %v2986
    %v2991 = vadd.f32 %v2981, %v2987
    %v2992 = vmax.f32 %v2990, 0.0
    %v2993 = vmax.f32 %v2991, 0.0
    %v2994 = vld [vmem:[#allocation2 + $0x40] sm:$0x30]
    %v2995 = vld [vmem:[#allocation2 + $0x48] sm:$0x30]
    %v2996 = vadd.f32 %v2921, %v2994
    %v2997 = vadd.f32 %v2925, %v2995
    %v2998 = vld [vmem:[#allocation2 + $0x50] sm:$0xc0]
    %v2999 = vld [vmem:[#allocation2 + $0x58] sm:$0xc0]
    %v3002 = vrot.slane %v2998, 2
    %v3003 = vrot.slane %v2999, 2
    %v3006 = vadd.f32 %v2996, %v3002
    %v3007 = vadd.f32 %v2997, %v3003
    %v3008 = vld [vmem:[#allocation2 + $0x30] sm:$0xc]
    %v3009 = vld [vmem:[#allocation2 + $0x38] sm:$0xc]
    %v3012 = vrot.slane %v3008, 6
    %v3013 = vrot.slane %v3009, 6
    %v3016 = vadd.f32 %v3006, %v3012
    %v3017 = vadd.f32 %v3007, %v3013
    %v3018 = vmax.f32 %v3016, 0.0
    %v3019 = vmax.f32 %v3017, 0.0
    %v3022 = vrot.slane %v2966, 4
    %v3023 = vrot.slane %v2967, 4
    %v3028 = vrot.slane %v3018, 4
    %v3029 = vrot.slane %v3019, 4
    %v3032 = vpack.c.bf16 %v2940, %v2940
    %v3033 = vpack.c.bf16 %v2941, %v2941
    %v3034 = vpack.c.bf16 %v3022, %v3022
    %v3035 = vpack.c.bf16 %v3023, %v3023
    %v3036 = vpack.c.bf16 %v2992, %v2992
    %v3037 = vpack.c.bf16 %v2993, %v2993
    %v3038 = vpack.c.bf16 %v3028, %v3028
    %v3039 = vpack.c.bf16 %v3029, %v3029
    %v3040 = vld [vmem:[#allocation18] sm:$0xff]
    %v3041 = vld [vmem:[#allocation18 + $0x8] sm:$0xff]
    %v3042 = vld [vmem:[#allocation18 + $0x10] sm:$0xff]
    %v3043 = vld [vmem:[#allocation18 + $0x18] sm:$0xff]
    %v3044 = vld [vmem:[#allocation18 + $0x20] sm:$0xff]
    %v3045 = vld [vmem:[#allocation18 + $0x28] sm:$0xff]
    %v3046 = vld [vmem:[#allocation18 + $0x30] sm:$0xff]
    %v3047 = vld [vmem:[#allocation18 + $0x38] sm:$0xff]
    %v3048 = vld [vmem:[#allocation18 + $0x40] sm:$0xff]
    %v3049 = vld [vmem:[#allocation18 + $0x48] sm:$0xff]
    %v3050 = vld [vmem:[#allocation18 + $0x50] sm:$0xff]
    %v3051 = vld [vmem:[#allocation18 + $0x58] sm:$0xff]
    %v3052 = vld [vmem:[#allocation18 + $0x60] sm:$0xff]
    %v3053 = vld [vmem:[#allocation18 + $0x68] sm:$0xff]
    %v3054 = vld [vmem:[#allocation18 + $0x70] sm:$0xff]
    %v3055 = vld [vmem:[#allocation18 + $0x78] sm:$0xff]
    %v3056 = vld [vmem:[#allocation18 + $0x80] sm:$0xff]
    %v3057 = vld [vmem:[#allocation18 + $0x88] sm:$0xff]
    %v3058 = vld [vmem:[#allocation18 + $0x90] sm:$0xff]
    %v3059 = vld [vmem:[#allocation18 + $0x98] sm:$0xff]
    %v3060 = vld [vmem:[#allocation18 + $0xa0] sm:$0xff]
    %v3061 = vld [vmem:[#allocation18 + $0xa8] sm:$0xff]
    %v3062 = vld [vmem:[#allocation18 + $0xb0] sm:$0xff]
    %v3063 = vld [vmem:[#allocation18 + $0xb8] sm:$0xff]
    %v3064 = vld [vmem:[#allocation18 + $0xc0] sm:$0xff]
    %v3065 = vld [vmem:[#allocation18 + $0xc8] sm:$0xff]
    %v3066 = vld [vmem:[#allocation18 + $0xd0] sm:$0xff]
    %v3067 = vld [vmem:[#allocation18 + $0xd8] sm:$0xff]
    %v3068 = vld [vmem:[#allocation18 + $0xe0] sm:$0xff]
    %v3069 = vld [vmem:[#allocation18 + $0xe8] sm:$0xff]
    %v3070 = vld [vmem:[#allocation18 + $0xf0] sm:$0xff]
    %v3071 = vld [vmem:[#allocation18 + $0xf8] sm:$0xff]
    %v3072 = vld [vmem:[#allocation18 + $0x100] sm:$0xff]
    %v3073 = vld [vmem:[#allocation18 + $0x108] sm:$0xff]
    %v3074 = vld [vmem:[#allocation18 + $0x110] sm:$0xff]
    %v3075 = vld [vmem:[#allocation18 + $0x118] sm:$0xff]
    %v3076 = vld [vmem:[#allocation18 + $0x120] sm:$0xff]
    %v3077 = vld [vmem:[#allocation18 + $0x128] sm:$0xff]
    %v3078 = vld [vmem:[#allocation18 + $0x130] sm:$0xff]
    %v3079 = vld [vmem:[#allocation18 + $0x138] sm:$0xff]
    %v3080 = vld [vmem:[#allocation18 + $0x140] sm:$0xff]
    %v3081 = vld [vmem:[#allocation18 + $0x148] sm:$0xff]
    %v3082 = vld [vmem:[#allocation18 + $0x150] sm:$0xff]
    %v3083 = vld [vmem:[#allocation18 + $0x158] sm:$0xff]
    %v3084 = vld [vmem:[#allocation18 + $0x160] sm:$0xff]
    %v3085 = vld [vmem:[#allocation18 + $0x168] sm:$0xff]
    %v3086 = vld [vmem:[#allocation18 + $0x170] sm:$0xff]
    %v3087 = vld [vmem:[#allocation18 + $0x178] sm:$0xff]
    %v3088 = vld [vmem:[#allocation18 + $0x180] sm:$0xff]
    %v3089 = vld [vmem:[#allocation18 + $0x188] sm:$0xff]
    %v3090 = vld [vmem:[#allocation18 + $0x190] sm:$0xff]
    %v3091 = vld [vmem:[#allocation18 + $0x198] sm:$0xff]
    %v3092 = vld [vmem:[#allocation18 + $0x1a0] sm:$0xff]
    %v3093 = vld [vmem:[#allocation18 + $0x1a8] sm:$0xff]
    %v3094 = vld [vmem:[#allocation18 + $0x1b0] sm:$0xff]
    %v3095 = vld [vmem:[#allocation18 + $0x1b8] sm:$0xff]
    %v3096 = vld [vmem:[#allocation18 + $0x1c0] sm:$0xff]
    %v3097 = vld [vmem:[#allocation18 + $0x1c8] sm:$0xff]
    %v3098 = vld [vmem:[#allocation18 + $0x1d0] sm:$0xff]
    %v3099 = vld [vmem:[#allocation18 + $0x1d8] sm:$0xff]
    %v3100 = vld [vmem:[#allocation18 + $0x1e0] sm:$0xff]
    %v3101 = vld [vmem:[#allocation18 + $0x1e8] sm:$0xff]
    %v3102 = vld [vmem:[#allocation18 + $0x1f0] sm:$0xff]
    %v3103 = vld [vmem:[#allocation18 + $0x1f8] sm:$0xff]
    %v3104 = vld [vmem:[#allocation18 + $0x200] sm:$0xff]
    %v3105 = vld [vmem:[#allocation18 + $0x208] sm:$0xff]
    %v3106 = vld [vmem:[#allocation18 + $0x210] sm:$0xff]
    %v3107 = vld [vmem:[#allocation18 + $0x218] sm:$0xff]
    %v3108 = vld [vmem:[#allocation18 + $0x220] sm:$0xff]
    %v3109 = vld [vmem:[#allocation18 + $0x228] sm:$0xff]
    %v3110 = vld [vmem:[#allocation18 + $0x230] sm:$0xff]
    %v3111 = vld [vmem:[#allocation18 + $0x238] sm:$0xff]
    %v3112 = vld [vmem:[#allocation18 + $0x240] sm:$0xff]
    %v3113 = vld [vmem:[#allocation18 + $0x248] sm:$0xff]
    %v3114 = vld [vmem:[#allocation18 + $0x250] sm:$0xff]
    %v3115 = vld [vmem:[#allocation18 + $0x258] sm:$0xff]
    %v3116 = vld [vmem:[#allocation18 + $0x260] sm:$0xff]
    %v3117 = vld [vmem:[#allocation18 + $0x268] sm:$0xff]
    %v3118 = vld [vmem:[#allocation18 + $0x270] sm:$0xff]
    %v3119 = vld [vmem:[#allocation18 + $0x278] sm:$0xff]
    %v3120 = vld [vmem:[#allocation18 + $0x280] sm:$0xff]
    %v3121 = vld [vmem:[#allocation18 + $0x288] sm:$0xff]
    %v3122 = vld [vmem:[#allocation18 + $0x290] sm:$0xff]
    %v3123 = vld [vmem:[#allocation18 + $0x298] sm:$0xff]
    %v3124 = vld [vmem:[#allocation18 + $0x2a0] sm:$0xff]
    %v3125 = vld [vmem:[#allocation18 + $0x2a8] sm:$0xff]
    %v3126 = vld [vmem:[#allocation18 + $0x2b0] sm:$0xff]
    %v3127 = vld [vmem:[#allocation18 + $0x2b8] sm:$0xff]
    %v3128 = vld [vmem:[#allocation18 + $0x2c0] sm:$0xff]
    %v3129 = vld [vmem:[#allocation18 + $0x2c8] sm:$0xff]
    %v3130 = vld [vmem:[#allocation18 + $0x2d0] sm:$0xff]
    %v3131 = vld [vmem:[#allocation18 + $0x2d8] sm:$0xff]
    %v3132 = vld [vmem:[#allocation18 + $0x2e0] sm:$0xff]
    %v3133 = vld [vmem:[#allocation18 + $0x2e8] sm:$0xff]
    %v3134 = vld [vmem:[#allocation18 + $0x2f0] sm:$0xff]
    %v3135 = vld [vmem:[#allocation18 + $0x2f8] sm:$0xff]
    %v3136 = vld [vmem:[#allocation18 + $0x300] sm:$0xff]
    %v3137 = vld [vmem:[#allocation18 + $0x308] sm:$0xff]
    %v3138 = vld [vmem:[#allocation18 + $0x310] sm:$0xff]
    %v3139 = vld [vmem:[#allocation18 + $0x318] sm:$0xff]
    %v3140 = vld [vmem:[#allocation18 + $0x320] sm:$0xff]
    %v3141 = vld [vmem:[#allocation18 + $0x328] sm:$0xff]
    %v3142 = vld [vmem:[#allocation18 + $0x330] sm:$0xff]
    %v3143 = vld [vmem:[#allocation18 + $0x338] sm:$0xff]
    %v3144 = vld [vmem:[#allocation18 + $0x340] sm:$0xff]
    %v3145 = vld [vmem:[#allocation18 + $0x348] sm:$0xff]
    %v3146 = vld [vmem:[#allocation18 + $0x350] sm:$0xff]
    %v3147 = vld [vmem:[#allocation18 + $0x358] sm:$0xff]
    %v3148 = vld [vmem:[#allocation18 + $0x360] sm:$0xff]
    %v3149 = vld [vmem:[#allocation18 + $0x368] sm:$0xff]
    %v3150 = vld [vmem:[#allocation18 + $0x370] sm:$0xff]
    %v3151 = vld [vmem:[#allocation18 + $0x378] sm:$0xff]
    %v3152 = vld [vmem:[#allocation18 + $0x380] sm:$0xff]
    %v3153 = vld [vmem:[#allocation18 + $0x388] sm:$0xff]
    %v3154 = vld [vmem:[#allocation18 + $0x390] sm:$0xff]
    %v3155 = vld [vmem:[#allocation18 + $0x398] sm:$0xff]
    %v3156 = vld [vmem:[#allocation18 + $0x3a0] sm:$0xff]
    %v3157 = vld [vmem:[#allocation18 + $0x3a8] sm:$0xff]
    %v3158 = vld [vmem:[#allocation18 + $0x3b0] sm:$0xff]
    %v3159 = vld [vmem:[#allocation18 + $0x3b8] sm:$0xff]
    %v3160 = vld [vmem:[#allocation18 + $0x3c0] sm:$0xff]
    %v3161 = vld [vmem:[#allocation18 + $0x3c8] sm:$0xff]
    %v3162 = vld [vmem:[#allocation18 + $0x3d0] sm:$0xff]
    %v3163 = vld [vmem:[#allocation18 + $0x3d8] sm:$0xff]
    %v3164 = vld [vmem:[#allocation18 + $0x3e0] sm:$0xff]
    %v3165 = vld [vmem:[#allocation18 + $0x3e8] sm:$0xff]
    %v3166 = vld [vmem:[#allocation18 + $0x3f0] sm:$0xff]
    %v3167 = vld [vmem:[#allocation18 + $0x3f8] sm:$0xff]
    %v3168 = vld [vmem:[%s8] sm:$0x3]
    %v3170 = vlaneseq
    %v3171 = vshrl.u32 %v3170, 7
    %v3172 = vsub.s32 0, %v3171
    %v3173 = vrot.slane %v3168, %v3172
    %v3174 = vlaneseq
    %v3175 = vshrl.u32 %v3174, 7
    %v3176 = vsub.s32 1, %v3175
    %v3177 = vrot.slane %v3168, %v3176
    %v3308 = vunpack.c.l.b16 %v3040
    %v3309 = vunpack.c.h.b16 %v3040
    %v3310 = vunpack.c.l.b16 %v3041
    %v3311 = vunpack.c.h.b16 %v3041
    %v3312 = vunpack.c.l.b16 %v3042
    %v3313 = vunpack.c.h.b16 %v3042
    %v3314 = vunpack.c.l.b16 %v3043
    %v3315 = vunpack.c.h.b16 %v3043
    %v3316 = vunpack.c.l.b16 %v3044
    %v3317 = vunpack.c.h.b16 %v3044
    %v3318 = vunpack.c.l.b16 %v3045
    %v3319 = vunpack.c.h.b16 %v3045
    %v3320 = vunpack.c.l.b16 %v3046
    %v3321 = vunpack.c.h.b16 %v3046
    %v3322 = vunpack.c.l.b16 %v3047
    %v3323 = vunpack.c.h.b16 %v3047
    %v3324 = vunpack.c.l.b16 %v3048
    %v3325 = vunpack.c.h.b16 %v3048
    %v3326 = vunpack.c.l.b16 %v3049
    %v3327 = vunpack.c.h.b16 %v3049
    %v3328 = vunpack.c.l.b16 %v3050
    %v3329 = vunpack.c.h.b16 %v3050
    %v3330 = vunpack.c.l.b16 %v3051
    %v3331 = vunpack.c.h.b16 %v3051
    %v3332 = vunpack.c.l.b16 %v3052
    %v3333 = vunpack.c.h.b16 %v3052
    %v3334 = vunpack.c.l.b16 %v3053
    %v3335 = vunpack.c.h.b16 %v3053
    %v3336 = vunpack.c.l.b16 %v3054
    %v3337 = vunpack.c.h.b16 %v3054
    %v3338 = vunpack.c.l.b16 %v3055
    %v3339 = vunpack.c.h.b16 %v3055
    %v3340 = vunpack.c.l.b16 %v3056
    %v3341 = vunpack.c.h.b16 %v3056
    %v3342 = vunpack.c.l.b16 %v3057
    %v3343 = vunpack.c.h.b16 %v3057
    %v3344 = vunpack.c.l.b16 %v3058
    %v3345 = vunpack.c.h.b16 %v3058
    %v3346 = vunpack.c.l.b16 %v3059
    %v3347 = vunpack.c.h.b16 %v3059
    %v3348 = vunpack.c.l.b16 %v3060
    %v3349 = vunpack.c.h.b16 %v3060
    %v3350 = vunpack.c.l.b16 %v3061
    %v3351 = vunpack.c.h.b16 %v3061
    %v3352 = vunpack.c.l.b16 %v3062
    %v3353 = vunpack.c.h.b16 %v3062
    %v3354 = vunpack.c.l.b16 %v3063
    %v3355 = vunpack.c.h.b16 %v3063
    %v3356 = vunpack.c.l.b16 %v3064
    %v3357 = vunpack.c.h.b16 %v3064
    %v3358 = vunpack.c.l.b16 %v3065
    %v3359 = vunpack.c.h.b16 %v3065
    %v3360 = vunpack.c.l.b16 %v3066
    %v3361 = vunpack.c.h.b16 %v3066
    %v3362 = vunpack.c.l.b16 %v3067
    %v3363 = vunpack.c.h.b16 %v3067
    %v3364 = vunpack.c.l.b16 %v3068
    %v3365 = vunpack.c.h.b16 %v3068
    %v3366 = vunpack.c.l.b16 %v3069
    %v3367 = vunpack.c.h.b16 %v3069
    %v3368 = vunpack.c.l.b16 %v3070
    %v3369 = vunpack.c.h.b16 %v3070
    %v3370 = vunpack.c.l.b16 %v3071
    %v3371 = vunpack.c.h.b16 %v3071
    %v3372 = vunpack.c.l.b16 %v3072
    %v3373 = vunpack.c.h.b16 %v3072
    %v3374 = vunpack.c.l.b16 %v3073
    %v3375 = vunpack.c.h.b16 %v3073
    %v3376 = vunpack.c.l.b16 %v3074
    %v3377 = vunpack.c.h.b16 %v3074
    %v3378 = vunpack.c.l.b16 %v3075
    %v3379 = vunpack.c.h.b16 %v3075
    %v3380 = vunpack.c.l.b16 %v3076
    %v3381 = vunpack.c.h.b16 %v3076
    %v3382 = vunpack.c.l.b16 %v3077
    %v3383 = vunpack.c.h.b16 %v3077
    %v3384 = vunpack.c.l.b16 %v3078
    %v3385 = vunpack.c.h.b16 %v3078
    %v3386 = vunpack.c.l.b16 %v3079
    %v3387 = vunpack.c.h.b16 %v3079
    %v3388 = vunpack.c.l.b16 %v3080
    %v3389 = vunpack.c.h.b16 %v3080
    %v3390 = vunpack.c.l.b16 %v3081
    %v3391 = vunpack.c.h.b16 %v3081
    %v3392 = vunpack.c.l.b16 %v3082
    %v3393 = vunpack.c.h.b16 %v3082
    %v3394 = vunpack.c.l.b16 %v3083
    %v3395 = vunpack.c.h.b16 %v3083
    %v3396 = vunpack.c.l.b16 %v3084
    %v3397 = vunpack.c.h.b16 %v3084
    %v3398 = vunpack.c.l.b16 %v3085
    %v3399 = vunpack.c.h.b16 %v3085
    %v3400 = vunpack.c.l.b16 %v3086
    %v3401 = vunpack.c.h.b16 %v3086
    %v3402 = vunpack.c.l.b16 %v3087
    %v3403 = vunpack.c.h.b16 %v3087
    %v3404 = vunpack.c.l.b16 %v3088
    %v3405 = vunpack.c.h.b16 %v3088
    %v3406 = vunpack.c.l.b16 %v3089
    %v3407 = vunpack.c.h.b16 %v3089
    %v3408 = vunpack.c.l.b16 %v3090
    %v3409 = vunpack.c.h.b16 %v3090
    %v3410 = vunpack.c.l.b16 %v3091
    %v3411 = vunpack.c.h.b16 %v3091
    %v3412 = vunpack.c.l.b16 %v3092
    %v3413 = vunpack.c.h.b16 %v3092
    %v3414 = vunpack.c.l.b16 %v3093
    %v3415 = vunpack.c.h.b16 %v3093
    %v3416 = vunpack.c.l.b16 %v3094
    %v3417 = vunpack.c.h.b16 %v3094
    %v3418 = vunpack.c.l.b16 %v3095
    %v3419 = vunpack.c.h.b16 %v3095
    %v3420 = vunpack.c.l.b16 %v3096
    %v3421 = vunpack.c.h.b16 %v3096
    %v3422 = vunpack.c.l.b16 %v3097
    %v3423 = vunpack.c.h.b16 %v3097
    %v3424 = vunpack.c.l.b16 %v3098
    %v3425 = vunpack.c.h.b16 %v3098
    %v3426 = vunpack.c.l.b16 %v3099
    %v3427 = vunpack.c.h.b16 %v3099
    %v3428 = vunpack.c.l.b16 %v3100
    %v3429 = vunpack.c.h.b16 %v3100
    %v3430 = vunpack.c.l.b16 %v3101
    %v3431 = vunpack.c.h.b16 %v3101
    %v3432 = vunpack.c.l.b16 %v3102
    %v3433 = vunpack.c.h.b16 %v3102
    %v3434 = vunpack.c.l.b16 %v3103
    %v3435 = vunpack.c.h.b16 %v3103
    %v3436 = vunpack.c.l.b16 %v3104
    %v3437 = vunpack.c.h.b16 %v3104
    %v3438 = vunpack.c.l.b16 %v3105
    %v3439 = vunpack.c.h.b16 %v3105
    %v3440 = vunpack.c.l.b16 %v3106
    %v3441 = vunpack.c.h.b16 %v3106
    %v3442 = vunpack.c.l.b16 %v3107
    %v3443 = vunpack.c.h.b16 %v3107
    %v3444 = vunpack.c.l.b16 %v3108
    %v3445 = vunpack.c.h.b16 %v3108
    %v3446 = vunpack.c.l.b16 %v3109
    %v3447 = vunpack.c.h.b16 %v3109
    %v3448 = vunpack.c.l.b16 %v3110
    %v3449 = vunpack.c.h.b16 %v3110
    %v3450 = vunpack.c.l.b16 %v3111
    %v3451 = vunpack.c.h.b16 %v3111
    %v3452 = vunpack.c.l.b16 %v3112
    %v3453 = vunpack.c.h.b16 %v3112
    %v3454 = vunpack.c.l.b16 %v3113
    %v3455 = vunpack.c.h.b16 %v3113
    %v3456 = vunpack.c.l.b16 %v3114
    %v3457 = vunpack.c.h.b16 %v3114
    %v3458 = vunpack.c.l.b16 %v3115
    %v3459 = vunpack.c.h.b16 %v3115
    %v3460 = vunpack.c.l.b16 %v3116
    %v3461 = vunpack.c.h.b16 %v3116
    %v3462 = vunpack.c.l.b16 %v3117
    %v3463 = vunpack.c.h.b16 %v3117
    %v3464 = vunpack.c.l.b16 %v3118
    %v3465 = vunpack.c.h.b16 %v3118
    %v3466 = vunpack.c.l.b16 %v3119
    %v3467 = vunpack.c.h.b16 %v3119
    %v3468 = vunpack.c.l.b16 %v3120
    %v3469 = vunpack.c.h.b16 %v3120
    %v3470 = vunpack.c.l.b16 %v3121
    %v3471 = vunpack.c.h.b16 %v3121
    %v3472 = vunpack.c.l.b16 %v3122
    %v3473 = vunpack.c.h.b16 %v3122
    %v3474 = vunpack.c.l.b16 %v3123
    %v3475 = vunpack.c.h.b16 %v3123
    %v3476 = vunpack.c.l.b16 %v3124
    %v3477 = vunpack.c.h.b16 %v3124
    %v3478 = vunpack.c.l.b16 %v3125
    %v3479 = vunpack.c.h.b16 %v3125
    %v3480 = vunpack.c.l.b16 %v3126
    %v3481 = vunpack.c.h.b16 %v3126
    %v3482 = vunpack.c.l.b16 %v3127
    %v3483 = vunpack.c.h.b16 %v3127
    %v3484 = vunpack.c.l.b16 %v3128
    %v3485 = vunpack.c.h.b16 %v3128
    %v3486 = vunpack.c.l.b16 %v3129
    %v3487 = vunpack.c.h.b16 %v3129
    %v3488 = vunpack.c.l.b16 %v3130
    %v3489 = vunpack.c.h.b16 %v3130
    %v3490 = vunpack.c.l.b16 %v3131
    %v3491 = vunpack.c.h.b16 %v3131
    %v3492 = vunpack.c.l.b16 %v3132
    %v3493 = vunpack.c.h.b16 %v3132
    %v3494 = vunpack.c.l.b16 %v3133
    %v3495 = vunpack.c.h.b16 %v3133
    %v3496 = vunpack.c.l.b16 %v3134
    %v3497 = vunpack.c.h.b16 %v3134
    %v3498 = vunpack.c.l.b16 %v3135
    %v3499 = vunpack.c.h.b16 %v3135
    %v3500 = vunpack.c.l.b16 %v3136
    %v3501 = vunpack.c.h.b16 %v3136
    %v3502 = vunpack.c.l.b16 %v3137
    %v3503 = vunpack.c.h.b16 %v3137
    %v3504 = vunpack.c.l.b16 %v3138
    %v3505 = vunpack.c.h.b16 %v3138
    %v3506 = vunpack.c.l.b16 %v3139
    %v3507 = vunpack.c.h.b16 %v3139
    %v3508 = vunpack.c.l.b16 %v3140
    %v3509 = vunpack.c.h.b16 %v3140
    %v3510 = vunpack.c.l.b16 %v3141
    %v3511 = vunpack.c.h.b16 %v3141
    %v3512 = vunpack.c.l.b16 %v3142
    %v3513 = vunpack.c.h.b16 %v3142
    %v3514 = vunpack.c.l.b16 %v3143
    %v3515 = vunpack.c.h.b16 %v3143
    %v3516 = vunpack.c.l.b16 %v3144
    %v3517 = vunpack.c.h.b16 %v3144
    %v3518 = vunpack.c.l.b16 %v3145
    %v3519 = vunpack.c.h.b16 %v3145
    %v3520 = vunpack.c.l.b16 %v3146
    %v3521 = vunpack.c.h.b16 %v3146
    %v3522 = vunpack.c.l.b16 %v3147
    %v3523 = vunpack.c.h.b16 %v3147
    %v3524 = vunpack.c.l.b16 %v3148
    %v3525 = vunpack.c.h.b16 %v3148
    %v3526 = vunpack.c.l.b16 %v3149
    %v3527 = vunpack.c.h.b16 %v3149
    %v3528 = vunpack.c.l.b16 %v3150
    %v3529 = vunpack.c.h.b16 %v3150
    %v3530 = vunpack.c.l.b16 %v3151
    %v3531 = vunpack.c.h.b16 %v3151
    %v3532 = vunpack.c.l.b16 %v3152
    %v3533 = vunpack.c.h.b16 %v3152
    %v3534 = vunpack.c.l.b16 %v3153
    %v3535 = vunpack.c.h.b16 %v3153
    %v3536 = vunpack.c.l.b16 %v3154
    %v3537 = vunpack.c.h.b16 %v3154
    %v3538 = vunpack.c.l.b16 %v3155
    %v3539 = vunpack.c.h.b16 %v3155
    %v3540 = vunpack.c.l.b16 %v3156
    %v3541 = vunpack.c.h.b16 %v3156
    %v3542 = vunpack.c.l.b16 %v3157
    %v3543 = vunpack.c.h.b16 %v3157
    %v3544 = vunpack.c.l.b16 %v3158
    %v3545 = vunpack.c.h.b16 %v3158
    %v3546 = vunpack.c.l.b16 %v3159
    %v3547 = vunpack.c.h.b16 %v3159
    %v3548 = vunpack.c.l.b16 %v3160
    %v3549 = vunpack.c.h.b16 %v3160
    %v3550 = vunpack.c.l.b16 %v3161
    %v3551 = vunpack.c.h.b16 %v3161
    %v3552 = vunpack.c.l.b16 %v3162
    %v3553 = vunpack.c.h.b16 %v3162
    %v3554 = vunpack.c.l.b16 %v3163
    %v3555 = vunpack.c.h.b16 %v3163
    %v3556 = vunpack.c.l.b16 %v3164
    %v3557 = vunpack.c.h.b16 %v3164
    %v3558 = vunpack.c.l.b16 %v3165
    %v3559 = vunpack.c.h.b16 %v3165
    %v3560 = vunpack.c.l.b16 %v3166
    %v3561 = vunpack.c.h.b16 %v3166
    %v3562 = vunpack.c.l.b16 %v3167
    %v3563 = vunpack.c.h.b16 %v3167
    %v3564 = vpack.c.b16 %v3310, %v3308
    %v3565 = vpack.c.b16 %v3311, %v3309
    %v3566 = vpack.c.b16 %v3314, %v3312
    %v3567 = vpack.c.b16 %v3315, %v3313
    %v3568 = vpack.c.b16 %v3318, %v3316
    %v3569 = vpack.c.b16 %v3319, %v3317
    %v3570 = vpack.c.b16 %v3322, %v3320
    %v3571 = vpack.c.b16 %v3323, %v3321
    %v3572 = vpack.c.b16 %v3326, %v3324
    %v3573 = vpack.c.b16 %v3327, %v3325
    %v3574 = vpack.c.b16 %v3330, %v3328
    %v3575 = vpack.c.b16 %v3331, %v3329
    %v3576 = vpack.c.b16 %v3334, %v3332
    %v3577 = vpack.c.b16 %v3335, %v3333
    %v3578 = vpack.c.b16 %v3338, %v3336
    %v3579 = vpack.c.b16 %v3339, %v3337
    %v3580 = vpack.c.b16 %v3342, %v3340
    %v3581 = vpack.c.b16 %v3343, %v3341
    %v3582 = vpack.c.b16 %v3346, %v3344
    %v3583 = vpack.c.b16 %v3347, %v3345
    %v3584 = vpack.c.b16 %v3350, %v3348
    %v3585 = vpack.c.b16 %v3351, %v3349
    %v3586 = vpack.c.b16 %v3354, %v3352
    %v3587 = vpack.c.b16 %v3355, %v3353
    %v3588 = vpack.c.b16 %v3358, %v3356
    %v3589 = vpack.c.b16 %v3359, %v3357
    %v3590 = vpack.c.b16 %v3362, %v3360
    %v3591 = vpack.c.b16 %v3363, %v3361
    %v3592 = vpack.c.b16 %v3366, %v3364
    %v3593 = vpack.c.b16 %v3367, %v3365
    %v3594 = vpack.c.b16 %v3370, %v3368
    %v3595 = vpack.c.b16 %v3371, %v3369
    %v3596 = vpack.c.b16 %v3374, %v3372
    %v3597 = vpack.c.b16 %v3375, %v3373
    %v3598 = vpack.c.b16 %v3378, %v3376
    %v3599 = vpack.c.b16 %v3379, %v3377
    %v3600 = vpack.c.b16 %v3382, %v3380
    %v3601 = vpack.c.b16 %v3383, %v3381
    %v3602 = vpack.c.b16 %v3386, %v3384
    %v3603 = vpack.c.b16 %v3387, %v3385
    %v3604 = vpack.c.b16 %v3390, %v3388
    %v3605 = vpack.c.b16 %v3391, %v3389
    %v3606 = vpack.c.b16 %v3394, %v3392
    %v3607 = vpack.c.b16 %v3395, %v3393
    %v3608 = vpack.c.b16 %v3398, %v3396
    %v3609 = vpack.c.b16 %v3399, %v3397
    %v3610 = vpack.c.b16 %v3402, %v3400
    %v3611 = vpack.c.b16 %v3403, %v3401
    %v3612 = vpack.c.b16 %v3406, %v3404
    %v3613 = vpack.c.b16 %v3407, %v3405
    %v3614 = vpack.c.b16 %v3410, %v3408
    %v3615 = vpack.c.b16 %v3411, %v3409
    %v3616 = vpack.c.b16 %v3414, %v3412
    %v3617 = vpack.c.b16 %v3415, %v3413
    %v3618 = vpack.c.b16 %v3418, %v3416
    %v3619 = vpack.c.b16 %v3419, %v3417
    %v3620 = vpack.c.b16 %v3422, %v3420
    %v3621 = vpack.c.b16 %v3423, %v3421
    %v3622 = vpack.c.b16 %v3426, %v3424
    %v3623 = vpack.c.b16 %v3427, %v3425
    %v3624 = vpack.c.b16 %v3430, %v3428
    %v3625 = vpack.c.b16 %v3431, %v3429
    %v3626 = vpack.c.b16 %v3434, %v3432
    %v3627 = vpack.c.b16 %v3435, %v3433
    %v3628 = vpack.c.b16 %v3438, %v3436
    %v3629 = vpack.c.b16 %v3439, %v3437
    %v3630 = vpack.c.b16 %v3442, %v3440
    %v3631 = vpack.c.b16 %v3443, %v3441
    %v3632 = vpack.c.b16 %v3446, %v3444
    %v3633 = vpack.c.b16 %v3447, %v3445
    %v3634 = vpack.c.b16 %v3450, %v3448
    %v3635 = vpack.c.b16 %v3451, %v3449
    %v3636 = vpack.c.b16 %v3454, %v3452
    %v3637 = vpack.c.b16 %v3455, %v3453
    %v3638 = vpack.c.b16 %v3458, %v3456
    %v3639 = vpack.c.b16 %v3459, %v3457
    %v3640 = vpack.c.b16 %v3462, %v3460
    %v3641 = vpack.c.b16 %v3463, %v3461
    %v3642 = vpack.c.b16 %v3466, %v3464
    %v3643 = vpack.c.b16 %v3467, %v3465
    %v3644 = vpack.c.b16 %v3470, %v3468
    %v3645 = vpack.c.b16 %v3471, %v3469
    %v3646 = vpack.c.b16 %v3474, %v3472
    %v3647 = vpack.c.b16 %v3475, %v3473
    %v3648 = vpack.c.b16 %v3478, %v3476
    %v3649 = vpack.c.b16 %v3479, %v3477
    %v3650 = vpack.c.b16 %v3482, %v3480
    %v3651 = vpack.c.b16 %v3483, %v3481
    %v3652 = vpack.c.b16 %v3486, %v3484
    %v3653 = vpack.c.b16 %v3487, %v3485
    %v3654 = vpack.c.b16 %v3490, %v3488
    %v3655 = vpack.c.b16 %v3491, %v3489
    %v3656 = vpack.c.b16 %v3494, %v3492
    %v3657 = vpack.c.b16 %v3495, %v3493
    %v3658 = vpack.c.b16 %v3498, %v3496
    %v3659 = vpack.c.b16 %v3499, %v3497
    %v3660 = vpack.c.b16 %v3502, %v3500
    %v3661 = vpack.c.b16 %v3503, %v3501
    %v3662 = vpack.c.b16 %v3506, %v3504
    %v3663 = vpack.c.b16 %v3507, %v3505
    %v3664 = vpack.c.b16 %v3510, %v3508
    %v3665 = vpack.c.b16 %v3511, %v3509
    %v3666 = vpack.c.b16 %v3514, %v3512
    %v3667 = vpack.c.b16 %v3515, %v3513
    %v3668 = vpack.c.b16 %v3518, %v3516
    %v3669 = vpack.c.b16 %v3519, %v3517
    %v3670 = vpack.c.b16 %v3522, %v3520
    %v3671 = vpack.c.b16 %v3523, %v3521
    %v3672 = vpack.c.b16 %v3526, %v3524
    %v3673 = vpack.c.b16 %v3527, %v3525
    %v3674 = vpack.c.b16 %v3530, %v3528
    %v3675 = vpack.c.b16 %v3531, %v3529
    %v3676 = vpack.c.b16 %v3534, %v3532
    %v3677 = vpack.c.b16 %v3535, %v3533
    %v3678 = vpack.c.b16 %v3538, %v3536
    %v3679 = vpack.c.b16 %v3539, %v3537
    %v3680 = vpack.c.b16 %v3542, %v3540
    %v3681 = vpack.c.b16 %v3543, %v3541
    %v3682 = vpack.c.b16 %v3546, %v3544
    %v3683 = vpack.c.b16 %v3547, %v3545
    %v3684 = vpack.c.b16 %v3550, %v3548
    %v3685 = vpack.c.b16 %v3551, %v3549
    %v3686 = vpack.c.b16 %v3554, %v3552
    %v3687 = vpack.c.b16 %v3555, %v3553
    %v3688 = vpack.c.b16 %v3558, %v3556
    %v3689 = vpack.c.b16 %v3559, %v3557
    %v3690 = vpack.c.b16 %v3562, %v3560
    %v3691 = vpack.c.b16 %v3563, %v3561
    %3820 = vmatprep.subr.bf16.mxu0 %v3565
    %3821 = vmatpush1.bf16.msra.mxu0 %v3564
    %3822 = vmatprep.subr.bf16.mxu0 %v3567
    %3823 = vmatpush1.bf16.msra.mxu0 %v3566
    %3824 = vmatprep.subr.bf16.mxu0 %v3569
    %3825 = vmatpush1.bf16.msra.mxu0 %v3568
    %3826 = vmatprep.subr.bf16.mxu0 %v3571
    %3827 = vmatpush1.bf16.msra.mxu0 %v3570
    %3828 = vmatprep.subr.bf16.mxu0 %v3573
    %3829 = vmatpush1.bf16.msra.mxu0 %v3572
    %3830 = vmatprep.subr.bf16.mxu0 %v3575
    %3831 = vmatpush1.bf16.msra.mxu0 %v3574
    %3832 = vmatprep.subr.bf16.mxu0 %v3577
    %3833 = vmatpush1.bf16.msra.mxu0 %v3576
    %3834 = vmatprep.subr.bf16.mxu0 %v3579
    %3835 = vmatpush1.bf16.msra.mxu0 %v3578
    %3836 = vmatprep.subr.bf16.mxu0 %v3581
    %3837 = vmatpush1.bf16.msra.mxu0 %v3580
    %3838 = vmatprep.subr.bf16.mxu0 %v3583
    %3839 = vmatpush1.bf16.msra.mxu0 %v3582
    %3840 = vmatprep.subr.bf16.mxu0 %v3585
    %3841 = vmatpush1.bf16.msra.mxu0 %v3584
    %3842 = vmatprep.subr.bf16.mxu0 %v3587
    %3843 = vmatpush1.bf16.msra.mxu0 %v3586
    %3844 = vmatprep.subr.bf16.mxu0 %v3589
    %3845 = vmatpush1.bf16.msra.mxu0 %v3588
    %3846 = vmatprep.subr.bf16.mxu0 %v3591
    %3847 = vmatpush1.bf16.msra.mxu0 %v3590
    %3848 = vmatprep.subr.bf16.mxu0 %v3593
    %3849 = vmatpush1.bf16.msra.mxu0 %v3592
    %3850 = vmatprep.subr.bf16.mxu0 %v3595
    %3851 = vmatpush1.bf16.msra.mxu0 %v3594
    %3852 = vmatprep.mubr.bf16.mxu0 %v3033
    %3853 = vmatmul.mubr.bf16.gmra.mrb[0].mxu0 %v3032
    %v3854 = vpop.f32.mrb[0].mxu0
    %v3855 = vadd.f32 %v3173, %v3854
    %v3856 = vpop.f32.mrb[0].mxu0
    %v3857 = vadd.f32 %v3177, %v3856
    %v3858 = vpop.f32.mrb[0].mxu0
    %v3859 = vpop.f32.mrb[0].mxu0
    %3860 = vdwg.mxu0
    %3861 = vmatprep.subr.bf16.mxu0 %v3597
    %3862 = vmatpush1.bf16.msra.mxu0 %v3596
    %3863 = vmatprep.subr.bf16.mxu0 %v3599
    %3864 = vmatpush1.bf16.msra.mxu0 %v3598
    %3865 = vmatprep.subr.bf16.mxu0 %v3601
    %3866 = vmatpush1.bf16.msra.mxu0 %v3600
    %3867 = vmatprep.subr.bf16.mxu0 %v3603
    %3868 = vmatpush1.bf16.msra.mxu0 %v3602
    %3869 = vmatprep.subr.bf16.mxu0 %v3605
    %3870 = vmatpush1.bf16.msra.mxu0 %v3604
    %3871 = vmatprep.subr.bf16.mxu0 %v3607
    %3872 = vmatpush1.bf16.msra.mxu0 %v3606
    %3873 = vmatprep.subr.bf16.mxu0 %v3609
    %3874 = vmatpush1.bf16.msra.mxu0 %v3608
    %3875 = vmatprep.subr.bf16.mxu0 %v3611
    %3876 = vmatpush1.bf16.msra.mxu0 %v3610
    %3877 = vmatprep.subr.bf16.mxu0 %v3613
    %3878 = vmatpush1.bf16.msra.mxu0 %v3612
    %3879 = vmatprep.subr.bf16.mxu0 %v3615
    %3880 = vmatpush1.bf16.msra.mxu0 %v3614
    %3881 = vmatprep.subr.bf16.mxu0 %v3617
    %3882 = vmatpush1.bf16.msra.mxu0 %v3616
    %3883 = vmatprep.subr.bf16.mxu0 %v3619
    %3884 = vmatpush1.bf16.msra.mxu0 %v3618
    %3885 = vmatprep.subr.bf16.mxu0 %v3621
    %3886 = vmatpush1.bf16.msra.mxu0 %v3620
    %3887 = vmatprep.subr.bf16.mxu0 %v3623
    %3888 = vmatpush1.bf16.msra.mxu0 %v3622
    %3889 = vmatprep.subr.bf16.mxu0 %v3625
    %3890 = vmatpush1.bf16.msra.mxu0 %v3624
    %3891 = vmatprep.subr.bf16.mxu0 %v3627
    %3892 = vmatpush1.bf16.msra.mxu0 %v3626
    %3893 = vmatprep.mubr.bf16.mxu0 %v3035
    %3894 = vmatmul.mubr.bf16.gmra.mrb[0].mxu0 %v3034
    %v3895 = vpop.f32.mrb[0].mxu0
    %v3896 = vadd.f32 %v3855, %v3895
    %v3897 = vpop.f32.mrb[0].mxu0
    %v3898 = vadd.f32 %v3857, %v3897
    %v3899 = vpop.f32.mrb[0].mxu0
    %v3900 = vpop.f32.mrb[0].mxu0
    %3901 = vdwg.mxu0
    %3902 = vmatprep.subr.bf16.mxu0 %v3629
    %3903 = vmatpush1.bf16.msra.mxu0 %v3628
    %3904 = vmatprep.subr.bf16.mxu0 %v3631
    %3905 = vmatpush1.bf16.msra.mxu0 %v3630
    %3906 = vmatprep.subr.bf16.mxu0 %v3633
    %3907 = vmatpush1.bf16.msra.mxu0 %v3632
    %3908 = vmatprep.subr.bf16.mxu0 %v3635
    %3909 = vmatpush1.bf16.msra.mxu0 %v3634
    %3910 = vmatprep.subr.bf16.mxu0 %v3637
    %3911 = vmatpush1.bf16.msra.mxu0 %v3636
    %3912 = vmatprep.subr.bf16.mxu0 %v3639
    %3913 = vmatpush1.bf16.msra.mxu0 %v3638
    %3914 = vmatprep.subr.bf16.mxu0 %v3641
    %3915 = vmatpush1.bf16.msra.mxu0 %v3640
    %3916 = vmatprep.subr.bf16.mxu0 %v3643
    %3917 = vmatpush1.bf16.msra.mxu0 %v3642
    %3918 = vmatprep.subr.bf16.mxu0 %v3645
    %3919 = vmatpush1.bf16.msra.mxu0 %v3644
    %3920 = vmatprep.subr.bf16.mxu0 %v3647
    %3921 = vmatpush1.bf16.msra.mxu0 %v3646
    %3922 = vmatprep.subr.bf16.mxu0 %v3649
    %3923 = vmatpush1.bf16.msra.mxu0 %v3648
    %3924 = vmatprep.subr.bf16.mxu0 %v3651
    %3925 = vmatpush1.bf16.msra.mxu0 %v3650
    %3926 = vmatprep.subr.bf16.mxu0 %v3653
    %3927 = vmatpush1.bf16.msra.mxu0 %v3652
    %3928 = vmatprep.subr.bf16.mxu0 %v3655
    %3929 = vmatpush1.bf16.msra.mxu0 %v3654
    %3930 = vmatprep.subr.bf16.mxu0 %v3657
    %3931 = vmatpush1.bf16.msra.mxu0 %v3656
    %3932 = vmatprep.subr.bf16.mxu0 %v3659
    %3933 = vmatpush1.bf16.msra.mxu0 %v3658
    %3934 = vmatprep.mubr.bf16.mxu0 %v3037
    %3935 = vmatmul.mubr.bf16.gmra.mrb[0].mxu0 %v3036
    %v3936 = vpop.f32.mrb[0].mxu0
    %v3937 = vadd.f32 %v3896, %v3936
    %v3938 = vpop.f32.mrb[0].mxu0
    %v3939 = vadd.f32 %v3898, %v3938
    %v3940 = vpop.f32.mrb[0].mxu0
    %v3941 = vpop.f32.mrb[0].mxu0
    %3942 = vdwg.mxu0
    %3943 = vmatprep.subr.bf16.mxu0 %v3661
    %3944 = vmatpush1.bf16.msra.mxu0 %v3660
    %3945 = vmatprep.subr.bf16.mxu0 %v3663
    %3946 = vmatpush1.bf16.msra.mxu0 %v3662
    %3947 = vmatprep.subr.bf16.mxu0 %v3665
    %3948 = vmatpush1.bf16.msra.mxu0 %v3664
    %3949 = vmatprep.subr.bf16.mxu0 %v3667
    %3950 = vmatpush1.bf16.msra.mxu0 %v3666
    %3951 = vmatprep.subr.bf16.mxu0 %v3669
    %3952 = vmatpush1.bf16.msra.mxu0 %v3668
    %3953 = vmatprep.subr.bf16.mxu0 %v3671
    %3954 = vmatpush1.bf16.msra.mxu0 %v3670
    %3955 = vmatprep.subr.bf16.mxu0 %v3673
    %3956 = vmatpush1.bf16.msra.mxu0 %v3672
    %3957 = vmatprep.subr.bf16.mxu0 %v3675
    %3958 = vmatpush1.bf16.msra.mxu0 %v3674
    %3959 = vmatprep.subr.bf16.mxu0 %v3677
    %3960 = vmatpush1.bf16.msra.mxu0 %v3676
    %3961 = vmatprep.subr.bf16.mxu0 %v3679
    %3962 = vmatpush1.bf16.msra.mxu0 %v3678
    %3963 = vmatprep.subr.bf16.mxu0 %v3681
    %3964 = vmatpush1.bf16.msra.mxu0 %v3680
    %3965 = vmatprep.subr.bf16.mxu0 %v3683
    %3966 = vmatpush1.bf16.msra.mxu0 %v3682
    %3967 = vmatprep.subr.bf16.mxu0 %v3685
    %3968 = vmatpush1.bf16.msra.mxu0 %v3684
    %3969 = vmatprep.subr.bf16.mxu0 %v3687
    %3970 = vmatpush1.bf16.msra.mxu0 %v3686
    %3971 = vmatprep.subr.bf16.mxu0 %v3689
    %3972 = vmatpush1.bf16.msra.mxu0 %v3688
    %3973 = vmatprep.subr.bf16.mxu0 %v3691
    %3974 = vmatpush1.bf16.msra.mxu0 %v3690
    %3975 = vmatprep.mubr.bf16.mxu0 %v3039
    %3976 = vmatmul.mubr.bf16.gmra.mrb[0].mxu0 %v3038
    %v3977 = vpop.f32.mrb[0].mxu0
    %v3978 = vadd.f32 %v3937, %v3977
    %v3979 = vpop.f32.mrb[0].mxu0
    %v3980 = vadd.f32 %v3939, %v3979
    %v3981 = vpop.f32.mrb[0].mxu0
    %v3982 = vpop.f32.mrb[0].mxu0
    %3983 = vdwg.mxu0
    %v3984 = vmax.f32 %v3978, 0.0
    %v3985 = vmax.f32 %v3980, 0.0
    %v3986 = vpack.c.bf16 %v3984, %v3984
    %v3987 = vpack.c.bf16 %v3985, %v3985
    %v3988 = vld [vmem:[%s9] sm:$0xf]
    %v3989 = vld [vmem:[%s9 + $0x4] sm:$0xf]
    %v3990 = vld [vmem:[%s9 + $0x8] sm:$0xf]
    %v3991 = vld [vmem:[%s9 + $0xc] sm:$0xf]
    %v3992 = vld [vmem:[%s9 + $0x10] sm:$0xf]
    %v3993 = vld [vmem:[%s9 + $0x14] sm:$0xf]
    %v3994 = vld [vmem:[%s9 + $0x18] sm:$0xf]
    %v3995 = vld [vmem:[%s9 + $0x1c] sm:$0xf]
    %v3996 = vld [vmem:[%s9 + $0x20] sm:$0xf]
    %v3997 = vld [vmem:[%s9 + $0x24] sm:$0xf]
    %v3998 = vld [vmem:[%s9 + $0x28] sm:$0xf]
    %v3999 = vld [vmem:[%s9 + $0x2c] sm:$0xf]
    %v4000 = vld [vmem:[%s9 + $0x30] sm:$0xf]
    %v4001 = vld [vmem:[%s9 + $0x34] sm:$0xf]
    %v4002 = vld [vmem:[%s9 + $0x38] sm:$0xf]
    %v4003 = vld [vmem:[%s9 + $0x3c] sm:$0xf]
    %v4004 = vld [vmem:[%s9 + $0x40] sm:$0xf]
    %v4005 = vld [vmem:[%s9 + $0x44] sm:$0xf]
    %v4006 = vld [vmem:[%s9 + $0x48] sm:$0xf]
    %v4007 = vld [vmem:[%s9 + $0x4c] sm:$0xf]
    %v4008 = vld [vmem:[%s9 + $0x50] sm:$0xf]
    %v4009 = vld [vmem:[%s9 + $0x54] sm:$0xf]
    %v4010 = vld [vmem:[%s9 + $0x58] sm:$0xf]
    %v4011 = vld [vmem:[%s9 + $0x5c] sm:$0xf]
    %v4012 = vld [vmem:[%s9 + $0x60] sm:$0xf]
    %v4013 = vld [vmem:[%s9 + $0x64] sm:$0xf]
    %v4014 = vld [vmem:[%s9 + $0x68] sm:$0xf]
    %v4015 = vld [vmem:[%s9 + $0x6c] sm:$0xf]
    %v4016 = vld [vmem:[%s9 + $0x70] sm:$0xf]
    %v4017 = vld [vmem:[%s9 + $0x74] sm:$0xf]
    %v4018 = vld [vmem:[%s9 + $0x78] sm:$0xf]
    %v4019 = vld [vmem:[%s9 + $0x7c] sm:$0x1]
    %v4020 = vld [vmem:[%s10] sm:$0x1]
    %v4022 = vlaneseq
    %v4023 = vshrl.u32 %v4022, 7
    %v4024 = vsub.s32 0, %v4023
    %v4025 = vrot.slane %v4020, %v4024
    %v4059 = vunpack.c.l.b16 %v3988
    %v4060 = vunpack.c.l.b16 %v3989
    %v4061 = vunpack.c.l.b16 %v3990
    %v4062 = vunpack.c.l.b16 %v3991
    %v4063 = vunpack.c.l.b16 %v3992
    %v4064 = vunpack.c.l.b16 %v3993
    %v4065 = vunpack.c.l.b16 %v3994
    %v4066 = vunpack.c.l.b16 %v3995
    %v4067 = vunpack.c.l.b16 %v3996
    %v4068 = vunpack.c.l.b16 %v3997
    %v4069 = vunpack.c.l.b16 %v3998
    %v4070 = vunpack.c.l.b16 %v3999
    %v4071 = vunpack.c.l.b16 %v4000
    %v4072 = vunpack.c.l.b16 %v4001
    %v4073 = vunpack.c.l.b16 %v4002
    %v4074 = vunpack.c.l.b16 %v4003
    %v4075 = vunpack.c.l.b16 %v4004
    %v4076 = vunpack.c.l.b16 %v4005
    %v4077 = vunpack.c.l.b16 %v4006
    %v4078 = vunpack.c.l.b16 %v4007
    %v4079 = vunpack.c.l.b16 %v4008
    %v4080 = vunpack.c.l.b16 %v4009
    %v4081 = vunpack.c.l.b16 %v4010
    %v4082 = vunpack.c.l.b16 %v4011
    %v4083 = vunpack.c.l.b16 %v4012
    %v4084 = vunpack.c.l.b16 %v4013
    %v4085 = vunpack.c.l.b16 %v4014
    %v4086 = vunpack.c.l.b16 %v4015
    %v4087 = vunpack.c.l.b16 %v4016
    %v4088 = vunpack.c.l.b16 %v4017
    %v4089 = vunpack.c.l.b16 %v4018
    %v4090 = vunpack.c.l.b16 %v4019
    %v4091 = vpack.c.b16 %v4060, %v4059
    %v4092 = vpack.c.b16 %v4062, %v4061
    %v4093 = vpack.c.b16 %v4064, %v4063
    %v4094 = vpack.c.b16 %v4066, %v4065
    %v4095 = vpack.c.b16 %v4068, %v4067
    %v4096 = vpack.c.b16 %v4070, %v4069
    %v4097 = vpack.c.b16 %v4072, %v4071
    %v4098 = vpack.c.b16 %v4074, %v4073
    %v4099 = vpack.c.b16 %v4076, %v4075
    %v4100 = vpack.c.b16 %v4078, %v4077
    %v4101 = vpack.c.b16 %v4080, %v4079
    %v4102 = vpack.c.b16 %v4082, %v4081
    %v4103 = vpack.c.b16 %v4084, %v4083
    %v4104 = vpack.c.b16 %v4086, %v4085
    %v4105 = vpack.c.b16 %v4088, %v4087
    %v4106 = vpack.c.b16 %v4090, %v4089
    %vm4122 = vcmask 998400
    %v4124 = vsel %vm4122, %v3987, 0
    %vm4126 = vcmask 1044480
    %v4128 = vsel %vm4126, %v4106, 0
    %4130 = vmatprep.subr.bf16.mxu0 0
    %4131 = vmatpush1.bf16.msra.mxu0 %v4091
    %4132 = vmatprep.subr.bf16.mxu0 0
    %4133 = vmatpush1.bf16.msra.mxu0 %v4092
    %4134 = vmatprep.subr.bf16.mxu0 0
    %4135 = vmatpush1.bf16.msra.mxu0 %v4093
    %4136 = vmatprep.subr.bf16.mxu0 0
    %4137 = vmatpush1.bf16.msra.mxu0 %v4094
    %4138 = vmatprep.subr.bf16.mxu0 0
    %4139 = vmatpush1.bf16.msra.mxu0 %v4095
    %4140 = vmatprep.subr.bf16.mxu0 0
    %4141 = vmatpush1.bf16.msra.mxu0 %v4096
    %4142 = vmatprep.subr.bf16.mxu0 0
    %4143 = vmatpush1.bf16.msra.mxu0 %v4097
    %4144 = vmatprep.subr.bf16.mxu0 0
    %4145 = vmatpush1.bf16.msra.mxu0 %v4098
    %4146 = vmatprep.subr.bf16.mxu0 0
    %4147 = vmatpush1.bf16.msra.mxu0 %v4099
    %4148 = vmatprep.subr.bf16.mxu0 0
    %4149 = vmatpush1.bf16.msra.mxu0 %v4100
    %4150 = vmatprep.subr.bf16.mxu0 0
    %4151 = vmatpush1.bf16.msra.mxu0 %v4101
    %4152 = vmatprep.subr.bf16.mxu0 0
    %4153 = vmatpush1.bf16.msra.mxu0 %v4102
    %4154 = vmatprep.subr.bf16.mxu0 0
    %4155 = vmatpush1.bf16.msra.mxu0 %v4103
    %4156 = vmatprep.subr.bf16.mxu0 0
    %4157 = vmatpush1.bf16.msra.mxu0 %v4104
    %4158 = vmatprep.subr.bf16.mxu0 0
    %4159 = vmatpush1.bf16.msra.mxu0 %v4105
    %4160 = vmatprep.subr.bf16.mxu0 0
    %4161 = vmatpush1.bf16.msra.mxu0 %v4128
    %4162 = vmatprep.mubr.bf16.mxu0 %v4124
    %4163 = vmatmul.mubr.bf16.gmra.mrb[0].mxu0 %v3986
    %v4164 = vpop.f32.mrb[0].mxu0
    %v4165 = vadd.f32 %v4025, %v4164
    %v4166 = vpop.f32.mrb[0].mxu0
    %v4167 = vpop.f32.mrb[0].mxu0
    %v4168 = vpop.f32.mrb[0].mxu0
    %4169 = vdwg.mxu0
    %v4170 = vmax.f32 %v4165, 0.0
    %v4171 = vpack.c.bf16 %v4170, %v4170
    %v4172 = vld [vmem:[%s11] sm:$0xf]
    %v4173 = vld [vmem:[%s11 + $0x4] sm:$0xf]
    %v4174 = vld [vmem:[%s11 + $0x8] sm:$0xf]
    %v4175 = vld [vmem:[%s11 + $0xc] sm:$0xf]
    %v4176 = vld [vmem:[%s11 + $0x10] sm:$0xf]
    %v4177 = vld [vmem:[%s11 + $0x14] sm:$0xf]
    %v4178 = vld [vmem:[%s11 + $0x18] sm:$0x1]
    %v4179 = vld [vmem:[%s12] sm:$0x1]
    %v4181 = vlaneseq
    %v4182 = vshrl.u32 %v4181, 7
    %v4183 = vsub.s32 0, %v4182
    %v4184 = vrot.slane %v4179, %v4183
    %v4193 = vunpack.c.l.b16 %v4172
    %v4194 = vunpack.c.l.b16 %v4173
    %v4195 = vunpack.c.l.b16 %v4174
    %v4196 = vunpack.c.l.b16 %v4175
    %v4197 = vunpack.c.l.b16 %v4176
    %v4198 = vunpack.c.l.b16 %v4177
    %v4199 = vunpack.c.l.b16 %v4178
    %v4200 = vpack.c.b16 %v4194, %v4193
    %v4201 = vpack.c.b16 %v4196, %v4195
    %v4202 = vpack.c.b16 %v4198, %v4197
    %v4203 = vpack.c.b16 %v4199, %v4199
    %vm4207 = vcmask 408576
    %v4209 = vsel %vm4207, %v4171, 0
    %vm4211 = vcmask 1040384
    %v4213 = vsel %vm4211, %v4203, 0
    %4215 = vmatprep.subr.bf16.mxu0 0
    %4216 = vmatpush1.bf16.msra.mxu0 %v4200
    %4217 = vmatprep.subr.bf16.mxu0 0
    %4218 = vmatpush1.bf16.msra.mxu0 %v4201
    %4219 = vmatprep.subr.bf16.mxu0 0
    %4220 = vmatpush1.bf16.msra.mxu0 %v4202
    %4221 = vmatprep.subr.bf16.mxu0 0
    %4222 = vmatpush1.bf16.msra.mxu0 %v4213
    %4223 = vmatprep.subr.bf16.mxu0 0
    %4224 = vmatpush1.bf16.msra.mxu0 0
    %4225 = vmatprep.subr.bf16.mxu0 0
    %4226 = vmatpush1.bf16.msra.mxu0 0
    %4227 = vmatprep.subr.bf16.mxu0 0
    %4228 = vmatpush1.bf16.msra.mxu0 0
    %4229 = vmatprep.subr.bf16.mxu0 0
    %4230 = vmatpush1.bf16.msra.mxu0 0
    %4231 = vmatprep.subr.bf16.mxu0 0
    %4232 = vmatpush1.bf16.msra.mxu0 0
    %4233 = vmatprep.subr.bf16.mxu0 0
    %4234 = vmatpush1.bf16.msra.mxu0 0
    %4235 = vmatprep.subr.bf16.mxu0 0
    %4236 = vmatpush1.bf16.msra.mxu0 0
    %4237 = vmatprep.subr.bf16.mxu0 0
    %4238 = vmatpush1.bf16.msra.mxu0 0
    %4239 = vmatprep.subr.bf16.mxu0 0
    %4240 = vmatpush1.bf16.msra.mxu0 0
    %4241 = vmatprep.subr.bf16.mxu0 0
    %4242 = vmatpush1.bf16.msra.mxu0 0
    %4243 = vmatprep.subr.bf16.mxu0 0
    %4244 = vmatpush1.bf16.msra.mxu0 0
    %4245 = vmatprep.subr.bf16.mxu0 0
    %4246 = vmatpush1.bf16.msra.mxu0 0
    %4247 = vmatprep.mubr.bf16.mxu0 0
    %4248 = vmatmul.mubr.bf16.gmra.mrb[0].mxu0 %v4209
    %v4249 = vpop.f32.mrb[0].mxu0
    %v4250 = vadd.f32 %v4184, %v4249
    %v4251 = vpop.f32.mrb[0].mxu0
    %v4252 = vpop.f32.mrb[0].mxu0
    %v4253 = vpop.f32.mrb[0].mxu0
    %4254 = vdwg.mxu0
    %4255 = vst [vmem:[#allocation19] sm:$0x3] %v4250
    %v4256 = vpack.c.bf16 %v4250, %v4250
    %v4257 = vld [vmem:[%s13] sm:$0xf]
    %v4258 = vld [vmem:[%s13 + $0x4] sm:$0xf]
    %v4259 = vld [vmem:[%s13 + $0x8] sm:$0xf]
    %v4260 = vld [vmem:[%s13 + $0xc] sm:$0xf]
    %v4261 = vld [vmem:[%s13 + $0x10] sm:$0xf]
    %v4262 = vld [vmem:[%s13 + $0x14] sm:$0xf]
    %v4263 = vld [vmem:[%s13 + $0x18] sm:$0xf]
    %v4264 = vld [vmem:[%s13 + $0x1c] sm:$0xf]
    %v4265 = vld [vmem:[%s13 + $0x20] sm:$0xf]
    %v4266 = vld [vmem:[%s13 + $0x24] sm:$0xf]
    %v4267 = vld [vmem:[%s13 + $0x28] sm:$0xf]
    %v4268 = vld [vmem:[%s13 + $0x2c] sm:$0xf]
    %v4269 = vld [vmem:[%s13 + $0x30] sm:$0xf]
    %v4270 = vld [vmem:[%s13 + $0x34] sm:$0xf]
    %v4271 = vld [vmem:[%s13 + $0x38] sm:$0xf]
    %v4272 = vld [vmem:[%s13 + $0x3c] sm:$0xf]
    %v4273 = vld [vmem:[%s14] sm:$0x1]
    %v4275 = vlaneseq
    %v4276 = vshrl.u32 %v4275, 7
    %v4277 = vsub.s32 0, %v4276
    %v4278 = vrot.slane %v4273, %v4277
    %v4296 = vunpack.c.l.b16 %v4257
    %v4297 = vunpack.c.l.b16 %v4258
    %v4298 = vunpack.c.l.b16 %v4259
    %v4299 = vunpack.c.l.b16 %v4260
    %v4300 = vunpack.c.l.b16 %v4261
    %v4301 = vunpack.c.l.b16 %v4262
    %v4302 = vunpack.c.l.b16 %v4263
    %v4303 = vunpack.c.l.b16 %v4264
    %v4304 = vunpack.c.l.b16 %v4265
    %v4305 = vunpack.c.l.b16 %v4266
    %v4306 = vunpack.c.l.b16 %v4267
    %v4307 = vunpack.c.l.b16 %v4268
    %v4308 = vunpack.c.l.b16 %v4269
    %v4309 = vunpack.c.l.b16 %v4270
    %v4310 = vunpack.c.l.b16 %v4271
    %v4311 = vunpack.c.l.b16 %v4272
    %v4312 = vpack.c.b16 %v4297, %v4296
    %v4313 = vpack.c.b16 %v4299, %v4298
    %v4314 = vpack.c.b16 %v4301, %v4300
    %v4315 = vpack.c.b16 %v4303, %v4302
    %v4316 = vpack.c.b16 %v4305, %v4304
    %v4317 = vpack.c.b16 %v4307, %v4306
    %v4318 = vpack.c.b16 %v4309, %v4308
    %v4319 = vpack.c.b16 %v4311, %v4310
    %4328 = vmatprep.subr.bf16.mxu0 0
    %4329 = vmatpush1.bf16.msra.mxu0 %v4312
    %4330 = vmatprep.subr.bf16.mxu0 0
    %4331 = vmatpush1.bf16.msra.mxu0 %v4313
    %4332 = vmatprep.subr.bf16.mxu0 0
    %4333 = vmatpush1.bf16.msra.mxu0 %v4314
    %4334 = vmatprep.subr.bf16.mxu0 0
    %4335 = vmatpush1.bf16.msra.mxu0 %v4315
    %4336 = vmatprep.subr.bf16.mxu0 0
    %4337 = vmatpush1.bf16.msra.mxu0 %v4316
    %4338 = vmatprep.subr.bf16.mxu0 0
    %4339 = vmatpush1.bf16.msra.mxu0 %v4317
    %4340 = vmatprep.subr.bf16.mxu0 0
    %4341 = vmatpush1.bf16.msra.mxu0 %v4318
    %4342 = vmatprep.subr.bf16.mxu0 0
    %4343 = vmatpush1.bf16.msra.mxu0 %v4319
    %4344 = vmatprep.subr.bf16.mxu0 0
    %4345 = vmatpush1.bf16.msra.mxu0 0
    %4346 = vmatprep.subr.bf16.mxu0 0
    %4347 = vmatpush1.bf16.msra.mxu0 0
    %4348 = vmatprep.subr.bf16.mxu0 0
    %4349 = vmatpush1.bf16.msra.mxu0 0
    %4350 = vmatprep.subr.bf16.mxu0 0
    %4351 = vmatpush1.bf16.msra.mxu0 0
    %4352 = vmatprep.subr.bf16.mxu0 0
    %4353 = vmatpush1.bf16.msra.mxu0 0
    %4354 = vmatprep.subr.bf16.mxu0 0
    %4355 = vmatpush1.bf16.msra.mxu0 0
    %4356 = vmatprep.subr.bf16.mxu0 0
    %4357 = vmatpush1.bf16.msra.mxu0 0
    %4358 = vmatprep.subr.bf16.mxu0 0
    %4359 = vmatpush1.bf16.msra.mxu0 0
    %4360 = vmatprep.mubr.bf16.mxu0 0
    %4361 = vmatmul.mubr.bf16.gmra.mrb[0].mxu0 %v4256
    %v4362 = vpop.f32.mrb[0].mxu0
    %v4363 = vadd.f32 %v4278, %v4362
    %v4364 = vpop.f32.mrb[0].mxu0
    %v4365 = vpop.f32.mrb[0].mxu0
    %v4366 = vpop.f32.mrb[0].mxu0
    %4367 = vdwg.mxu0
    %v4368 = vmax.f32 %v4363, 0.0
    %v4369 = vpack.c.bf16 %v4368, %v4368
    %v4370 = vld [vmem:[%s15] sm:$0xff]
    %v4371 = vld [vmem:[%s15 + $0x8] sm:$0xff]
    %v4372 = vld [vmem:[%s15 + $0x10] sm:$0xff]
    %v4373 = vld [vmem:[%s15 + $0x18] sm:$0xff]
    %v4374 = vld [vmem:[%s15 + $0x20] sm:$0xff]
    %v4375 = vld [vmem:[%s15 + $0x28] sm:$0xff]
    %v4376 = vld [vmem:[%s15 + $0x30] sm:$0x11]
    %v4377 = vld [vmem:[%s16] sm:$0x3]
    %v4379 = vlaneseq
    %v4380 = vshrl.u32 %v4379, 7
    %v4381 = vsub.s32 0, %v4380
    %v4382 = vrot.slane %v4377, %v4381
    %v4383 = vlaneseq
    %v4384 = vshrl.u32 %v4383, 7
    %v4385 = vsub.s32 1, %v4384
    %v4386 = vrot.slane %v4377, %v4385
    %v4396 = vunpack.c.l.b16 %v4370
    %v4397 = vunpack.c.h.b16 %v4370
    %v4398 = vunpack.c.l.b16 %v4371
    %v4399 = vunpack.c.h.b16 %v4371
    %v4400 = vunpack.c.l.b16 %v4372
    %v4401 = vunpack.c.h.b16 %v4372
    %v4402 = vunpack.c.l.b16 %v4373
    %v4403 = vunpack.c.h.b16 %v4373
    %v4404 = vunpack.c.l.b16 %v4374
    %v4405 = vunpack.c.h.b16 %v4374
    %v4406 = vunpack.c.l.b16 %v4375
    %v4407 = vunpack.c.h.b16 %v4375
    %v4408 = vunpack.c.l.b16 %v4376
    %v4409 = vunpack.c.h.b16 %v4376
    %v4410 = vpack.c.b16 %v4398, %v4396
    %v4411 = vpack.c.b16 %v4399, %v4397
    %v4412 = vpack.c.b16 %v4402, %v4400
    %v4413 = vpack.c.b16 %v4403, %v4401
    %v4414 = vpack.c.b16 %v4406, %v4404
    %v4415 = vpack.c.b16 %v4407, %v4405
    %v4416 = vpack.c.b16 %v4408, %v4408
    %v4417 = vpack.c.b16 %v4409, %v4409
    %v4425 = vsel %vm4207, %v4369, 0
    %v4428 = vsel %vm4211, %v4416, 0
    %v4431 = vsel %vm4211, %v4417, 0
    %4433 = vmatprep.subr.bf16.mxu0 %v4411
    %4434 = vmatpush1.bf16.msra.mxu0 %v4410
    %4435 = vmatprep.subr.bf16.mxu0 %v4413
    %4436 = vmatpush1.bf16.msra.mxu0 %v4412
    %4437 = vmatprep.subr.bf16.mxu0 %v4415
    %4438 = vmatpush1.bf16.msra.mxu0 %v4414
    %4439 = vmatprep.subr.bf16.mxu0 %v4431
    %4440 = vmatpush1.bf16.msra.mxu0 %v4428
    %4441 = vmatprep.subr.bf16.mxu0 0
    %4442 = vmatpush1.bf16.msra.mxu0 0
    %4443 = vmatprep.subr.bf16.mxu0 0
    %4444 = vmatpush1.bf16.msra.mxu0 0
    %4445 = vmatprep.subr.bf16.mxu0 0
    %4446 = vmatpush1.bf16.msra.mxu0 0
    %4447 = vmatprep.subr.bf16.mxu0 0
    %4448 = vmatpush1.bf16.msra.mxu0 0
    %4449 = vmatprep.subr.bf16.mxu0 0
    %4450 = vmatpush1.bf16.msra.mxu0 0
    %4451 = vmatprep.subr.bf16.mxu0 0
    %4452 = vmatpush1.bf16.msra.mxu0 0
    %4453 = vmatprep.subr.bf16.mxu0 0
    %4454 = vmatpush1.bf16.msra.mxu0 0
    %4455 = vmatprep.subr.bf16.mxu0 0
    %4456 = vmatpush1.bf16.msra.mxu0 0
    %4457 = vmatprep.subr.bf16.mxu0 0
    %4458 = vmatpush1.bf16.msra.mxu0 0
    %4459 = vmatprep.subr.bf16.mxu0 0
    %4460 = vmatpush1.bf16.msra.mxu0 0
    %4461 = vmatprep.subr.bf16.mxu0 0
    %4462 = vmatpush1.bf16.msra.mxu0 0
    %4463 = vmatprep.subr.bf16.mxu0 0
    %4464 = vmatpush1.bf16.msra.mxu0 0
    %4465 = vmatprep.mubr.bf16.mxu0 0
    %4466 = vmatmul.mubr.bf16.gmra.mrb[0].mxu0 %v4425
    %v4467 = vpop.f32.mrb[0].mxu0
    %v4468 = vadd.f32 %v4382, %v4467
    %v4469 = vpop.f32.mrb[0].mxu0
    %v4470 = vadd.f32 %v4386, %v4469
    %v4471 = vpop.f32.mrb[0].mxu0
    %v4472 = vpop.f32.mrb[0].mxu0
    %4473 = vdwg.mxu0
    %v4474 = vmax.f32 %v4468, 0.0
    %v4475 = vmax.f32 %v4470, 0.0
    %s4476 = smul.u32 4, 32
    %s4477 = smul.u32 %s4476, 8
    %s4478 = sshll.u32 %s4477, 4
    %4479 = dma.done [#allocation12], %s4478
    %v4480 = vpack.c.bf16 %v4474, %v4474
    %v4481 = vpack.c.bf16 %v4475, %v4475
    %v4482 = vld [vmem:[#allocation8] sm:$0xff]
    %v4483 = vld [vmem:[#allocation8 + $0x8] sm:$0xff]
    %v4484 = vld [vmem:[#allocation8 + $0x10] sm:$0xff]
    %v4485 = vld [vmem:[#allocation8 + $0x18] sm:$0xff]
    %v4486 = vld [vmem:[#allocation8 + $0x20] sm:$0xff]
    %v4487 = vld [vmem:[#allocation8 + $0x28] sm:$0xff]
    %v4488 = vld [vmem:[#allocation8 + $0x30] sm:$0xff]
    %v4489 = vld [vmem:[#allocation8 + $0x38] sm:$0xff]
    %v4490 = vld [vmem:[#allocation8 + $0x40] sm:$0xff]
    %v4491 = vld [vmem:[#allocation8 + $0x48] sm:$0xff]
    %v4492 = vld [vmem:[#allocation8 + $0x50] sm:$0xff]
    %v4493 = vld [vmem:[#allocation8 + $0x58] sm:$0xff]
    %v4494 = vld [vmem:[#allocation8 + $0x60] sm:$0xff]
    %v4495 = vld [vmem:[#allocation8 + $0x68] sm:$0xff]
    %v4496 = vld [vmem:[#allocation8 + $0x70] sm:$0xff]
    %v4497 = vld [vmem:[#allocation8 + $0x78] sm:$0xff]
    %v4498 = vld [vmem:[#allocation8 + $0x80] sm:$0xff]
    %v4499 = vld [vmem:[#allocation8 + $0x88] sm:$0xff]
    %v4500 = vld [vmem:[#allocation8 + $0x90] sm:$0xff]
    %v4501 = vld [vmem:[#allocation8 + $0x98] sm:$0xff]
    %v4502 = vld [vmem:[#allocation8 + $0xa0] sm:$0xff]
    %v4503 = vld [vmem:[#allocation8 + $0xa8] sm:$0xff]
    %v4504 = vld [vmem:[#allocation8 + $0xb0] sm:$0xff]
    %v4505 = vld [vmem:[#allocation8 + $0xb8] sm:$0xff]
    %v4506 = vld [vmem:[#allocation8 + $0xc0] sm:$0xff]
    %v4507 = vld [vmem:[#allocation8 + $0xc8] sm:$0xff]
    %v4508 = vld [vmem:[#allocation8 + $0xd0] sm:$0xff]
    %v4509 = vld [vmem:[#allocation8 + $0xd8] sm:$0xff]
    %v4510 = vld [vmem:[#allocation8 + $0xe0] sm:$0xff]
    %v4511 = vld [vmem:[#allocation8 + $0xe8] sm:$0xff]
    %v4512 = vld [vmem:[#allocation8 + $0xf0] sm:$0xff]
    %v4513 = vld [vmem:[#allocation8 + $0xf8] sm:$0xff]
    %v4514 = vld [vmem:[#allocation8 + $0x100] sm:$0xff]
    %v4515 = vld [vmem:[#allocation8 + $0x108] sm:$0xff]
    %v4516 = vld [vmem:[#allocation8 + $0x110] sm:$0xff]
    %v4517 = vld [vmem:[#allocation8 + $0x118] sm:$0xff]
    %v4518 = vld [vmem:[#allocation8 + $0x120] sm:$0xff]
    %v4519 = vld [vmem:[#allocation8 + $0x128] sm:$0xff]
    %v4520 = vld [vmem:[#allocation8 + $0x130] sm:$0xff]
    %v4521 = vld [vmem:[#allocation8 + $0x138] sm:$0xff]
    %v4522 = vld [vmem:[#allocation8 + $0x140] sm:$0xff]
    %v4523 = vld [vmem:[#allocation8 + $0x148] sm:$0xff]
    %v4524 = vld [vmem:[#allocation8 + $0x150] sm:$0xff]
    %v4525 = vld [vmem:[#allocation8 + $0x158] sm:$0xff]
    %v4526 = vld [vmem:[#allocation8 + $0x160] sm:$0xff]
    %v4527 = vld [vmem:[#allocation8 + $0x168] sm:$0xff]
    %v4528 = vld [vmem:[#allocation8 + $0x170] sm:$0xff]
    %v4529 = vld [vmem:[#allocation8 + $0x178] sm:$0xff]
    %v4530 = vld [vmem:[#allocation8 + $0x180] sm:$0xff]
    %v4531 = vld [vmem:[#allocation8 + $0x188] sm:$0xff]
    %v4532 = vld [vmem:[#allocation8 + $0x190] sm:$0xff]
    %v4533 = vld [vmem:[#allocation8 + $0x198] sm:$0xff]
    %v4534 = vld [vmem:[#allocation8 + $0x1a0] sm:$0xff]
    %v4535 = vld [vmem:[#allocation8 + $0x1a8] sm:$0xff]
    %v4536 = vld [vmem:[#allocation8 + $0x1b0] sm:$0xff]
    %v4537 = vld [vmem:[#allocation8 + $0x1b8] sm:$0xff]
    %v4538 = vld [vmem:[#allocation8 + $0x1c0] sm:$0xff]
    %v4539 = vld [vmem:[#allocation8 + $0x1c8] sm:$0xff]
    %v4540 = vld [vmem:[#allocation8 + $0x1d0] sm:$0xff]
    %v4541 = vld [vmem:[#allocation8 + $0x1d8] sm:$0xff]
    %v4542 = vld [vmem:[#allocation8 + $0x1e0] sm:$0xff]
    %v4543 = vld [vmem:[#allocation8 + $0x1e8] sm:$0xff]
    %v4544 = vld [vmem:[#allocation8 + $0x1f0] sm:$0xff]
    %v4545 = vld [vmem:[#allocation8 + $0x1f8] sm:$0xff]
    %v4546 = vld [vmem:[#allocation8 + $0x200] sm:$0xff]
    %v4547 = vld [vmem:[#allocation8 + $0x208] sm:$0xff]
    %v4548 = vld [vmem:[#allocation8 + $0x210] sm:$0xff]
    %v4549 = vld [vmem:[#allocation8 + $0x218] sm:$0xff]
    %v4550 = vld [vmem:[#allocation8 + $0x220] sm:$0xff]
    %v4551 = vld [vmem:[#allocation8 + $0x228] sm:$0xff]
    %v4552 = vld [vmem:[#allocation8 + $0x230] sm:$0xff]
    %v4553 = vld [vmem:[#allocation8 + $0x238] sm:$0xff]
    %v4554 = vld [vmem:[#allocation8 + $0x240] sm:$0xff]
    %v4555 = vld [vmem:[#allocation8 + $0x248] sm:$0xff]
    %v4556 = vld [vmem:[#allocation8 + $0x250] sm:$0xff]
    %v4557 = vld [vmem:[#allocation8 + $0x258] sm:$0xff]
    %v4558 = vld [vmem:[#allocation8 + $0x260] sm:$0xff]
    %v4559 = vld [vmem:[#allocation8 + $0x268] sm:$0xff]
    %v4560 = vld [vmem:[#allocation8 + $0x270] sm:$0xff]
    %v4561 = vld [vmem:[#allocation8 + $0x278] sm:$0xff]
    %v4562 = vld [vmem:[#allocation8 + $0x280] sm:$0xff]
    %v4563 = vld [vmem:[#allocation8 + $0x288] sm:$0xff]
    %v4564 = vld [vmem:[#allocation8 + $0x290] sm:$0xff]
    %v4565 = vld [vmem:[#allocation8 + $0x298] sm:$0xff]
    %v4566 = vld [vmem:[#allocation8 + $0x2a0] sm:$0xff]
    %v4567 = vld [vmem:[#allocation8 + $0x2a8] sm:$0xff]
    %v4568 = vld [vmem:[#allocation8 + $0x2b0] sm:$0xff]
    %v4569 = vld [vmem:[#allocation8 + $0x2b8] sm:$0xff]
    %v4570 = vld [vmem:[#allocation8 + $0x2c0] sm:$0xff]
    %v4571 = vld [vmem:[#allocation8 + $0x2c8] sm:$0xff]
    %v4572 = vld [vmem:[#allocation8 + $0x2d0] sm:$0xff]
    %v4573 = vld [vmem:[#allocation8 + $0x2d8] sm:$0xff]
    %v4574 = vld [vmem:[#allocation8 + $0x2e0] sm:$0xff]
    %v4575 = vld [vmem:[#allocation8 + $0x2e8] sm:$0xff]
    %v4576 = vld [vmem:[#allocation8 + $0x2f0] sm:$0xff]
    %v4577 = vld [vmem:[#allocation8 + $0x2f8] sm:$0xff]
    %v4578 = vld [vmem:[#allocation8 + $0x300] sm:$0xff]
    %v4579 = vld [vmem:[#allocation8 + $0x308] sm:$0xff]
    %v4580 = vld [vmem:[#allocation8 + $0x310] sm:$0xff]
    %v4581 = vld [vmem:[#allocation8 + $0x318] sm:$0xff]
    %v4582 = vld [vmem:[#allocation8 + $0x320] sm:$0xff]
    %v4583 = vld [vmem:[#allocation8 + $0x328] sm:$0xff]
    %v4584 = vld [vmem:[#allocation8 + $0x330] sm:$0xff]
    %v4585 = vld [vmem:[#allocation8 + $0x338] sm:$0xff]
    %v4586 = vld [vmem:[#allocation8 + $0x340] sm:$0xff]
    %v4587 = vld [vmem:[#allocation8 + $0x348] sm:$0xff]
    %v4588 = vld [vmem:[#allocation8 + $0x350] sm:$0xff]
    %v4589 = vld [vmem:[#allocation8 + $0x358] sm:$0xff]
    %v4590 = vld [vmem:[#allocation8 + $0x360] sm:$0xff]
    %v4591 = vld [vmem:[#allocation8 + $0x368] sm:$0xff]
    %v4592 = vld [vmem:[#allocation8 + $0x370] sm:$0xff]
    %v4593 = vld [vmem:[#allocation8 + $0x378] sm:$0xff]
    %v4594 = vld [vmem:[#allocation8 + $0x380] sm:$0xff]
    %v4595 = vld [vmem:[#allocation8 + $0x388] sm:$0xff]
    %v4596 = vld [vmem:[#allocation8 + $0x390] sm:$0xff]
    %v4597 = vld [vmem:[#allocation8 + $0x398] sm:$0xff]
    %v4598 = vld [vmem:[#allocation8 + $0x3a0] sm:$0xff]
    %v4599 = vld [vmem:[#allocation8 + $0x3a8] sm:$0xff]
    %v4600 = vld [vmem:[#allocation8 + $0x3b0] sm:$0xff]
    %v4601 = vld [vmem:[#allocation8 + $0x3b8] sm:$0xff]
    %v4602 = vld [vmem:[#allocation8 + $0x3c0] sm:$0xff]
    %v4603 = vld [vmem:[#allocation8 + $0x3c8] sm:$0xff]
    %v4604 = vld [vmem:[#allocation8 + $0x3d0] sm:$0xff]
    %v4605 = vld [vmem:[#allocation8 + $0x3d8] sm:$0xff]
    %v4606 = vld [vmem:[#allocation8 + $0x3e0] sm:$0x11]
    %v4607 = vld [vmem:[#allocation8 + $0x3e8] sm:$0x11]
    %v4608 = vld [vmem:[#allocation8 + $0x3f0] sm:$0x11]
    %v4609 = vld [vmem:[#allocation8 + $0x3f8] sm:$0x11]
    %v4610 = vld [vmem:[%s18] sm:$0xff]
    %v4612 = vlaneseq
    %v4613 = vshrl.u32 %v4612, 7
    %v4614 = vsub.s32 0, %v4613
    %v4615 = vrot.slane %v4610, %v4614
    %v4616 = vlaneseq
    %v4617 = vshrl.u32 %v4616, 7
    %v4618 = vsub.s32 1, %v4617
    %v4619 = vrot.slane %v4610, %v4618
    %v4620 = vlaneseq
    %v4621 = vshrl.u32 %v4620, 7
    %v4622 = vsub.s32 2, %v4621
    %v4623 = vrot.slane %v4610, %v4622
    %v4624 = vlaneseq
    %v4625 = vshrl.u32 %v4624, 7
    %v4626 = vsub.s32 3, %v4625
    %v4627 = vrot.slane %v4610, %v4626
    %v4628 = vlaneseq
    %v4629 = vshrl.u32 %v4628, 7
    %v4630 = vsub.s32 4, %v4629
    %v4631 = vrot.slane %v4610, %v4630
    %v4632 = vlaneseq
    %v4633 = vshrl.u32 %v4632, 7
    %v4634 = vsub.s32 5, %v4633
    %v4635 = vrot.slane %v4610, %v4634
    %v4636 = vlaneseq
    %v4637 = vshrl.u32 %v4636, 7
    %v4638 = vsub.s32 6, %v4637
    %v4639 = vrot.slane %v4610, %v4638
    %v4640 = vlaneseq
    %v4641 = vshrl.u32 %v4640, 7
    %v4642 = vsub.s32 7, %v4641
    %v4643 = vrot.slane %v4610, %v4642
    %v4780 = vunpack.c.l.b16 %v4482
    %v4781 = vunpack.c.h.b16 %v4482
    %v4782 = vunpack.c.l.b16 %v4483
    %v4783 = vunpack.c.h.b16 %v4483
    %v4784 = vunpack.c.l.b16 %v4484
    %v4785 = vunpack.c.h.b16 %v4484
    %v4786 = vunpack.c.l.b16 %v4485
    %v4787 = vunpack.c.h.b16 %v4485
    %v4788 = vunpack.c.l.b16 %v4486
    %v4789 = vunpack.c.h.b16 %v4486
    %v4790 = vunpack.c.l.b16 %v4487
    %v4791 = vunpack.c.h.b16 %v4487
    %v4792 = vunpack.c.l.b16 %v4488
    %v4793 = vunpack.c.h.b16 %v4488
    %v4794 = vunpack.c.l.b16 %v4489
    %v4795 = vunpack.c.h.b16 %v4489
    %v4796 = vunpack.c.l.b16 %v4490
    %v4797 = vunpack.c.h.b16 %v4490
    %v4798 = vunpack.c.l.b16 %v4491
    %v4799 = vunpack.c.h.b16 %v4491
    %v4800 = vunpack.c.l.b16 %v4492
    %v4801 = vunpack.c.h.b16 %v4492
    %v4802 = vunpack.c.l.b16 %v4493
    %v4803 = vunpack.c.h.b16 %v4493
    %v4804 = vunpack.c.l.b16 %v4494
    %v4805 = vunpack.c.h.b16 %v4494
    %v4806 = vunpack.c.l.b16 %v4495
    %v4807 = vunpack.c.h.b16 %v4495
    %v4808 = vunpack.c.l.b16 %v4496
    %v4809 = vunpack.c.h.b16 %v4496
    %v4810 = vunpack.c.l.b16 %v4497
    %v4811 = vunpack.c.h.b16 %v4497
    %v4812 = vunpack.c.l.b16 %v4498
    %v4813 = vunpack.c.h.b16 %v4498
    %v4814 = vunpack.c.l.b16 %v4499
    %v4815 = vunpack.c.h.b16 %v4499
    %v4816 = vunpack.c.l.b16 %v4500
    %v4817 = vunpack.c.h.b16 %v4500
    %v4818 = vunpack.c.l.b16 %v4501
    %v4819 = vunpack.c.h.b16 %v4501
    %v4820 = vunpack.c.l.b16 %v4502
    %v4821 = vunpack.c.h.b16 %v4502
    %v4822 = vunpack.c.l.b16 %v4503
    %v4823 = vunpack.c.h.b16 %v4503
    %v4824 = vunpack.c.l.b16 %v4504
    %v4825 = vunpack.c.h.b16 %v4504
    %v4826 = vunpack.c.l.b16 %v4505
    %v4827 = vunpack.c.h.b16 %v4505
    %v4828 = vunpack.c.l.b16 %v4506
    %v4829 = vunpack.c.h.b16 %v4506
    %v4830 = vunpack.c.l.b16 %v4507
    %v4831 = vunpack.c.h.b16 %v4507
    %v4832 = vunpack.c.l.b16 %v4508
    %v4833 = vunpack.c.h.b16 %v4508
    %v4834 = vunpack.c.l.b16 %v4509
    %v4835 = vunpack.c.h.b16 %v4509
    %v4836 = vunpack.c.l.b16 %v4510
    %v4837 = vunpack.c.h.b16 %v4510
    %v4838 = vunpack.c.l.b16 %v4511
    %v4839 = vunpack.c.h.b16 %v4511
    %v4840 = vunpack.c.l.b16 %v4512
    %v4841 = vunpack.c.h.b16 %v4512
    %v4842 = vunpack.c.l.b16 %v4513
    %v4843 = vunpack.c.h.b16 %v4513
    %v4844 = vunpack.c.l.b16 %v4514
    %v4845 = vunpack.c.h.b16 %v4514
    %v4846 = vunpack.c.l.b16 %v4515
    %v4847 = vunpack.c.h.b16 %v4515
    %v4848 = vunpack.c.l.b16 %v4516
    %v4849 = vunpack.c.h.b16 %v4516
    %v4850 = vunpack.c.l.b16 %v4517
    %v4851 = vunpack.c.h.b16 %v4517
    %v4852 = vunpack.c.l.b16 %v4518
    %v4853 = vunpack.c.h.b16 %v4518
    %v4854 = vunpack.c.l.b16 %v4519
    %v4855 = vunpack.c.h.b16 %v4519
    %v4856 = vunpack.c.l.b16 %v4520
    %v4857 = vunpack.c.h.b16 %v4520
    %v4858 = vunpack.c.l.b16 %v4521
    %v4859 = vunpack.c.h.b16 %v4521
    %v4860 = vunpack.c.l.b16 %v4522
    %v4861 = vunpack.c.h.b16 %v4522
    %v4862 = vunpack.c.l.b16 %v4523
    %v4863 = vunpack.c.h.b16 %v4523
    %v4864 = vunpack.c.l.b16 %v4524
    %v4865 = vunpack.c.h.b16 %v4524
    %v4866 = vunpack.c.l.b16 %v4525
    %v4867 = vunpack.c.h.b16 %v4525
    %v4868 = vunpack.c.l.b16 %v4526
    %v4869 = vunpack.c.h.b16 %v4526
    %v4870 = vunpack.c.l.b16 %v4527
    %v4871 = vunpack.c.h.b16 %v4527
    %v4872 = vunpack.c.l.b16 %v4528
    %v4873 = vunpack.c.h.b16 %v4528
    %v4874 = vunpack.c.l.b16 %v4529
    %v4875 = vunpack.c.h.b16 %v4529
    %v4876 = vunpack.c.l.b16 %v4530
    %v4877 = vunpack.c.h.b16 %v4530
    %v4878 = vunpack.c.l.b16 %v4531
    %v4879 = vunpack.c.h.b16 %v4531
    %v4880 = vunpack.c.l.b16 %v4532
    %v4881 = vunpack.c.h.b16 %v4532
    %v4882 = vunpack.c.l.b16 %v4533
    %v4883 = vunpack.c.h.b16 %v4533
    %v4884 = vunpack.c.l.b16 %v4534
    %v4885 = vunpack.c.h.b16 %v4534
    %v4886 = vunpack.c.l.b16 %v4535
    %v4887 = vunpack.c.h.b16 %v4535
    %v4888 = vunpack.c.l.b16 %v4536
    %v4889 = vunpack.c.h.b16 %v4536
    %v4890 = vunpack.c.l.b16 %v4537
    %v4891 = vunpack.c.h.b16 %v4537
    %v4892 = vunpack.c.l.b16 %v4538
    %v4893 = vunpack.c.h.b16 %v4538
    %v4894 = vunpack.c.l.b16 %v4539
    %v4895 = vunpack.c.h.b16 %v4539
    %v4896 = vunpack.c.l.b16 %v4540
    %v4897 = vunpack.c.h.b16 %v4540
    %v4898 = vunpack.c.l.b16 %v4541
    %v4899 = vunpack.c.h.b16 %v4541
    %v4900 = vunpack.c.l.b16 %v4542
    %v4901 = vunpack.c.h.b16 %v4542
    %v4902 = vunpack.c.l.b16 %v4543
    %v4903 = vunpack.c.h.b16 %v4543
    %v4904 = vunpack.c.l.b16 %v4544
    %v4905 = vunpack.c.h.b16 %v4544
    %v4906 = vunpack.c.l.b16 %v4545
    %v4907 = vunpack.c.h.b16 %v4545
    %v4908 = vunpack.c.l.b16 %v4546
    %v4909 = vunpack.c.h.b16 %v4546
    %v4910 = vunpack.c.l.b16 %v4547
    %v4911 = vunpack.c.h.b16 %v4547
    %v4912 = vunpack.c.l.b16 %v4548
    %v4913 = vunpack.c.h.b16 %v4548
    %v4914 = vunpack.c.l.b16 %v4549
    %v4915 = vunpack.c.h.b16 %v4549
    %v4916 = vunpack.c.l.b16 %v4550
    %v4917 = vunpack.c.h.b16 %v4550
    %v4918 = vunpack.c.l.b16 %v4551
    %v4919 = vunpack.c.h.b16 %v4551
    %v4920 = vunpack.c.l.b16 %v4552
    %v4921 = vunpack.c.h.b16 %v4552
    %v4922 = vunpack.c.l.b16 %v4553
    %v4923 = vunpack.c.h.b16 %v4553
    %v4924 = vunpack.c.l.b16 %v4554
    %v4925 = vunpack.c.h.b16 %v4554
    %v4926 = vunpack.c.l.b16 %v4555
    %v4927 = vunpack.c.h.b16 %v4555
    %v4928 = vunpack.c.l.b16 %v4556
    %v4929 = vunpack.c.h.b16 %v4556
    %v4930 = vunpack.c.l.b16 %v4557
    %v4931 = vunpack.c.h.b16 %v4557
    %v4932 = vunpack.c.l.b16 %v4558
    %v4933 = vunpack.c.h.b16 %v4558
    %v4934 = vunpack.c.l.b16 %v4559
    %v4935 = vunpack.c.h.b16 %v4559
    %v4936 = vunpack.c.l.b16 %v4560
    %v4937 = vunpack.c.h.b16 %v4560
    %v4938 = vunpack.c.l.b16 %v4561
    %v4939 = vunpack.c.h.b16 %v4561
    %v4940 = vunpack.c.l.b16 %v4562
    %v4941 = vunpack.c.h.b16 %v4562
    %v4942 = vunpack.c.l.b16 %v4563
    %v4943 = vunpack.c.h.b16 %v4563
    %v4944 = vunpack.c.l.b16 %v4564
    %v4945 = vunpack.c.h.b16 %v4564
    %v4946 = vunpack.c.l.b16 %v4565
    %v4947 = vunpack.c.h.b16 %v4565
    %v4948 = vunpack.c.l.b16 %v4566
    %v4949 = vunpack.c.h.b16 %v4566
    %v4950 = vunpack.c.l.b16 %v4567
    %v4951 = vunpack.c.h.b16 %v4567
    %v4952 = vunpack.c.l.b16 %v4568
    %v4953 = vunpack.c.h.b16 %v4568
    %v4954 = vunpack.c.l.b16 %v4569
    %v4955 = vunpack.c.h.b16 %v4569
    %v4956 = vunpack.c.l.b16 %v4570
    %v4957 = vunpack.c.h.b16 %v4570
    %v4958 = vunpack.c.l.b16 %v4571
    %v4959 = vunpack.c.h.b16 %v4571
    %v4960 = vunpack.c.l.b16 %v4572
    %v4961 = vunpack.c.h.b16 %v4572
    %v4962 = vunpack.c.l.b16 %v4573
    %v4963 = vunpack.c.h.b16 %v4573
    %v4964 = vunpack.c.l.b16 %v4574
    %v4965 = vunpack.c.h.b16 %v4574
    %v4966 = vunpack.c.l.b16 %v4575
    %v4967 = vunpack.c.h.b16 %v4575
    %v4968 = vunpack.c.l.b16 %v4576
    %v4969 = vunpack.c.h.b16 %v4576
    %v4970 = vunpack.c.l.b16 %v4577
    %v4971 = vunpack.c.h.b16 %v4577
    %v4972 = vunpack.c.l.b16 %v4578
    %v4973 = vunpack.c.h.b16 %v4578
    %v4974 = vunpack.c.l.b16 %v4579
    %v4975 = vunpack.c.h.b16 %v4579
    %v4976 = vunpack.c.l.b16 %v4580
    %v4977 = vunpack.c.h.b16 %v4580
    %v4978 = vunpack.c.l.b16 %v4581
    %v4979 = vunpack.c.h.b16 %v4581
    %v4980 = vunpack.c.l.b16 %v4582
    %v4981 = vunpack.c.h.b16 %v4582
    %v4982 = vunpack.c.l.b16 %v4583
    %v4983 = vunpack.c.h.b16 %v4583
    %v4984 = vunpack.c.l.b16 %v4584
    %v4985 = vunpack.c.h.b16 %v4584
    %v4986 = vunpack.c.l.b16 %v4585
    %v4987 = vunpack.c.h.b16 %v4585
    %v4988 = vunpack.c.l.b16 %v4586
    %v4989 = vunpack.c.h.b16 %v4586
    %v4990 = vunpack.c.l.b16 %v4587
    %v4991 = vunpack.c.h.b16 %v4587
    %v4992 = vunpack.c.l.b16 %v4588
    %v4993 = vunpack.c.h.b16 %v4588
    %v4994 = vunpack.c.l.b16 %v4589
    %v4995 = vunpack.c.h.b16 %v4589
    %v4996 = vunpack.c.l.b16 %v4590
    %v4997 = vunpack.c.h.b16 %v4590
    %v4998 = vunpack.c.l.b16 %v4591
    %v4999 = vunpack.c.h.b16 %v4591
    %v5000 = vunpack.c.l.b16 %v4592
    %v5001 = vunpack.c.h.b16 %v4592
    %v5002 = vunpack.c.l.b16 %v4593
    %v5003 = vunpack.c.h.b16 %v4593
    %v5004 = vunpack.c.l.b16 %v4594
    %v5005 = vunpack.c.h.b16 %v4594
    %v5006 = vunpack.c.l.b16 %v4595
    %v5007 = vunpack.c.h.b16 %v4595
    %v5008 = vunpack.c.l.b16 %v4596
    %v5009 = vunpack.c.h.b16 %v4596
    %v5010 = vunpack.c.l.b16 %v4597
    %v5011 = vunpack.c.h.b16 %v4597
    %v5012 = vunpack.c.l.b16 %v4598
    %v5013 = vunpack.c.h.b16 %v4598
    %v5014 = vunpack.c.l.b16 %v4599
    %v5015 = vunpack.c.h.b16 %v4599
    %v5016 = vunpack.c.l.b16 %v4600
    %v5017 = vunpack.c.h.b16 %v4600
    %v5018 = vunpack.c.l.b16 %v4601
    %v5019 = vunpack.c.h.b16 %v4601
    %v5020 = vunpack.c.l.b16 %v4602
    %v5021 = vunpack.c.h.b16 %v4602
    %v5022 = vunpack.c.l.b16 %v4603
    %v5023 = vunpack.c.h.b16 %v4603
    %v5024 = vunpack.c.l.b16 %v4604
    %v5025 = vunpack.c.h.b16 %v4604
    %v5026 = vunpack.c.l.b16 %v4605
    %v5027 = vunpack.c.h.b16 %v4605
    %v5028 = vunpack.c.l.b16 %v4606
    %v5029 = vunpack.c.h.b16 %v4606
    %v5030 = vunpack.c.l.b16 %v4607
    %v5031 = vunpack.c.h.b16 %v4607
    %v5032 = vunpack.c.l.b16 %v4608
    %v5033 = vunpack.c.h.b16 %v4608
    %v5034 = vunpack.c.l.b16 %v4609
    %v5035 = vunpack.c.h.b16 %v4609
    %v5036 = vpack.c.b16 %v4788, %v4780
    %v5037 = vpack.c.b16 %v4789, %v4781
    %v5038 = vpack.c.b16 %v4790, %v4782
    %v5039 = vpack.c.b16 %v4791, %v4783
    %v5040 = vpack.c.b16 %v4792, %v4784
    %v5041 = vpack.c.b16 %v4793, %v4785
    %v5042 = vpack.c.b16 %v4794, %v4786
    %v5043 = vpack.c.b16 %v4795, %v4787
    %v5044 = vpack.c.b16 %v4804, %v4796
    %v5045 = vpack.c.b16 %v4805, %v4797
    %v5046 = vpack.c.b16 %v4806, %v4798
    %v5047 = vpack.c.b16 %v4807, %v4799
    %v5048 = vpack.c.b16 %v4808, %v4800
    %v5049 = vpack.c.b16 %v4809, %v4801
    %v5050 = vpack.c.b16 %v4810, %v4802
    %v5051 = vpack.c.b16 %v4811, %v4803
    %v5052 = vpack.c.b16 %v4820, %v4812
    %v5053 = vpack.c.b16 %v4821, %v4813
    %v5054 = vpack.c.b16 %v4822, %v4814
    %v5055 = vpack.c.b16 %v4823, %v4815
    %v5056 = vpack.c.b16 %v4824, %v4816
    %v5057 = vpack.c.b16 %v4825, %v4817
    %v5058 = vpack.c.b16 %v4826, %v4818
    %v5059 = vpack.c.b16 %v4827, %v4819
    %v5060 = vpack.c.b16 %v4836, %v4828
    %v5061 = vpack.c.b16 %v4837, %v4829
    %v5062 = vpack.c.b16 %v4838, %v4830
    %v5063 = vpack.c.b16 %v4839, %v4831
    %v5064 = vpack.c.b16 %v4840, %v4832
    %v5065 = vpack.c.b16 %v4841, %v4833
    %v5066 = vpack.c.b16 %v4842, %v4834
    %v5067 = vpack.c.b16 %v4843, %v4835
    %v5068 = vpack.c.b16 %v4852, %v4844
    %v5069 = vpack.c.b16 %v4853, %v4845
    %v5070 = vpack.c.b16 %v4854, %v4846
    %v5071 = vpack.c.b16 %v4855, %v4847
    %v5072 = vpack.c.b16 %v4856, %v4848
    %v5073 = vpack.c.b16 %v4857, %v4849
    %v5074 = vpack.c.b16 %v4858, %v4850
    %v5075 = vpack.c.b16 %v4859, %v4851
    %v5076 = vpack.c.b16 %v4868, %v4860
    %v5077 = vpack.c.b16 %v4869, %v4861
    %v5078 = vpack.c.b16 %v4870, %v4862
    %v5079 = vpack.c.b16 %v4871, %v4863
    %v5080 = vpack.c.b16 %v4872, %v4864
    %v5081 = vpack.c.b16 %v4873, %v4865
    %v5082 = vpack.c.b16 %v4874, %v4866
    %v5083 = vpack.c.b16 %v4875, %v4867
    %v5084 = vpack.c.b16 %v4884, %v4876
    %v5085 = vpack.c.b16 %v4885, %v4877
    %v5086 = vpack.c.b16 %v4886, %v4878
    %v5087 = vpack.c.b16 %v4887, %v4879
    %v5088 = vpack.c.b16 %v4888, %v4880
    %v5089 = vpack.c.b16 %v4889, %v4881
    %v5090 = vpack.c.b16 %v4890, %v4882
    %v5091 = vpack.c.b16 %v4891, %v4883
    %v5092 = vpack.c.b16 %v4900, %v4892
    %v5093 = vpack.c.b16 %v4901, %v4893
    %v5094 = vpack.c.b16 %v4902, %v4894
    %v5095 = vpack.c.b16 %v4903, %v4895
    %v5096 = vpack.c.b16 %v4904, %v4896
    %v5097 = vpack.c.b16 %v4905, %v4897
    %v5098 = vpack.c.b16 %v4906, %v4898
    %v5099 = vpack.c.b16 %v4907, %v4899
    %v5100 = vpack.c.b16 %v4916, %v4908
    %v5101 = vpack.c.b16 %v4917, %v4909
    %v5102 = vpack.c.b16 %v4918, %v4910
    %v5103 = vpack.c.b16 %v4919, %v4911
    %v5104 = vpack.c.b16 %v4920, %v4912
    %v5105 = vpack.c.b16 %v4921, %v4913
    %v5106 = vpack.c.b16 %v4922, %v4914
    %v5107 = vpack.c.b16 %v4923, %v4915
    %v5108 = vpack.c.b16 %v4932, %v4924
    %v5109 = vpack.c.b16 %v4933, %v4925
    %v5110 = vpack.c.b16 %v4934, %v4926
    %v5111 = vpack.c.b16 %v4935, %v4927
    %v5112 = vpack.c.b16 %v4936, %v4928
    %v5113 = vpack.c.b16 %v4937, %v4929
    %v5114 = vpack.c.b16 %v4938, %v4930
    %v5115 = vpack.c.b16 %v4939, %v4931
    %v5116 = vpack.c.b16 %v4948, %v4940
    %v5117 = vpack.c.b16 %v4949, %v4941
    %v5118 = vpack.c.b16 %v4950, %v4942
    %v5119 = vpack.c.b16 %v4951, %v4943
    %v5120 = vpack.c.b16 %v4952, %v4944
    %v5121 = vpack.c.b16 %v4953, %v4945
    %v5122 = vpack.c.b16 %v4954, %v4946
    %v5123 = vpack.c.b16 %v4955, %v4947
    %v5124 = vpack.c.b16 %v4964, %v4956
    %v5125 = vpack.c.b16 %v4965, %v4957
    %v5126 = vpack.c.b16 %v4966, %v4958
    %v5127 = vpack.c.b16 %v4967, %v4959
    %v5128 = vpack.c.b16 %v4968, %v4960
    %v5129 = vpack.c.b16 %v4969, %v4961
    %v5130 = vpack.c.b16 %v4970, %v4962
    %v5131 = vpack.c.b16 %v4971, %v4963
    %v5132 = vpack.c.b16 %v4980, %v4972
    %v5133 = vpack.c.b16 %v4981, %v4973
    %v5134 = vpack.c.b16 %v4982, %v4974
    %v5135 = vpack.c.b16 %v4983, %v4975
    %v5136 = vpack.c.b16 %v4984, %v4976
    %v5137 = vpack.c.b16 %v4985, %v4977
    %v5138 = vpack.c.b16 %v4986, %v4978
    %v5139 = vpack.c.b16 %v4987, %v4979
    %v5140 = vpack.c.b16 %v4996, %v4988
    %v5141 = vpack.c.b16 %v4997, %v4989
    %v5142 = vpack.c.b16 %v4998, %v4990
    %v5143 = vpack.c.b16 %v4999, %v4991
    %v5144 = vpack.c.b16 %v5000, %v4992
    %v5145 = vpack.c.b16 %v5001, %v4993
    %v5146 = vpack.c.b16 %v5002, %v4994
    %v5147 = vpack.c.b16 %v5003, %v4995
    %v5148 = vpack.c.b16 %v5012, %v5004
    %v5149 = vpack.c.b16 %v5013, %v5005
    %v5150 = vpack.c.b16 %v5014, %v5006
    %v5151 = vpack.c.b16 %v5015, %v5007
    %v5152 = vpack.c.b16 %v5016, %v5008
    %v5153 = vpack.c.b16 %v5017, %v5009
    %v5154 = vpack.c.b16 %v5018, %v5010
    %v5155 = vpack.c.b16 %v5019, %v5011
    %v5156 = vpack.c.b16 %v5028, %v5020
    %v5157 = vpack.c.b16 %v5029, %v5021
    %v5158 = vpack.c.b16 %v5030, %v5022
    %v5159 = vpack.c.b16 %v5031, %v5023
    %v5160 = vpack.c.b16 %v5032, %v5024
    %v5161 = vpack.c.b16 %v5033, %v5025
    %v5162 = vpack.c.b16 %v5034, %v5026
    %v5163 = vpack.c.b16 %v5035, %v5027
    %v5285 = vsel %vm4122, %v4481, 0
    %v5288 = vsel %vm4126, %v5156, 0
    %v5291 = vsel %vm4126, %v5157, 0
    %v5294 = vsel %vm4126, %v5158, 0
    %v5297 = vsel %vm4126, %v5159, 0
    %v5300 = vsel %vm4126, %v5160, 0
    %v5303 = vsel %vm4126, %v5161, 0
    %v5306 = vsel %vm4126, %v5162, 0
    %v5309 = vsel %vm4126, %v5163, 0
    %5311 = vmatprep.subr.bf16.mxu0 %v5037
    %5312 = vmatpush1.bf16.msra.mxu0 %v5036
    %5313 = vmatprep.subr.bf16.mxu0 %v5045
    %5314 = vmatpush1.bf16.msra.mxu0 %v5044
    %5315 = vmatprep.subr.bf16.mxu0 %v5053
    %5316 = vmatpush1.bf16.msra.mxu0 %v5052
    %5317 = vmatprep.subr.bf16.mxu0 %v5061
    %5318 = vmatpush1.bf16.msra.mxu0 %v5060
    %5319 = vmatprep.subr.bf16.mxu0 %v5069
    %5320 = vmatpush1.bf16.msra.mxu0 %v5068
    %5321 = vmatprep.subr.bf16.mxu0 %v5077
    %5322 = vmatpush1.bf16.msra.mxu0 %v5076
    %5323 = vmatprep.subr.bf16.mxu0 %v5085
    %5324 = vmatpush1.bf16.msra.mxu0 %v5084
    %5325 = vmatprep.subr.bf16.mxu0 %v5093
    %5326 = vmatpush1.bf16.msra.mxu0 %v5092
    %5327 = vmatprep.subr.bf16.mxu0 %v5101
    %5328 = vmatpush1.bf16.msra.mxu0 %v5100
    %5329 = vmatprep.subr.bf16.mxu0 %v5109
    %5330 = vmatpush1.bf16.msra.mxu0 %v5108
    %5331 = vmatprep.subr.bf16.mxu0 %v5117
    %5332 = vmatpush1.bf16.msra.mxu0 %v5116
    %5333 = vmatprep.subr.bf16.mxu0 %v5125
    %5334 = vmatpush1.bf16.msra.mxu0 %v5124
    %5335 = vmatprep.subr.bf16.mxu0 %v5133
    %5336 = vmatpush1.bf16.msra.mxu0 %v5132
    %5337 = vmatprep.subr.bf16.mxu0 %v5141
    %5338 = vmatpush1.bf16.msra.mxu0 %v5140
    %5339 = vmatprep.subr.bf16.mxu0 %v5149
    %5340 = vmatpush1.bf16.msra.mxu0 %v5148
    %5341 = vmatprep.subr.bf16.mxu0 %v5291
    %5342 = vmatpush1.bf16.msra.mxu0 %v5288
    %5343 = vmatprep.mubr.bf16.mxu0 %v5285
    %5344 = vmatmul.mubr.bf16.gmra.mrb[0].mxu0 %v4480
    %v5345 = vpop.f32.mrb[0].mxu0
    %v5346 = vadd.f32 %v4615, %v5345
    %v5347 = vpop.f32.mrb[0].mxu0
    %v5348 = vadd.f32 %v4619, %v5347
    %v5349 = vpop.f32.mrb[0].mxu0
    %v5350 = vpop.f32.mrb[0].mxu0
    %5351 = vdwg.mxu0
    %5352 = vmatprep.subr.bf16.mxu0 %v5039
    %5353 = vmatpush1.bf16.msra.mxu0 %v5038
    %5354 = vmatprep.subr.bf16.mxu0 %v5047
    %5355 = vmatpush1.bf16.msra.mxu0 %v5046
    %5356 = vmatprep.subr.bf16.mxu0 %v5055
    %5357 = vmatpush1.bf16.msra.mxu0 %v5054
    %5358 = vmatprep.subr.bf16.mxu0 %v5063
    %5359 = vmatpush1.bf16.msra.mxu0 %v5062
    %5360 = vmatprep.subr.bf16.mxu0 %v5071
    %5361 = vmatpush1.bf16.msra.mxu0 %v5070
    %5362 = vmatprep.subr.bf16.mxu0 %v5079
    %5363 = vmatpush1.bf16.msra.mxu0 %v5078
    %5364 = vmatprep.subr.bf16.mxu0 %v5087
    %5365 = vmatpush1.bf16.msra.mxu0 %v5086
    %5366 = vmatprep.subr.bf16.mxu0 %v5095
    %5367 = vmatpush1.bf16.msra.mxu0 %v5094
    %5368 = vmatprep.subr.bf16.mxu0 %v5103
    %5369 = vmatpush1.bf16.msra.mxu0 %v5102
    %5370 = vmatprep.subr.bf16.mxu0 %v5111
    %5371 = vmatpush1.bf16.msra.mxu0 %v5110
    %5372 = vmatprep.subr.bf16.mxu0 %v5119
    %5373 = vmatpush1.bf16.msra.mxu0 %v5118
    %5374 = vmatprep.subr.bf16.mxu0 %v5127
    %5375 = vmatpush1.bf16.msra.mxu0 %v5126
    %5376 = vmatprep.subr.bf16.mxu0 %v5135
    %5377 = vmatpush1.bf16.msra.mxu0 %v5134
    %5378 = vmatprep.subr.bf16.mxu0 %v5143
    %5379 = vmatpush1.bf16.msra.mxu0 %v5142
    %5380 = vmatprep.subr.bf16.mxu0 %v5151
    %5381 = vmatpush1.bf16.msra.mxu0 %v5150
    %5382 = vmatprep.subr.bf16.mxu0 %v5297
    %5383 = vmatpush1.bf16.msra.mxu0 %v5294
    %5384 = vmatprep.mubr.bf16.mxu0 %v5285
    %5385 = vmatmul.mubr.bf16.gmra.mrb[0].mxu0 %v4480
    %v5386 = vpop.f32.mrb[0].mxu0
    %v5387 = vadd.f32 %v4623, %v5386
    %v5388 = vpop.f32.mrb[0].mxu0
    %v5389 = vadd.f32 %v4627, %v5388
    %v5390 = vpop.f32.mrb[0].mxu0
    %v5391 = vpop.f32.mrb[0].mxu0
    %5392 = vdwg.mxu0
    %5393 = vmatprep.subr.bf16.mxu0 %v5041
    %5394 = vmatpush1.bf16.msra.mxu0 %v5040
    %5395 = vmatprep.subr.bf16.mxu0 %v5049
    %5396 = vmatpush1.bf16.msra.mxu0 %v5048
    %5397 = vmatprep.subr.bf16.mxu0 %v5057
    %5398 = vmatpush1.bf16.msra.mxu0 %v5056
    %5399 = vmatprep.subr.bf16.mxu0 %v5065
    %5400 = vmatpush1.bf16.msra.mxu0 %v5064
    %5401 = vmatprep.subr.bf16.mxu0 %v5073
    %5402 = vmatpush1.bf16.msra.mxu0 %v5072
    %5403 = vmatprep.subr.bf16.mxu0 %v5081
    %5404 = vmatpush1.bf16.msra.mxu0 %v5080
    %5405 = vmatprep.subr.bf16.mxu0 %v5089
    %5406 = vmatpush1.bf16.msra.mxu0 %v5088
    %5407 = vmatprep.subr.bf16.mxu0 %v5097
    %5408 = vmatpush1.bf16.msra.mxu0 %v5096
    %5409 = vmatprep.subr.bf16.mxu0 %v5105
    %5410 = vmatpush1.bf16.msra.mxu0 %v5104
    %5411 = vmatprep.subr.bf16.mxu0 %v5113
    %5412 = vmatpush1.bf16.msra.mxu0 %v5112
    %5413 = vmatprep.subr.bf16.mxu0 %v5121
    %5414 = vmatpush1.bf16.msra.mxu0 %v5120
    %5415 = vmatprep.subr.bf16.mxu0 %v5129
    %5416 = vmatpush1.bf16.msra.mxu0 %v5128
    %5417 = vmatprep.subr.bf16.mxu0 %v5137
    %5418 = vmatpush1.bf16.msra.mxu0 %v5136
    %5419 = vmatprep.subr.bf16.mxu0 %v5145
    %5420 = vmatpush1.bf16.msra.mxu0 %v5144
    %5421 = vmatprep.subr.bf16.mxu0 %v5153
    %5422 = vmatpush1.bf16.msra.mxu0 %v5152
    %5423 = vmatprep.subr.bf16.mxu0 %v5303
    %5424 = vmatpush1.bf16.msra.mxu0 %v5300
    %5425 = vmatprep.mubr.bf16.mxu0 %v5285
    %5426 = vmatmul.mubr.bf16.gmra.mrb[0].mxu0 %v4480
    %v5427 = vpop.f32.mrb[0].mxu0
    %v5428 = vadd.f32 %v4631, %v5427
    %v5429 = vpop.f32.mrb[0].mxu0
    %v5430 = vadd.f32 %v4635, %v5429
    %v5431 = vpop.f32.mrb[0].mxu0
    %v5432 = vpop.f32.mrb[0].mxu0
    %5433 = vdwg.mxu0
    %5434 = vmatprep.subr.bf16.mxu0 %v5043
    %5435 = vmatpush1.bf16.msra.mxu0 %v5042
    %5436 = vmatprep.subr.bf16.mxu0 %v5051
    %5437 = vmatpush1.bf16.msra.mxu0 %v5050
    %5438 = vmatprep.subr.bf16.mxu0 %v5059
    %5439 = vmatpush1.bf16.msra.mxu0 %v5058
    %5440 = vmatprep.subr.bf16.mxu0 %v5067
    %5441 = vmatpush1.bf16.msra.mxu0 %v5066
    %5442 = vmatprep.subr.bf16.mxu0 %v5075
    %5443 = vmatpush1.bf16.msra.mxu0 %v5074
    %5444 = vmatprep.subr.bf16.mxu0 %v5083
    %5445 = vmatpush1.bf16.msra.mxu0 %v5082
    %5446 = vmatprep.subr.bf16.mxu0 %v5091
    %5447 = vmatpush1.bf16.msra.mxu0 %v5090
    %5448 = vmatprep.subr.bf16.mxu0 %v5099
    %5449 = vmatpush1.bf16.msra.mxu0 %v5098
    %5450 = vmatprep.subr.bf16.mxu0 %v5107
    %5451 = vmatpush1.bf16.msra.mxu0 %v5106
    %5452 = vmatprep.subr.bf16.mxu0 %v5115
    %5453 = vmatpush1.bf16.msra.mxu0 %v5114
    %5454 = vmatprep.subr.bf16.mxu0 %v5123
    %5455 = vmatpush1.bf16.msra.mxu0 %v5122
    %5456 = vmatprep.subr.bf16.mxu0 %v5131
    %5457 = vmatpush1.bf16.msra.mxu0 %v5130
    %5458 = vmatprep.subr.bf16.mxu0 %v5139
    %5459 = vmatpush1.bf16.msra.mxu0 %v5138
    %5460 = vmatprep.subr.bf16.mxu0 %v5147
    %5461 = vmatpush1.bf16.msra.mxu0 %v5146
    %5462 = vmatprep.subr.bf16.mxu0 %v5155
    %5463 = vmatpush1.bf16.msra.mxu0 %v5154
    %5464 = vmatprep.subr.bf16.mxu0 %v5309
    %5465 = vmatpush1.bf16.msra.mxu0 %v5306
    %5466 = vmatprep.mubr.bf16.mxu0 %v5285
    %5467 = vmatmul.mubr.bf16.gmra.mrb[0].mxu0 %v4480
    %v5468 = vpop.f32.mrb[0].mxu0
    %v5469 = vadd.f32 %v4639, %v5468
    %v5470 = vpop.f32.mrb[0].mxu0
    %v5471 = vadd.f32 %v4643, %v5470
    %v5472 = vpop.f32.mrb[0].mxu0
    %v5473 = vpop.f32.mrb[0].mxu0
    %5474 = vdwg.mxu0
    %v5475 = vmax.f32 %v5346, 0.0
    %v5476 = vmax.f32 %v5348, 0.0
    %v5477 = vmax.f32 %v5387, 0.0
    %v5478 = vmax.f32 %v5389, 0.0
    %v5479 = vmax.f32 %v5428, 0.0
    %v5480 = vmax.f32 %v5430, 0.0
    %v5481 = vmax.f32 %v5469, 0.0
    %v5482 = vmax.f32 %v5471, 0.0
    %5483 = vst [vmem:[#allocation5] sm:$0x3] %v5475
    %5484 = vst [vmem:[#allocation5 + $0x8] sm:$0x3] %v5476
    %v5487 = vrot.slane %v5477, 6
    %v5488 = vrot.slane %v5478, 6
    %5491 = vst [vmem:[#allocation5] sm:$0xc] %v5487
    %5492 = vst [vmem:[#allocation5 + $0x8] sm:$0xc] %v5488
    %v5495 = vrot.slane %v5479, 4
    %v5496 = vrot.slane %v5480, 4
    %5499 = vst [vmem:[#allocation5] sm:$0x30] %v5495
    %5500 = vst [vmem:[#allocation5 + $0x8] sm:$0x30] %v5496
    %v5503 = vrot.slane %v5481, 2
    %v5504 = vrot.slane %v5482, 2
    %5507 = vst [vmem:[#allocation5] sm:$0xc0] %v5503
    %5508 = vst [vmem:[#allocation5 + $0x8] sm:$0xc0] %v5504
    %s5509 = smul.u32 %s4476, 6
    %s5510 = sshll.u32 %s5509, 4
    %5511 = dma.done %s128, %s5510
    %v5512 = vld [vmem:[#allocation5] sm:$0xff]
    %v5513 = vld [vmem:[#allocation5 + $0x8] sm:$0xff]
    %v5514 = vpack.c.bf16 %v5512, %v5512
    %v5515 = vpack.c.bf16 %v5513, %v5513
    %v5516 = vld [vmem:[#allocation9] sm:$0xff]
    %v5517 = vld [vmem:[#allocation9 + $0x8] sm:$0xff]
    %v5518 = vld [vmem:[#allocation9 + $0x10] sm:$0xff]
    %v5519 = vld [vmem:[#allocation9 + $0x18] sm:$0xff]
    %v5520 = vld [vmem:[#allocation9 + $0x20] sm:$0xff]
    %v5521 = vld [vmem:[#allocation9 + $0x28] sm:$0xff]
    %v5522 = vld [vmem:[#allocation9 + $0x30] sm:$0xff]
    %v5523 = vld [vmem:[#allocation9 + $0x38] sm:$0xff]
    %v5524 = vld [vmem:[#allocation9 + $0x40] sm:$0xff]
    %v5525 = vld [vmem:[#allocation9 + $0x48] sm:$0xff]
    %v5526 = vld [vmem:[#allocation9 + $0x50] sm:$0xff]
    %v5527 = vld [vmem:[#allocation9 + $0x58] sm:$0xff]
    %v5528 = vld [vmem:[#allocation9 + $0x60] sm:$0xff]
    %v5529 = vld [vmem:[#allocation9 + $0x68] sm:$0xff]
    %v5530 = vld [vmem:[#allocation9 + $0x70] sm:$0xff]
    %v5531 = vld [vmem:[#allocation9 + $0x78] sm:$0xff]
    %v5532 = vld [vmem:[#allocation9 + $0x80] sm:$0xff]
    %v5533 = vld [vmem:[#allocation9 + $0x88] sm:$0xff]
    %v5534 = vld [vmem:[#allocation9 + $0x90] sm:$0xff]
    %v5535 = vld [vmem:[#allocation9 + $0x98] sm:$0xff]
    %v5536 = vld [vmem:[#allocation9 + $0xa0] sm:$0xff]
    %v5537 = vld [vmem:[#allocation9 + $0xa8] sm:$0xff]
    %v5538 = vld [vmem:[#allocation9 + $0xb0] sm:$0xff]
    %v5539 = vld [vmem:[#allocation9 + $0xb8] sm:$0xff]
    %v5540 = vld [vmem:[#allocation9 + $0xc0] sm:$0xff]
    %v5541 = vld [vmem:[#allocation9 + $0xc8] sm:$0xff]
    %v5542 = vld [vmem:[#allocation9 + $0xd0] sm:$0xff]
    %v5543 = vld [vmem:[#allocation9 + $0xd8] sm:$0xff]
    %v5544 = vld [vmem:[#allocation9 + $0xe0] sm:$0xff]
    %v5545 = vld [vmem:[#allocation9 + $0xe8] sm:$0xff]
    %v5546 = vld [vmem:[#allocation9 + $0xf0] sm:$0xff]
    %v5547 = vld [vmem:[#allocation9 + $0xf8] sm:$0xff]
    %v5548 = vld [vmem:[#allocation9 + $0x100] sm:$0xff]
    %v5549 = vld [vmem:[#allocation9 + $0x108] sm:$0xff]
    %v5550 = vld [vmem:[#allocation9 + $0x110] sm:$0xff]
    %v5551 = vld [vmem:[#allocation9 + $0x118] sm:$0xff]
    %v5552 = vld [vmem:[#allocation9 + $0x120] sm:$0xff]
    %v5553 = vld [vmem:[#allocation9 + $0x128] sm:$0xff]
    %v5554 = vld [vmem:[#allocation9 + $0x130] sm:$0xff]
    %v5555 = vld [vmem:[#allocation9 + $0x138] sm:$0xff]
    %v5556 = vld [vmem:[#allocation9 + $0x140] sm:$0xff]
    %v5557 = vld [vmem:[#allocation9 + $0x148] sm:$0xff]
    %v5558 = vld [vmem:[#allocation9 + $0x150] sm:$0xff]
    %v5559 = vld [vmem:[#allocation9 + $0x158] sm:$0xff]
    %v5560 = vld [vmem:[#allocation9 + $0x160] sm:$0xff]
    %v5561 = vld [vmem:[#allocation9 + $0x168] sm:$0xff]
    %v5562 = vld [vmem:[#allocation9 + $0x170] sm:$0xff]
    %v5563 = vld [vmem:[#allocation9 + $0x178] sm:$0xff]
    %v5564 = vld [vmem:[#allocation9 + $0x180] sm:$0xff]
    %v5565 = vld [vmem:[#allocation9 + $0x188] sm:$0xff]
    %v5566 = vld [vmem:[#allocation9 + $0x190] sm:$0xff]
    %v5567 = vld [vmem:[#allocation9 + $0x198] sm:$0xff]
    %v5568 = vld [vmem:[#allocation9 + $0x1a0] sm:$0xff]
    %v5569 = vld [vmem:[#allocation9 + $0x1a8] sm:$0xff]
    %v5570 = vld [vmem:[#allocation9 + $0x1b0] sm:$0xff]
    %v5571 = vld [vmem:[#allocation9 + $0x1b8] sm:$0xff]
    %v5572 = vld [vmem:[#allocation9 + $0x1c0] sm:$0xff]
    %v5573 = vld [vmem:[#allocation9 + $0x1c8] sm:$0xff]
    %v5574 = vld [vmem:[#allocation9 + $0x1d0] sm:$0xff]
    %v5575 = vld [vmem:[#allocation9 + $0x1d8] sm:$0xff]
    %v5576 = vld [vmem:[#allocation9 + $0x1e0] sm:$0xff]
    %v5577 = vld [vmem:[#allocation9 + $0x1e8] sm:$0xff]
    %v5578 = vld [vmem:[#allocation9 + $0x1f0] sm:$0xff]
    %v5579 = vld [vmem:[#allocation9 + $0x1f8] sm:$0xff]
    %v5580 = vld [vmem:[#allocation9 + $0x200] sm:$0xff]
    %v5581 = vld [vmem:[#allocation9 + $0x208] sm:$0xff]
    %v5582 = vld [vmem:[#allocation9 + $0x210] sm:$0xff]
    %v5583 = vld [vmem:[#allocation9 + $0x218] sm:$0xff]
    %v5584 = vld [vmem:[#allocation9 + $0x220] sm:$0xff]
    %v5585 = vld [vmem:[#allocation9 + $0x228] sm:$0xff]
    %v5586 = vld [vmem:[#allocation9 + $0x230] sm:$0xff]
    %v5587 = vld [vmem:[#allocation9 + $0x238] sm:$0xff]
    %v5588 = vld [vmem:[#allocation9 + $0x240] sm:$0xff]
    %v5589 = vld [vmem:[#allocation9 + $0x248] sm:$0xff]
    %v5590 = vld [vmem:[#allocation9 + $0x250] sm:$0xff]
    %v5591 = vld [vmem:[#allocation9 + $0x258] sm:$0xff]
    %v5592 = vld [vmem:[#allocation9 + $0x260] sm:$0xff]
    %v5593 = vld [vmem:[#allocation9 + $0x268] sm:$0xff]
    %v5594 = vld [vmem:[#allocation9 + $0x270] sm:$0xff]
    %v5595 = vld [vmem:[#allocation9 + $0x278] sm:$0xff]
    %v5596 = vld [vmem:[#allocation9 + $0x280] sm:$0xff]
    %v5597 = vld [vmem:[#allocation9 + $0x288] sm:$0xff]
    %v5598 = vld [vmem:[#allocation9 + $0x290] sm:$0xff]
    %v5599 = vld [vmem:[#allocation9 + $0x298] sm:$0xff]
    %v5600 = vld [vmem:[#allocation9 + $0x2a0] sm:$0xff]
    %v5601 = vld [vmem:[#allocation9 + $0x2a8] sm:$0xff]
    %v5602 = vld [vmem:[#allocation9 + $0x2b0] sm:$0xff]
    %v5603 = vld [vmem:[#allocation9 + $0x2b8] sm:$0xff]
    %v5604 = vld [vmem:[#allocation9 + $0x2c0] sm:$0xff]
    %v5605 = vld [vmem:[#allocation9 + $0x2c8] sm:$0xff]
    %v5606 = vld [vmem:[#allocation9 + $0x2d0] sm:$0xff]
    %v5607 = vld [vmem:[#allocation9 + $0x2d8] sm:$0xff]
    %v5608 = vld [vmem:[#allocation9 + $0x2e0] sm:$0xff]
    %v5609 = vld [vmem:[#allocation9 + $0x2e8] sm:$0xff]
    %v5610 = vld [vmem:[#allocation9 + $0x2f0] sm:$0xff]
    %v5611 = vld [vmem:[#allocation9 + $0x2f8] sm:$0xff]
    %5612 = vmatprep.subr.bf16.mxu0 %v5517
    %5613 = vmatpush1.bf16.msra.mxu0 %v5516
    %5614 = vmatprep.subr.bf16.mxu0 %v5523
    %5615 = vmatpush1.bf16.msra.mxu0 %v5522
    %5616 = vmatprep.subr.bf16.mxu0 %v5529
    %5617 = vmatpush1.bf16.msra.mxu0 %v5528
    %5618 = vmatprep.subr.bf16.mxu0 %v5535
    %5619 = vmatpush1.bf16.msra.mxu0 %v5534
    %5620 = vmatprep.subr.bf16.mxu0 %v5541
    %5621 = vmatpush1.bf16.msra.mxu0 %v5540
    %5622 = vmatprep.subr.bf16.mxu0 %v5547
    %5623 = vmatpush1.bf16.msra.mxu0 %v5546
    %5624 = vmatprep.subr.bf16.mxu0 %v5553
    %5625 = vmatpush1.bf16.msra.mxu0 %v5552
    %5626 = vmatprep.subr.bf16.mxu0 %v5559
    %5627 = vmatpush1.bf16.msra.mxu0 %v5558
    %5628 = vmatprep.subr.bf16.mxu0 %v5565
    %5629 = vmatpush1.bf16.msra.mxu0 %v5564
    %5630 = vmatprep.subr.bf16.mxu0 %v5571
    %5631 = vmatpush1.bf16.msra.mxu0 %v5570
    %5632 = vmatprep.subr.bf16.mxu0 %v5577
    %5633 = vmatpush1.bf16.msra.mxu0 %v5576
    %5634 = vmatprep.subr.bf16.mxu0 %v5583
    %5635 = vmatpush1.bf16.msra.mxu0 %v5582
    %5636 = vmatprep.subr.bf16.mxu0 %v5589
    %5637 = vmatpush1.bf16.msra.mxu0 %v5588
    %5638 = vmatprep.subr.bf16.mxu0 %v5595
    %5639 = vmatpush1.bf16.msra.mxu0 %v5594
    %5640 = vmatprep.subr.bf16.mxu0 %v5601
    %5641 = vmatpush1.bf16.msra.mxu0 %v5600
    %5642 = vmatprep.subr.bf16.mxu0 %v5607
    %5643 = vmatpush1.bf16.msra.mxu0 %v5606
    %5644 = vmatprep.mubr.bf16.mxu0 %v5515
    %5645 = vmatmul.mubr.bf16.gmra.mrb[0].mxu0 %v5514
    %v5646 = vpop.f32.mrb[0].mxu0
    %v5647 = vadd.f32 0.0, %v5646
    %v5648 = vpop.f32.mrb[0].mxu0
    %v5649 = vadd.f32 0.0, %v5648
    %v5650 = vpop.f32.mrb[0].mxu0
    %v5651 = vpop.f32.mrb[0].mxu0
    %5652 = vdwg.mxu0
    %5653 = vmatprep.subr.bf16.mxu0 %v5519
    %5654 = vmatpush1.bf16.msra.mxu0 %v5518
    %5655 = vmatprep.subr.bf16.mxu0 %v5525
    %5656 = vmatpush1.bf16.msra.mxu0 %v5524
    %5657 = vmatprep.subr.bf16.mxu0 %v5531
    %5658 = vmatpush1.bf16.msra.mxu0 %v5530
    %5659 = vmatprep.subr.bf16.mxu0 %v5537
    %5660 = vmatpush1.bf16.msra.mxu0 %v5536
    %5661 = vmatprep.subr.bf16.mxu0 %v5543
    %5662 = vmatpush1.bf16.msra.mxu0 %v5542
    %5663 = vmatprep.subr.bf16.mxu0 %v5549
    %5664 = vmatpush1.bf16.msra.mxu0 %v5548
    %5665 = vmatprep.subr.bf16.mxu0 %v5555
    %5666 = vmatpush1.bf16.msra.mxu0 %v5554
    %5667 = vmatprep.subr.bf16.mxu0 %v5561
    %5668 = vmatpush1.bf16.msra.mxu0 %v5560
    %5669 = vmatprep.subr.bf16.mxu0 %v5567
    %5670 = vmatpush1.bf16.msra.mxu0 %v5566
    %5671 = vmatprep.subr.bf16.mxu0 %v5573
    %5672 = vmatpush1.bf16.msra.mxu0 %v5572
    %5673 = vmatprep.subr.bf16.mxu0 %v5579
    %5674 = vmatpush1.bf16.msra.mxu0 %v5578
    %5675 = vmatprep.subr.bf16.mxu0 %v5585
    %5676 = vmatpush1.bf16.msra.mxu0 %v5584
    %5677 = vmatprep.subr.bf16.mxu0 %v5591
    %5678 = vmatpush1.bf16.msra.mxu0 %v5590
    %5679 = vmatprep.subr.bf16.mxu0 %v5597
    %5680 = vmatpush1.bf16.msra.mxu0 %v5596
    %5681 = vmatprep.subr.bf16.mxu0 %v5603
    %5682 = vmatpush1.bf16.msra.mxu0 %v5602
    %5683 = vmatprep.subr.bf16.mxu0 %v5609
    %5684 = vmatpush1.bf16.msra.mxu0 %v5608
    %5685 = vmatprep.mubr.bf16.mxu0 %v5515
    %5686 = vmatmul.mubr.bf16.gmra.mrb[0].mxu0 %v5514
    %v5687 = vpop.f32.mrb[0].mxu0
    %v5688 = vadd.f32 0.0, %v5687
    %v5689 = vpop.f32.mrb[0].mxu0
    %v5690 = vadd.f32 0.0, %v5689
    %v5691 = vpop.f32.mrb[0].mxu0
    %v5692 = vpop.f32.mrb[0].mxu0
    %5693 = vdwg.mxu0
    %5694 = vmatprep.subr.bf16.mxu0 %v5521
    %5695 = vmatpush1.bf16.msra.mxu0 %v5520
    %5696 = vmatprep.subr.bf16.mxu0 %v5527
    %5697 = vmatpush1.bf16.msra.mxu0 %v5526
    %5698 = vmatprep.subr.bf16.mxu0 %v5533
    %5699 = vmatpush1.bf16.msra.mxu0 %v5532
    %5700 = vmatprep.subr.bf16.mxu0 %v5539
    %5701 = vmatpush1.bf16.msra.mxu0 %v5538
    %5702 = vmatprep.subr.bf16.mxu0 %v5545
    %5703 = vmatpush1.bf16.msra.mxu0 %v5544
    %5704 = vmatprep.subr.bf16.mxu0 %v5551
    %5705 = vmatpush1.bf16.msra.mxu0 %v5550
    %5706 = vmatprep.subr.bf16.mxu0 %v5557
    %5707 = vmatpush1.bf16.msra.mxu0 %v5556
    %5708 = vmatprep.subr.bf16.mxu0 %v5563
    %5709 = vmatpush1.bf16.msra.mxu0 %v5562
    %5710 = vmatprep.subr.bf16.mxu0 %v5569
    %5711 = vmatpush1.bf16.msra.mxu0 %v5568
    %5712 = vmatprep.subr.bf16.mxu0 %v5575
    %5713 = vmatpush1.bf16.msra.mxu0 %v5574
    %5714 = vmatprep.subr.bf16.mxu0 %v5581
    %5715 = vmatpush1.bf16.msra.mxu0 %v5580
    %5716 = vmatprep.subr.bf16.mxu0 %v5587
    %5717 = vmatpush1.bf16.msra.mxu0 %v5586
    %5718 = vmatprep.subr.bf16.mxu0 %v5593
    %5719 = vmatpush1.bf16.msra.mxu0 %v5592
    %5720 = vmatprep.subr.bf16.mxu0 %v5599
    %5721 = vmatpush1.bf16.msra.mxu0 %v5598
    %5722 = vmatprep.subr.bf16.mxu0 %v5605
    %5723 = vmatpush1.bf16.msra.mxu0 %v5604
    %5724 = vmatprep.subr.bf16.mxu0 %v5611
    %5725 = vmatpush1.bf16.msra.mxu0 %v5610
    %5726 = vmatprep.mubr.bf16.mxu0 %v5515
    %5727 = vmatmul.mubr.bf16.gmra.mrb[0].mxu0 %v5514
    %v5728 = vpop.f32.mrb[0].mxu0
    %v5729 = vadd.f32 0.0, %v5728
    %v5730 = vpop.f32.mrb[0].mxu0
    %v5731 = vadd.f32 0.0, %v5730
    %v5732 = vpop.f32.mrb[0].mxu0
    %v5733 = vpop.f32.mrb[0].mxu0
    %5734 = vdwg.mxu0
    %5735 = vst [vmem:[#allocation2] sm:$0xff] %v5647
    %5736 = vst [vmem:[#allocation2 + $0x8] sm:$0xff] %v5649
    %5737 = vst [vmem:[#allocation2 + $0x10] sm:$0xff] %v5688
    %5738 = vst [vmem:[#allocation2 + $0x18] sm:$0xff] %v5690
    %5739 = vst [vmem:[#allocation2 + $0x20] sm:$0xff] %v5729
    %5740 = vst [vmem:[#allocation2 + $0x28] sm:$0xff] %v5731
    %v5741 = vld [vmem:[%s20] sm:$0x3]
    %v5742 = vld [vmem:[#allocation2 + $0x10] sm:$0x3]
    %v5743 = vld [vmem:[#allocation2 + $0x18] sm:$0x3]
    %v5745 = vlaneseq
    %v5746 = vshrl.u32 %v5745, 7
    %v5747 = vsub.s32 0, %v5746
    %v5748 = vrot.slane %v5741, %v5747
    %v5749 = vlaneseq
    %v5750 = vshrl.u32 %v5749, 7
    %v5751 = vsub.s32 1, %v5750
    %v5752 = vrot.slane %v5741, %v5751
    %v5755 = vadd.f32 %v5748, %v5742
    %v5756 = vadd.f32 %v5752, %v5743
    %v5757 = vld [vmem:[#allocation2 + $0x20] sm:$0x3]
    %v5758 = vld [vmem:[#allocation2 + $0x28] sm:$0x3]
    %v5759 = vadd.f32 %v5748, %v5757
    %v5760 = vadd.f32 %v5752, %v5758
    %v5761 = vld [vmem:[#allocation2] sm:$0xc]
    %v5762 = vld [vmem:[#allocation2 + $0x8] sm:$0xc]
    %v5765 = vrot.slane %v5761, 2
    %v5766 = vrot.slane %v5762, 2
    %v5769 = vadd.f32 %v5759, %v5765
    %v5770 = vadd.f32 %v5760, %v5766
    %v5771 = vmax.f32 %v5755, 0.0
    %v5772 = vmax.f32 %v5756, 0.0
    %v5773 = vmax.f32 %v5769, 0.0
    %v5774 = vmax.f32 %v5770, 0.0
    %5775 = vst [vmem:[#allocation6] sm:$0x3] %v5771
    %5776 = vst [vmem:[#allocation6 + $0x8] sm:$0x3] %v5772
    %v5779 = vrot.slane %v5773, 6
    %v5780 = vrot.slane %v5774, 6
    %5783 = vst [vmem:[#allocation6] sm:$0xc] %v5779
    %5784 = vst [vmem:[#allocation6 + $0x8] sm:$0xc] %v5780
    %v5785 = vld [vmem:[#allocation2 + $0x10] sm:$0xc]
    %v5786 = vld [vmem:[#allocation2 + $0x18] sm:$0xc]
    %v5787 = vadd.f32 %v5748, %v5785
    %v5788 = vadd.f32 %v5752, %v5786
    %v5789 = vld [vmem:[#allocation2 + $0x20] sm:$0xc]
    %v5790 = vld [vmem:[#allocation2 + $0x28] sm:$0xc]
    %v5791 = vadd.f32 %v5748, %v5789
    %v5792 = vadd.f32 %v5752, %v5790
    %v5793 = vld [vmem:[#allocation2] sm:$0x30]
    %v5794 = vld [vmem:[#allocation2 + $0x8] sm:$0x30]
    %v5797 = vrot.slane %v5793, 2
    %v5798 = vrot.slane %v5794, 2
    %v5801 = vadd.f32 %v5791, %v5797
    %v5802 = vadd.f32 %v5792, %v5798
    %v5803 = vmax.f32 %v5787, 0.0
    %v5804 = vmax.f32 %v5788, 0.0
    %v5805 = vmax.f32 %v5801, 0.0
    %v5806 = vmax.f32 %v5802, 0.0
    %v5809 = vrot.slane %v5803, 6
    %v5810 = vrot.slane %v5804, 6
    %5813 = vst [vmem:[#allocation6] sm:$0x30] %v5809
    %5814 = vst [vmem:[#allocation6 + $0x8] sm:$0x30] %v5810
    %v5817 = vrot.slane %v5805, 4
    %v5818 = vrot.slane %v5806, 4
    %5821 = vst [vmem:[#allocation6] sm:$0xc0] %v5817
    %5822 = vst [vmem:[#allocation6 + $0x8] sm:$0xc0] %v5818
    %v5823 = vld [vmem:[#allocation2 + $0x10] sm:$0x30]
    %v5824 = vld [vmem:[#allocation2 + $0x18] sm:$0x30]
    %v5825 = vadd.f32 %v5748, %v5823
    %v5826 = vadd.f32 %v5752, %v5824
    %v5827 = vld [vmem:[#allocation2 + $0x20] sm:$0x30]
    %v5828 = vld [vmem:[#allocation2 + $0x28] sm:$0x30]
    %v5829 = vadd.f32 %v5748, %v5827
    %v5830 = vadd.f32 %v5752, %v5828
    %v5831 = vld [vmem:[#allocation2] sm:$0xc0]
    %v5832 = vld [vmem:[#allocation2 + $0x8] sm:$0xc0]
    %v5835 = vrot.slane %v5831, 2
    %v5836 = vrot.slane %v5832, 2
    %v5839 = vadd.f32 %v5829, %v5835
    %v5840 = vadd.f32 %v5830, %v5836
    %v5841 = vmax.f32 %v5825, 0.0
    %v5842 = vmax.f32 %v5826, 0.0
    %v5843 = vmax.f32 %v5839, 0.0
    %v5844 = vmax.f32 %v5840, 0.0
    %v5847 = vrot.slane %v5841, 4
    %v5848 = vrot.slane %v5842, 4
    %5851 = vst [vmem:[#allocation6 + $0x10] sm:$0x3] %v5847
    %5852 = vst [vmem:[#allocation6 + $0x18] sm:$0x3] %v5848
    %v5855 = vrot.slane %v5843, 2
    %v5856 = vrot.slane %v5844, 2
    %5859 = vst [vmem:[#allocation6 + $0x10] sm:$0xc] %v5855
    %5860 = vst [vmem:[#allocation6 + $0x18] sm:$0xc] %v5856
    %v5861 = vld [vmem:[#allocation2 + $0x10] sm:$0xc0]
    %v5862 = vld [vmem:[#allocation2 + $0x18] sm:$0xc0]
    %v5863 = vadd.f32 %v5748, %v5861
    %v5864 = vadd.f32 %v5752, %v5862
    %v5865 = vld [vmem:[#allocation2 + $0x20] sm:$0xc0]
    %v5866 = vld [vmem:[#allocation2 + $0x28] sm:$0xc0]
    %v5867 = vadd.f32 %v5748, %v5865
    %v5868 = vadd.f32 %v5752, %v5866
    %v5869 = vmax.f32 %v5863, 0.0
    %v5870 = vmax.f32 %v5864, 0.0
    %v5871 = vmax.f32 %v5867, 0.0
    %v5872 = vmax.f32 %v5868, 0.0
    %v5875 = vrot.slane %v5869, 2
    %v5876 = vrot.slane %v5870, 2
    %5879 = vst [vmem:[#allocation6 + $0x10] sm:$0x30] %v5875
    %5880 = vst [vmem:[#allocation6 + $0x18] sm:$0x30] %v5876
    %5881 = vst [vmem:[#allocation6 + $0x10] sm:$0xc0] %v5871
    %5882 = vst [vmem:[#allocation6 + $0x18] sm:$0xc0] %v5872
    %s5883 = sshll.u32 %s5509, 4
    %5884 = dma.done %s164, %s5883
    %v5885 = vld [vmem:[#allocation6] sm:$0xff]
    %v5886 = vld [vmem:[#allocation6 + $0x8] sm:$0xff]
    %v5887 = vld [vmem:[#allocation6 + $0x10] sm:$0xff]
    %v5888 = vld [vmem:[#allocation6 + $0x18] sm:$0xff]
    %v5889 = vpack.c.bf16 %v5887, %v5885
    %v5890 = vpack.c.bf16 %v5888, %v5886
    %v5891 = vld [vmem:[#allocation10] sm:$0xff]
    %v5892 = vld [vmem:[#allocation10 + $0x8] sm:$0xff]
    %v5893 = vld [vmem:[#allocation10 + $0x10] sm:$0xff]
    %v5894 = vld [vmem:[#allocation10 + $0x18] sm:$0xff]
    %v5895 = vld [vmem:[#allocation10 + $0x20] sm:$0xff]
    %v5896 = vld [vmem:[#allocation10 + $0x28] sm:$0xff]
    %v5897 = vld [vmem:[#allocation10 + $0x30] sm:$0xff]
    %v5898 = vld [vmem:[#allocation10 + $0x38] sm:$0xff]
    %v5899 = vld [vmem:[#allocation10 + $0x40] sm:$0xff]
    %v5900 = vld [vmem:[#allocation10 + $0x48] sm:$0xff]
    %v5901 = vld [vmem:[#allocation10 + $0x50] sm:$0xff]
    %v5902 = vld [vmem:[#allocation10 + $0x58] sm:$0xff]
    %v5903 = vld [vmem:[#allocation10 + $0x60] sm:$0xff]
    %v5904 = vld [vmem:[#allocation10 + $0x68] sm:$0xff]
    %v5905 = vld [vmem:[#allocation10 + $0x70] sm:$0xff]
    %v5906 = vld [vmem:[#allocation10 + $0x78] sm:$0xff]
    %v5907 = vld [vmem:[#allocation10 + $0x80] sm:$0xff]
    %v5908 = vld [vmem:[#allocation10 + $0x88] sm:$0xff]
    %v5909 = vld [vmem:[#allocation10 + $0x90] sm:$0xff]
    %v5910 = vld [vmem:[#allocation10 + $0x98] sm:$0xff]
    %v5911 = vld [vmem:[#allocation10 + $0xa0] sm:$0xff]
    %v5912 = vld [vmem:[#allocation10 + $0xa8] sm:$0xff]
    %v5913 = vld [vmem:[#allocation10 + $0xb0] sm:$0xff]
    %v5914 = vld [vmem:[#allocation10 + $0xb8] sm:$0xff]
    %v5915 = vld [vmem:[#allocation10 + $0xc0] sm:$0xff]
    %v5916 = vld [vmem:[#allocation10 + $0xc8] sm:$0xff]
    %v5917 = vld [vmem:[#allocation10 + $0xd0] sm:$0xff]
    %v5918 = vld [vmem:[#allocation10 + $0xd8] sm:$0xff]
    %v5919 = vld [vmem:[#allocation10 + $0xe0] sm:$0xff]
    %v5920 = vld [vmem:[#allocation10 + $0xe8] sm:$0xff]
    %v5921 = vld [vmem:[#allocation10 + $0xf0] sm:$0xff]
    %v5922 = vld [vmem:[#allocation10 + $0xf8] sm:$0xff]
    %v5923 = vld [vmem:[#allocation10 + $0x100] sm:$0xff]
    %v5924 = vld [vmem:[#allocation10 + $0x108] sm:$0xff]
    %v5925 = vld [vmem:[#allocation10 + $0x110] sm:$0xff]
    %v5926 = vld [vmem:[#allocation10 + $0x118] sm:$0xff]
    %v5927 = vld [vmem:[#allocation10 + $0x120] sm:$0xff]
    %v5928 = vld [vmem:[#allocation10 + $0x128] sm:$0xff]
    %v5929 = vld [vmem:[#allocation10 + $0x130] sm:$0xff]
    %v5930 = vld [vmem:[#allocation10 + $0x138] sm:$0xff]
    %v5931 = vld [vmem:[#allocation10 + $0x140] sm:$0xff]
    %v5932 = vld [vmem:[#allocation10 + $0x148] sm:$0xff]
    %v5933 = vld [vmem:[#allocation10 + $0x150] sm:$0xff]
    %v5934 = vld [vmem:[#allocation10 + $0x158] sm:$0xff]
    %v5935 = vld [vmem:[#allocation10 + $0x160] sm:$0xff]
    %v5936 = vld [vmem:[#allocation10 + $0x168] sm:$0xff]
    %v5937 = vld [vmem:[#allocation10 + $0x170] sm:$0xff]
    %v5938 = vld [vmem:[#allocation10 + $0x178] sm:$0xff]
    %v5939 = vld [vmem:[#allocation10 + $0x180] sm:$0xff]
    %v5940 = vld [vmem:[#allocation10 + $0x188] sm:$0xff]
    %v5941 = vld [vmem:[#allocation10 + $0x190] sm:$0xff]
    %v5942 = vld [vmem:[#allocation10 + $0x198] sm:$0xff]
    %v5943 = vld [vmem:[#allocation10 + $0x1a0] sm:$0xff]
    %v5944 = vld [vmem:[#allocation10 + $0x1a8] sm:$0xff]
    %v5945 = vld [vmem:[#allocation10 + $0x1b0] sm:$0xff]
    %v5946 = vld [vmem:[#allocation10 + $0x1b8] sm:$0xff]
    %v5947 = vld [vmem:[#allocation10 + $0x1c0] sm:$0xff]
    %v5948 = vld [vmem:[#allocation10 + $0x1c8] sm:$0xff]
    %v5949 = vld [vmem:[#allocation10 + $0x1d0] sm:$0xff]
    %v5950 = vld [vmem:[#allocation10 + $0x1d8] sm:$0xff]
    %v5951 = vld [vmem:[#allocation10 + $0x1e0] sm:$0xff]
    %v5952 = vld [vmem:[#allocation10 + $0x1e8] sm:$0xff]
    %v5953 = vld [vmem:[#allocation10 + $0x1f0] sm:$0xff]
    %v5954 = vld [vmem:[#allocation10 + $0x1f8] sm:$0xff]
    %v5955 = vld [vmem:[#allocation10 + $0x200] sm:$0xff]
    %v5956 = vld [vmem:[#allocation10 + $0x208] sm:$0xff]
    %v5957 = vld [vmem:[#allocation10 + $0x210] sm:$0xff]
    %v5958 = vld [vmem:[#allocation10 + $0x218] sm:$0xff]
    %v5959 = vld [vmem:[#allocation10 + $0x220] sm:$0xff]
    %v5960 = vld [vmem:[#allocation10 + $0x228] sm:$0xff]
    %v5961 = vld [vmem:[#allocation10 + $0x230] sm:$0xff]
    %v5962 = vld [vmem:[#allocation10 + $0x238] sm:$0xff]
    %v5963 = vld [vmem:[#allocation10 + $0x240] sm:$0xff]
    %v5964 = vld [vmem:[#allocation10 + $0x248] sm:$0xff]
    %v5965 = vld [vmem:[#allocation10 + $0x250] sm:$0xff]
    %v5966 = vld [vmem:[#allocation10 + $0x258] sm:$0xff]
    %v5967 = vld [vmem:[#allocation10 + $0x260] sm:$0xff]
    %v5968 = vld [vmem:[#allocation10 + $0x268] sm:$0xff]
    %v5969 = vld [vmem:[#allocation10 + $0x270] sm:$0xff]
    %v5970 = vld [vmem:[#allocation10 + $0x278] sm:$0xff]
    %v5971 = vld [vmem:[#allocation10 + $0x280] sm:$0xff]
    %v5972 = vld [vmem:[#allocation10 + $0x288] sm:$0xff]
    %v5973 = vld [vmem:[#allocation10 + $0x290] sm:$0xff]
    %v5974 = vld [vmem:[#allocation10 + $0x298] sm:$0xff]
    %v5975 = vld [vmem:[#allocation10 + $0x2a0] sm:$0xff]
    %v5976 = vld [vmem:[#allocation10 + $0x2a8] sm:$0xff]
    %v5977 = vld [vmem:[#allocation10 + $0x2b0] sm:$0xff]
    %v5978 = vld [vmem:[#allocation10 + $0x2b8] sm:$0xff]
    %v5979 = vld [vmem:[#allocation10 + $0x2c0] sm:$0xff]
    %v5980 = vld [vmem:[#allocation10 + $0x2c8] sm:$0xff]
    %v5981 = vld [vmem:[#allocation10 + $0x2d0] sm:$0xff]
    %v5982 = vld [vmem:[#allocation10 + $0x2d8] sm:$0xff]
    %v5983 = vld [vmem:[#allocation10 + $0x2e0] sm:$0xff]
    %v5984 = vld [vmem:[#allocation10 + $0x2e8] sm:$0xff]
    %v5985 = vld [vmem:[#allocation10 + $0x2f0] sm:$0xff]
    %v5986 = vld [vmem:[#allocation10 + $0x2f8] sm:$0xff]
    %5987 = vmatprep.subr.bf16.mxu0 %v5892
    %5988 = vmatpush1.bf16.msra.mxu0 %v5891
    %5989 = vmatprep.subr.bf16.mxu0 %v5898
    %5990 = vmatpush1.bf16.msra.mxu0 %v5897
    %5991 = vmatprep.subr.bf16.mxu0 %v5904
    %5992 = vmatpush1.bf16.msra.mxu0 %v5903
    %5993 = vmatprep.subr.bf16.mxu0 %v5910
    %5994 = vmatpush1.bf16.msra.mxu0 %v5909
    %5995 = vmatprep.subr.bf16.mxu0 %v5916
    %5996 = vmatpush1.bf16.msra.mxu0 %v5915
    %5997 = vmatprep.subr.bf16.mxu0 %v5922
    %5998 = vmatpush1.bf16.msra.mxu0 %v5921
    %5999 = vmatprep.subr.bf16.mxu0 %v5928
    %6000 = vmatpush1.bf16.msra.mxu0 %v5927
    %6001 = vmatprep.subr.bf16.mxu0 %v5934
    %6002 = vmatpush1.bf16.msra.mxu0 %v5933
    %6003 = vmatprep.subr.bf16.mxu0 %v5940
    %6004 = vmatpush1.bf16.msra.mxu0 %v5939
    %6005 = vmatprep.subr.bf16.mxu0 %v5946
    %6006 = vmatpush1.bf16.msra.mxu0 %v5945
    %6007 = vmatprep.subr.bf16.mxu0 %v5952
    %6008 = vmatpush1.bf16.msra.mxu0 %v5951
    %6009 = vmatprep.subr.bf16.mxu0 %v5958
    %6010 = vmatpush1.bf16.msra.mxu0 %v5957
    %6011 = vmatprep.subr.bf16.mxu0 %v5964
    %6012 = vmatpush1.bf16.msra.mxu0 %v5963
    %6013 = vmatprep.subr.bf16.mxu0 %v5970
    %6014 = vmatpush1.bf16.msra.mxu0 %v5969
    %6015 = vmatprep.subr.bf16.mxu0 %v5976
    %6016 = vmatpush1.bf16.msra.mxu0 %v5975
    %6017 = vmatprep.subr.bf16.mxu0 %v5982
    %6018 = vmatpush1.bf16.msra.mxu0 %v5981
    %6019 = vmatprep.mubr.bf16.mxu0 %v5890
    %6020 = vmatmul.mubr.bf16.gmra.mrb[0].mxu0 %v5889
    %v6021 = vpop.f32.mrb[0].mxu0
    %v6022 = vadd.f32 0.0, %v6021
    %v6023 = vpop.f32.mrb[0].mxu0
    %v6024 = vadd.f32 0.0, %v6023
    %v6025 = vpop.f32.mrb[0].mxu0
    %v6026 = vadd.f32 0.0, %v6025
    %v6027 = vpop.f32.mrb[0].mxu0
    %v6028 = vadd.f32 0.0, %v6027
    %6029 = vdwg.mxu0
    %6030 = vmatprep.subr.bf16.mxu0 %v5894
    %6031 = vmatpush1.bf16.msra.mxu0 %v5893
    %6032 = vmatprep.subr.bf16.mxu0 %v5900
    %6033 = vmatpush1.bf16.msra.mxu0 %v5899
    %6034 = vmatprep.subr.bf16.mxu0 %v5906
    %6035 = vmatpush1.bf16.msra.mxu0 %v5905
    %6036 = vmatprep.subr.bf16.mxu0 %v5912
    %6037 = vmatpush1.bf16.msra.mxu0 %v5911
    %6038 = vmatprep.subr.bf16.mxu0 %v5918
    %6039 = vmatpush1.bf16.msra.mxu0 %v5917
    %6040 = vmatprep.subr.bf16.mxu0 %v5924
    %6041 = vmatpush1.bf16.msra.mxu0 %v5923
    %6042 = vmatprep.subr.bf16.mxu0 %v5930
    %6043 = vmatpush1.bf16.msra.mxu0 %v5929
    %6044 = vmatprep.subr.bf16.mxu0 %v5936
    %6045 = vmatpush1.bf16.msra.mxu0 %v5935
    %6046 = vmatprep.subr.bf16.mxu0 %v5942
    %6047 = vmatpush1.bf16.msra.mxu0 %v5941
    %6048 = vmatprep.subr.bf16.mxu0 %v5948
    %6049 = vmatpush1.bf16.msra.mxu0 %v5947
    %6050 = vmatprep.subr.bf16.mxu0 %v5954
    %6051 = vmatpush1.bf16.msra.mxu0 %v5953
    %6052 = vmatprep.subr.bf16.mxu0 %v5960
    %6053 = vmatpush1.bf16.msra.mxu0 %v5959
    %6054 = vmatprep.subr.bf16.mxu0 %v5966
    %6055 = vmatpush1.bf16.msra.mxu0 %v5965
    %6056 = vmatprep.subr.bf16.mxu0 %v5972
    %6057 = vmatpush1.bf16.msra.mxu0 %v5971
    %6058 = vmatprep.subr.bf16.mxu0 %v5978
    %6059 = vmatpush1.bf16.msra.mxu0 %v5977
    %6060 = vmatprep.subr.bf16.mxu0 %v5984
    %6061 = vmatpush1.bf16.msra.mxu0 %v5983
    %6062 = vmatprep.mubr.bf16.mxu0 %v5890
    %6063 = vmatmul.mubr.bf16.gmra.mrb[0].mxu0 %v5889
    %v6064 = vpop.f32.mrb[0].mxu0
    %v6065 = vadd.f32 0.0, %v6064
    %v6066 = vpop.f32.mrb[0].mxu0
    %v6067 = vadd.f32 0.0, %v6066
    %v6068 = vpop.f32.mrb[0].mxu0
    %v6069 = vadd.f32 0.0, %v6068
    %v6070 = vpop.f32.mrb[0].mxu0
    %v6071 = vadd.f32 0.0, %v6070
    %6072 = vdwg.mxu0
    %6073 = vmatprep.subr.bf16.mxu0 %v5896
    %6074 = vmatpush1.bf16.msra.mxu0 %v5895
    %6075 = vmatprep.subr.bf16.mxu0 %v5902
    %6076 = vmatpush1.bf16.msra.mxu0 %v5901
    %6077 = vmatprep.subr.bf16.mxu0 %v5908
    %6078 = vmatpush1.bf16.msra.mxu0 %v5907
    %6079 = vmatprep.subr.bf16.mxu0 %v5914
    %6080 = vmatpush1.bf16.msra.mxu0 %v5913
    %6081 = vmatprep.subr.bf16.mxu0 %v5920
    %6082 = vmatpush1.bf16.msra.mxu0 %v5919
    %6083 = vmatprep.subr.bf16.mxu0 %v5926
    %6084 = vmatpush1.bf16.msra.mxu0 %v5925
    %6085 = vmatprep.subr.bf16.mxu0 %v5932
    %6086 = vmatpush1.bf16.msra.mxu0 %v5931
    %6087 = vmatprep.subr.bf16.mxu0 %v5938
    %6088 = vmatpush1.bf16.msra.mxu0 %v5937
    %6089 = vmatprep.subr.bf16.mxu0 %v5944
    %6090 = vmatpush1.bf16.msra.mxu0 %v5943
    %6091 = vmatprep.subr.bf16.mxu0 %v5950
    %6092 = vmatpush1.bf16.msra.mxu0 %v5949
    %6093 = vmatprep.subr.bf16.mxu0 %v5956
    %6094 = vmatpush1.bf16.msra.mxu0 %v5955
    %6095 = vmatprep.subr.bf16.mxu0 %v5962
    %6096 = vmatpush1.bf16.msra.mxu0 %v5961
    %6097 = vmatprep.subr.bf16.mxu0 %v5968
    %6098 = vmatpush1.bf16.msra.mxu0 %v5967
    %6099 = vmatprep.subr.bf16.mxu0 %v5974
    %6100 = vmatpush1.bf16.msra.mxu0 %v5973
    %6101 = vmatprep.subr.bf16.mxu0 %v5980
    %6102 = vmatpush1.bf16.msra.mxu0 %v5979
    %6103 = vmatprep.subr.bf16.mxu0 %v5986
    %6104 = vmatpush1.bf16.msra.mxu0 %v5985
    %6105 = vmatprep.mubr.bf16.mxu0 %v5890
    %6106 = vmatmul.mubr.bf16.gmra.mrb[0].mxu0 %v5889
    %v6107 = vpop.f32.mrb[0].mxu0
    %v6108 = vadd.f32 0.0, %v6107
    %v6109 = vpop.f32.mrb[0].mxu0
    %v6110 = vadd.f32 0.0, %v6109
    %v6111 = vpop.f32.mrb[0].mxu0
    %v6112 = vadd.f32 0.0, %v6111
    %v6113 = vpop.f32.mrb[0].mxu0
    %v6114 = vadd.f32 0.0, %v6113
    %6115 = vdwg.mxu0
    %6116 = vst [vmem:[#allocation2] sm:$0xff] %v6022
    %6117 = vst [vmem:[#allocation2 + $0x8] sm:$0xff] %v6024
    %6118 = vst [vmem:[#allocation2 + $0x10] sm:$0xff] %v6065
    %6119 = vst [vmem:[#allocation2 + $0x18] sm:$0xff] %v6067
    %6120 = vst [vmem:[#allocation2 + $0x20] sm:$0xff] %v6108
    %6121 = vst [vmem:[#allocation2 + $0x28] sm:$0xff] %v6110
    %6122 = vst [vmem:[#allocation2 + $0x30] sm:$0xff] %v6026
    %6123 = vst [vmem:[#allocation2 + $0x38] sm:$0xff] %v6028
    %6124 = vst [vmem:[#allocation2 + $0x40] sm:$0xff] %v6069
    %6125 = vst [vmem:[#allocation2 + $0x48] sm:$0xff] %v6071
    %6126 = vst [vmem:[#allocation2 + $0x50] sm:$0xff] %v6112
    %6127 = vst [vmem:[#allocation2 + $0x58] sm:$0xff] %v6114
    %v6128 = vld [vmem:[%s22] sm:$0x3]
    %v6129 = vld [vmem:[#allocation2 + $0x10] sm:$0x3]
    %v6130 = vld [vmem:[#allocation2 + $0x18] sm:$0x3]
    %v6132 = vlaneseq
    %v6133 = vshrl.u32 %v6132, 7
    %v6134 = vsub.s32 0, %v6133
    %v6135 = vrot.slane %v6128, %v6134
    %v6136 = vlaneseq
    %v6137 = vshrl.u32 %v6136, 7
    %v6138 = vsub.s32 1, %v6137
    %v6139 = vrot.slane %v6128, %v6138
    %v6142 = vadd.f32 %v6135, %v6129
    %v6143 = vadd.f32 %v6139, %v6130
    %v6144 = vld [vmem:[#allocation2 + $0x20] sm:$0x3]
    %v6145 = vld [vmem:[#allocation2 + $0x28] sm:$0x3]
    %v6146 = vadd.f32 %v6135, %v6144
    %v6147 = vadd.f32 %v6139, %v6145
    %v6148 = vld [vmem:[#allocation2] sm:$0xc]
    %v6149 = vld [vmem:[#allocation2 + $0x8] sm:$0xc]
    %v6152 = vrot.slane %v6148, 2
    %v6153 = vrot.slane %v6149, 2
    %v6156 = vadd.f32 %v6146, %v6152
    %v6157 = vadd.f32 %v6147, %v6153
    %v6158 = vmax.f32 %v6142, 0.0
    %v6159 = vmax.f32 %v6143, 0.0
    %v6160 = vmax.f32 %v6156, 0.0
    %v6161 = vmax.f32 %v6157, 0.0
    %6162 = vst [vmem:[#allocation7] sm:$0x3] %v6158
    %6163 = vst [vmem:[#allocation7 + $0x8] sm:$0x3] %v6159
    %v6166 = vrot.slane %v6160, 6
    %v6167 = vrot.slane %v6161, 6
    %6170 = vst [vmem:[#allocation7] sm:$0xc] %v6166
    %6171 = vst [vmem:[#allocation7 + $0x8] sm:$0xc] %v6167
    %v6172 = vld [vmem:[#allocation2 + $0x10] sm:$0xc]
    %v6173 = vld [vmem:[#allocation2 + $0x18] sm:$0xc]
    %v6174 = vadd.f32 %v6135, %v6172
    %v6175 = vadd.f32 %v6139, %v6173
    %v6176 = vld [vmem:[#allocation2 + $0x20] sm:$0xc]
    %v6177 = vld [vmem:[#allocation2 + $0x28] sm:$0xc]
    %v6178 = vadd.f32 %v6135, %v6176
    %v6179 = vadd.f32 %v6139, %v6177
    %v6180 = vld [vmem:[#allocation2] sm:$0x30]
    %v6181 = vld [vmem:[#allocation2 + $0x8] sm:$0x30]
    %v6184 = vrot.slane %v6180, 2
    %v6185 = vrot.slane %v6181, 2
    %v6188 = vadd.f32 %v6178, %v6184
    %v6189 = vadd.f32 %v6179, %v6185
    %v6190 = vmax.f32 %v6174, 0.0
    %v6191 = vmax.f32 %v6175, 0.0
    %v6192 = vmax.f32 %v6188, 0.0
    %v6193 = vmax.f32 %v6189, 0.0
    %v6196 = vrot.slane %v6190, 6
    %v6197 = vrot.slane %v6191, 6
    %6200 = vst [vmem:[#allocation7] sm:$0x30] %v6196
    %6201 = vst [vmem:[#allocation7 + $0x8] sm:$0x30] %v6197
    %v6204 = vrot.slane %v6192, 4
    %v6205 = vrot.slane %v6193, 4
    %6208 = vst [vmem:[#allocation7] sm:$0xc0] %v6204
    %6209 = vst [vmem:[#allocation7 + $0x8] sm:$0xc0] %v6205
    %v6210 = vld [vmem:[#allocation2 + $0x10] sm:$0x30]
    %v6211 = vld [vmem:[#allocation2 + $0x18] sm:$0x30]
    %v6212 = vadd.f32 %v6135, %v6210
    %v6213 = vadd.f32 %v6139, %v6211
    %v6214 = vld [vmem:[#allocation2 + $0x20] sm:$0x30]
    %v6215 = vld [vmem:[#allocation2 + $0x28] sm:$0x30]
    %v6216 = vadd.f32 %v6135, %v6214
    %v6217 = vadd.f32 %v6139, %v6215
    %v6218 = vld [vmem:[#allocation2] sm:$0xc0]
    %v6219 = vld [vmem:[#allocation2 + $0x8] sm:$0xc0]
    %v6222 = vrot.slane %v6218, 2
    %v6223 = vrot.slane %v6219, 2
    %v6226 = vadd.f32 %v6216, %v6222
    %v6227 = vadd.f32 %v6217, %v6223
    %v6228 = vmax.f32 %v6212, 0.0
    %v6229 = vmax.f32 %v6213, 0.0
    %v6230 = vmax.f32 %v6226, 0.0
    %v6231 = vmax.f32 %v6227, 0.0
    %v6234 = vrot.slane %v6228, 4
    %v6235 = vrot.slane %v6229, 4
    %6238 = vst [vmem:[#allocation7 + $0x10] sm:$0x3] %v6234
    %6239 = vst [vmem:[#allocation7 + $0x18] sm:$0x3] %v6235
    %v6242 = vrot.slane %v6230, 2
    %v6243 = vrot.slane %v6231, 2
    %6246 = vst [vmem:[#allocation7 + $0x10] sm:$0xc] %v6242
    %6247 = vst [vmem:[#allocation7 + $0x18] sm:$0xc] %v6243
    %v6248 = vld [vmem:[#allocation2 + $0x10] sm:$0xc0]
    %v6249 = vld [vmem:[#allocation2 + $0x18] sm:$0xc0]
    %v6250 = vadd.f32 %v6135, %v6248
    %v6251 = vadd.f32 %v6139, %v6249
    %v6252 = vld [vmem:[#allocation2 + $0x20] sm:$0xc0]
    %v6253 = vld [vmem:[#allocation2 + $0x28] sm:$0xc0]
    %v6254 = vadd.f32 %v6135, %v6252
    %v6255 = vadd.f32 %v6139, %v6253
    %v6256 = vld [vmem:[#allocation2 + $0x30] sm:$0x3]
    %v6257 = vld [vmem:[#allocation2 + $0x38] sm:$0x3]
    %v6260 = vrot.slane %v6256, 2
    %v6261 = vrot.slane %v6257, 2
    %v6264 = vadd.f32 %v6254, %v6260
    %v6265 = vadd.f32 %v6255, %v6261
    %v6266 = vmax.f32 %v6250, 0.0
    %v6267 = vmax.f32 %v6251, 0.0
    %v6268 = vmax.f32 %v6264, 0.0
    %v6269 = vmax.f32 %v6265, 0.0
    %v6272 = vrot.slane %v6266, 2
    %v6273 = vrot.slane %v6267, 2
    %6276 = vst [vmem:[#allocation7 + $0x10] sm:$0x30] %v6272
    %6277 = vst [vmem:[#allocation7 + $0x18] sm:$0x30] %v6273
    %6278 = vst [vmem:[#allocation7 + $0x10] sm:$0xc0] %v6268
    %6279 = vst [vmem:[#allocation7 + $0x18] sm:$0xc0] %v6269
    %v6280 = vld [vmem:[#allocation2 + $0x40] sm:$0x3]
    %v6281 = vld [vmem:[#allocation2 + $0x48] sm:$0x3]
    %v6282 = vadd.f32 %v6135, %v6280
    %v6283 = vadd.f32 %v6139, %v6281
    %v6284 = vld [vmem:[#allocation2 + $0x50] sm:$0x3]
    %v6285 = vld [vmem:[#allocation2 + $0x58] sm:$0x3]
    %v6286 = vadd.f32 %v6135, %v6284
    %v6287 = vadd.f32 %v6139, %v6285
    %v6288 = vld [vmem:[#allocation2 + $0x30] sm:$0xc]
    %v6289 = vld [vmem:[#allocation2 + $0x38] sm:$0xc]
    %v6292 = vrot.slane %v6288, 2
    %v6293 = vrot.slane %v6289, 2
    %v6296 = vadd.f32 %v6286, %v6292
    %v6297 = vadd.f32 %v6287, %v6293
    %v6298 = vmax.f32 %v6282, 0.0
    %v6299 = vmax.f32 %v6283, 0.0
    %v6300 = vmax.f32 %v6296, 0.0
    %v6301 = vmax.f32 %v6297, 0.0
    %6302 = vst [vmem:[#allocation7 + $0x20] sm:$0x3] %v6298
    %6303 = vst [vmem:[#allocation7 + $0x28] sm:$0x3] %v6299
    %v6306 = vrot.slane %v6300, 6
    %v6307 = vrot.slane %v6301, 6
    %6310 = vst [vmem:[#allocation7 + $0x20] sm:$0xc] %v6306
    %6311 = vst [vmem:[#allocation7 + $0x28] sm:$0xc] %v6307
    %v6312 = vld [vmem:[#allocation2 + $0x40] sm:$0xc]
    %v6313 = vld [vmem:[#allocation2 + $0x48] sm:$0xc]
    %v6314 = vadd.f32 %v6135, %v6312
    %v6315 = vadd.f32 %v6139, %v6313
    %v6316 = vld [vmem:[#allocation2 + $0x50] sm:$0xc]
    %v6317 = vld [vmem:[#allocation2 + $0x58] sm:$0xc]
    %v6318 = vadd.f32 %v6135, %v6316
    %v6319 = vadd.f32 %v6139, %v6317
    %v6320 = vld [vmem:[#allocation2 + $0x30] sm:$0x30]
    %v6321 = vld [vmem:[#allocation2 + $0x38] sm:$0x30]
    %v6324 = vrot.slane %v6320, 2
    %v6325 = vrot.slane %v6321, 2
    %v6328 = vadd.f32 %v6318, %v6324
    %v6329 = vadd.f32 %v6319, %v6325
    %v6330 = vmax.f32 %v6314, 0.0
    %v6331 = vmax.f32 %v6315, 0.0
    %v6332 = vmax.f32 %v6328, 0.0
    %v6333 = vmax.f32 %v6329, 0.0
    %v6336 = vrot.slane %v6330, 6
    %v6337 = vrot.slane %v6331, 6
    %6340 = vst [vmem:[#allocation7 + $0x20] sm:$0x30] %v6336
    %6341 = vst [vmem:[#allocation7 + $0x28] sm:$0x30] %v6337
    %v6344 = vrot.slane %v6332, 4
    %v6345 = vrot.slane %v6333, 4
    %6348 = vst [vmem:[#allocation7 + $0x20] sm:$0xc0] %v6344
    %6349 = vst [vmem:[#allocation7 + $0x28] sm:$0xc0] %v6345
    %v6350 = vld [vmem:[#allocation2 + $0x40] sm:$0x30]
    %v6351 = vld [vmem:[#allocation2 + $0x48] sm:$0x30]
    %v6352 = vadd.f32 %v6135, %v6350
    %v6353 = vadd.f32 %v6139, %v6351
    %v6354 = vld [vmem:[#allocation2 + $0x50] sm:$0x30]
    %v6355 = vld [vmem:[#allocation2 + $0x58] sm:$0x30]
    %v6356 = vadd.f32 %v6135, %v6354
    %v6357 = vadd.f32 %v6139, %v6355
    %v6358 = vld [vmem:[#allocation2 + $0x30] sm:$0xc0]
    %v6359 = vld [vmem:[#allocation2 + $0x38] sm:$0xc0]
    %v6362 = vrot.slane %v6358, 2
    %v6363 = vrot.slane %v6359, 2
    %v6366 = vadd.f32 %v6356, %v6362
    %v6367 = vadd.f32 %v6357, %v6363
    %v6368 = vmax.f32 %v6352, 0.0
    %v6369 = vmax.f32 %v6353, 0.0
    %v6370 = vmax.f32 %v6366, 0.0
    %v6371 = vmax.f32 %v6367, 0.0
    %v6374 = vrot.slane %v6368, 4
    %v6375 = vrot.slane %v6369, 4
    %6378 = vst [vmem:[#allocation7 + $0x30] sm:$0x3] %v6374
    %6379 = vst [vmem:[#allocation7 + $0x38] sm:$0x3] %v6375
    %v6382 = vrot.slane %v6370, 2
    %v6383 = vrot.slane %v6371, 2
    %6386 = vst [vmem:[#allocation7 + $0x30] sm:$0xc] %v6382
    %6387 = vst [vmem:[#allocation7 + $0x38] sm:$0xc] %v6383
    %v6388 = vld [vmem:[#allocation2 + $0x40] sm:$0xc0]
    %v6389 = vld [vmem:[#allocation2 + $0x48] sm:$0xc0]
    %v6390 = vadd.f32 %v6135, %v6388
    %v6391 = vadd.f32 %v6139, %v6389
    %v6392 = vld [vmem:[#allocation2 + $0x50] sm:$0xc0]
    %v6393 = vld [vmem:[#allocation2 + $0x58] sm:$0xc0]
    %v6394 = vadd.f32 %v6135, %v6392
    %v6395 = vadd.f32 %v6139, %v6393
    %v6396 = vmax.f32 %v6390, 0.0
    %v6397 = vmax.f32 %v6391, 0.0
    %v6398 = vmax.f32 %v6394, 0.0
    %v6399 = vmax.f32 %v6395, 0.0
    %v6402 = vrot.slane %v6396, 2
    %v6403 = vrot.slane %v6397, 2
    %6406 = vst [vmem:[#allocation7 + $0x30] sm:$0x30] %v6402
    %6407 = vst [vmem:[#allocation7 + $0x38] sm:$0x30] %v6403
    %6408 = vst [vmem:[#allocation7 + $0x30] sm:$0xc0] %v6398
    %6409 = vst [vmem:[#allocation7 + $0x38] sm:$0xc0] %v6399
    %s6410 = smul.u32 %s4476, 1
    %s6411 = sshll.u32 %s6410, 4
    %6412 = dma.done %s199, %s6411
    %v6413 = vld [vmem:[#allocation7] sm:$0xff]
    %v6414 = vld [vmem:[#allocation7 + $0x8] sm:$0xff]
    %v6415 = vld [vmem:[#allocation7 + $0x10] sm:$0xff]
    %v6416 = vld [vmem:[#allocation7 + $0x18] sm:$0xff]
    %v6417 = vld [vmem:[#allocation7 + $0x20] sm:$0xff]
    %v6418 = vld [vmem:[#allocation7 + $0x28] sm:$0xff]
    %v6419 = vld [vmem:[#allocation7 + $0x30] sm:$0xff]
    %v6420 = vld [vmem:[#allocation7 + $0x38] sm:$0xff]
    %v6421 = vpack.c.bf16 %v6415, %v6413
    %v6422 = vpack.c.bf16 %v6416, %v6414
    %v6423 = vpack.c.bf16 %v6419, %v6417
    %v6424 = vpack.c.bf16 %v6420, %v6418
    %v6425 = vld [vmem:[#allocation11] sm:$0xff]
    %v6426 = vld [vmem:[#allocation11 + $0x8] sm:$0xff]
    %v6427 = vld [vmem:[#allocation11 + $0x10] sm:$0xff]
    %v6428 = vld [vmem:[#allocation11 + $0x18] sm:$0xff]
    %v6429 = vld [vmem:[#allocation11 + $0x20] sm:$0xff]
    %v6430 = vld [vmem:[#allocation11 + $0x28] sm:$0xff]
    %v6431 = vld [vmem:[#allocation11 + $0x30] sm:$0xff]
    %v6432 = vld [vmem:[#allocation11 + $0x38] sm:$0xff]
    %v6433 = vld [vmem:[#allocation11 + $0x40] sm:$0xff]
    %v6434 = vld [vmem:[#allocation11 + $0x48] sm:$0xff]
    %v6435 = vld [vmem:[#allocation11 + $0x50] sm:$0xff]
    %v6436 = vld [vmem:[#allocation11 + $0x58] sm:$0xff]
    %v6437 = vld [vmem:[#allocation11 + $0x60] sm:$0xff]
    %v6438 = vld [vmem:[#allocation11 + $0x68] sm:$0xff]
    %v6439 = vld [vmem:[#allocation11 + $0x70] sm:$0xff]
    %v6440 = vld [vmem:[#allocation11 + $0x78] sm:$0xff]
    %6441 = vmatprep.subr.bf16.mxu0 0
    %6442 = vmatpush1.bf16.msra.mxu0 %v6425
    %6443 = vmatprep.subr.bf16.mxu0 0
    %6444 = vmatpush1.bf16.msra.mxu0 %v6426
    %6445 = vmatprep.subr.bf16.mxu0 0
    %6446 = vmatpush1.bf16.msra.mxu0 %v6427
    %6447 = vmatprep.subr.bf16.mxu0 0
    %6448 = vmatpush1.bf16.msra.mxu0 %v6428
    %6449 = vmatprep.subr.bf16.mxu0 0
    %6450 = vmatpush1.bf16.msra.mxu0 %v6429
    %6451 = vmatprep.subr.bf16.mxu0 0
    %6452 = vmatpush1.bf16.msra.mxu0 %v6430
    %6453 = vmatprep.subr.bf16.mxu0 0
    %6454 = vmatpush1.bf16.msra.mxu0 %v6431
    %6455 = vmatprep.subr.bf16.mxu0 0
    %6456 = vmatpush1.bf16.msra.mxu0 %v6432
    %6457 = vmatprep.subr.bf16.mxu0 0
    %6458 = vmatpush1.bf16.msra.mxu0 %v6433
    %6459 = vmatprep.subr.bf16.mxu0 0
    %6460 = vmatpush1.bf16.msra.mxu0 %v6434
    %6461 = vmatprep.subr.bf16.mxu0 0
    %6462 = vmatpush1.bf16.msra.mxu0 %v6435
    %6463 = vmatprep.subr.bf16.mxu0 0
    %6464 = vmatpush1.bf16.msra.mxu0 %v6436
    %6465 = vmatprep.subr.bf16.mxu0 0
    %6466 = vmatpush1.bf16.msra.mxu0 %v6437
    %6467 = vmatprep.subr.bf16.mxu0 0
    %6468 = vmatpush1.bf16.msra.mxu0 %v6438
    %6469 = vmatprep.subr.bf16.mxu0 0
    %6470 = vmatpush1.bf16.msra.mxu0 %v6439
    %6471 = vmatprep.subr.bf16.mxu0 0
    %6472 = vmatpush1.bf16.msra.mxu0 %v6440
    %6473 = vmatprep.mubr.bf16.mxu0 %v6422
    %6474 = vmatmul.mubr.bf16.gmra.mrb[0].mxu0 %v6421
    %v6475 = vpop.f32.mrb[0].mxu0
    %v6476 = vadd.f32 0.0, %v6475
    %v6477 = vpop.f32.mrb[0].mxu0
    %v6478 = vpop.f32.mrb[0].mxu0
    %v6479 = vadd.f32 0.0, %v6478
    %v6480 = vpop.f32.mrb[0].mxu0
    %6481 = vmatprep.mubr.bf16.mxu0 %v6424
    %6482 = vmatmul.mubr.bf16.gmra.mrb[0].mxu0 %v6423
    %v6483 = vpop.f32.mrb[0].mxu0
    %v6484 = vadd.f32 0.0, %v6483
    %v6485 = vpop.f32.mrb[0].mxu0
    %v6486 = vpop.f32.mrb[0].mxu0
    %v6487 = vadd.f32 0.0, %v6486
    %v6488 = vpop.f32.mrb[0].mxu0
    %6489 = vdwg.mxu0
    %vm6490 = vcmask 785408
    %6491 = vst.msk [vmem:[#allocation2] sm:$0xff] %vm6490, %v6476
    %6492 = vst.msk [vmem:[#allocation2 + $0x30] sm:$0xff] %vm6490, %v6479
    %6493 = vst.msk [vmem:[#allocation2 + $0x60] sm:$0xff] %vm6490, %v6484
    %6494 = vst.msk [vmem:[#allocation2 + $0x90] sm:$0xff] %vm6490, %v6487
    %v6495 = vld [vmem:[%s24] sm:$0x1]
    %v6496 = vld [vmem:[#allocation2] sm:$0x3]
    %v6498 = vlaneseq
    %v6499 = vshrl.u32 %v6498, 7
    %v6500 = vsub.s32 0, %v6499
    %v6501 = vrot.slane %v6495, %v6500
    %6504 = vrot.lane.b32.xlu0 %v6496, 96
    %v6505 = vpop.permute.xlu0 %6504
    %v6507 = vadd.f32 %v6501, %v6505
    %6508 = vrot.lane.b32.xlu0 %v6496, 64
    %v6509 = vpop.permute.xlu0 %6508
    %v6511 = vadd.f32 %v6501, %v6509
    %v6512 = vld [vmem:[#allocation2] sm:$0xc]
    %v6514 = vrot.slane %v6512, 2
    %v6516 = vadd.f32 %v6511, %v6514
    %vm6517 = vcmask 254976
    %6518 = vst.msk [vmem:[%s25] sm:$0x3] %vm6517, %v6507
    %v6521 = vunpack.c.l.s4 1983009808
    %v6522 = vunpack.c.0.s8 %v6521
    %v6523 = vlaneseq
    %v6524 = vshrl.u32 %v6523, 7
    %v6525 = vsub.s32 %v6522, %v6524
    %v6526 = vrot.slane %v6516, %v6525
    %6527 = vrot.lane.b32.xlu0 %v6526, 32
    %v6528 = vpop.permute.xlu0 %6527
    %vm6530 = vcmask 517376
    %6531 = vst.msk [vmem:[%s25] sm:$0x3] %vm6530, %v6528
    %v6532 = vld [vmem:[#allocation2] sm:$0xc]
    %v6534 = vrot.slane %v6532, 2
    %6535 = vrot.lane.b32.xlu0 %v6534, 96
    %v6536 = vpop.permute.xlu0 %6535
    %v6538 = vadd.f32 %v6501, %v6536
    %6539 = vrot.lane.b32.xlu0 %v6534, 64
    %v6540 = vpop.permute.xlu0 %6539
    %v6542 = vadd.f32 %v6501, %v6540
    %v6543 = vld [vmem:[#allocation2] sm:$0x30]
    %v6545 = vrot.slane %v6543, 4
    %v6547 = vadd.f32 %v6542, %v6545
    %v6550 = vunpack.c.l.s4 1983009808
    %v6551 = vunpack.c.0.s8 %v6550
    %v6552 = vlaneseq
    %v6553 = vshrl.u32 %v6552, 7
    %v6554 = vsub.s32 %v6551, %v6553
    %v6555 = vrot.slane %v6538, %v6554
    %6556 = vrot.lane.b32.xlu0 %v6555, 64
    %v6557 = vpop.permute.xlu0 %6556
    %vm6559 = vcmask 779776
    %6560 = vst.msk [vmem:[%s25] sm:$0x3] %vm6559, %v6557
    %v6563 = vunpack.c.l.s4 1983009808
    %v6564 = vunpack.c.0.s8 %v6563
    %v6565 = vlaneseq
    %v6566 = vshrl.u32 %v6565, 7
    %v6567 = vsub.s32 %v6564, %v6566
    %v6568 = vrot.slane %v6547, %v6567
    %6569 = vrot.lane.b32.xlu0 %v6568, 96
    %v6570 = vpop.permute.xlu0 %6569
    %vm6572 = vcmask 1042176
    %6573 = vst.msk [vmem:[%s25] sm:$0x3] %vm6572, %v6570
    %v6574 = vld [vmem:[#allocation2] sm:$0x30]
    %v6576 = vrot.slane %v6574, 4
    %6577 = vrot.lane.b32.xlu0 %v6576, 96
    %v6578 = vpop.permute.xlu0 %6577
    %v6580 = vadd.f32 %v6501, %v6578
    %6581 = vrot.lane.b32.xlu0 %v6576, 64
    %v6582 = vpop.permute.xlu0 %6581
    %v6584 = vadd.f32 %v6501, %v6582
    %v6585 = vld [vmem:[#allocation2] sm:$0xc0]
    %v6587 = vrot.slane %v6585, 6
    %v6589 = vadd.f32 %v6584, %v6587
    %6590 = vst.msk [vmem:[%s25 + $0x2] sm:$0x3] %vm6517, %v6580
    %v6593 = vunpack.c.l.s4 1983009808
    %v6594 = vunpack.c.0.s8 %v6593
    %v6595 = vlaneseq
    %v6596 = vshrl.u32 %v6595, 7
    %v6597 = vsub.s32 %v6594, %v6596
    %v6598 = vrot.slane %v6589, %v6597
    %6599 = vrot.lane.b32.xlu0 %v6598, 32
    %v6600 = vpop.permute.xlu0 %6599
    %6602 = vst.msk [vmem:[%s25 + $0x2] sm:$0x3] %vm6530, %v6600
    %v6603 = vld [vmem:[#allocation2] sm:$0xc0]
    %v6605 = vrot.slane %v6603, 6
    %6606 = vrot.lane.b32.xlu0 %v6605, 96
    %v6607 = vpop.permute.xlu0 %6606
    %v6609 = vadd.f32 %v6501, %v6607
    %6610 = vrot.lane.b32.xlu0 %v6605, 64
    %v6611 = vpop.permute.xlu0 %6610
    %v6613 = vadd.f32 %v6501, %v6611
    %v6614 = vld [vmem:[#allocation2 + $0x30] sm:$0x3]
    %v6615 = vadd.f32 %v6613, %v6614
    %v6618 = vunpack.c.l.s4 1983009808
    %v6619 = vunpack.c.0.s8 %v6618
    %v6620 = vlaneseq
    %v6621 = vshrl.u32 %v6620, 7
    %v6622 = vsub.s32 %v6619, %v6621
    %v6623 = vrot.slane %v6609, %v6622
    %6624 = vrot.lane.b32.xlu0 %v6623, 64
    %v6625 = vpop.permute.xlu0 %6624
    %6627 = vst.msk [vmem:[%s25 + $0x2] sm:$0x3] %vm6559, %v6625
    %v6630 = vunpack.c.l.s4 1983009808
    %v6631 = vunpack.c.0.s8 %v6630
    %v6632 = vlaneseq
    %v6633 = vshrl.u32 %v6632, 7
    %v6634 = vsub.s32 %v6631, %v6633
    %v6635 = vrot.slane %v6615, %v6634
    %6636 = vrot.lane.b32.xlu0 %v6635, 96
    %v6637 = vpop.permute.xlu0 %6636
    %6639 = vst.msk [vmem:[%s25 + $0x2] sm:$0x3] %vm6572, %v6637
    %v6640 = vld [vmem:[#allocation2 + $0x30] sm:$0x3]
    %6642 = vrot.lane.b32.xlu0 %v6640, 96
    %v6643 = vpop.permute.xlu0 %6642
    %v6645 = vadd.f32 %v6501, %v6643
    %6646 = vrot.lane.b32.xlu0 %v6640, 64
    %v6647 = vpop.permute.xlu0 %6646
    %v6649 = vadd.f32 %v6501, %v6647
    %v6650 = vld [vmem:[#allocation2 + $0x30] sm:$0xc]
    %v6652 = vrot.slane %v6650, 2
    %v6654 = vadd.f32 %v6649, %v6652
    %6655 = vst.msk [vmem:[%s25 + $0x4] sm:$0x3] %vm6517, %v6645
    %v6658 = vunpack.c.l.s4 1983009808
    %v6659 = vunpack.c.0.s8 %v6658
    %v6660 = vlaneseq
    %v6661 = vshrl.u32 %v6660, 7
    %v6662 = vsub.s32 %v6659, %v6661
    %v6663 = vrot.slane %v6654, %v6662
    %6664 = vrot.lane.b32.xlu0 %v6663, 32
    %v6665 = vpop.permute.xlu0 %6664
    %6667 = vst.msk [vmem:[%s25 + $0x4] sm:$0x3] %vm6530, %v6665
    %v6668 = vld [vmem:[#allocation2 + $0x30] sm:$0xc]
    %v6670 = vrot.slane %v6668, 2
    %6671 = vrot.lane.b32.xlu0 %v6670, 96
    %v6672 = vpop.permute.xlu0 %6671
    %v6674 = vadd.f32 %v6501, %v6672
    %6675 = vrot.lane.b32.xlu0 %v6670, 64
    %v6676 = vpop.permute.xlu0 %6675
    %v6678 = vadd.f32 %v6501, %v6676
    %v6679 = vld [vmem:[#allocation2 + $0x30] sm:$0x30]
    %v6681 = vrot.slane %v6679, 4
    %v6683 = vadd.f32 %v6678, %v6681
    %v6686 = vunpack.c.l.s4 1983009808
    %v6687 = vunpack.c.0.s8 %v6686
    %v6688 = vlaneseq
    %v6689 = vshrl.u32 %v6688, 7
    %v6690 = vsub.s32 %v6687, %v6689
    %v6691 = vrot.slane %v6674, %v6690
    %6692 = vrot.lane.b32.xlu0 %v6691, 64
    %v6693 = vpop.permute.xlu0 %6692
    %6695 = vst.msk [vmem:[%s25 + $0x4] sm:$0x3] %vm6559, %v6693
    %v6698 = vunpack.c.l.s4 1983009808
    %v6699 = vunpack.c.0.s8 %v6698
    %v6700 = vlaneseq
    %v6701 = vshrl.u32 %v6700, 7
    %v6702 = vsub.s32 %v6699, %v6701
    %v6703 = vrot.slane %v6683, %v6702
    %6704 = vrot.lane.b32.xlu0 %v6703, 96
    %v6705 = vpop.permute.xlu0 %6704
    %6707 = vst.msk [vmem:[%s25 + $0x4] sm:$0x3] %vm6572, %v6705
    %v6708 = vld [vmem:[#allocation2 + $0x30] sm:$0x30]
    %v6710 = vrot.slane %v6708, 4
    %6711 = vrot.lane.b32.xlu0 %v6710, 96
    %v6712 = vpop.permute.xlu0 %6711
    %v6714 = vadd.f32 %v6501, %v6712
    %6715 = vrot.lane.b32.xlu0 %v6710, 64
    %v6716 = vpop.permute.xlu0 %6715
    %v6718 = vadd.f32 %v6501, %v6716
    %v6719 = vld [vmem:[#allocation2 + $0x30] sm:$0xc0]
    %v6721 = vrot.slane %v6719, 6
    %v6723 = vadd.f32 %v6718, %v6721
    %6724 = vst.msk [vmem:[%s25 + $0x6] sm:$0x3] %vm6517, %v6714
    %v6727 = vunpack.c.l.s4 1983009808
    %v6728 = vunpack.c.0.s8 %v6727
    %v6729 = vlaneseq
    %v6730 = vshrl.u32 %v6729, 7
    %v6731 = vsub.s32 %v6728, %v6730
    %v6732 = vrot.slane %v6723, %v6731
    %6733 = vrot.lane.b32.xlu0 %v6732, 32
    %v6734 = vpop.permute.xlu0 %6733
    %6736 = vst.msk [vmem:[%s25 + $0x6] sm:$0x3] %vm6530, %v6734
    %v6737 = vld [vmem:[#allocation2 + $0x30] sm:$0xc0]
    %v6739 = vrot.slane %v6737, 6
    %6740 = vrot.lane.b32.xlu0 %v6739, 96
    %v6741 = vpop.permute.xlu0 %6740
    %v6743 = vadd.f32 %v6501, %v6741
    %6744 = vrot.lane.b32.xlu0 %v6739, 64
    %v6745 = vpop.permute.xlu0 %6744
    %v6747 = vadd.f32 %v6501, %v6745
    %v6748 = vld [vmem:[#allocation2 + $0x60] sm:$0x3]
    %v6749 = vadd.f32 %v6747, %v6748
    %v6752 = vunpack.c.l.s4 1983009808
    %v6753 = vunpack.c.0.s8 %v6752
    %v6754 = vlaneseq
    %v6755 = vshrl.u32 %v6754, 7
    %v6756 = vsub.s32 %v6753, %v6755
    %v6757 = vrot.slane %v6743, %v6756
    %6758 = vrot.lane.b32.xlu0 %v6757, 64
    %v6759 = vpop.permute.xlu0 %6758
    %6761 = vst.msk [vmem:[%s25 + $0x6] sm:$0x3] %vm6559, %v6759
    %v6764 = vunpack.c.l.s4 1983009808
    %v6765 = vunpack.c.0.s8 %v6764
    %v6766 = vlaneseq
    %v6767 = vshrl.u32 %v6766, 7
    %v6768 = vsub.s32 %v6765, %v6767
    %v6769 = vrot.slane %v6749, %v6768
    %6770 = vrot.lane.b32.xlu0 %v6769, 96
    %v6771 = vpop.permute.xlu0 %6770
    %6773 = vst.msk [vmem:[%s25 + $0x6] sm:$0x3] %vm6572, %v6771
    %v6774 = vld [vmem:[#allocation2 + $0x60] sm:$0x3]
    %6776 = vrot.lane.b32.xlu0 %v6774, 96
    %v6777 = vpop.permute.xlu0 %6776
    %v6779 = vadd.f32 %v6501, %v6777
    %6780 = vrot.lane.b32.xlu0 %v6774, 64
    %v6781 = vpop.permute.xlu0 %6780
    %v6783 = vadd.f32 %v6501, %v6781
    %v6784 = vld [vmem:[#allocation2 + $0x60] sm:$0xc]
    %v6786 = vrot.slane %v6784, 2
    %v6788 = vadd.f32 %v6783, %v6786
    %6789 = vst.msk [vmem:[%s25 + $0x8] sm:$0x3] %vm6517, %v6779
    %v6792 = vunpack.c.l.s4 1983009808
    %v6793 = vunpack.c.0.s8 %v6792
    %v6794 = vlaneseq
    %v6795 = vshrl.u32 %v6794, 7
    %v6796 = vsub.s32 %v6793, %v6795
    %v6797 = vrot.slane %v6788, %v6796
    %6798 = vrot.lane.b32.xlu0 %v6797, 32
    %v6799 = vpop.permute.xlu0 %6798
    %6801 = vst.msk [vmem:[%s25 + $0x8] sm:$0x3] %vm6530, %v6799
    %v6802 = vld [vmem:[#allocation2 + $0x60] sm:$0xc]
    %v6804 = vrot.slane %v6802, 2
    %6805 = vrot.lane.b32.xlu0 %v6804, 96
    %v6806 = vpop.permute.xlu0 %6805
    %v6808 = vadd.f32 %v6501, %v6806
    %6809 = vrot.lane.b32.xlu0 %v6804, 64
    %v6810 = vpop.permute.xlu0 %6809
    %v6812 = vadd.f32 %v6501, %v6810
    %v6813 = vld [vmem:[#allocation2 + $0x60] sm:$0x30]
    %v6815 = vrot.slane %v6813, 4
    %v6817 = vadd.f32 %v6812, %v6815
    %v6820 = vunpack.c.l.s4 1983009808
    %v6821 = vunpack.c.0.s8 %v6820
    %v6822 = vlaneseq
    %v6823 = vshrl.u32 %v6822, 7
    %v6824 = vsub.s32 %v6821, %v6823
    %v6825 = vrot.slane %v6808, %v6824
    %6826 = vrot.lane.b32.xlu0 %v6825, 64
    %v6827 = vpop.permute.xlu0 %6826
    %6829 = vst.msk [vmem:[%s25 + $0x8] sm:$0x3] %vm6559, %v6827
    %v6832 = vunpack.c.l.s4 1983009808
    %v6833 = vunpack.c.0.s8 %v6832
    %v6834 = vlaneseq
    %v6835 = vshrl.u32 %v6834, 7
    %v6836 = vsub.s32 %v6833, %v6835
    %v6837 = vrot.slane %v6817, %v6836
    %6838 = vrot.lane.b32.xlu0 %v6837, 96
    %v6839 = vpop.permute.xlu0 %6838
    %6841 = vst.msk [vmem:[%s25 + $0x8] sm:$0x3] %vm6572, %v6839
    %v6842 = vld [vmem:[#allocation2 + $0x60] sm:$0x30]
    %v6844 = vrot.slane %v6842, 4
    %6845 = vrot.lane.b32.xlu0 %v6844, 96
    %v6846 = vpop.permute.xlu0 %6845
    %v6848 = vadd.f32 %v6501, %v6846
    %6849 = vrot.lane.b32.xlu0 %v6844, 64
    %v6850 = vpop.permute.xlu0 %6849
    %v6852 = vadd.f32 %v6501, %v6850
    %v6853 = vld [vmem:[#allocation2 + $0x60] sm:$0xc0]
    %v6855 = vrot.slane %v6853, 6
    %v6857 = vadd.f32 %v6852, %v6855
    %6858 = vst.msk [vmem:[%s25 + $0xa] sm:$0x3] %vm6517, %v6848
    %v6861 = vunpack.c.l.s4 1983009808
    %v6862 = vunpack.c.0.s8 %v6861
    %v6863 = vlaneseq
    %v6864 = vshrl.u32 %v6863, 7
    %v6865 = vsub.s32 %v6862, %v6864
    %v6866 = vrot.slane %v6857, %v6865
    %6867 = vrot.lane.b32.xlu0 %v6866, 32
    %v6868 = vpop.permute.xlu0 %6867
    %6870 = vst.msk [vmem:[%s25 + $0xa] sm:$0x3] %vm6530, %v6868
    %v6871 = vld [vmem:[#allocation2 + $0x60] sm:$0xc0]
    %v6873 = vrot.slane %v6871, 6
    %6874 = vrot.lane.b32.xlu0 %v6873, 96
    %v6875 = vpop.permute.xlu0 %6874
    %v6877 = vadd.f32 %v6501, %v6875
    %6878 = vrot.lane.b32.xlu0 %v6873, 64
    %v6879 = vpop.permute.xlu0 %6878
    %v6881 = vadd.f32 %v6501, %v6879
    %v6882 = vld [vmem:[#allocation2 + $0x90] sm:$0x3]
    %v6883 = vadd.f32 %v6881, %v6882
    %v6886 = vunpack.c.l.s4 1983009808
    %v6887 = vunpack.c.0.s8 %v6886
    %v6888 = vlaneseq
    %v6889 = vshrl.u32 %v6888, 7
    %v6890 = vsub.s32 %v6887, %v6889
    %v6891 = vrot.slane %v6877, %v6890
    %6892 = vrot.lane.b32.xlu0 %v6891, 64
    %v6893 = vpop.permute.xlu0 %6892
    %6895 = vst.msk [vmem:[%s25 + $0xa] sm:$0x3] %vm6559, %v6893
    %v6898 = vunpack.c.l.s4 1983009808
    %v6899 = vunpack.c.0.s8 %v6898
    %v6900 = vlaneseq
    %v6901 = vshrl.u32 %v6900, 7
    %v6902 = vsub.s32 %v6899, %v6901
    %v6903 = vrot.slane %v6883, %v6902
    %6904 = vrot.lane.b32.xlu0 %v6903, 96
    %v6905 = vpop.permute.xlu0 %6904
    %6907 = vst.msk [vmem:[%s25 + $0xa] sm:$0x3] %vm6572, %v6905
    %v6908 = vld [vmem:[#allocation2 + $0x90] sm:$0x3]
    %6910 = vrot.lane.b32.xlu0 %v6908, 96
    %v6911 = vpop.permute.xlu0 %6910
    %v6913 = vadd.f32 %v6501, %v6911
    %6914 = vrot.lane.b32.xlu0 %v6908, 64
    %v6915 = vpop.permute.xlu0 %6914
    %v6917 = vadd.f32 %v6501, %v6915
    %v6918 = vld [vmem:[#allocation2 + $0x90] sm:$0xc]
    %v6920 = vrot.slane %v6918, 2
    %v6922 = vadd.f32 %v6917, %v6920
    %6923 = vst.msk [vmem:[%s25 + $0xc] sm:$0x3] %vm6517, %v6913
    %v6926 = vunpack.c.l.s4 1983009808
    %v6927 = vunpack.c.0.s8 %v6926
    %v6928 = vlaneseq
    %v6929 = vshrl.u32 %v6928, 7
    %v6930 = vsub.s32 %v6927, %v6929
    %v6931 = vrot.slane %v6922, %v6930
    %6932 = vrot.lane.b32.xlu0 %v6931, 32
    %v6933 = vpop.permute.xlu0 %6932
    %6935 = vst.msk [vmem:[%s25 + $0xc] sm:$0x3] %vm6530, %v6933
    %v6936 = vld [vmem:[#allocation2 + $0x90] sm:$0xc]
    %v6938 = vrot.slane %v6936, 2
    %6939 = vrot.lane.b32.xlu0 %v6938, 96
    %v6940 = vpop.permute.xlu0 %6939
    %v6942 = vadd.f32 %v6501, %v6940
    %6943 = vrot.lane.b32.xlu0 %v6938, 64
    %v6944 = vpop.permute.xlu0 %6943
    %v6946 = vadd.f32 %v6501, %v6944
    %v6947 = vld [vmem:[#allocation2 + $0x90] sm:$0x30]
    %v6949 = vrot.slane %v6947, 4
    %v6951 = vadd.f32 %v6946, %v6949
    %v6954 = vunpack.c.l.s4 1983009808
    %v6955 = vunpack.c.0.s8 %v6954
    %v6956 = vlaneseq
    %v6957 = vshrl.u32 %v6956, 7
    %v6958 = vsub.s32 %v6955, %v6957
    %v6959 = vrot.slane %v6942, %v6958
    %6960 = vrot.lane.b32.xlu0 %v6959, 64
    %v6961 = vpop.permute.xlu0 %6960
    %6963 = vst.msk [vmem:[%s25 + $0xc] sm:$0x3] %vm6559, %v6961
    %v6966 = vunpack.c.l.s4 1983009808
    %v6967 = vunpack.c.0.s8 %v6966
    %v6968 = vlaneseq
    %v6969 = vshrl.u32 %v6968, 7
    %v6970 = vsub.s32 %v6967, %v6969
    %v6971 = vrot.slane %v6951, %v6970
    %6972 = vrot.lane.b32.xlu0 %v6971, 96
    %v6973 = vpop.permute.xlu0 %6972
    %6975 = vst.msk [vmem:[%s25 + $0xc] sm:$0x3] %vm6572, %v6973
    %v6976 = vld [vmem:[#allocation2 + $0x90] sm:$0x30]
    %v6978 = vrot.slane %v6976, 4
    %6979 = vrot.lane.b32.xlu0 %v6978, 96
    %v6980 = vpop.permute.xlu0 %6979
    %v6982 = vadd.f32 %v6501, %v6980
    %6983 = vrot.lane.b32.xlu0 %v6978, 64
    %v6984 = vpop.permute.xlu0 %6983
    %v6986 = vadd.f32 %v6501, %v6984
    %v6987 = vld [vmem:[#allocation2 + $0x90] sm:$0xc0]
    %v6989 = vrot.slane %v6987, 6
    %v6991 = vadd.f32 %v6986, %v6989
    %6992 = vst.msk [vmem:[%s25 + $0xe] sm:$0x3] %vm6517, %v6982
    %v6995 = vunpack.c.l.s4 1983009808
    %v6996 = vunpack.c.0.s8 %v6995
    %v6997 = vlaneseq
    %v6998 = vshrl.u32 %v6997, 7
    %v6999 = vsub.s32 %v6996, %v6998
    %v7000 = vrot.slane %v6991, %v6999
    %7001 = vrot.lane.b32.xlu0 %v7000, 32
    %v7002 = vpop.permute.xlu0 %7001
    %7004 = vst.msk [vmem:[%s25 + $0xe] sm:$0x3] %vm6530, %v7002
    %v7005 = vld [vmem:[#allocation2 + $0x90] sm:$0xc0]
    %v7007 = vrot.slane %v7005, 6
    %7008 = vrot.lane.b32.xlu0 %v7007, 96
    %v7009 = vpop.permute.xlu0 %7008
    %v7011 = vadd.f32 %v6501, %v7009
    %7012 = vrot.lane.b32.xlu0 %v7007, 64
    %v7013 = vpop.permute.xlu0 %7012
    %v7015 = vadd.f32 %v6501, %v7013
    %v7018 = vunpack.c.l.s4 1983009808
    %v7019 = vunpack.c.0.s8 %v7018
    %v7020 = vlaneseq
    %v7021 = vshrl.u32 %v7020, 7
    %v7022 = vsub.s32 %v7019, %v7021
    %v7023 = vrot.slane %v7011, %v7022
    %7024 = vrot.lane.b32.xlu0 %v7023, 64
    %v7025 = vpop.permute.xlu0 %7024
    %7027 = vst.msk [vmem:[%s25 + $0xe] sm:$0x3] %vm6559, %v7025
    %v7030 = vunpack.c.l.s4 1983009808
    %v7031 = vunpack.c.0.s8 %v7030
    %v7032 = vlaneseq
    %v7033 = vshrl.u32 %v7032, 7
    %v7034 = vsub.s32 %v7031, %v7033
    %v7035 = vrot.slane %v7015, %v7034
    %7036 = vrot.lane.b32.xlu0 %v7035, 96
    %v7037 = vpop.permute.xlu0 %7036
    %7039 = vst.msk [vmem:[%s25 + $0xe] sm:$0x3] %vm6572, %v7037
    // Predicated region
    $region136: #{conv_autoencoder_forward.1} parent=1 // pred_check
      _
    $region137: #{conv_autoencoder_forward.1} parent=1 // pred_check_branch
      %7041 = sbr.rel (0) target = $region139
    $region138: #{conv_autoencoder_forward.1} parent=1 // pred_region
      _
    $region139: #{conv_autoencoder_forward.1} parent=1 // pred_fallthru
      _
    // Predicated region
    $region140: #{conv_autoencoder_forward.1} parent=1 // pred_check
      _
    $region141: #{conv_autoencoder_forward.1} parent=1 // pred_check_branch
      %7043 = sbr.rel (0) target = $region143
    $region142: #{conv_autoencoder_forward.1} parent=1 // pred_region
      %s7045 = ssub.s32 32, 32
      %7046 = vsyncadd [#allocation15], %s7045
      %s7048 = sshll.u32 [#allocation19], 4
      %s7049 = int_to_ptr.vmem [resolvable:$true] %s7048
      %7051 = dma.vmem_to_hbm [thread:$0]  %s7049, 32, %s26, [#allocation15]
    $region143: #{conv_autoencoder_forward.1} parent=1 // pred_fallthru
      _
    // Predicated region
    $region144: #{conv_autoencoder_forward.1} parent=1 // pred_check
      _
    $region145: #{conv_autoencoder_forward.1} parent=1 // pred_check_branch
      %7053 = sbr.rel (0) target = $region147
    $region146: #{conv_autoencoder_forward.1} parent=1 // pred_region
      _
    $region147: #{conv_autoencoder_forward.1} parent=1 // pred_fallthru
      _
    // Predicated region
    $region148: #{conv_autoencoder_forward.1} parent=1 // pred_check
      _
    $region149: #{conv_autoencoder_forward.1} parent=1 // pred_check_branch
      %7055 = sbr.rel (0) target = $region151
    $region150: #{conv_autoencoder_forward.1} parent=1 // pred_region
      %7056 = dma.done [#allocation15], 32
    $region151: #{conv_autoencoder_forward.1} parent=1 // pred_fallthru
      _
    %7057 = vsyncpa [#allocation14], 1
    %7058 = vsyncpa [#allocation17], 1
    %7059 = vsyncpa [#allocation15], 1
  %7060 = vsyncmov [#allocation12]
  %s7061 = vpop.sfrf %7060
  %p7062 = scmp.eq.s32.totalorder %s7061, 0
  %p7063 = pneg %p7062
  %7065 = shalt.err (%p7063)
  %s7066 = scalar_lea.sflag [#allocation12], 1
  %7067 = vsyncmov %s7066
  %s7068 = vpop.sfrf %7067
  %p7069 = scmp.eq.s32.totalorder %s7068, 0
  %p7070 = pneg %p7069
  %7072 = shalt.err (%p7070)
  %s7073 = scalar_lea.sflag [#allocation12], 2
  %7074 = vsyncmov %s7073
  %s7075 = vpop.sfrf %7074
  %p7076 = scmp.eq.s32.totalorder %s7075, 0
  %p7077 = pneg %p7076
  %7079 = shalt.err (%p7077)
  %s7080 = scalar_lea.sflag [#allocation12], 3
  %7081 = vsyncmov %s7080
  %s7082 = vpop.sfrf %7081
  %p7083 = scmp.eq.s32.totalorder %s7082, 0
  %p7084 = pneg %p7083
  %7086 = shalt.err (%p7084)

</llo_original>
